<compile_context>
chip_gen: v7x
topology: tpu7x:2x2x1
jax: 0.10.0
libtpu: 0.0.40
codegen_flags: <defaults>
</compile_context>

<pallas_src>
import functools

import jax
import jax.numpy as jnp
from jax import lax
from jax.experimental import pallas as pl
from jax.experimental.pallas import tpu as pltpu


# --------------------------------------------------------------------------
# Kernel
# --------------------------------------------------------------------------
def attention_kernel(num_heads, head_dim, batch_tile,
                     x_ref, wqkv_ref, wproj_ref, bproj_ref, o_ref,
                     qkv_s, ocat_s):
    """One grid step = `batch_tile` samples, each a full (N, D) token slab.

    x_ref    : (Bt, N, D) bf16
    wqkv_ref : (D, 3D)    bf16, columns [Q | K | V], head-major inside each
                          block; 1/sqrt(head_dim) folded into the Q columns.
    wproj_ref: (D, D)     bf16, rows head-major.
    bproj_ref: (1, D)     f32.
    o_ref    : (Bt, N, D) bf16
    qkv_s    : (Bt*N, 3D) bf16 VMEM scratch (staged fused-QKV activations)
    ocat_s   : (Bt*N, D)  bf16 VMEM scratch (concatenated head outputs)
    """
    bt = batch_tile
    hd = head_dim
    n = x_ref.shape[1]
    d = x_ref.shape[2]
    m = bt * n

    # ---- Fused QKV projection: one full-width bf16 MXU matmul over all Bt
    # samples (M = Bt*N rows), f32 accumulation.  Result is staged once to a
    # bf16 VMEM scratch so no large f32 value stays live across the head loop.
    x = x_ref[...].reshape(m, d)                         # bf16; major-dim reshape
    qkv_s[...] = jnp.dot(
        x, wqkv_ref[...], preferred_element_type=jnp.float32
    ).astype(jnp.bfloat16)

    # ---- Per-(sample, head) attention.  Only one (N, N) score/prob tile is
    # live at a time; each head's output goes straight into the concat scratch.
    for b in range(bt):                                  # static, fully unrolled
        r = b * n
        for h in range(num_heads):                       # static, fully unrolled
            c = h * hd
            q = qkv_s[r:r + n, c:c + hd]                 # (N, hd) bf16, pre-scaled
            k = qkv_s[r:r + n, d + c:d + c + hd]         # (N, hd) bf16
            v = qkv_s[r:r + n, 2 * d + c:2 * d + c + hd]  # (N, hd) bf16

            # scores = q @ k^T (contract last dims; no transposed copy).
            s = lax.dot_general(q, k, (((1,), (1,)), ((), ())),
                                preferred_element_type=jnp.float32)  # (N, N) f32

            # Stable softmax in f32; divide on the EUP via approx reciprocal.
            s = s - jnp.max(s, axis=-1, keepdims=True)
            p = jnp.exp(s)
            p = p * pl.reciprocal(jnp.sum(p, axis=-1, keepdims=True), approx=True)

            ocat_s[r:r + n, c:c + hd] = jnp.dot(
                p.astype(jnp.bfloat16), v,
                preferred_element_type=jnp.float32).astype(jnp.bfloat16)

    # ---- Output projection: single full-depth (K = D) bf16 matmul + f32 bias.
    y = jnp.dot(ocat_s[...], wproj_ref[...],
                preferred_element_type=jnp.float32) + bproj_ref[...]
    o_ref[...] = y.reshape(bt, n, d).astype(o_ref.dtype)


# --------------------------------------------------------------------------
# One-time parameter restructuring (load-time, outside the hot path)
# --------------------------------------------------------------------------
def prepare_params(params, num_heads):
    """Fold the softmax scale into the Q columns and cast weights to bf16.

    Assumes the timm/ViT layout: wqkv columns ordered [q | k | v] with
    head-major blocks inside each, wproj rows head-major.
    """
    wqkv = params["wqkv"]      # (D, 3D)
    wproj = params["wproj"]    # (D, D)
    bproj = params["bproj"]    # (1, D)
    D = wqkv.shape[0]
    assert wqkv.shape == (D, 3 * D), "expected fused qkv weight of shape (D, 3D)"
    assert wproj.shape == (D, D) and bproj.shape == (1, D)
    assert D % num_heads == 0, "embed_dim must be divisible by num_heads"
    hd = D // num_heads
    scale = hd ** (-0.5)

    wqkv_p = jnp.concatenate(
        [wqkv[:, 0:D] * scale, wqkv[:, D:3 * D]], axis=1
    ).astype(jnp.bfloat16)                               # (D, 3D) bf16

    return {"wqkv_p": wqkv_p,
            "wproj_p": wproj.astype(jnp.bfloat16),       # (D, D) bf16
            "bproj": bproj.astype(jnp.float32),          # (1, D) f32
            "head_dim": hd}


# --------------------------------------------------------------------------
# Wrapper
# --------------------------------------------------------------------------
def _derive_vmem_limit(bt, n, d):
    """Honest scoped-VMEM budget: double-buffered activation blocks, resident
    (double-buffered) weights, explicit scratch, plus the in-kernel f32 live
    values (qkv before the bf16 store, y, one score/prob tile), +50% headroom.
    Clamped to the smallest-generation (v7x) physical VMEM."""
    bf, f32 = 2, 4
    act_blocks = 2 * 2 * (bt * n * d * bf)                    # x + out, 2 bufs each
    weights = 2 * (d * 3 * d * bf + d * d * bf + d * f32)     # 2 bufs each
    scratch = bt * n * 3 * d * bf + bt * n * d * bf
    live_f32 = bt * n * 3 * d * f32 + bt * n * d * f32 + 3 * n * n * f32
    total = act_blocks + weights + scratch + live_f32
    return min(int(total * 1.5) + (2 << 20), 64 << 20)


def attention(x, wqkv_p, wproj_p, bproj, *, num_heads, head_dim,
              batch_tile=None, out_dtype=jnp.bfloat16):
    B, N, D = x.shape
    assert D == num_heads * head_dim
    assert N % 8 == 0 and D % 128 == 0, "expect sublane/lane-dense token slabs"

    # Several samples per grid step (amortize per-step overhead, raise matmul M).
    if batch_tile is None:
        batch_tile = max(t for t in range(1, min(B, 8) + 1) if B % t == 0)
    assert B % batch_tile == 0
    bt = batch_tile

    # Activation cast happens outside the kernel (half the x HBM bytes).
    if x.dtype != jnp.bfloat16:
        x = x.astype(jnp.bfloat16)

    kernel = functools.partial(attention_kernel, num_heads, head_dim, bt)

    in_specs = [
        pl.BlockSpec((bt, N, D), lambda i: (i, 0, 0)),   # x: Bt samples / step
        # Constant index_maps: weights are DMA'd once and stay resident in VMEM.
        pl.BlockSpec((D, 3 * D), lambda i: (0, 0)),      # fused qkv weight (bf16)
        pl.BlockSpec((D, D), lambda i: (0, 0)),          # proj weight (bf16)
        pl.BlockSpec((1, D), lambda i: (0, 0)),          # proj bias (f32)
    ]
    out_spec = pl.BlockSpec((bt, N, D), lambda i: (i, 0, 0))

    return pl.pallas_call(
        kernel,
        out_shape=jax.ShapeDtypeStruct((B, N, D), out_dtype),
        grid_spec=pltpu.PrefetchScalarGridSpec(
            num_scalar_prefetch=0,
            grid=(B // bt,),
            in_specs=in_specs,
            out_specs=out_spec,
            scratch_shapes=[
                pltpu.VMEM((bt * N, 3 * D), jnp.bfloat16),   # staged qkv
                pltpu.VMEM((bt * N, D), jnp.bfloat16),       # concat head outputs
            ],
        ),
        compiler_params=pltpu.CompilerParams(
            dimension_semantics=("parallel",),
            vmem_limit_bytes=_derive_vmem_limit(bt, N, D),
        ),
    )(x, wqkv_p, wproj_p, bproj)


# --------------------------------------------------------------------------
# Pure-JAX reference (mirrors the PyTorch module, f32)
# --------------------------------------------------------------------------
def attention_ref(x, params, num_heads):
    B, N, D = x.shape
    hd = D // num_heads
    scale = hd ** (-0.5)
    qkv = x @ params["wqkv"]                                   # (B, N, 3D)
    qkv = qkv.reshape(B, N, 3, num_heads, hd).transpose(2, 0, 3, 1, 4)
    q, k, v = qkv[0], qkv[1], qkv[2]                           # (B, H, N, hd)
    attn = jax.nn.softmax(jnp.einsum("bhnd,bhmd->bhnm", q, k) * scale, axis=-1)
    o = jnp.einsum("bhnm,bhmd->bhnd", attn, v)
    o = o.transpose(0, 2, 1, 3).reshape(B, N, D)
    return o @ params["wproj"] + params["bproj"][0]


def make_params(key, embed_dim):
    ks = jax.random.split(key, 3)
    s = 0.02
    return {
        "wqkv": s * jax.random.normal(ks[0], (embed_dim, 3 * embed_dim), jnp.float32),
        "wproj": s * jax.random.normal(ks[1], (embed_dim, embed_dim), jnp.float32),
        "bproj": s * jax.random.normal(ks[2], (1, embed_dim), jnp.float32),
    }


if __name__ == "__main__":
    # ViT-Small-like config: embed_dim=384 (lane-dense multiple of 128),
    # num_heads=6 (module default) => head_dim=64.
    B, N, D = 2, 128, 384
    num_heads = 6

    key = jax.random.PRNGKey(0)
    kx, kp = jax.random.split(key)
    x = jax.random.normal(kx, (B, N, D), jnp.float32)
    params = make_params(kp, D)

    prep = prepare_params(params, num_heads)           # one-time, load-time transform
    out = attention(x, prep["wqkv_p"], prep["wproj_p"], prep["bproj"],
                    num_heads=num_heads, head_dim=prep["head_dim"])
    out = jax.block_until_ready(out)

    ref = attention_ref(x, params, num_heads)
    assert out.shape == (B, N, D) and out.dtype == jnp.bfloat16
    out_f32 = out.astype(jnp.float32)
    assert bool(jnp.all(jnp.isfinite(out_f32)))
    # bf16 activations/weights (f32 accumulation) + bf16 output => relaxed tol.
    assert bool(jnp.allclose(out_f32, ref, rtol=2e-2, atol=8e-3)), "mismatch vs reference"
    rel = jnp.linalg.norm(out_f32 - ref) / jnp.linalg.norm(ref)
    assert float(rel) < 3e-2, float(rel)

    print("KERNEL_OK")
</pallas_src>

<mosaic_0001>
module attributes {stable_mosaic.version = 11 : i64} {
  func.func @attention_kernel(%arg0: i32, %arg1: memref<2x128x384xbf16, #tpu.memory_space<vmem>>, %arg2: memref<384x1152xbf16, #tpu.memory_space<vmem>>, %arg3: memref<384x384xbf16, #tpu.memory_space<vmem>>, %arg4: memref<1x384xf32, #tpu.memory_space<vmem>>, %arg5: memref<2x128x384xbf16, #tpu.memory_space<vmem>>, %arg6: memref<256x1152xbf16, #tpu.memory_space<vmem>>, %arg7: memref<256x384xbf16, #tpu.memory_space<vmem>>) attributes {dimension_semantics = [#tpu.dimension_semantics<parallel>], iteration_bounds = array<i64: 1>, scalar_prefetch = 0 : i64, scratch_operands = 2 : i64, tpu.core_type = #tpu.core_type<tc>, window_params = [{transform_indices = @transform_0, window_bounds = array<i64: 2, 128, 384>}, {pipeline_mode = #tpu.pipeline_mode<synchronous>, transform_indices = @transform_1, window_bounds = array<i64: 384, 1152>}, {pipeline_mode = #tpu.pipeline_mode<synchronous>, transform_indices = @transform_2, window_bounds = array<i64: 384, 384>}, {pipeline_mode = #tpu.pipeline_mode<synchronous>, transform_indices = @transform_3, window_bounds = array<i64: 1, 384>}, {transform_indices = @transform_4, window_bounds = array<i64: 2, 128, 384>}]} {
    %c0 = arith.constant 0 : index
    %c0_0 = arith.constant 0 : index
    %c0_1 = arith.constant 0 : index
    %0 = vector.load %arg1[%c0, %c0_0, %c0_1] : memref<2x128x384xbf16, #tpu.memory_space<vmem>>, vector<2x128x384xbf16>
    %1 = vector.shape_cast %0 : vector<2x128x384xbf16> to vector<256x384xbf16>
    %c0_2 = arith.constant 0 : index
    %c0_3 = arith.constant 0 : index
    %2 = vector.load %arg2[%c0_2, %c0_3] : memref<384x1152xbf16, #tpu.memory_space<vmem>>, vector<384x1152xbf16>
    %cst = arith.constant dense<0.000000e+00> : vector<256x1152xf32>
    %3 = tpu.matmul %1, %2, %cst {dimension_numbers = #tpu.dot_dimension_numbers<[1], [0], [0], [1], [0, 0, 1, 1], [], []>} : vector<256x384xbf16>, vector<384x1152xbf16>, vector<256x1152xf32> -> vector<256x1152xf32>
    %4 = arith.truncf %3 : vector<256x1152xf32> to vector<256x1152xbf16>
    %c0_4 = arith.constant 0 : index
    %c0_5 = arith.constant 0 : index
    %5 = vector.load %arg6[%c0_4, %c0_5] : memref<256x1152xbf16, #tpu.memory_space<vmem>>, vector<256x1152xbf16>
    tpu.vector_store %arg6[%c0_4, %c0_5], %4 {strides = array<i32>} : memref<256x1152xbf16, #tpu.memory_space<vmem>>, vector<256x1152xbf16>,
    %c0_6 = arith.constant 0 : index
    %c0_7 = arith.constant 0 : index
    %6 = vector.load %arg6[%c0_6, %c0_7] : memref<256x1152xbf16, #tpu.memory_space<vmem>>, vector<128x64xbf16>
    %c0_8 = arith.constant 0 : index
    %c384 = arith.constant 384 : index
    %7 = vector.load %arg6[%c0_8, %c384] : memref<256x1152xbf16, #tpu.memory_space<vmem>>, vector<128x64xbf16>
    %c0_9 = arith.constant 0 : index
    %c768 = arith.constant 768 : index
    %8 = vector.load %arg6[%c0_9, %c768] : memref<256x1152xbf16, #tpu.memory_space<vmem>>, vector<128x64xbf16>
    %cst_10 = arith.constant dense<0.000000e+00> : vector<128x128xf32>
    %9 = tpu.matmul %6, %7, %cst_10 {dimension_numbers = #tpu.dot_dimension_numbers<[1], [1], [0], [0], [0, 0, 1, 0], [], []>} : vector<128x64xbf16>, vector<128x64xbf16>, vector<128x128xf32> -> vector<128x128xf32>
    %cst_11 = arith.constant dense<0xFF800000> : vector<128xf32>
    %10 = vector.multi_reduction <maximumf>, %9, %cst_11 [1] : vector<128x128xf32> to vector<128xf32>
    %11 = vector.shape_cast %10 : vector<128xf32> to vector<128x1xf32>
    %12 = vector.broadcast %11 : vector<128x1xf32> to vector<128x128xf32>
    %13 = arith.subf %9, %12 : vector<128x128xf32>
    %14 = math.exp %13 : vector<128x128xf32>
    %cst_12 = arith.constant dense<0.000000e+00> : vector<128xf32>
    %15 = vector.multi_reduction <add>, %14, %cst_12 [1] : vector<128x128xf32> to vector<128xf32>
    %16 = vector.shape_cast %15 : vector<128xf32> to vector<128x1xf32>
    %17 = tpu.reciprocal %16 {approx = true} : vector<128x1xf32> -> vector<128x1xf32>
    %18 = vector.broadcast %17 : vector<128x1xf32> to vector<128x128xf32>
    %19 = arith.mulf %14, %18 : vector<128x128xf32>
    %20 = arith.truncf %19 : vector<128x128xf32> to vector<128x128xbf16>
    %cst_13 = arith.constant dense<0.000000e+00> : vector<128x64xf32>
    %21 = tpu.matmul %20, %8, %cst_13 {dimension_numbers = #tpu.dot_dimension_numbers<[1], [0], [0], [1], [0, 0, 1, 1], [], []>} : vector<128x128xbf16>, vector<128x64xbf16>, vector<128x64xf32> -> vector<128x64xf32>
    %22 = arith.truncf %21 : vector<128x64xf32> to vector<128x64xbf16>
    %c0_14 = arith.constant 0 : index
    %c0_15 = arith.constant 0 : index
    %23 = vector.load %arg7[%c0_14, %c0_15] : memref<256x384xbf16, #tpu.memory_space<vmem>>, vector<128x64xbf16>
    tpu.vector_store %arg7[%c0_14, %c0_15], %22 {strides = array<i32>} : memref<256x384xbf16, #tpu.memory_space<vmem>>, vector<128x64xbf16>,
    %c0_16 = arith.constant 0 : index
    %c64 = arith.constant 64 : index
    %24 = vector.load %arg6[%c0_16, %c64] : memref<256x1152xbf16, #tpu.memory_space<vmem>>, vector<128x64xbf16>
    %c0_17 = arith.constant 0 : index
    %c448 = arith.constant 448 : index
    %25 = vector.load %arg6[%c0_17, %c448] : memref<256x1152xbf16, #tpu.memory_space<vmem>>, vector<128x64xbf16>
    %c0_18 = arith.constant 0 : index
    %c832 = arith.constant 832 : index
    %26 = vector.load %arg6[%c0_18, %c832] : memref<256x1152xbf16, #tpu.memory_space<vmem>>, vector<128x64xbf16>
    %cst_19 = arith.constant dense<0.000000e+00> : vector<128x128xf32>
    %27 = tpu.matmul %24, %25, %cst_19 {dimension_numbers = #tpu.dot_dimension_numbers<[1], [1], [0], [0], [0, 0, 1, 0], [], []>} : vector<128x64xbf16>, vector<128x64xbf16>, vector<128x128xf32> -> vector<128x128xf32>
    %cst_20 = arith.constant dense<0xFF800000> : vector<128xf32>
    %28 = vector.multi_reduction <maximumf>, %27, %cst_20 [1] : vector<128x128xf32> to vector<128xf32>
    %29 = vector.shape_cast %28 : vector<128xf32> to vector<128x1xf32>
    %30 = vector.broadcast %29 : vector<128x1xf32> to vector<128x128xf32>
    %31 = arith.subf %27, %30 : vector<128x128xf32>
    %32 = math.exp %31 : vector<128x128xf32>
    %cst_21 = arith.constant dense<0.000000e+00> : vector<128xf32>
    %33 = vector.multi_reduction <add>, %32, %cst_21 [1] : vector<128x128xf32> to vector<128xf32>
    %34 = vector.shape_cast %33 : vector<128xf32> to vector<128x1xf32>
    %35 = tpu.reciprocal %34 {approx = true} : vector<128x1xf32> -> vector<128x1xf32>
    %36 = vector.broadcast %35 : vector<128x1xf32> to vector<128x128xf32>
    %37 = arith.mulf %32, %36 : vector<128x128xf32>
    %38 = arith.truncf %37 : vector<128x128xf32> to vector<128x128xbf16>
    %cst_22 = arith.constant dense<0.000000e+00> : vector<128x64xf32>
    %39 = tpu.matmul %38, %26, %cst_22 {dimension_numbers = #tpu.dot_dimension_numbers<[1], [0], [0], [1], [0, 0, 1, 1], [], []>} : vector<128x128xbf16>, vector<128x64xbf16>, vector<128x64xf32> -> vector<128x64xf32>
    %40 = arith.truncf %39 : vector<128x64xf32> to vector<128x64xbf16>
    %c0_23 = arith.constant 0 : index
    %c64_24 = arith.constant 64 : index
    %41 = vector.load %arg7[%c0_23, %c64_24] : memref<256x384xbf16, #tpu.memory_space<vmem>>, vector<128x64xbf16>
    tpu.vector_store %arg7[%c0_23, %c64_24], %40 {strides = array<i32>} : memref<256x384xbf16, #tpu.memory_space<vmem>>, vector<128x64xbf16>,
    %c0_25 = arith.constant 0 : index
    %c128 = arith.constant 128 : index
    %42 = vector.load %arg6[%c0_25, %c128] : memref<256x1152xbf16, #tpu.memory_space<vmem>>, vector<128x64xbf16>
    %c0_26 = arith.constant 0 : index
    %c512 = arith.constant 512 : index
    %43 = vector.load %arg6[%c0_26, %c512] : memref<256x1152xbf16, #tpu.memory_space<vmem>>, vector<128x64xbf16>
    %c0_27 = arith.constant 0 : index
    %c896 = arith.constant 896 : index
    %44 = vector.load %arg6[%c0_27, %c896] : memref<256x1152xbf16, #tpu.memory_space<vmem>>, vector<128x64xbf16>
    %cst_28 = arith.constant dense<0.000000e+00> : vector<128x128xf32>
    %45 = tpu.matmul %42, %43, %cst_28 {dimension_numbers = #tpu.dot_dimension_numbers<[1], [1], [0], [0], [0, 0, 1, 0], [], []>} : vector<128x64xbf16>, vector<128x64xbf16>, vector<128x128xf32> -> vector<128x128xf32>
    %cst_29 = arith.constant dense<0xFF800000> : vector<128xf32>
    %46 = vector.multi_reduction <maximumf>, %45, %cst_29 [1] : vector<128x128xf32> to vector<128xf32>
    %47 = vector.shape_cast %46 : vector<128xf32> to vector<128x1xf32>
    %48 = vector.broadcast %47 : vector<128x1xf32> to vector<128x128xf32>
    %49 = arith.subf %45, %48 : vector<128x128xf32>
    %50 = math.exp %49 : vector<128x128xf32>
    %cst_30 = arith.constant dense<0.000000e+00> : vector<128xf32>
    %51 = vector.multi_reduction <add>, %50, %cst_30 [1] : vector<128x128xf32> to vector<128xf32>
    %52 = vector.shape_cast %51 : vector<128xf32> to vector<128x1xf32>
    %53 = tpu.reciprocal %52 {approx = true} : vector<128x1xf32> -> vector<128x1xf32>
    %54 = vector.broadcast %53 : vector<128x1xf32> to vector<128x128xf32>
    %55 = arith.mulf %50, %54 : vector<128x128xf32>
    %56 = arith.truncf %55 : vector<128x128xf32> to vector<128x128xbf16>
    %cst_31 = arith.constant dense<0.000000e+00> : vector<128x64xf32>
    %57 = tpu.matmul %56, %44, %cst_31 {dimension_numbers = #tpu.dot_dimension_numbers<[1], [0], [0], [1], [0, 0, 1, 1], [], []>} : vector<128x128xbf16>, vector<128x64xbf16>, vector<128x64xf32> -> vector<128x64xf32>
    %58 = arith.truncf %57 : vector<128x64xf32> to vector<128x64xbf16>
    %c0_32 = arith.constant 0 : index
    %c128_33 = arith.constant 128 : index
    %59 = vector.load %arg7[%c0_32, %c128_33] : memref<256x384xbf16, #tpu.memory_space<vmem>>, vector<128x64xbf16>
    tpu.vector_store %arg7[%c0_32, %c128_33], %58 {strides = array<i32>} : memref<256x384xbf16, #tpu.memory_space<vmem>>, vector<128x64xbf16>,
    %c0_34 = arith.constant 0 : index
    %c192 = arith.constant 192 : index
    %60 = vector.load %arg6[%c0_34, %c192] : memref<256x1152xbf16, #tpu.memory_space<vmem>>, vector<128x64xbf16>
    %c0_35 = arith.constant 0 : index
    %c576 = arith.constant 576 : index
    %61 = vector.load %arg6[%c0_35, %c576] : memref<256x1152xbf16, #tpu.memory_space<vmem>>, vector<128x64xbf16>
    %c0_36 = arith.constant 0 : index
    %c960 = arith.constant 960 : index
    %62 = vector.load %arg6[%c0_36, %c960] : memref<256x1152xbf16, #tpu.memory_space<vmem>>, vector<128x64xbf16>
    %cst_37 = arith.constant dense<0.000000e+00> : vector<128x128xf32>
    %63 = tpu.matmul %60, %61, %cst_37 {dimension_numbers = #tpu.dot_dimension_numbers<[1], [1], [0], [0], [0, 0, 1, 0], [], []>} : vector<128x64xbf16>, vector<128x64xbf16>, vector<128x128xf32> -> vector<128x128xf32>
    %cst_38 = arith.constant dense<0xFF800000> : vector<128xf32>
    %64 = vector.multi_reduction <maximumf>, %63, %cst_38 [1] : vector<128x128xf32> to vector<128xf32>
    %65 = vector.shape_cast %64 : vector<128xf32> to vector<128x1xf32>
    %66 = vector.broadcast %65 : vector<128x1xf32> to vector<128x128xf32>
    %67 = arith.subf %63, %66 : vector<128x128xf32>
    %68 = math.exp %67 : vector<128x128xf32>
    %cst_39 = arith.constant dense<0.000000e+00> : vector<128xf32>
    %69 = vector.multi_reduction <add>, %68, %cst_39 [1] : vector<128x128xf32> to vector<128xf32>
    %70 = vector.shape_cast %69 : vector<128xf32> to vector<128x1xf32>
    %71 = tpu.reciprocal %70 {approx = true} : vector<128x1xf32> -> vector<128x1xf32>
    %72 = vector.broadcast %71 : vector<128x1xf32> to vector<128x128xf32>
    %73 = arith.mulf %68, %72 : vector<128x128xf32>
    %74 = arith.truncf %73 : vector<128x128xf32> to vector<128x128xbf16>
    %cst_40 = arith.constant dense<0.000000e+00> : vector<128x64xf32>
    %75 = tpu.matmul %74, %62, %cst_40 {dimension_numbers = #tpu.dot_dimension_numbers<[1], [0], [0], [1], [0, 0, 1, 1], [], []>} : vector<128x128xbf16>, vector<128x64xbf16>, vector<128x64xf32> -> vector<128x64xf32>
    %76 = arith.truncf %75 : vector<128x64xf32> to vector<128x64xbf16>
    %c0_41 = arith.constant 0 : index
    %c192_42 = arith.constant 192 : index
    %77 = vector.load %arg7[%c0_41, %c192_42] : memref<256x384xbf16, #tpu.memory_space<vmem>>, vector<128x64xbf16>
    tpu.vector_store %arg7[%c0_41, %c192_42], %76 {strides = array<i32>} : memref<256x384xbf16, #tpu.memory_space<vmem>>, vector<128x64xbf16>,
    %c0_43 = arith.constant 0 : index
    %c256 = arith.constant 256 : index
    %78 = vector.load %arg6[%c0_43, %c256] : memref<256x1152xbf16, #tpu.memory_space<vmem>>, vector<128x64xbf16>
    %c0_44 = arith.constant 0 : index
    %c640 = arith.constant 640 : index
    %79 = vector.load %arg6[%c0_44, %c640] : memref<256x1152xbf16, #tpu.memory_space<vmem>>, vector<128x64xbf16>
    %c0_45 = arith.constant 0 : index
    %c1024 = arith.constant 1024 : index
    %80 = vector.load %arg6[%c0_45, %c1024] : memref<256x1152xbf16, #tpu.memory_space<vmem>>, vector<128x64xbf16>
    %cst_46 = arith.constant dense<0.000000e+00> : vector<128x128xf32>
    %81 = tpu.matmul %78, %79, %cst_46 {dimension_numbers = #tpu.dot_dimension_numbers<[1], [1], [0], [0], [0, 0, 1, 0], [], []>} : vector<128x64xbf16>, vector<128x64xbf16>, vector<128x128xf32> -> vector<128x128xf32>
    %cst_47 = arith.constant dense<0xFF800000> : vector<128xf32>
    %82 = vector.multi_reduction <maximumf>, %81, %cst_47 [1] : vector<128x128xf32> to vector<128xf32>
    %83 = vector.shape_cast %82 : vector<128xf32> to vector<128x1xf32>
    %84 = vector.broadcast %83 : vector<128x1xf32> to vector<128x128xf32>
    %85 = arith.subf %81, %84 : vector<128x128xf32>
    %86 = math.exp %85 : vector<128x128xf32>
    %cst_48 = arith.constant dense<0.000000e+00> : vector<128xf32>
    %87 = vector.multi_reduction <add>, %86, %cst_48 [1] : vector<128x128xf32> to vector<128xf32>
    %88 = vector.shape_cast %87 : vector<128xf32> to vector<128x1xf32>
    %89 = tpu.reciprocal %88 {approx = true} : vector<128x1xf32> -> vector<128x1xf32>
    %90 = vector.broadcast %89 : vector<128x1xf32> to vector<128x128xf32>
    %91 = arith.mulf %86, %90 : vector<128x128xf32>
    %92 = arith.truncf %91 : vector<128x128xf32> to vector<128x128xbf16>
    %cst_49 = arith.constant dense<0.000000e+00> : vector<128x64xf32>
    %93 = tpu.matmul %92, %80, %cst_49 {dimension_numbers = #tpu.dot_dimension_numbers<[1], [0], [0], [1], [0, 0, 1, 1], [], []>} : vector<128x128xbf16>, vector<128x64xbf16>, vector<128x64xf32> -> vector<128x64xf32>
    %94 = arith.truncf %93 : vector<128x64xf32> to vector<128x64xbf16>
    %c0_50 = arith.constant 0 : index
    %c256_51 = arith.constant 256 : index
    %95 = vector.load %arg7[%c0_50, %c256_51] : memref<256x384xbf16, #tpu.memory_space<vmem>>, vector<128x64xbf16>
    tpu.vector_store %arg7[%c0_50, %c256_51], %94 {strides = array<i32>} : memref<256x384xbf16, #tpu.memory_space<vmem>>, vector<128x64xbf16>,
    %c0_52 = arith.constant 0 : index
    %c320 = arith.constant 320 : index
    %96 = vector.load %arg6[%c0_52, %c320] : memref<256x1152xbf16, #tpu.memory_space<vmem>>, vector<128x64xbf16>
    %c0_53 = arith.constant 0 : index
    %c704 = arith.constant 704 : index
    %97 = vector.load %arg6[%c0_53, %c704] : memref<256x1152xbf16, #tpu.memory_space<vmem>>, vector<128x64xbf16>
    %c0_54 = arith.constant 0 : index
    %c1088 = arith.constant 1088 : index
    %98 = vector.load %arg6[%c0_54, %c1088] : memref<256x1152xbf16, #tpu.memory_space<vmem>>, vector<128x64xbf16>
    %cst_55 = arith.constant dense<0.000000e+00> : vector<128x128xf32>
    %99 = tpu.matmul %96, %97, %cst_55 {dimension_numbers = #tpu.dot_dimension_numbers<[1], [1], [0], [0], [0, 0, 1, 0], [], []>} : vector<128x64xbf16>, vector<128x64xbf16>, vector<128x128xf32> -> vector<128x128xf32>
    %cst_56 = arith.constant dense<0xFF800000> : vector<128xf32>
    %100 = vector.multi_reduction <maximumf>, %99, %cst_56 [1] : vector<128x128xf32> to vector<128xf32>
    %101 = vector.shape_cast %100 : vector<128xf32> to vector<128x1xf32>
    %102 = vector.broadcast %101 : vector<128x1xf32> to vector<128x128xf32>
    %103 = arith.subf %99, %102 : vector<128x128xf32>
    %104 = math.exp %103 : vector<128x128xf32>
    %cst_57 = arith.constant dense<0.000000e+00> : vector<128xf32>
    %105 = vector.multi_reduction <add>, %104, %cst_57 [1] : vector<128x128xf32> to vector<128xf32>
    %106 = vector.shape_cast %105 : vector<128xf32> to vector<128x1xf32>
    %107 = tpu.reciprocal %106 {approx = true} : vector<128x1xf32> -> vector<128x1xf32>
    %108 = vector.broadcast %107 : vector<128x1xf32> to vector<128x128xf32>
    %109 = arith.mulf %104, %108 : vector<128x128xf32>
    %110 = arith.truncf %109 : vector<128x128xf32> to vector<128x128xbf16>
    %cst_58 = arith.constant dense<0.000000e+00> : vector<128x64xf32>
    %111 = tpu.matmul %110, %98, %cst_58 {dimension_numbers = #tpu.dot_dimension_numbers<[1], [0], [0], [1], [0, 0, 1, 1], [], []>} : vector<128x128xbf16>, vector<128x64xbf16>, vector<128x64xf32> -> vector<128x64xf32>
    %112 = arith.truncf %111 : vector<128x64xf32> to vector<128x64xbf16>
    %c0_59 = arith.constant 0 : index
    %c320_60 = arith.constant 320 : index
    %113 = vector.load %arg7[%c0_59, %c320_60] : memref<256x384xbf16, #tpu.memory_space<vmem>>, vector<128x64xbf16>
    tpu.vector_store %arg7[%c0_59, %c320_60], %112 {strides = array<i32>} : memref<256x384xbf16, #tpu.memory_space<vmem>>, vector<128x64xbf16>,
    %c128_61 = arith.constant 128 : index
    %c0_62 = arith.constant 0 : index
    %114 = vector.load %arg6[%c128_61, %c0_62] : memref<256x1152xbf16, #tpu.memory_space<vmem>>, vector<128x64xbf16>
    %c128_63 = arith.constant 128 : index
    %c384_64 = arith.constant 384 : index
    %115 = vector.load %arg6[%c128_63, %c384_64] : memref<256x1152xbf16, #tpu.memory_space<vmem>>, vector<128x64xbf16>
    %c128_65 = arith.constant 128 : index
    %c768_66 = arith.constant 768 : index
    %116 = vector.load %arg6[%c128_65, %c768_66] : memref<256x1152xbf16, #tpu.memory_space<vmem>>, vector<128x64xbf16>
    %cst_67 = arith.constant dense<0.000000e+00> : vector<128x128xf32>
    %117 = tpu.matmul %114, %115, %cst_67 {dimension_numbers = #tpu.dot_dimension_numbers<[1], [1], [0], [0], [0, 0, 1, 0], [], []>} : vector<128x64xbf16>, vector<128x64xbf16>, vector<128x128xf32> -> vector<128x128xf32>
    %cst_68 = arith.constant dense<0xFF800000> : vector<128xf32>
    %118 = vector.multi_reduction <maximumf>, %117, %cst_68 [1] : vector<128x128xf32> to vector<128xf32>
    %119 = vector.shape_cast %118 : vector<128xf32> to vector<128x1xf32>
    %120 = vector.broadcast %119 : vector<128x1xf32> to vector<128x128xf32>
    %121 = arith.subf %117, %120 : vector<128x128xf32>
    %122 = math.exp %121 : vector<128x128xf32>
    %cst_69 = arith.constant dense<0.000000e+00> : vector<128xf32>
    %123 = vector.multi_reduction <add>, %122, %cst_69 [1] : vector<128x128xf32> to vector<128xf32>
    %124 = vector.shape_cast %123 : vector<128xf32> to vector<128x1xf32>
    %125 = tpu.reciprocal %124 {approx = true} : vector<128x1xf32> -> vector<128x1xf32>
    %126 = vector.broadcast %125 : vector<128x1xf32> to vector<128x128xf32>
    %127 = arith.mulf %122, %126 : vector<128x128xf32>
    %128 = arith.truncf %127 : vector<128x128xf32> to vector<128x128xbf16>
    %cst_70 = arith.constant dense<0.000000e+00> : vector<128x64xf32>
    %129 = tpu.matmul %128, %116, %cst_70 {dimension_numbers = #tpu.dot_dimension_numbers<[1], [0], [0], [1], [0, 0, 1, 1], [], []>} : vector<128x128xbf16>, vector<128x64xbf16>, vector<128x64xf32> -> vector<128x64xf32>
    %130 = arith.truncf %129 : vector<128x64xf32> to vector<128x64xbf16>
    %c128_71 = arith.constant 128 : index
    %c0_72 = arith.constant 0 : index
    %131 = vector.load %arg7[%c128_71, %c0_72] : memref<256x384xbf16, #tpu.memory_space<vmem>>, vector<128x64xbf16>
    tpu.vector_store %arg7[%c128_71, %c0_72], %130 {strides = array<i32>} : memref<256x384xbf16, #tpu.memory_space<vmem>>, vector<128x64xbf16>,
    %c128_73 = arith.constant 128 : index
    %c64_74 = arith.constant 64 : index
    %132 = vector.load %arg6[%c128_73, %c64_74] : memref<256x1152xbf16, #tpu.memory_space<vmem>>, vector<128x64xbf16>
    %c128_75 = arith.constant 128 : index
    %c448_76 = arith.constant 448 : index
    %133 = vector.load %arg6[%c128_75, %c448_76] : memref<256x1152xbf16, #tpu.memory_space<vmem>>, vector<128x64xbf16>
    %c128_77 = arith.constant 128 : index
    %c832_78 = arith.constant 832 : index
    %134 = vector.load %arg6[%c128_77, %c832_78] : memref<256x1152xbf16, #tpu.memory_space<vmem>>, vector<128x64xbf16>
    %cst_79 = arith.constant dense<0.000000e+00> : vector<128x128xf32>
    %135 = tpu.matmul %132, %133, %cst_79 {dimension_numbers = #tpu.dot_dimension_numbers<[1], [1], [0], [0], [0, 0, 1, 0], [], []>} : vector<128x64xbf16>, vector<128x64xbf16>, vector<128x128xf32> -> vector<128x128xf32>
    %cst_80 = arith.constant dense<0xFF800000> : vector<128xf32>
    %136 = vector.multi_reduction <maximumf>, %135, %cst_80 [1] : vector<128x128xf32> to vector<128xf32>
    %137 = vector.shape_cast %136 : vector<128xf32> to vector<128x1xf32>
    %138 = vector.broadcast %137 : vector<128x1xf32> to vector<128x128xf32>
    %139 = arith.subf %135, %138 : vector<128x128xf32>
    %140 = math.exp %139 : vector<128x128xf32>
    %cst_81 = arith.constant dense<0.000000e+00> : vector<128xf32>
    %141 = vector.multi_reduction <add>, %140, %cst_81 [1] : vector<128x128xf32> to vector<128xf32>
    %142 = vector.shape_cast %141 : vector<128xf32> to vector<128x1xf32>
    %143 = tpu.reciprocal %142 {approx = true} : vector<128x1xf32> -> vector<128x1xf32>
    %144 = vector.broadcast %143 : vector<128x1xf32> to vector<128x128xf32>
    %145 = arith.mulf %140, %144 : vector<128x128xf32>
    %146 = arith.truncf %145 : vector<128x128xf32> to vector<128x128xbf16>
    %cst_82 = arith.constant dense<0.000000e+00> : vector<128x64xf32>
    %147 = tpu.matmul %146, %134, %cst_82 {dimension_numbers = #tpu.dot_dimension_numbers<[1], [0], [0], [1], [0, 0, 1, 1], [], []>} : vector<128x128xbf16>, vector<128x64xbf16>, vector<128x64xf32> -> vector<128x64xf32>
    %148 = arith.truncf %147 : vector<128x64xf32> to vector<128x64xbf16>
    %c128_83 = arith.constant 128 : index
    %c64_84 = arith.constant 64 : index
    %149 = vector.load %arg7[%c128_83, %c64_84] : memref<256x384xbf16, #tpu.memory_space<vmem>>, vector<128x64xbf16>
    tpu.vector_store %arg7[%c128_83, %c64_84], %148 {strides = array<i32>} : memref<256x384xbf16, #tpu.memory_space<vmem>>, vector<128x64xbf16>,
    %c128_85 = arith.constant 128 : index
    %c128_86 = arith.constant 128 : index
    %150 = vector.load %arg6[%c128_85, %c128_86] : memref<256x1152xbf16, #tpu.memory_space<vmem>>, vector<128x64xbf16>
    %c128_87 = arith.constant 128 : index
    %c512_88 = arith.constant 512 : index
    %151 = vector.load %arg6[%c128_87, %c512_88] : memref<256x1152xbf16, #tpu.memory_space<vmem>>, vector<128x64xbf16>
    %c128_89 = arith.constant 128 : index
    %c896_90 = arith.constant 896 : index
    %152 = vector.load %arg6[%c128_89, %c896_90] : memref<256x1152xbf16, #tpu.memory_space<vmem>>, vector<128x64xbf16>
    %cst_91 = arith.constant dense<0.000000e+00> : vector<128x128xf32>
    %153 = tpu.matmul %150, %151, %cst_91 {dimension_numbers = #tpu.dot_dimension_numbers<[1], [1], [0], [0], [0, 0, 1, 0], [], []>} : vector<128x64xbf16>, vector<128x64xbf16>, vector<128x128xf32> -> vector<128x128xf32>
    %cst_92 = arith.constant dense<0xFF800000> : vector<128xf32>
    %154 = vector.multi_reduction <maximumf>, %153, %cst_92 [1] : vector<128x128xf32> to vector<128xf32>
    %155 = vector.shape_cast %154 : vector<128xf32> to vector<128x1xf32>
    %156 = vector.broadcast %155 : vector<128x1xf32> to vector<128x128xf32>
    %157 = arith.subf %153, %156 : vector<128x128xf32>
    %158 = math.exp %157 : vector<128x128xf32>
    %cst_93 = arith.constant dense<0.000000e+00> : vector<128xf32>
    %159 = vector.multi_reduction <add>, %158, %cst_93 [1] : vector<128x128xf32> to vector<128xf32>
    %160 = vector.shape_cast %159 : vector<128xf32> to vector<128x1xf32>
    %161 = tpu.reciprocal %160 {approx = true} : vector<128x1xf32> -> vector<128x1xf32>
    %162 = vector.broadcast %161 : vector<128x1xf32> to vector<128x128xf32>
    %163 = arith.mulf %158, %162 : vector<128x128xf32>
    %164 = arith.truncf %163 : vector<128x128xf32> to vector<128x128xbf16>
    %cst_94 = arith.constant dense<0.000000e+00> : vector<128x64xf32>
    %165 = tpu.matmul %164, %152, %cst_94 {dimension_numbers = #tpu.dot_dimension_numbers<[1], [0], [0], [1], [0, 0, 1, 1], [], []>} : vector<128x128xbf16>, vector<128x64xbf16>, vector<128x64xf32> -> vector<128x64xf32>
    %166 = arith.truncf %165 : vector<128x64xf32> to vector<128x64xbf16>
    %c128_95 = arith.constant 128 : index
    %c128_96 = arith.constant 128 : index
    %167 = vector.load %arg7[%c128_95, %c128_96] : memref<256x384xbf16, #tpu.memory_space<vmem>>, vector<128x64xbf16>
    tpu.vector_store %arg7[%c128_95, %c128_96], %166 {strides = array<i32>} : memref<256x384xbf16, #tpu.memory_space<vmem>>, vector<128x64xbf16>,
    %c128_97 = arith.constant 128 : index
    %c192_98 = arith.constant 192 : index
    %168 = vector.load %arg6[%c128_97, %c192_98] : memref<256x1152xbf16, #tpu.memory_space<vmem>>, vector<128x64xbf16>
    %c128_99 = arith.constant 128 : index
    %c576_100 = arith.constant 576 : index
    %169 = vector.load %arg6[%c128_99, %c576_100] : memref<256x1152xbf16, #tpu.memory_space<vmem>>, vector<128x64xbf16>
    %c128_101 = arith.constant 128 : index
    %c960_102 = arith.constant 960 : index
    %170 = vector.load %arg6[%c128_101, %c960_102] : memref<256x1152xbf16, #tpu.memory_space<vmem>>, vector<128x64xbf16>
    %cst_103 = arith.constant dense<0.000000e+00> : vector<128x128xf32>
    %171 = tpu.matmul %168, %169, %cst_103 {dimension_numbers = #tpu.dot_dimension_numbers<[1], [1], [0], [0], [0, 0, 1, 0], [], []>} : vector<128x64xbf16>, vector<128x64xbf16>, vector<128x128xf32> -> vector<128x128xf32>
    %cst_104 = arith.constant dense<0xFF800000> : vector<128xf32>
    %172 = vector.multi_reduction <maximumf>, %171, %cst_104 [1] : vector<128x128xf32> to vector<128xf32>
    %173 = vector.shape_cast %172 : vector<128xf32> to vector<128x1xf32>
    %174 = vector.broadcast %173 : vector<128x1xf32> to vector<128x128xf32>
    %175 = arith.subf %171, %174 : vector<128x128xf32>
    %176 = math.exp %175 : vector<128x128xf32>
    %cst_105 = arith.constant dense<0.000000e+00> : vector<128xf32>
    %177 = vector.multi_reduction <add>, %176, %cst_105 [1] : vector<128x128xf32> to vector<128xf32>
    %178 = vector.shape_cast %177 : vector<128xf32> to vector<128x1xf32>
    %179 = tpu.reciprocal %178 {approx = true} : vector<128x1xf32> -> vector<128x1xf32>
    %180 = vector.broadcast %179 : vector<128x1xf32> to vector<128x128xf32>
    %181 = arith.mulf %176, %180 : vector<128x128xf32>
    %182 = arith.truncf %181 : vector<128x128xf32> to vector<128x128xbf16>
    %cst_106 = arith.constant dense<0.000000e+00> : vector<128x64xf32>
    %183 = tpu.matmul %182, %170, %cst_106 {dimension_numbers = #tpu.dot_dimension_numbers<[1], [0], [0], [1], [0, 0, 1, 1], [], []>} : vector<128x128xbf16>, vector<128x64xbf16>, vector<128x64xf32> -> vector<128x64xf32>
    %184 = arith.truncf %183 : vector<128x64xf32> to vector<128x64xbf16>
    %c128_107 = arith.constant 128 : index
    %c192_108 = arith.constant 192 : index
    %185 = vector.load %arg7[%c128_107, %c192_108] : memref<256x384xbf16, #tpu.memory_space<vmem>>, vector<128x64xbf16>
    tpu.vector_store %arg7[%c128_107, %c192_108], %184 {strides = array<i32>} : memref<256x384xbf16, #tpu.memory_space<vmem>>, vector<128x64xbf16>,
    %c128_109 = arith.constant 128 : index
    %c256_110 = arith.constant 256 : index
    %186 = vector.load %arg6[%c128_109, %c256_110] : memref<256x1152xbf16, #tpu.memory_space<vmem>>, vector<128x64xbf16>
    %c128_111 = arith.constant 128 : index
    %c640_112 = arith.constant 640 : index
    %187 = vector.load %arg6[%c128_111, %c640_112] : memref<256x1152xbf16, #tpu.memory_space<vmem>>, vector<128x64xbf16>
    %c128_113 = arith.constant 128 : index
    %c1024_114 = arith.constant 1024 : index
    %188 = vector.load %arg6[%c128_113, %c1024_114] : memref<256x1152xbf16, #tpu.memory_space<vmem>>, vector<128x64xbf16>
    %cst_115 = arith.constant dense<0.000000e+00> : vector<128x128xf32>
    %189 = tpu.matmul %186, %187, %cst_115 {dimension_numbers = #tpu.dot_dimension_numbers<[1], [1], [0], [0], [0, 0, 1, 0], [], []>} : vector<128x64xbf16>, vector<128x64xbf16>, vector<128x128xf32> -> vector<128x128xf32>
    %cst_116 = arith.constant dense<0xFF800000> : vector<128xf32>
    %190 = vector.multi_reduction <maximumf>, %189, %cst_116 [1] : vector<128x128xf32> to vector<128xf32>
    %191 = vector.shape_cast %190 : vector<128xf32> to vector<128x1xf32>
    %192 = vector.broadcast %191 : vector<128x1xf32> to vector<128x128xf32>
    %193 = arith.subf %189, %192 : vector<128x128xf32>
    %194 = math.exp %193 : vector<128x128xf32>
    %cst_117 = arith.constant dense<0.000000e+00> : vector<128xf32>
    %195 = vector.multi_reduction <add>, %194, %cst_117 [1] : vector<128x128xf32> to vector<128xf32>
    %196 = vector.shape_cast %195 : vector<128xf32> to vector<128x1xf32>
    %197 = tpu.reciprocal %196 {approx = true} : vector<128x1xf32> -> vector<128x1xf32>
    %198 = vector.broadcast %197 : vector<128x1xf32> to vector<128x128xf32>
    %199 = arith.mulf %194, %198 : vector<128x128xf32>
    %200 = arith.truncf %199 : vector<128x128xf32> to vector<128x128xbf16>
    %cst_118 = arith.constant dense<0.000000e+00> : vector<128x64xf32>
    %201 = tpu.matmul %200, %188, %cst_118 {dimension_numbers = #tpu.dot_dimension_numbers<[1], [0], [0], [1], [0, 0, 1, 1], [], []>} : vector<128x128xbf16>, vector<128x64xbf16>, vector<128x64xf32> -> vector<128x64xf32>
    %202 = arith.truncf %201 : vector<128x64xf32> to vector<128x64xbf16>
    %c128_119 = arith.constant 128 : index
    %c256_120 = arith.constant 256 : index
    %203 = vector.load %arg7[%c128_119, %c256_120] : memref<256x384xbf16, #tpu.memory_space<vmem>>, vector<128x64xbf16>
    tpu.vector_store %arg7[%c128_119, %c256_120], %202 {strides = array<i32>} : memref<256x384xbf16, #tpu.memory_space<vmem>>, vector<128x64xbf16>,
    %c128_121 = arith.constant 128 : index
    %c320_122 = arith.constant 320 : index
    %204 = vector.load %arg6[%c128_121, %c320_122] : memref<256x1152xbf16, #tpu.memory_space<vmem>>, vector<128x64xbf16>
    %c128_123 = arith.constant 128 : index
    %c704_124 = arith.constant 704 : index
    %205 = vector.load %arg6[%c128_123, %c704_124] : memref<256x1152xbf16, #tpu.memory_space<vmem>>, vector<128x64xbf16>
    %c128_125 = arith.constant 128 : index
    %c1088_126 = arith.constant 1088 : index
    %206 = vector.load %arg6[%c128_125, %c1088_126] : memref<256x1152xbf16, #tpu.memory_space<vmem>>, vector<128x64xbf16>
    %cst_127 = arith.constant dense<0.000000e+00> : vector<128x128xf32>
    %207 = tpu.matmul %204, %205, %cst_127 {dimension_numbers = #tpu.dot_dimension_numbers<[1], [1], [0], [0], [0, 0, 1, 0], [], []>} : vector<128x64xbf16>, vector<128x64xbf16>, vector<128x128xf32> -> vector<128x128xf32>
    %cst_128 = arith.constant dense<0xFF800000> : vector<128xf32>
    %208 = vector.multi_reduction <maximumf>, %207, %cst_128 [1] : vector<128x128xf32> to vector<128xf32>
    %209 = vector.shape_cast %208 : vector<128xf32> to vector<128x1xf32>
    %210 = vector.broadcast %209 : vector<128x1xf32> to vector<128x128xf32>
    %211 = arith.subf %207, %210 : vector<128x128xf32>
    %212 = math.exp %211 : vector<128x128xf32>
    %cst_129 = arith.constant dense<0.000000e+00> : vector<128xf32>
    %213 = vector.multi_reduction <add>, %212, %cst_129 [1] : vector<128x128xf32> to vector<128xf32>
    %214 = vector.shape_cast %213 : vector<128xf32> to vector<128x1xf32>
    %215 = tpu.reciprocal %214 {approx = true} : vector<128x1xf32> -> vector<128x1xf32>
    %216 = vector.broadcast %215 : vector<128x1xf32> to vector<128x128xf32>
    %217 = arith.mulf %212, %216 : vector<128x128xf32>
    %218 = arith.truncf %217 : vector<128x128xf32> to vector<128x128xbf16>
    %cst_130 = arith.constant dense<0.000000e+00> : vector<128x64xf32>
    %219 = tpu.matmul %218, %206, %cst_130 {dimension_numbers = #tpu.dot_dimension_numbers<[1], [0], [0], [1], [0, 0, 1, 1], [], []>} : vector<128x128xbf16>, vector<128x64xbf16>, vector<128x64xf32> -> vector<128x64xf32>
    %220 = arith.truncf %219 : vector<128x64xf32> to vector<128x64xbf16>
    %c128_131 = arith.constant 128 : index
    %c320_132 = arith.constant 320 : index
    %221 = vector.load %arg7[%c128_131, %c320_132] : memref<256x384xbf16, #tpu.memory_space<vmem>>, vector<128x64xbf16>
    tpu.vector_store %arg7[%c128_131, %c320_132], %220 {strides = array<i32>} : memref<256x384xbf16, #tpu.memory_space<vmem>>, vector<128x64xbf16>,
    %c0_133 = arith.constant 0 : index
    %c0_134 = arith.constant 0 : index
    %222 = vector.load %arg7[%c0_133, %c0_134] : memref<256x384xbf16, #tpu.memory_space<vmem>>, vector<256x384xbf16>
    %c0_135 = arith.constant 0 : index
    %c0_136 = arith.constant 0 : index
    %223 = vector.load %arg3[%c0_135, %c0_136] : memref<384x384xbf16, #tpu.memory_space<vmem>>, vector<384x384xbf16>
    %cst_137 = arith.constant dense<0.000000e+00> : vector<256x384xf32>
    %224 = tpu.matmul %222, %223, %cst_137 {dimension_numbers = #tpu.dot_dimension_numbers<[1], [0], [0], [1], [0, 0, 1, 1], [], []>} : vector<256x384xbf16>, vector<384x384xbf16>, vector<256x384xf32> -> vector<256x384xf32>
    %c0_138 = arith.constant 0 : index
    %c0_139 = arith.constant 0 : index
    %225 = vector.load %arg4[%c0_138, %c0_139] : memref<1x384xf32, #tpu.memory_space<vmem>>, vector<1x384xf32>
    %226 = vector.broadcast %225 : vector<1x384xf32> to vector<256x384xf32>
    %227 = arith.addf %224, %226 : vector<256x384xf32>
    %228 = vector.shape_cast %227 : vector<256x384xf32> to vector<2x128x384xf32>
    %229 = arith.truncf %228 : vector<2x128x384xf32> to vector<2x128x384xbf16>
    %c0_140 = arith.constant 0 : index
    %c0_141 = arith.constant 0 : index
    %c0_142 = arith.constant 0 : index
    %230 = vector.load %arg5[%c0_140, %c0_141, %c0_142] : memref<2x128x384xbf16, #tpu.memory_space<vmem>>, vector<2x128x384xbf16>
    tpu.vector_store %arg5[%c0_140, %c0_141, %c0_142], %229 {strides = array<i32>} : memref<2x128x384xbf16, #tpu.memory_space<vmem>>, vector<2x128x384xbf16>,
    return
  }
  func.func @transform_0(%arg0: i32) -> (i32, i32, i32) {
    %c0_i32 = arith.constant 0 : i32
    %c0_i32_0 = arith.constant 0 : i32
    %c0_i32_1 = arith.constant 0 : i32
    return %arg0, %c0_i32, %c0_i32_0 : i32, i32, i32
  }
  func.func @transform_1(%arg0: i32) -> (i32, i32) {
    %c0_i32 = arith.constant 0 : i32
    %c0_i32_0 = arith.constant 0 : i32
    %c0_i32_1 = arith.constant 0 : i32
    return %c0_i32, %c0_i32_0 : i32, i32
  }
  func.func @transform_2(%arg0: i32) -> (i32, i32) {
    %c0_i32 = arith.constant 0 : i32
    %c0_i32_0 = arith.constant 0 : i32
    %c0_i32_1 = arith.constant 0 : i32
    return %c0_i32, %c0_i32_0 : i32, i32
  }
  func.func @transform_3(%arg0: i32) -> (i32, i32) {
    %c0_i32 = arith.constant 0 : i32
    %c0_i32_0 = arith.constant 0 : i32
    %c0_i32_1 = arith.constant 0 : i32
    return %c0_i32, %c0_i32_0 : i32, i32
  }
  func.func @transform_4(%arg0: i32) -> (i32, i32, i32) {
    %c0_i32 = arith.constant 0 : i32
    %c0_i32_0 = arith.constant 0 : i32
    %c0_i32_1 = arith.constant 0 : i32
    return %arg0, %c0_i32, %c0_i32_0 : i32, i32, i32
  }
}

</mosaic_0001>

<llo_original>
// kernel: tpu_custom_call.1
$region0: #{tpu_custom_call.1}
  #allocation0 [shape = 'u32[]', space=smem, size = 0x4, offset = 0x4, fixed_abs, tag = 'smem constant byte address 0x4 - core index']
  #allocation1 [shape = 'u32[144,128]{1,0:T(1,128)}', space=vmem, size = 0x12000, scoped, tag = 'internal scratch']
  #allocation2 [shape = 'bf16[256,1152]{1,0:T(16,128)(2,1)}', space=vmem, size = 0x90000, scoped, tag = 'scratch operand']
  #allocation3 [shape = 'bf16[256,384]{1,0:T(16,128)(2,1)}', space=vmem, size = 0x30000, scoped, tag = 'scratch operand']
  %s0 = inlined_call_operand.hbm [shape: bf16[2,128,384], index: 0, kind: input, shape index: {}]
  %s1 = inlined_call_operand.hbm [shape: bf16[384,1152], index: 1, kind: input, shape index: {}]
  %s2 = inlined_call_operand.hbm [shape: bf16[384,384], index: 2, kind: input, shape index: {}]
  %s3 = inlined_call_operand.vmem [shape: f32[1,384], index: 3, kind: input, shape index: {}]
  %s4 = inlined_call_operand.hbm [shape: bf16[2,128,384], index: 4, kind: output, shape index: {}]
  %s5 = sld [smem:[#allocation0]]
  $region38: #{tpu_custom_call.1} parent=0
    _
  %s7 = ssub.s32 1, %s5
  %s8 = scalar_select 0, %s7, %s5
  $region1: #{tpu_custom_call.1} parent=0
    #allocation4 [shape = 'u8[196608]{0}', space=vmem, size = 0x30000, scoped, tag = 'input window, operand 0, single buffered']
    #allocation5 [shape = 's32[1]{0}', space=sflag, size = 0x4, scoped, tag = 'scoped memory for tpu_custom_call.1']
    #allocation6 [shape = 's32[1]{0}', space=sflag, size = 0x4, scoped, tag = 'scoped memory for tpu_custom_call.1']
    #allocation7 [shape = 'u8[884736]{0}', space=vmem, size = 0xd8000, scoped, tag = 'input window, operand 1, single buffered']
    #allocation8 [shape = 's32[1]{0}', space=sflag, size = 0x4, scoped, tag = 'scoped memory for tpu_custom_call.1']
    #allocation9 [shape = 'u8[294912]{0}', space=vmem, size = 0x48000, scoped, tag = 'input window, operand 2, single buffered']
    #allocation10 [shape = 'u8[196608]{0}', space=vmem, size = 0x30000, scoped, tag = 'output window, operand 0, single buffered']
    %9 = vsyncpa [#allocation5], 0
    %10 = vsyncpa [#allocation8], 0
    %11 = vsyncpa [#allocation6], 0
    // Predicated region
    $region2: #{tpu_custom_call.1} parent=1 // pred_check
      _
    $region3: #{tpu_custom_call.1} parent=1 // pred_check_branch
      %13 = sbr.rel (0) target = $region5
    $region4: #{tpu_custom_call.1} parent=1 // pred_region
      %s15 = ssub.s32 6144, 6144
      %16 = vsyncadd [#allocation5], %s15
      %s17 = sshll.u32 [#allocation4], 4
      %s18 = int_to_ptr.vmem [resolvable:$true] %s17
      %23 = dma.hbm_to_vmem [thread:$0]  %s0, 6144, %s18, [#allocation5], 192, 192, 12
    $region5: #{tpu_custom_call.1} parent=1 // pred_fallthru
      _
    // Predicated region
    $region6: #{tpu_custom_call.1} parent=1 // pred_check
      _
    $region7: #{tpu_custom_call.1} parent=1 // pred_check_branch
      %25 = sbr.rel (0) target = $region9
    $region8: #{tpu_custom_call.1} parent=1 // pred_region
      %s27 = ssub.s32 27648, 27648
      %28 = vsyncadd [#allocation8], %s27
      %s29 = sshll.u32 [#allocation7], 4
      %s30 = int_to_ptr.vmem [resolvable:$true] %s29
      %35 = dma.hbm_to_vmem [thread:$0]  %s1, 27648, %s30, [#allocation8], 576, 576, 36
    $region9: #{tpu_custom_call.1} parent=1 // pred_fallthru
      _
    // Predicated region
    $region10: #{tpu_custom_call.1} parent=1 // pred_check
      _
    $region11: #{tpu_custom_call.1} parent=1 // pred_check_branch
      %37 = sbr.rel (0) target = $region13
    $region12: #{tpu_custom_call.1} parent=1 // pred_region
      %s39 = ssub.s32 9216, 9216
      %40 = vsyncadd [#allocation8], %s39
      %s41 = sshll.u32 [#allocation9], 4
      %s42 = int_to_ptr.vmem [resolvable:$true] %s41
      %47 = dma.hbm_to_vmem [thread:$0]  %s2, 9216, %s42, [#allocation8], 192, 192, 12
    $region13: #{tpu_custom_call.1} parent=1 // pred_fallthru
      _
    // Predicated region
    $region14: #{tpu_custom_call.1} parent=1 // pred_check
      _
    $region15: #{tpu_custom_call.1} parent=1 // pred_check_branch
      %49 = sbr.rel (0) target = $region17
    $region16: #{tpu_custom_call.1} parent=1 // pred_region
      _
    $region17: #{tpu_custom_call.1} parent=1 // pred_fallthru
      _
    // Predicated region
    $region18: #{tpu_custom_call.1} parent=1 // pred_check
      _
    $region19: #{tpu_custom_call.1} parent=1 // pred_check_branch
      %51 = sbr.rel (0) target = $region21
    $region20: #{tpu_custom_call.1} parent=1 // pred_region
      %52 = dma.done [#allocation5], 6144
    $region21: #{tpu_custom_call.1} parent=1 // pred_fallthru
      _
    // Predicated region
    $region22: #{tpu_custom_call.1} parent=1 // pred_check
      _
    $region23: #{tpu_custom_call.1} parent=1 // pred_check_branch
      %54 = sbr.rel (0) target = $region25
    $region24: #{tpu_custom_call.1} parent=1 // pred_region
      %55 = dma.done [#allocation8], 27648
    $region25: #{tpu_custom_call.1} parent=1 // pred_fallthru
      _
    // Predicated region
    $region26: #{tpu_custom_call.1} parent=1 // pred_check
      _
    $region27: #{tpu_custom_call.1} parent=1 // pred_check_branch
      %57 = sbr.rel (0) target = $region29
    $region28: #{tpu_custom_call.1} parent=1 // pred_region
      %58 = dma.done [#allocation8], 9216
    $region29: #{tpu_custom_call.1} parent=1 // pred_fallthru
      _
    %v60 = vld [vmem:[#allocation4] sm:$0xff]
    %v61 = vld [vmem:[#allocation4 + $0x8] sm:$0xf]
    %v62 = vld [vmem:[#allocation4 + $0xc] sm:$0xff]
    %v63 = vld [vmem:[#allocation4 + $0x14] sm:$0xf]
    %v64 = vld [vmem:[#allocation4 + $0x18] sm:$0xff]
    %v65 = vld [vmem:[#allocation4 + $0x20] sm:$0xf]
    %v66 = vld [vmem:[#allocation4 + $0x24] sm:$0xff]
    %v67 = vld [vmem:[#allocation4 + $0x2c] sm:$0xf]
    %v68 = vld [vmem:[#allocation4 + $0x30] sm:$0xff]
    %v69 = vld [vmem:[#allocation4 + $0x38] sm:$0xf]
    %v70 = vld [vmem:[#allocation4 + $0x3c] sm:$0xff]
    %v71 = vld [vmem:[#allocation4 + $0x44] sm:$0xf]
    %v72 = vld [vmem:[#allocation4 + $0x48] sm:$0xff]
    %v73 = vld [vmem:[#allocation4 + $0x50] sm:$0xf]
    %v74 = vld [vmem:[#allocation4 + $0x54] sm:$0xff]
    %v75 = vld [vmem:[#allocation4 + $0x5c] sm:$0xf]
    %v76 = vld [vmem:[#allocation4 + $0x60] sm:$0xff]
    %v77 = vld [vmem:[#allocation4 + $0x68] sm:$0xf]
    %v78 = vld [vmem:[#allocation4 + $0x6c] sm:$0xff]
    %v79 = vld [vmem:[#allocation4 + $0x74] sm:$0xf]
    %v80 = vld [vmem:[#allocation4 + $0x78] sm:$0xff]
    %v81 = vld [vmem:[#allocation4 + $0x80] sm:$0xf]
    %v82 = vld [vmem:[#allocation4 + $0x84] sm:$0xff]
    %v83 = vld [vmem:[#allocation4 + $0x8c] sm:$0xf]
    %v84 = vld [vmem:[#allocation4 + $0x90] sm:$0xff]
    %v85 = vld [vmem:[#allocation4 + $0x98] sm:$0xf]
    %v86 = vld [vmem:[#allocation4 + $0x9c] sm:$0xff]
    %v87 = vld [vmem:[#allocation4 + $0xa4] sm:$0xf]
    %v88 = vld [vmem:[#allocation4 + $0xa8] sm:$0xff]
    %v89 = vld [vmem:[#allocation4 + $0xb0] sm:$0xf]
    %v90 = vld [vmem:[#allocation4 + $0xb4] sm:$0xff]
    %v91 = vld [vmem:[#allocation4 + $0xbc] sm:$0xf]
    %v92 = vld [vmem:[#allocation4 + $0xc0] sm:$0xff]
    %v93 = vld [vmem:[#allocation4 + $0xc8] sm:$0xf]
    %v94 = vld [vmem:[#allocation4 + $0xcc] sm:$0xff]
    %v95 = vld [vmem:[#allocation4 + $0xd4] sm:$0xf]
    %v96 = vld [vmem:[#allocation4 + $0xd8] sm:$0xff]
    %v97 = vld [vmem:[#allocation4 + $0xe0] sm:$0xf]
    %v98 = vld [vmem:[#allocation4 + $0xe4] sm:$0xff]
    %v99 = vld [vmem:[#allocation4 + $0xec] sm:$0xf]
    %v100 = vld [vmem:[#allocation4 + $0xf0] sm:$0xff]
    %v101 = vld [vmem:[#allocation4 + $0xf8] sm:$0xf]
    %v102 = vld [vmem:[#allocation4 + $0xfc] sm:$0xff]
    %v103 = vld [vmem:[#allocation4 + $0x104] sm:$0xf]
    %v104 = vld [vmem:[#allocation4 + $0x108] sm:$0xff]
    %v105 = vld [vmem:[#allocation4 + $0x110] sm:$0xf]
    %v106 = vld [vmem:[#allocation4 + $0x114] sm:$0xff]
    %v107 = vld [vmem:[#allocation4 + $0x11c] sm:$0xf]
    %v108 = vld [vmem:[#allocation4 + $0x120] sm:$0xff]
    %v109 = vld [vmem:[#allocation4 + $0x128] sm:$0xf]
    %v110 = vld [vmem:[#allocation4 + $0x12c] sm:$0xff]
    %v111 = vld [vmem:[#allocation4 + $0x134] sm:$0xf]
    %v112 = vld [vmem:[#allocation4 + $0x138] sm:$0xff]
    %v113 = vld [vmem:[#allocation4 + $0x140] sm:$0xf]
    %v114 = vld [vmem:[#allocation4 + $0x144] sm:$0xff]
    %v115 = vld [vmem:[#allocation4 + $0x14c] sm:$0xf]
    %v116 = vld [vmem:[#allocation4 + $0x150] sm:$0xff]
    %v117 = vld [vmem:[#allocation4 + $0x158] sm:$0xf]
    %v118 = vld [vmem:[#allocation4 + $0x15c] sm:$0xff]
    %v119 = vld [vmem:[#allocation4 + $0x164] sm:$0xf]
    %v120 = vld [vmem:[#allocation4 + $0x168] sm:$0xff]
    %v121 = vld [vmem:[#allocation4 + $0x170] sm:$0xf]
    %v122 = vld [vmem:[#allocation4 + $0x174] sm:$0xff]
    %v123 = vld [vmem:[#allocation4 + $0x17c] sm:$0xf]
    %v124 = vld [vmem:[#allocation7] sm:$0xff]
    %v125 = vld [vmem:[#allocation7 + $0x8] sm:$0xff]
    %v126 = vld [vmem:[#allocation7 + $0x10] sm:$0xff]
    %v127 = vld [vmem:[#allocation7 + $0x18] sm:$0xff]
    %v128 = vld [vmem:[#allocation7 + $0x20] sm:$0xf]
    %v129 = vld [vmem:[#allocation7 + $0x24] sm:$0xff]
    %v130 = vld [vmem:[#allocation7 + $0x2c] sm:$0xff]
    %v131 = vld [vmem:[#allocation7 + $0x34] sm:$0xff]
    %v132 = vld [vmem:[#allocation7 + $0x3c] sm:$0xff]
    %v133 = vld [vmem:[#allocation7 + $0x44] sm:$0xf]
    %v134 = vld [vmem:[#allocation7 + $0x48] sm:$0xff]
    %v135 = vld [vmem:[#allocation7 + $0x50] sm:$0xff]
    %v136 = vld [vmem:[#allocation7 + $0x58] sm:$0xff]
    %v137 = vld [vmem:[#allocation7 + $0x60] sm:$0xff]
    %v138 = vld [vmem:[#allocation7 + $0x68] sm:$0xf]
    %v139 = vld [vmem:[#allocation7 + $0x6c] sm:$0xff]
    %v140 = vld [vmem:[#allocation7 + $0x74] sm:$0xff]
    %v141 = vld [vmem:[#allocation7 + $0x7c] sm:$0xff]
    %v142 = vld [vmem:[#allocation7 + $0x84] sm:$0xff]
    %v143 = vld [vmem:[#allocation7 + $0x8c] sm:$0xf]
    %v144 = vld [vmem:[#allocation7 + $0x90] sm:$0xff]
    %v145 = vld [vmem:[#allocation7 + $0x98] sm:$0xff]
    %v146 = vld [vmem:[#allocation7 + $0xa0] sm:$0xff]
    %v147 = vld [vmem:[#allocation7 + $0xa8] sm:$0xff]
    %v148 = vld [vmem:[#allocation7 + $0xb0] sm:$0xf]
    %v149 = vld [vmem:[#allocation7 + $0xb4] sm:$0xff]
    %v150 = vld [vmem:[#allocation7 + $0xbc] sm:$0xff]
    %v151 = vld [vmem:[#allocation7 + $0xc4] sm:$0xff]
    %v152 = vld [vmem:[#allocation7 + $0xcc] sm:$0xff]
    %v153 = vld [vmem:[#allocation7 + $0xd4] sm:$0xf]
    %v154 = vld [vmem:[#allocation7 + $0xd8] sm:$0xff]
    %v155 = vld [vmem:[#allocation7 + $0xe0] sm:$0xff]
    %v156 = vld [vmem:[#allocation7 + $0xe8] sm:$0xff]
    %v157 = vld [vmem:[#allocation7 + $0xf0] sm:$0xff]
    %v158 = vld [vmem:[#allocation7 + $0xf8] sm:$0xf]
    %v159 = vld [vmem:[#allocation7 + $0xfc] sm:$0xff]
    %v160 = vld [vmem:[#allocation7 + $0x104] sm:$0xff]
    %v161 = vld [vmem:[#allocation7 + $0x10c] sm:$0xff]
    %v162 = vld [vmem:[#allocation7 + $0x114] sm:$0xff]
    %v163 = vld [vmem:[#allocation7 + $0x11c] sm:$0xf]
    %v164 = vld [vmem:[#allocation7 + $0x120] sm:$0xff]
    %v165 = vld [vmem:[#allocation7 + $0x128] sm:$0xff]
    %v166 = vld [vmem:[#allocation7 + $0x130] sm:$0xff]
    %v167 = vld [vmem:[#allocation7 + $0x138] sm:$0xff]
    %v168 = vld [vmem:[#allocation7 + $0x140] sm:$0xf]
    %v169 = vld [vmem:[#allocation7 + $0x144] sm:$0xff]
    %v170 = vld [vmem:[#allocation7 + $0x14c] sm:$0xff]
    %v171 = vld [vmem:[#allocation7 + $0x154] sm:$0xff]
    %v172 = vld [vmem:[#allocation7 + $0x15c] sm:$0xff]
    %v173 = vld [vmem:[#allocation7 + $0x164] sm:$0xf]
    %v174 = vld [vmem:[#allocation7 + $0x168] sm:$0xff]
    %v175 = vld [vmem:[#allocation7 + $0x170] sm:$0xff]
    %v176 = vld [vmem:[#allocation7 + $0x178] sm:$0xff]
    %v177 = vld [vmem:[#allocation7 + $0x180] sm:$0xff]
    %v178 = vld [vmem:[#allocation7 + $0x188] sm:$0xf]
    %v179 = vld [vmem:[#allocation7 + $0x18c] sm:$0xff]
    %v180 = vld [vmem:[#allocation7 + $0x194] sm:$0xff]
    %v181 = vld [vmem:[#allocation7 + $0x19c] sm:$0xff]
    %v182 = vld [vmem:[#allocation7 + $0x1a4] sm:$0xff]
    %v183 = vld [vmem:[#allocation7 + $0x1ac] sm:$0xf]
    %v184 = vld [vmem:[#allocation7 + $0x1b0] sm:$0xff]
    %v185 = vld [vmem:[#allocation7 + $0x1b8] sm:$0xff]
    %v186 = vld [vmem:[#allocation7 + $0x1c0] sm:$0xff]
    %v187 = vld [vmem:[#allocation7 + $0x1c8] sm:$0xff]
    %v188 = vld [vmem:[#allocation7 + $0x1d0] sm:$0xf]
    %v189 = vld [vmem:[#allocation7 + $0x1d4] sm:$0xff]
    %v190 = vld [vmem:[#allocation7 + $0x1dc] sm:$0xff]
    %v191 = vld [vmem:[#allocation7 + $0x1e4] sm:$0xff]
    %v192 = vld [vmem:[#allocation7 + $0x1ec] sm:$0xff]
    %v193 = vld [vmem:[#allocation7 + $0x1f4] sm:$0xf]
    %v194 = vld [vmem:[#allocation7 + $0x1f8] sm:$0xff]
    %v195 = vld [vmem:[#allocation7 + $0x200] sm:$0xff]
    %v196 = vld [vmem:[#allocation7 + $0x208] sm:$0xff]
    %v197 = vld [vmem:[#allocation7 + $0x210] sm:$0xff]
    %v198 = vld [vmem:[#allocation7 + $0x218] sm:$0xf]
    %v199 = vld [vmem:[#allocation7 + $0x21c] sm:$0xff]
    %v200 = vld [vmem:[#allocation7 + $0x224] sm:$0xff]
    %v201 = vld [vmem:[#allocation7 + $0x22c] sm:$0xff]
    %v202 = vld [vmem:[#allocation7 + $0x234] sm:$0xff]
    %v203 = vld [vmem:[#allocation7 + $0x23c] sm:$0xf]
    %v204 = vld [vmem:[#allocation7 + $0x240] sm:$0xff]
    %v205 = vld [vmem:[#allocation7 + $0x248] sm:$0xff]
    %v206 = vld [vmem:[#allocation7 + $0x250] sm:$0xff]
    %v207 = vld [vmem:[#allocation7 + $0x258] sm:$0xff]
    %v208 = vld [vmem:[#allocation7 + $0x260] sm:$0xf]
    %v209 = vld [vmem:[#allocation7 + $0x264] sm:$0xff]
    %v210 = vld [vmem:[#allocation7 + $0x26c] sm:$0xff]
    %v211 = vld [vmem:[#allocation7 + $0x274] sm:$0xff]
    %v212 = vld [vmem:[#allocation7 + $0x27c] sm:$0xff]
    %v213 = vld [vmem:[#allocation7 + $0x284] sm:$0xf]
    %v214 = vld [vmem:[#allocation7 + $0x288] sm:$0xff]
    %v215 = vld [vmem:[#allocation7 + $0x290] sm:$0xff]
    %v216 = vld [vmem:[#allocation7 + $0x298] sm:$0xff]
    %v217 = vld [vmem:[#allocation7 + $0x2a0] sm:$0xff]
    %v218 = vld [vmem:[#allocation7 + $0x2a8] sm:$0xf]
    %v219 = vld [vmem:[#allocation7 + $0x2ac] sm:$0xff]
    %v220 = vld [vmem:[#allocation7 + $0x2b4] sm:$0xff]
    %v221 = vld [vmem:[#allocation7 + $0x2bc] sm:$0xff]
    %v222 = vld [vmem:[#allocation7 + $0x2c4] sm:$0xff]
    %v223 = vld [vmem:[#allocation7 + $0x2cc] sm:$0xf]
    %v224 = vld [vmem:[#allocation7 + $0x2d0] sm:$0xff]
    %v225 = vld [vmem:[#allocation7 + $0x2d8] sm:$0xff]
    %v226 = vld [vmem:[#allocation7 + $0x2e0] sm:$0xff]
    %v227 = vld [vmem:[#allocation7 + $0x2e8] sm:$0xff]
    %v228 = vld [vmem:[#allocation7 + $0x2f0] sm:$0xf]
    %v229 = vld [vmem:[#allocation7 + $0x2f4] sm:$0xff]
    %v230 = vld [vmem:[#allocation7 + $0x2fc] sm:$0xff]
    %v231 = vld [vmem:[#allocation7 + $0x304] sm:$0xff]
    %v232 = vld [vmem:[#allocation7 + $0x30c] sm:$0xff]
    %v233 = vld [vmem:[#allocation7 + $0x314] sm:$0xf]
    %v234 = vld [vmem:[#allocation7 + $0x318] sm:$0xff]
    %v235 = vld [vmem:[#allocation7 + $0x320] sm:$0xff]
    %v236 = vld [vmem:[#allocation7 + $0x328] sm:$0xff]
    %v237 = vld [vmem:[#allocation7 + $0x330] sm:$0xff]
    %v238 = vld [vmem:[#allocation7 + $0x338] sm:$0xf]
    %v239 = vld [vmem:[#allocation7 + $0x33c] sm:$0xff]
    %v240 = vld [vmem:[#allocation7 + $0x344] sm:$0xff]
    %v241 = vld [vmem:[#allocation7 + $0x34c] sm:$0xff]
    %v242 = vld [vmem:[#allocation7 + $0x354] sm:$0xff]
    %v243 = vld [vmem:[#allocation7 + $0x35c] sm:$0xf]
    %v244 = vld [vmem:[#allocation7 + $0x360] sm:$0xff]
    %v245 = vld [vmem:[#allocation7 + $0x368] sm:$0xff]
    %v246 = vld [vmem:[#allocation7 + $0x370] sm:$0xff]
    %v247 = vld [vmem:[#allocation7 + $0x378] sm:$0xff]
    %v248 = vld [vmem:[#allocation7 + $0x380] sm:$0xf]
    %v249 = vld [vmem:[#allocation7 + $0x384] sm:$0xff]
    %v250 = vld [vmem:[#allocation7 + $0x38c] sm:$0xff]
    %v251 = vld [vmem:[#allocation7 + $0x394] sm:$0xff]
    %v252 = vld [vmem:[#allocation7 + $0x39c] sm:$0xff]
    %v253 = vld [vmem:[#allocation7 + $0x3a4] sm:$0xf]
    %v254 = vld [vmem:[#allocation7 + $0x3a8] sm:$0xff]
    %v255 = vld [vmem:[#allocation7 + $0x3b0] sm:$0xff]
    %v256 = vld [vmem:[#allocation7 + $0x3b8] sm:$0xff]
    %v257 = vld [vmem:[#allocation7 + $0x3c0] sm:$0xff]
    %v258 = vld [vmem:[#allocation7 + $0x3c8] sm:$0xf]
    %v259 = vld [vmem:[#allocation7 + $0x3cc] sm:$0xff]
    %v260 = vld [vmem:[#allocation7 + $0x3d4] sm:$0xff]
    %v261 = vld [vmem:[#allocation7 + $0x3dc] sm:$0xff]
    %v262 = vld [vmem:[#allocation7 + $0x3e4] sm:$0xff]
    %v263 = vld [vmem:[#allocation7 + $0x3ec] sm:$0xf]
    %v264 = vld [vmem:[#allocation7 + $0x3f0] sm:$0xff]
    %v265 = vld [vmem:[#allocation7 + $0x3f8] sm:$0xff]
    %v266 = vld [vmem:[#allocation7 + $0x400] sm:$0xff]
    %v267 = vld [vmem:[#allocation7 + $0x408] sm:$0xff]
    %v268 = vld [vmem:[#allocation7 + $0x410] sm:$0xf]
    %v269 = vld [vmem:[#allocation7 + $0x414] sm:$0xff]
    %v270 = vld [vmem:[#allocation7 + $0x41c] sm:$0xff]
    %v271 = vld [vmem:[#allocation7 + $0x424] sm:$0xff]
    %v272 = vld [vmem:[#allocation7 + $0x42c] sm:$0xff]
    %v273 = vld [vmem:[#allocation7 + $0x434] sm:$0xf]
    %v274 = vld [vmem:[#allocation7 + $0x438] sm:$0xff]
    %v275 = vld [vmem:[#allocation7 + $0x440] sm:$0xff]
    %v276 = vld [vmem:[#allocation7 + $0x448] sm:$0xff]
    %v277 = vld [vmem:[#allocation7 + $0x450] sm:$0xff]
    %v278 = vld [vmem:[#allocation7 + $0x458] sm:$0xf]
    %v279 = vld [vmem:[#allocation7 + $0x45c] sm:$0xff]
    %v280 = vld [vmem:[#allocation7 + $0x464] sm:$0xff]
    %v281 = vld [vmem:[#allocation7 + $0x46c] sm:$0xff]
    %v282 = vld [vmem:[#allocation7 + $0x474] sm:$0xff]
    %v283 = vld [vmem:[#allocation7 + $0x47c] sm:$0xf]
    %v284 = vld [vmem:[#allocation7 + $0x480] sm:$0xff]
    %v285 = vld [vmem:[#allocation7 + $0x488] sm:$0xff]
    %v286 = vld [vmem:[#allocation7 + $0x490] sm:$0xff]
    %v287 = vld [vmem:[#allocation7 + $0x498] sm:$0xff]
    %v288 = vld [vmem:[#allocation7 + $0x4a0] sm:$0xf]
    %v289 = vld [vmem:[#allocation7 + $0x4a4] sm:$0xff]
    %v290 = vld [vmem:[#allocation7 + $0x4ac] sm:$0xff]
    %v291 = vld [vmem:[#allocation7 + $0x4b4] sm:$0xff]
    %v292 = vld [vmem:[#allocation7 + $0x4bc] sm:$0xff]
    %v293 = vld [vmem:[#allocation7 + $0x4c4] sm:$0xf]
    %v294 = vld [vmem:[#allocation7 + $0x4c8] sm:$0xff]
    %v295 = vld [vmem:[#allocation7 + $0x4d0] sm:$0xff]
    %v296 = vld [vmem:[#allocation7 + $0x4d8] sm:$0xff]
    %v297 = vld [vmem:[#allocation7 + $0x4e0] sm:$0xff]
    %v298 = vld [vmem:[#allocation7 + $0x4e8] sm:$0xf]
    %v299 = vld [vmem:[#allocation7 + $0x4ec] sm:$0xff]
    %v300 = vld [vmem:[#allocation7 + $0x4f4] sm:$0xff]
    %v301 = vld [vmem:[#allocation7 + $0x4fc] sm:$0xff]
    %v302 = vld [vmem:[#allocation7 + $0x504] sm:$0xff]
    %v303 = vld [vmem:[#allocation7 + $0x50c] sm:$0xf]
    %v304 = vld [vmem:[#allocation7 + $0x510] sm:$0xff]
    %v305 = vld [vmem:[#allocation7 + $0x518] sm:$0xff]
    %v306 = vld [vmem:[#allocation7 + $0x520] sm:$0xff]
    %v307 = vld [vmem:[#allocation7 + $0x528] sm:$0xff]
    %v308 = vld [vmem:[#allocation7 + $0x530] sm:$0xf]
    %v309 = vld [vmem:[#allocation7 + $0x534] sm:$0xff]
    %v310 = vld [vmem:[#allocation7 + $0x53c] sm:$0xff]
    %v311 = vld [vmem:[#allocation7 + $0x544] sm:$0xff]
    %v312 = vld [vmem:[#allocation7 + $0x54c] sm:$0xff]
    %v313 = vld [vmem:[#allocation7 + $0x554] sm:$0xf]
    %v314 = vld [vmem:[#allocation7 + $0x558] sm:$0xff]
    %v315 = vld [vmem:[#allocation7 + $0x560] sm:$0xff]
    %v316 = vld [vmem:[#allocation7 + $0x568] sm:$0xff]
    %v317 = vld [vmem:[#allocation7 + $0x570] sm:$0xff]
    %v318 = vld [vmem:[#allocation7 + $0x578] sm:$0xf]
    %v319 = vld [vmem:[#allocation7 + $0x57c] sm:$0xff]
    %v320 = vld [vmem:[#allocation7 + $0x584] sm:$0xff]
    %v321 = vld [vmem:[#allocation7 + $0x58c] sm:$0xff]
    %v322 = vld [vmem:[#allocation7 + $0x594] sm:$0xff]
    %v323 = vld [vmem:[#allocation7 + $0x59c] sm:$0xf]
    %v324 = vld [vmem:[#allocation7 + $0x5a0] sm:$0xff]
    %v325 = vld [vmem:[#allocation7 + $0x5a8] sm:$0xff]
    %v326 = vld [vmem:[#allocation7 + $0x5b0] sm:$0xff]
    %v327 = vld [vmem:[#allocation7 + $0x5b8] sm:$0xff]
    %v328 = vld [vmem:[#allocation7 + $0x5c0] sm:$0xf]
    %v329 = vld [vmem:[#allocation7 + $0x5c4] sm:$0xff]
    %v330 = vld [vmem:[#allocation7 + $0x5cc] sm:$0xff]
    %v331 = vld [vmem:[#allocation7 + $0x5d4] sm:$0xff]
    %v332 = vld [vmem:[#allocation7 + $0x5dc] sm:$0xff]
    %v333 = vld [vmem:[#allocation7 + $0x5e4] sm:$0xf]
    %v334 = vld [vmem:[#allocation7 + $0x5e8] sm:$0xff]
    %v335 = vld [vmem:[#allocation7 + $0x5f0] sm:$0xff]
    %v336 = vld [vmem:[#allocation7 + $0x5f8] sm:$0xff]
    %v337 = vld [vmem:[#allocation7 + $0x600] sm:$0xff]
    %v338 = vld [vmem:[#allocation7 + $0x608] sm:$0xf]
    %v339 = vld [vmem:[#allocation7 + $0x60c] sm:$0xff]
    %v340 = vld [vmem:[#allocation7 + $0x614] sm:$0xff]
    %v341 = vld [vmem:[#allocation7 + $0x61c] sm:$0xff]
    %v342 = vld [vmem:[#allocation7 + $0x624] sm:$0xff]
    %v343 = vld [vmem:[#allocation7 + $0x62c] sm:$0xf]
    %v344 = vld [vmem:[#allocation7 + $0x630] sm:$0xff]
    %v345 = vld [vmem:[#allocation7 + $0x638] sm:$0xff]
    %v346 = vld [vmem:[#allocation7 + $0x640] sm:$0xff]
    %v347 = vld [vmem:[#allocation7 + $0x648] sm:$0xff]
    %v348 = vld [vmem:[#allocation7 + $0x650] sm:$0xf]
    %v349 = vld [vmem:[#allocation7 + $0x654] sm:$0xff]
    %v350 = vld [vmem:[#allocation7 + $0x65c] sm:$0xff]
    %v351 = vld [vmem:[#allocation7 + $0x664] sm:$0xff]
    %v352 = vld [vmem:[#allocation7 + $0x66c] sm:$0xff]
    %v353 = vld [vmem:[#allocation7 + $0x674] sm:$0xf]
    %v354 = vld [vmem:[#allocation7 + $0x678] sm:$0xff]
    %v355 = vld [vmem:[#allocation7 + $0x680] sm:$0xff]
    %v356 = vld [vmem:[#allocation7 + $0x688] sm:$0xff]
    %v357 = vld [vmem:[#allocation7 + $0x690] sm:$0xff]
    %v358 = vld [vmem:[#allocation7 + $0x698] sm:$0xf]
    %v359 = vld [vmem:[#allocation7 + $0x69c] sm:$0xff]
    %v360 = vld [vmem:[#allocation7 + $0x6a4] sm:$0xff]
    %v361 = vld [vmem:[#allocation7 + $0x6ac] sm:$0xff]
    %v362 = vld [vmem:[#allocation7 + $0x6b4] sm:$0xff]
    %v363 = vld [vmem:[#allocation7 + $0x6bc] sm:$0xf]
    %v428 = vunpack.c.l.b16 %v60
    %v429 = vunpack.c.h.b16 %v60
    %v430 = vunpack.c.l.b16 %v61
    %v431 = vunpack.c.l.b16 %v62
    %v432 = vunpack.c.h.b16 %v62
    %v433 = vunpack.c.l.b16 %v63
    %v434 = vunpack.c.l.b16 %v64
    %v435 = vunpack.c.h.b16 %v64
    %v436 = vunpack.c.l.b16 %v65
    %v437 = vunpack.c.l.b16 %v66
    %v438 = vunpack.c.h.b16 %v66
    %v439 = vunpack.c.l.b16 %v67
    %v440 = vunpack.c.l.b16 %v68
    %v441 = vunpack.c.h.b16 %v68
    %v442 = vunpack.c.l.b16 %v69
    %v443 = vunpack.c.l.b16 %v70
    %v444 = vunpack.c.h.b16 %v70
    %v445 = vunpack.c.l.b16 %v71
    %v446 = vunpack.c.l.b16 %v72
    %v447 = vunpack.c.h.b16 %v72
    %v448 = vunpack.c.l.b16 %v73
    %v449 = vunpack.c.l.b16 %v74
    %v450 = vunpack.c.h.b16 %v74
    %v451 = vunpack.c.l.b16 %v75
    %v452 = vunpack.c.l.b16 %v76
    %v453 = vunpack.c.h.b16 %v76
    %v454 = vunpack.c.l.b16 %v77
    %v455 = vunpack.c.l.b16 %v78
    %v456 = vunpack.c.h.b16 %v78
    %v457 = vunpack.c.l.b16 %v79
    %v458 = vunpack.c.l.b16 %v80
    %v459 = vunpack.c.h.b16 %v80
    %v460 = vunpack.c.l.b16 %v81
    %v461 = vunpack.c.l.b16 %v82
    %v462 = vunpack.c.h.b16 %v82
    %v463 = vunpack.c.l.b16 %v83
    %v464 = vunpack.c.l.b16 %v84
    %v465 = vunpack.c.h.b16 %v84
    %v466 = vunpack.c.l.b16 %v85
    %v467 = vunpack.c.l.b16 %v86
    %v468 = vunpack.c.h.b16 %v86
    %v469 = vunpack.c.l.b16 %v87
    %v470 = vunpack.c.l.b16 %v88
    %v471 = vunpack.c.h.b16 %v88
    %v472 = vunpack.c.l.b16 %v89
    %v473 = vunpack.c.l.b16 %v90
    %v474 = vunpack.c.h.b16 %v90
    %v475 = vunpack.c.l.b16 %v91
    %v476 = vunpack.c.l.b16 %v92
    %v477 = vunpack.c.h.b16 %v92
    %v478 = vunpack.c.l.b16 %v93
    %v479 = vunpack.c.l.b16 %v94
    %v480 = vunpack.c.h.b16 %v94
    %v481 = vunpack.c.l.b16 %v95
    %v482 = vunpack.c.l.b16 %v96
    %v483 = vunpack.c.h.b16 %v96
    %v484 = vunpack.c.l.b16 %v97
    %v485 = vunpack.c.l.b16 %v98
    %v486 = vunpack.c.h.b16 %v98
    %v487 = vunpack.c.l.b16 %v99
    %v488 = vunpack.c.l.b16 %v100
    %v489 = vunpack.c.h.b16 %v100
    %v490 = vunpack.c.l.b16 %v101
    %v491 = vunpack.c.l.b16 %v102
    %v492 = vunpack.c.h.b16 %v102
    %v493 = vunpack.c.l.b16 %v103
    %v494 = vunpack.c.l.b16 %v104
    %v495 = vunpack.c.h.b16 %v104
    %v496 = vunpack.c.l.b16 %v105
    %v497 = vunpack.c.l.b16 %v106
    %v498 = vunpack.c.h.b16 %v106
    %v499 = vunpack.c.l.b16 %v107
    %v500 = vunpack.c.l.b16 %v108
    %v501 = vunpack.c.h.b16 %v108
    %v502 = vunpack.c.l.b16 %v109
    %v503 = vunpack.c.l.b16 %v110
    %v504 = vunpack.c.h.b16 %v110
    %v505 = vunpack.c.l.b16 %v111
    %v506 = vunpack.c.l.b16 %v112
    %v507 = vunpack.c.h.b16 %v112
    %v508 = vunpack.c.l.b16 %v113
    %v509 = vunpack.c.l.b16 %v114
    %v510 = vunpack.c.h.b16 %v114
    %v511 = vunpack.c.l.b16 %v115
    %v512 = vunpack.c.l.b16 %v116
    %v513 = vunpack.c.h.b16 %v116
    %v514 = vunpack.c.l.b16 %v117
    %v515 = vunpack.c.l.b16 %v118
    %v516 = vunpack.c.h.b16 %v118
    %v517 = vunpack.c.l.b16 %v119
    %v518 = vunpack.c.l.b16 %v120
    %v519 = vunpack.c.h.b16 %v120
    %v520 = vunpack.c.l.b16 %v121
    %v521 = vunpack.c.l.b16 %v122
    %v522 = vunpack.c.h.b16 %v122
    %v523 = vunpack.c.l.b16 %v123
    %v524 = vpack.c.b16 %v431, %v428
    %v525 = vpack.c.b16 %v432, %v429
    %v526 = vpack.c.b16 %v433, %v430
    %v527 = vpack.c.b16 %v437, %v434
    %v528 = vpack.c.b16 %v438, %v435
    %v529 = vpack.c.b16 %v439, %v436
    %v530 = vpack.c.b16 %v443, %v440
    %v531 = vpack.c.b16 %v444, %v441
    %v532 = vpack.c.b16 %v445, %v442
    %v533 = vpack.c.b16 %v449, %v446
    %v534 = vpack.c.b16 %v450, %v447
    %v535 = vpack.c.b16 %v451, %v448
    %v536 = vpack.c.b16 %v455, %v452
    %v537 = vpack.c.b16 %v456, %v453
    %v538 = vpack.c.b16 %v457, %v454
    %v539 = vpack.c.b16 %v461, %v458
    %v540 = vpack.c.b16 %v462, %v459
    %v541 = vpack.c.b16 %v463, %v460
    %v542 = vpack.c.b16 %v467, %v464
    %v543 = vpack.c.b16 %v468, %v465
    %v544 = vpack.c.b16 %v469, %v466
    %v545 = vpack.c.b16 %v473, %v470
    %v546 = vpack.c.b16 %v474, %v471
    %v547 = vpack.c.b16 %v475, %v472
    %v548 = vpack.c.b16 %v479, %v476
    %v549 = vpack.c.b16 %v480, %v477
    %v550 = vpack.c.b16 %v481, %v478
    %v551 = vpack.c.b16 %v485, %v482
    %v552 = vpack.c.b16 %v486, %v483
    %v553 = vpack.c.b16 %v487, %v484
    %v554 = vpack.c.b16 %v491, %v488
    %v555 = vpack.c.b16 %v492, %v489
    %v556 = vpack.c.b16 %v493, %v490
    %v557 = vpack.c.b16 %v497, %v494
    %v558 = vpack.c.b16 %v498, %v495
    %v559 = vpack.c.b16 %v499, %v496
    %v560 = vpack.c.b16 %v503, %v500
    %v561 = vpack.c.b16 %v504, %v501
    %v562 = vpack.c.b16 %v505, %v502
    %v563 = vpack.c.b16 %v509, %v506
    %v564 = vpack.c.b16 %v510, %v507
    %v565 = vpack.c.b16 %v511, %v508
    %v566 = vpack.c.b16 %v515, %v512
    %v567 = vpack.c.b16 %v516, %v513
    %v568 = vpack.c.b16 %v517, %v514
    %v569 = vpack.c.b16 %v521, %v518
    %v570 = vpack.c.b16 %v522, %v519
    %v571 = vpack.c.b16 %v523, %v520
    %v860 = vunpack.c.l.b16 %v124
    %v861 = vunpack.c.h.b16 %v124
    %v862 = vunpack.c.l.b16 %v125
    %v863 = vunpack.c.h.b16 %v125
    %v864 = vunpack.c.l.b16 %v126
    %v865 = vunpack.c.h.b16 %v126
    %v866 = vunpack.c.l.b16 %v127
    %v867 = vunpack.c.h.b16 %v127
    %v868 = vunpack.c.l.b16 %v128
    %v869 = vunpack.c.l.b16 %v129
    %v870 = vunpack.c.h.b16 %v129
    %v871 = vunpack.c.l.b16 %v130
    %v872 = vunpack.c.h.b16 %v130
    %v873 = vunpack.c.l.b16 %v131
    %v874 = vunpack.c.h.b16 %v131
    %v875 = vunpack.c.l.b16 %v132
    %v876 = vunpack.c.h.b16 %v132
    %v877 = vunpack.c.l.b16 %v133
    %v878 = vunpack.c.l.b16 %v134
    %v879 = vunpack.c.h.b16 %v134
    %v880 = vunpack.c.l.b16 %v135
    %v881 = vunpack.c.h.b16 %v135
    %v882 = vunpack.c.l.b16 %v136
    %v883 = vunpack.c.h.b16 %v136
    %v884 = vunpack.c.l.b16 %v137
    %v885 = vunpack.c.h.b16 %v137
    %v886 = vunpack.c.l.b16 %v138
    %v887 = vunpack.c.l.b16 %v139
    %v888 = vunpack.c.h.b16 %v139
    %v889 = vunpack.c.l.b16 %v140
    %v890 = vunpack.c.h.b16 %v140
    %v891 = vunpack.c.l.b16 %v141
    %v892 = vunpack.c.h.b16 %v141
    %v893 = vunpack.c.l.b16 %v142
    %v894 = vunpack.c.h.b16 %v142
    %v895 = vunpack.c.l.b16 %v143
    %v896 = vunpack.c.l.b16 %v144
    %v897 = vunpack.c.h.b16 %v144
    %v898 = vunpack.c.l.b16 %v145
    %v899 = vunpack.c.h.b16 %v145
    %v900 = vunpack.c.l.b16 %v146
    %v901 = vunpack.c.h.b16 %v146
    %v902 = vunpack.c.l.b16 %v147
    %v903 = vunpack.c.h.b16 %v147
    %v904 = vunpack.c.l.b16 %v148
    %v905 = vunpack.c.l.b16 %v149
    %v906 = vunpack.c.h.b16 %v149
    %v907 = vunpack.c.l.b16 %v150
    %v908 = vunpack.c.h.b16 %v150
    %v909 = vunpack.c.l.b16 %v151
    %v910 = vunpack.c.h.b16 %v151
    %v911 = vunpack.c.l.b16 %v152
    %v912 = vunpack.c.h.b16 %v152
    %v913 = vunpack.c.l.b16 %v153
    %v914 = vunpack.c.l.b16 %v154
    %v915 = vunpack.c.h.b16 %v154
    %v916 = vunpack.c.l.b16 %v155
    %v917 = vunpack.c.h.b16 %v155
    %v918 = vunpack.c.l.b16 %v156
    %v919 = vunpack.c.h.b16 %v156
    %v920 = vunpack.c.l.b16 %v157
    %v921 = vunpack.c.h.b16 %v157
    %v922 = vunpack.c.l.b16 %v158
    %v923 = vunpack.c.l.b16 %v159
    %v924 = vunpack.c.h.b16 %v159
    %v925 = vunpack.c.l.b16 %v160
    %v926 = vunpack.c.h.b16 %v160
    %v927 = vunpack.c.l.b16 %v161
    %v928 = vunpack.c.h.b16 %v161
    %v929 = vunpack.c.l.b16 %v162
    %v930 = vunpack.c.h.b16 %v162
    %v931 = vunpack.c.l.b16 %v163
    %v932 = vunpack.c.l.b16 %v164
    %v933 = vunpack.c.h.b16 %v164
    %v934 = vunpack.c.l.b16 %v165
    %v935 = vunpack.c.h.b16 %v165
    %v936 = vunpack.c.l.b16 %v166
    %v937 = vunpack.c.h.b16 %v166
    %v938 = vunpack.c.l.b16 %v167
    %v939 = vunpack.c.h.b16 %v167
    %v940 = vunpack.c.l.b16 %v168
    %v941 = vunpack.c.l.b16 %v169
    %v942 = vunpack.c.h.b16 %v169
    %v943 = vunpack.c.l.b16 %v170
    %v944 = vunpack.c.h.b16 %v170
    %v945 = vunpack.c.l.b16 %v171
    %v946 = vunpack.c.h.b16 %v171
    %v947 = vunpack.c.l.b16 %v172
    %v948 = vunpack.c.h.b16 %v172
    %v949 = vunpack.c.l.b16 %v173
    %v950 = vunpack.c.l.b16 %v174
    %v951 = vunpack.c.h.b16 %v174
    %v952 = vunpack.c.l.b16 %v175
    %v953 = vunpack.c.h.b16 %v175
    %v954 = vunpack.c.l.b16 %v176
    %v955 = vunpack.c.h.b16 %v176
    %v956 = vunpack.c.l.b16 %v177
    %v957 = vunpack.c.h.b16 %v177
    %v958 = vunpack.c.l.b16 %v178
    %v959 = vunpack.c.l.b16 %v179
    %v960 = vunpack.c.h.b16 %v179
    %v961 = vunpack.c.l.b16 %v180
    %v962 = vunpack.c.h.b16 %v180
    %v963 = vunpack.c.l.b16 %v181
    %v964 = vunpack.c.h.b16 %v181
    %v965 = vunpack.c.l.b16 %v182
    %v966 = vunpack.c.h.b16 %v182
    %v967 = vunpack.c.l.b16 %v183
    %v968 = vunpack.c.l.b16 %v184
    %v969 = vunpack.c.h.b16 %v184
    %v970 = vunpack.c.l.b16 %v185
    %v971 = vunpack.c.h.b16 %v185
    %v972 = vunpack.c.l.b16 %v186
    %v973 = vunpack.c.h.b16 %v186
    %v974 = vunpack.c.l.b16 %v187
    %v975 = vunpack.c.h.b16 %v187
    %v976 = vunpack.c.l.b16 %v188
    %v977 = vunpack.c.l.b16 %v189
    %v978 = vunpack.c.h.b16 %v189
    %v979 = vunpack.c.l.b16 %v190
    %v980 = vunpack.c.h.b16 %v190
    %v981 = vunpack.c.l.b16 %v191
    %v982 = vunpack.c.h.b16 %v191
    %v983 = vunpack.c.l.b16 %v192
    %v984 = vunpack.c.h.b16 %v192
    %v985 = vunpack.c.l.b16 %v193
    %v986 = vunpack.c.l.b16 %v194
    %v987 = vunpack.c.h.b16 %v194
    %v988 = vunpack.c.l.b16 %v195
    %v989 = vunpack.c.h.b16 %v195
    %v990 = vunpack.c.l.b16 %v196
    %v991 = vunpack.c.h.b16 %v196
    %v992 = vunpack.c.l.b16 %v197
    %v993 = vunpack.c.h.b16 %v197
    %v994 = vunpack.c.l.b16 %v198
    %v995 = vunpack.c.l.b16 %v199
    %v996 = vunpack.c.h.b16 %v199
    %v997 = vunpack.c.l.b16 %v200
    %v998 = vunpack.c.h.b16 %v200
    %v999 = vunpack.c.l.b16 %v201
    %v1000 = vunpack.c.h.b16 %v201
    %v1001 = vunpack.c.l.b16 %v202
    %v1002 = vunpack.c.h.b16 %v202
    %v1003 = vunpack.c.l.b16 %v203
    %v1004 = vunpack.c.l.b16 %v204
    %v1005 = vunpack.c.h.b16 %v204
    %v1006 = vunpack.c.l.b16 %v205
    %v1007 = vunpack.c.h.b16 %v205
    %v1008 = vunpack.c.l.b16 %v206
    %v1009 = vunpack.c.h.b16 %v206
    %v1010 = vunpack.c.l.b16 %v207
    %v1011 = vunpack.c.h.b16 %v207
    %v1012 = vunpack.c.l.b16 %v208
    %v1013 = vunpack.c.l.b16 %v209
    %v1014 = vunpack.c.h.b16 %v209
    %v1015 = vunpack.c.l.b16 %v210
    %v1016 = vunpack.c.h.b16 %v210
    %v1017 = vunpack.c.l.b16 %v211
    %v1018 = vunpack.c.h.b16 %v211
    %v1019 = vunpack.c.l.b16 %v212
    %v1020 = vunpack.c.h.b16 %v212
    %v1021 = vunpack.c.l.b16 %v213
    %v1022 = vunpack.c.l.b16 %v214
    %v1023 = vunpack.c.h.b16 %v214
    %v1024 = vunpack.c.l.b16 %v215
    %v1025 = vunpack.c.h.b16 %v215
    %v1026 = vunpack.c.l.b16 %v216
    %v1027 = vunpack.c.h.b16 %v216
    %v1028 = vunpack.c.l.b16 %v217
    %v1029 = vunpack.c.h.b16 %v217
    %v1030 = vunpack.c.l.b16 %v218
    %v1031 = vunpack.c.l.b16 %v219
    %v1032 = vunpack.c.h.b16 %v219
    %v1033 = vunpack.c.l.b16 %v220
    %v1034 = vunpack.c.h.b16 %v220
    %v1035 = vunpack.c.l.b16 %v221
    %v1036 = vunpack.c.h.b16 %v221
    %v1037 = vunpack.c.l.b16 %v222
    %v1038 = vunpack.c.h.b16 %v222
    %v1039 = vunpack.c.l.b16 %v223
    %v1040 = vunpack.c.l.b16 %v224
    %v1041 = vunpack.c.h.b16 %v224
    %v1042 = vunpack.c.l.b16 %v225
    %v1043 = vunpack.c.h.b16 %v225
    %v1044 = vunpack.c.l.b16 %v226
    %v1045 = vunpack.c.h.b16 %v226
    %v1046 = vunpack.c.l.b16 %v227
    %v1047 = vunpack.c.h.b16 %v227
    %v1048 = vunpack.c.l.b16 %v228
    %v1049 = vunpack.c.l.b16 %v229
    %v1050 = vunpack.c.h.b16 %v229
    %v1051 = vunpack.c.l.b16 %v230
    %v1052 = vunpack.c.h.b16 %v230
    %v1053 = vunpack.c.l.b16 %v231
    %v1054 = vunpack.c.h.b16 %v231
    %v1055 = vunpack.c.l.b16 %v232
    %v1056 = vunpack.c.h.b16 %v232
    %v1057 = vunpack.c.l.b16 %v233
    %v1058 = vunpack.c.l.b16 %v234
    %v1059 = vunpack.c.h.b16 %v234
    %v1060 = vunpack.c.l.b16 %v235
    %v1061 = vunpack.c.h.b16 %v235
    %v1062 = vunpack.c.l.b16 %v236
    %v1063 = vunpack.c.h.b16 %v236
    %v1064 = vunpack.c.l.b16 %v237
    %v1065 = vunpack.c.h.b16 %v237
    %v1066 = vunpack.c.l.b16 %v238
    %v1067 = vunpack.c.l.b16 %v239
    %v1068 = vunpack.c.h.b16 %v239
    %v1069 = vunpack.c.l.b16 %v240
    %v1070 = vunpack.c.h.b16 %v240
    %v1071 = vunpack.c.l.b16 %v241
    %v1072 = vunpack.c.h.b16 %v241
    %v1073 = vunpack.c.l.b16 %v242
    %v1074 = vunpack.c.h.b16 %v242
    %v1075 = vunpack.c.l.b16 %v243
    %v1076 = vunpack.c.l.b16 %v244
    %v1077 = vunpack.c.h.b16 %v244
    %v1078 = vunpack.c.l.b16 %v245
    %v1079 = vunpack.c.h.b16 %v245
    %v1080 = vunpack.c.l.b16 %v246
    %v1081 = vunpack.c.h.b16 %v246
    %v1082 = vunpack.c.l.b16 %v247
    %v1083 = vunpack.c.h.b16 %v247
    %v1084 = vunpack.c.l.b16 %v248
    %v1085 = vunpack.c.l.b16 %v249
    %v1086 = vunpack.c.h.b16 %v249
    %v1087 = vunpack.c.l.b16 %v250
    %v1088 = vunpack.c.h.b16 %v250
    %v1089 = vunpack.c.l.b16 %v251
    %v1090 = vunpack.c.h.b16 %v251
    %v1091 = vunpack.c.l.b16 %v252
    %v1092 = vunpack.c.h.b16 %v252
    %v1093 = vunpack.c.l.b16 %v253
    %v1094 = vunpack.c.l.b16 %v254
    %v1095 = vunpack.c.h.b16 %v254
    %v1096 = vunpack.c.l.b16 %v255
    %v1097 = vunpack.c.h.b16 %v255
    %v1098 = vunpack.c.l.b16 %v256
    %v1099 = vunpack.c.h.b16 %v256
    %v1100 = vunpack.c.l.b16 %v257
    %v1101 = vunpack.c.h.b16 %v257
    %v1102 = vunpack.c.l.b16 %v258
    %v1103 = vunpack.c.l.b16 %v259
    %v1104 = vunpack.c.h.b16 %v259
    %v1105 = vunpack.c.l.b16 %v260
    %v1106 = vunpack.c.h.b16 %v260
    %v1107 = vunpack.c.l.b16 %v261
    %v1108 = vunpack.c.h.b16 %v261
    %v1109 = vunpack.c.l.b16 %v262
    %v1110 = vunpack.c.h.b16 %v262
    %v1111 = vunpack.c.l.b16 %v263
    %v1112 = vunpack.c.l.b16 %v264
    %v1113 = vunpack.c.h.b16 %v264
    %v1114 = vunpack.c.l.b16 %v265
    %v1115 = vunpack.c.h.b16 %v265
    %v1116 = vunpack.c.l.b16 %v266
    %v1117 = vunpack.c.h.b16 %v266
    %v1118 = vunpack.c.l.b16 %v267
    %v1119 = vunpack.c.h.b16 %v267
    %v1120 = vunpack.c.l.b16 %v268
    %v1121 = vunpack.c.l.b16 %v269
    %v1122 = vunpack.c.h.b16 %v269
    %v1123 = vunpack.c.l.b16 %v270
    %v1124 = vunpack.c.h.b16 %v270
    %v1125 = vunpack.c.l.b16 %v271
    %v1126 = vunpack.c.h.b16 %v271
    %v1127 = vunpack.c.l.b16 %v272
    %v1128 = vunpack.c.h.b16 %v272
    %v1129 = vunpack.c.l.b16 %v273
    %v1130 = vunpack.c.l.b16 %v274
    %v1131 = vunpack.c.h.b16 %v274
    %v1132 = vunpack.c.l.b16 %v275
    %v1133 = vunpack.c.h.b16 %v275
    %v1134 = vunpack.c.l.b16 %v276
    %v1135 = vunpack.c.h.b16 %v276
    %v1136 = vunpack.c.l.b16 %v277
    %v1137 = vunpack.c.h.b16 %v277
    %v1138 = vunpack.c.l.b16 %v278
    %v1139 = vunpack.c.l.b16 %v279
    %v1140 = vunpack.c.h.b16 %v279
    %v1141 = vunpack.c.l.b16 %v280
    %v1142 = vunpack.c.h.b16 %v280
    %v1143 = vunpack.c.l.b16 %v281
    %v1144 = vunpack.c.h.b16 %v281
    %v1145 = vunpack.c.l.b16 %v282
    %v1146 = vunpack.c.h.b16 %v282
    %v1147 = vunpack.c.l.b16 %v283
    %v1148 = vunpack.c.l.b16 %v284
    %v1149 = vunpack.c.h.b16 %v284
    %v1150 = vunpack.c.l.b16 %v285
    %v1151 = vunpack.c.h.b16 %v285
    %v1152 = vunpack.c.l.b16 %v286
    %v1153 = vunpack.c.h.b16 %v286
    %v1154 = vunpack.c.l.b16 %v287
    %v1155 = vunpack.c.h.b16 %v287
    %v1156 = vunpack.c.l.b16 %v288
    %v1157 = vunpack.c.l.b16 %v289
    %v1158 = vunpack.c.h.b16 %v289
    %v1159 = vunpack.c.l.b16 %v290
    %v1160 = vunpack.c.h.b16 %v290
    %v1161 = vunpack.c.l.b16 %v291
    %v1162 = vunpack.c.h.b16 %v291
    %v1163 = vunpack.c.l.b16 %v292
    %v1164 = vunpack.c.h.b16 %v292
    %v1165 = vunpack.c.l.b16 %v293
    %v1166 = vunpack.c.l.b16 %v294
    %v1167 = vunpack.c.h.b16 %v294
    %v1168 = vunpack.c.l.b16 %v295
    %v1169 = vunpack.c.h.b16 %v295
    %v1170 = vunpack.c.l.b16 %v296
    %v1171 = vunpack.c.h.b16 %v296
    %v1172 = vunpack.c.l.b16 %v297
    %v1173 = vunpack.c.h.b16 %v297
    %v1174 = vunpack.c.l.b16 %v298
    %v1175 = vunpack.c.l.b16 %v299
    %v1176 = vunpack.c.h.b16 %v299
    %v1177 = vunpack.c.l.b16 %v300
    %v1178 = vunpack.c.h.b16 %v300
    %v1179 = vunpack.c.l.b16 %v301
    %v1180 = vunpack.c.h.b16 %v301
    %v1181 = vunpack.c.l.b16 %v302
    %v1182 = vunpack.c.h.b16 %v302
    %v1183 = vunpack.c.l.b16 %v303
    %v1184 = vunpack.c.l.b16 %v304
    %v1185 = vunpack.c.h.b16 %v304
    %v1186 = vunpack.c.l.b16 %v305
    %v1187 = vunpack.c.h.b16 %v305
    %v1188 = vunpack.c.l.b16 %v306
    %v1189 = vunpack.c.h.b16 %v306
    %v1190 = vunpack.c.l.b16 %v307
    %v1191 = vunpack.c.h.b16 %v307
    %v1192 = vunpack.c.l.b16 %v308
    %v1193 = vunpack.c.l.b16 %v309
    %v1194 = vunpack.c.h.b16 %v309
    %v1195 = vunpack.c.l.b16 %v310
    %v1196 = vunpack.c.h.b16 %v310
    %v1197 = vunpack.c.l.b16 %v311
    %v1198 = vunpack.c.h.b16 %v311
    %v1199 = vunpack.c.l.b16 %v312
    %v1200 = vunpack.c.h.b16 %v312
    %v1201 = vunpack.c.l.b16 %v313
    %v1202 = vunpack.c.l.b16 %v314
    %v1203 = vunpack.c.h.b16 %v314
    %v1204 = vunpack.c.l.b16 %v315
    %v1205 = vunpack.c.h.b16 %v315
    %v1206 = vunpack.c.l.b16 %v316
    %v1207 = vunpack.c.h.b16 %v316
    %v1208 = vunpack.c.l.b16 %v317
    %v1209 = vunpack.c.h.b16 %v317
    %v1210 = vunpack.c.l.b16 %v318
    %v1211 = vunpack.c.l.b16 %v319
    %v1212 = vunpack.c.h.b16 %v319
    %v1213 = vunpack.c.l.b16 %v320
    %v1214 = vunpack.c.h.b16 %v320
    %v1215 = vunpack.c.l.b16 %v321
    %v1216 = vunpack.c.h.b16 %v321
    %v1217 = vunpack.c.l.b16 %v322
    %v1218 = vunpack.c.h.b16 %v322
    %v1219 = vunpack.c.l.b16 %v323
    %v1220 = vunpack.c.l.b16 %v324
    %v1221 = vunpack.c.h.b16 %v324
    %v1222 = vunpack.c.l.b16 %v325
    %v1223 = vunpack.c.h.b16 %v325
    %v1224 = vunpack.c.l.b16 %v326
    %v1225 = vunpack.c.h.b16 %v326
    %v1226 = vunpack.c.l.b16 %v327
    %v1227 = vunpack.c.h.b16 %v327
    %v1228 = vunpack.c.l.b16 %v328
    %v1229 = vunpack.c.l.b16 %v329
    %v1230 = vunpack.c.h.b16 %v329
    %v1231 = vunpack.c.l.b16 %v330
    %v1232 = vunpack.c.h.b16 %v330
    %v1233 = vunpack.c.l.b16 %v331
    %v1234 = vunpack.c.h.b16 %v331
    %v1235 = vunpack.c.l.b16 %v332
    %v1236 = vunpack.c.h.b16 %v332
    %v1237 = vunpack.c.l.b16 %v333
    %v1238 = vunpack.c.l.b16 %v334
    %v1239 = vunpack.c.h.b16 %v334
    %v1240 = vunpack.c.l.b16 %v335
    %v1241 = vunpack.c.h.b16 %v335
    %v1242 = vunpack.c.l.b16 %v336
    %v1243 = vunpack.c.h.b16 %v336
    %v1244 = vunpack.c.l.b16 %v337
    %v1245 = vunpack.c.h.b16 %v337
    %v1246 = vunpack.c.l.b16 %v338
    %v1247 = vunpack.c.l.b16 %v339
    %v1248 = vunpack.c.h.b16 %v339
    %v1249 = vunpack.c.l.b16 %v340
    %v1250 = vunpack.c.h.b16 %v340
    %v1251 = vunpack.c.l.b16 %v341
    %v1252 = vunpack.c.h.b16 %v341
    %v1253 = vunpack.c.l.b16 %v342
    %v1254 = vunpack.c.h.b16 %v342
    %v1255 = vunpack.c.l.b16 %v343
    %v1256 = vunpack.c.l.b16 %v344
    %v1257 = vunpack.c.h.b16 %v344
    %v1258 = vunpack.c.l.b16 %v345
    %v1259 = vunpack.c.h.b16 %v345
    %v1260 = vunpack.c.l.b16 %v346
    %v1261 = vunpack.c.h.b16 %v346
    %v1262 = vunpack.c.l.b16 %v347
    %v1263 = vunpack.c.h.b16 %v347
    %v1264 = vunpack.c.l.b16 %v348
    %v1265 = vunpack.c.l.b16 %v349
    %v1266 = vunpack.c.h.b16 %v349
    %v1267 = vunpack.c.l.b16 %v350
    %v1268 = vunpack.c.h.b16 %v350
    %v1269 = vunpack.c.l.b16 %v351
    %v1270 = vunpack.c.h.b16 %v351
    %v1271 = vunpack.c.l.b16 %v352
    %v1272 = vunpack.c.h.b16 %v352
    %v1273 = vunpack.c.l.b16 %v353
    %v1274 = vunpack.c.l.b16 %v354
    %v1275 = vunpack.c.h.b16 %v354
    %v1276 = vunpack.c.l.b16 %v355
    %v1277 = vunpack.c.h.b16 %v355
    %v1278 = vunpack.c.l.b16 %v356
    %v1279 = vunpack.c.h.b16 %v356
    %v1280 = vunpack.c.l.b16 %v357
    %v1281 = vunpack.c.h.b16 %v357
    %v1282 = vunpack.c.l.b16 %v358
    %v1283 = vunpack.c.l.b16 %v359
    %v1284 = vunpack.c.h.b16 %v359
    %v1285 = vunpack.c.l.b16 %v360
    %v1286 = vunpack.c.h.b16 %v360
    %v1287 = vunpack.c.l.b16 %v361
    %v1288 = vunpack.c.h.b16 %v361
    %v1289 = vunpack.c.l.b16 %v362
    %v1290 = vunpack.c.h.b16 %v362
    %v1291 = vunpack.c.l.b16 %v363
    %v1292 = vpack.c.b16 %v869, %v860
    %v1293 = vpack.c.b16 %v870, %v861
    %v1294 = vpack.c.b16 %v871, %v862
    %v1295 = vpack.c.b16 %v872, %v863
    %v1296 = vpack.c.b16 %v873, %v864
    %v1297 = vpack.c.b16 %v874, %v865
    %v1298 = vpack.c.b16 %v875, %v866
    %v1299 = vpack.c.b16 %v876, %v867
    %v1300 = vpack.c.b16 %v877, %v868
    %v1301 = vpack.c.b16 %v887, %v878
    %v1302 = vpack.c.b16 %v888, %v879
    %v1303 = vpack.c.b16 %v889, %v880
    %v1304 = vpack.c.b16 %v890, %v881
    %v1305 = vpack.c.b16 %v891, %v882
    %v1306 = vpack.c.b16 %v892, %v883
    %v1307 = vpack.c.b16 %v893, %v884
    %v1308 = vpack.c.b16 %v894, %v885
    %v1309 = vpack.c.b16 %v895, %v886
    %v1310 = vpack.c.b16 %v905, %v896
    %v1311 = vpack.c.b16 %v906, %v897
    %v1312 = vpack.c.b16 %v907, %v898
    %v1313 = vpack.c.b16 %v908, %v899
    %v1314 = vpack.c.b16 %v909, %v900
    %v1315 = vpack.c.b16 %v910, %v901
    %v1316 = vpack.c.b16 %v911, %v902
    %v1317 = vpack.c.b16 %v912, %v903
    %v1318 = vpack.c.b16 %v913, %v904
    %v1319 = vpack.c.b16 %v923, %v914
    %v1320 = vpack.c.b16 %v924, %v915
    %v1321 = vpack.c.b16 %v925, %v916
    %v1322 = vpack.c.b16 %v926, %v917
    %v1323 = vpack.c.b16 %v927, %v918
    %v1324 = vpack.c.b16 %v928, %v919
    %v1325 = vpack.c.b16 %v929, %v920
    %v1326 = vpack.c.b16 %v930, %v921
    %v1327 = vpack.c.b16 %v931, %v922
    %v1328 = vpack.c.b16 %v941, %v932
    %v1329 = vpack.c.b16 %v942, %v933
    %v1330 = vpack.c.b16 %v943, %v934
    %v1331 = vpack.c.b16 %v944, %v935
    %v1332 = vpack.c.b16 %v945, %v936
    %v1333 = vpack.c.b16 %v946, %v937
    %v1334 = vpack.c.b16 %v947, %v938
    %v1335 = vpack.c.b16 %v948, %v939
    %v1336 = vpack.c.b16 %v949, %v940
    %v1337 = vpack.c.b16 %v959, %v950
    %v1338 = vpack.c.b16 %v960, %v951
    %v1339 = vpack.c.b16 %v961, %v952
    %v1340 = vpack.c.b16 %v962, %v953
    %v1341 = vpack.c.b16 %v963, %v954
    %v1342 = vpack.c.b16 %v964, %v955
    %v1343 = vpack.c.b16 %v965, %v956
    %v1344 = vpack.c.b16 %v966, %v957
    %v1345 = vpack.c.b16 %v967, %v958
    %v1346 = vpack.c.b16 %v977, %v968
    %v1347 = vpack.c.b16 %v978, %v969
    %v1348 = vpack.c.b16 %v979, %v970
    %v1349 = vpack.c.b16 %v980, %v971
    %v1350 = vpack.c.b16 %v981, %v972
    %v1351 = vpack.c.b16 %v982, %v973
    %v1352 = vpack.c.b16 %v983, %v974
    %v1353 = vpack.c.b16 %v984, %v975
    %v1354 = vpack.c.b16 %v985, %v976
    %v1355 = vpack.c.b16 %v995, %v986
    %v1356 = vpack.c.b16 %v996, %v987
    %v1357 = vpack.c.b16 %v997, %v988
    %v1358 = vpack.c.b16 %v998, %v989
    %v1359 = vpack.c.b16 %v999, %v990
    %v1360 = vpack.c.b16 %v1000, %v991
    %v1361 = vpack.c.b16 %v1001, %v992
    %v1362 = vpack.c.b16 %v1002, %v993
    %v1363 = vpack.c.b16 %v1003, %v994
    %v1364 = vpack.c.b16 %v1013, %v1004
    %v1365 = vpack.c.b16 %v1014, %v1005
    %v1366 = vpack.c.b16 %v1015, %v1006
    %v1367 = vpack.c.b16 %v1016, %v1007
    %v1368 = vpack.c.b16 %v1017, %v1008
    %v1369 = vpack.c.b16 %v1018, %v1009
    %v1370 = vpack.c.b16 %v1019, %v1010
    %v1371 = vpack.c.b16 %v1020, %v1011
    %v1372 = vpack.c.b16 %v1021, %v1012
    %v1373 = vpack.c.b16 %v1031, %v1022
    %v1374 = vpack.c.b16 %v1032, %v1023
    %v1375 = vpack.c.b16 %v1033, %v1024
    %v1376 = vpack.c.b16 %v1034, %v1025
    %v1377 = vpack.c.b16 %v1035, %v1026
    %v1378 = vpack.c.b16 %v1036, %v1027
    %v1379 = vpack.c.b16 %v1037, %v1028
    %v1380 = vpack.c.b16 %v1038, %v1029
    %v1381 = vpack.c.b16 %v1039, %v1030
    %v1382 = vpack.c.b16 %v1049, %v1040
    %v1383 = vpack.c.b16 %v1050, %v1041
    %v1384 = vpack.c.b16 %v1051, %v1042
    %v1385 = vpack.c.b16 %v1052, %v1043
    %v1386 = vpack.c.b16 %v1053, %v1044
    %v1387 = vpack.c.b16 %v1054, %v1045
    %v1388 = vpack.c.b16 %v1055, %v1046
    %v1389 = vpack.c.b16 %v1056, %v1047
    %v1390 = vpack.c.b16 %v1057, %v1048
    %v1391 = vpack.c.b16 %v1067, %v1058
    %v1392 = vpack.c.b16 %v1068, %v1059
    %v1393 = vpack.c.b16 %v1069, %v1060
    %v1394 = vpack.c.b16 %v1070, %v1061
    %v1395 = vpack.c.b16 %v1071, %v1062
    %v1396 = vpack.c.b16 %v1072, %v1063
    %v1397 = vpack.c.b16 %v1073, %v1064
    %v1398 = vpack.c.b16 %v1074, %v1065
    %v1399 = vpack.c.b16 %v1075, %v1066
    %v1400 = vpack.c.b16 %v1085, %v1076
    %v1401 = vpack.c.b16 %v1086, %v1077
    %v1402 = vpack.c.b16 %v1087, %v1078
    %v1403 = vpack.c.b16 %v1088, %v1079
    %v1404 = vpack.c.b16 %v1089, %v1080
    %v1405 = vpack.c.b16 %v1090, %v1081
    %v1406 = vpack.c.b16 %v1091, %v1082
    %v1407 = vpack.c.b16 %v1092, %v1083
    %v1408 = vpack.c.b16 %v1093, %v1084
    %v1409 = vpack.c.b16 %v1103, %v1094
    %v1410 = vpack.c.b16 %v1104, %v1095
    %v1411 = vpack.c.b16 %v1105, %v1096
    %v1412 = vpack.c.b16 %v1106, %v1097
    %v1413 = vpack.c.b16 %v1107, %v1098
    %v1414 = vpack.c.b16 %v1108, %v1099
    %v1415 = vpack.c.b16 %v1109, %v1100
    %v1416 = vpack.c.b16 %v1110, %v1101
    %v1417 = vpack.c.b16 %v1111, %v1102
    %v1418 = vpack.c.b16 %v1121, %v1112
    %v1419 = vpack.c.b16 %v1122, %v1113
    %v1420 = vpack.c.b16 %v1123, %v1114
    %v1421 = vpack.c.b16 %v1124, %v1115
    %v1422 = vpack.c.b16 %v1125, %v1116
    %v1423 = vpack.c.b16 %v1126, %v1117
    %v1424 = vpack.c.b16 %v1127, %v1118
    %v1425 = vpack.c.b16 %v1128, %v1119
    %v1426 = vpack.c.b16 %v1129, %v1120
    %v1427 = vpack.c.b16 %v1139, %v1130
    %v1428 = vpack.c.b16 %v1140, %v1131
    %v1429 = vpack.c.b16 %v1141, %v1132
    %v1430 = vpack.c.b16 %v1142, %v1133
    %v1431 = vpack.c.b16 %v1143, %v1134
    %v1432 = vpack.c.b16 %v1144, %v1135
    %v1433 = vpack.c.b16 %v1145, %v1136
    %v1434 = vpack.c.b16 %v1146, %v1137
    %v1435 = vpack.c.b16 %v1147, %v1138
    %v1436 = vpack.c.b16 %v1157, %v1148
    %v1437 = vpack.c.b16 %v1158, %v1149
    %v1438 = vpack.c.b16 %v1159, %v1150
    %v1439 = vpack.c.b16 %v1160, %v1151
    %v1440 = vpack.c.b16 %v1161, %v1152
    %v1441 = vpack.c.b16 %v1162, %v1153
    %v1442 = vpack.c.b16 %v1163, %v1154
    %v1443 = vpack.c.b16 %v1164, %v1155
    %v1444 = vpack.c.b16 %v1165, %v1156
    %v1445 = vpack.c.b16 %v1175, %v1166
    %v1446 = vpack.c.b16 %v1176, %v1167
    %v1447 = vpack.c.b16 %v1177, %v1168
    %v1448 = vpack.c.b16 %v1178, %v1169
    %v1449 = vpack.c.b16 %v1179, %v1170
    %v1450 = vpack.c.b16 %v1180, %v1171
    %v1451 = vpack.c.b16 %v1181, %v1172
    %v1452 = vpack.c.b16 %v1182, %v1173
    %v1453 = vpack.c.b16 %v1183, %v1174
    %v1454 = vpack.c.b16 %v1193, %v1184
    %v1455 = vpack.c.b16 %v1194, %v1185
    %v1456 = vpack.c.b16 %v1195, %v1186
    %v1457 = vpack.c.b16 %v1196, %v1187
    %v1458 = vpack.c.b16 %v1197, %v1188
    %v1459 = vpack.c.b16 %v1198, %v1189
    %v1460 = vpack.c.b16 %v1199, %v1190
    %v1461 = vpack.c.b16 %v1200, %v1191
    %v1462 = vpack.c.b16 %v1201, %v1192
    %v1463 = vpack.c.b16 %v1211, %v1202
    %v1464 = vpack.c.b16 %v1212, %v1203
    %v1465 = vpack.c.b16 %v1213, %v1204
    %v1466 = vpack.c.b16 %v1214, %v1205
    %v1467 = vpack.c.b16 %v1215, %v1206
    %v1468 = vpack.c.b16 %v1216, %v1207
    %v1469 = vpack.c.b16 %v1217, %v1208
    %v1470 = vpack.c.b16 %v1218, %v1209
    %v1471 = vpack.c.b16 %v1219, %v1210
    %v1472 = vpack.c.b16 %v1229, %v1220
    %v1473 = vpack.c.b16 %v1230, %v1221
    %v1474 = vpack.c.b16 %v1231, %v1222
    %v1475 = vpack.c.b16 %v1232, %v1223
    %v1476 = vpack.c.b16 %v1233, %v1224
    %v1477 = vpack.c.b16 %v1234, %v1225
    %v1478 = vpack.c.b16 %v1235, %v1226
    %v1479 = vpack.c.b16 %v1236, %v1227
    %v1480 = vpack.c.b16 %v1237, %v1228
    %v1481 = vpack.c.b16 %v1247, %v1238
    %v1482 = vpack.c.b16 %v1248, %v1239
    %v1483 = vpack.c.b16 %v1249, %v1240
    %v1484 = vpack.c.b16 %v1250, %v1241
    %v1485 = vpack.c.b16 %v1251, %v1242
    %v1486 = vpack.c.b16 %v1252, %v1243
    %v1487 = vpack.c.b16 %v1253, %v1244
    %v1488 = vpack.c.b16 %v1254, %v1245
    %v1489 = vpack.c.b16 %v1255, %v1246
    %v1490 = vpack.c.b16 %v1265, %v1256
    %v1491 = vpack.c.b16 %v1266, %v1257
    %v1492 = vpack.c.b16 %v1267, %v1258
    %v1493 = vpack.c.b16 %v1268, %v1259
    %v1494 = vpack.c.b16 %v1269, %v1260
    %v1495 = vpack.c.b16 %v1270, %v1261
    %v1496 = vpack.c.b16 %v1271, %v1262
    %v1497 = vpack.c.b16 %v1272, %v1263
    %v1498 = vpack.c.b16 %v1273, %v1264
    %v1499 = vpack.c.b16 %v1283, %v1274
    %v1500 = vpack.c.b16 %v1284, %v1275
    %v1501 = vpack.c.b16 %v1285, %v1276
    %v1502 = vpack.c.b16 %v1286, %v1277
    %v1503 = vpack.c.b16 %v1287, %v1278
    %v1504 = vpack.c.b16 %v1288, %v1279
    %v1505 = vpack.c.b16 %v1289, %v1280
    %v1506 = vpack.c.b16 %v1290, %v1281
    %v1507 = vpack.c.b16 %v1291, %v1282
    %1724 = vmatprep.subr.bf16.mxu0 %v1293
    %1725 = vmatpush1.bf16.msra.mxu0 %v1292
    %1726 = vmatprep.subr.bf16.mxu0 %v1302
    %1727 = vmatpush1.bf16.msra.mxu0 %v1301
    %1728 = vmatprep.subr.bf16.mxu0 %v1311
    %1729 = vmatpush1.bf16.msra.mxu0 %v1310
    %1730 = vmatprep.subr.bf16.mxu0 %v1320
    %1731 = vmatpush1.bf16.msra.mxu0 %v1319
    %1732 = vmatprep.subr.bf16.mxu0 %v1329
    %1733 = vmatpush1.bf16.msra.mxu0 %v1328
    %1734 = vmatprep.subr.bf16.mxu0 %v1338
    %1735 = vmatpush1.bf16.msra.mxu0 %v1337
    %1736 = vmatprep.subr.bf16.mxu0 %v1347
    %1737 = vmatpush1.bf16.msra.mxu0 %v1346
    %1738 = vmatprep.subr.bf16.mxu0 %v1356
    %1739 = vmatpush1.bf16.msra.mxu0 %v1355
    %1740 = vmatprep.subr.bf16.mxu0 %v1365
    %1741 = vmatpush1.bf16.msra.mxu0 %v1364
    %1742 = vmatprep.subr.bf16.mxu0 %v1374
    %1743 = vmatpush1.bf16.msra.mxu0 %v1373
    %1744 = vmatprep.subr.bf16.mxu0 %v1383
    %1745 = vmatpush1.bf16.msra.mxu0 %v1382
    %1746 = vmatprep.subr.bf16.mxu0 %v1392
    %1747 = vmatpush1.bf16.msra.mxu0 %v1391
    %1748 = vmatprep.subr.bf16.mxu0 %v1401
    %1749 = vmatpush1.bf16.msra.mxu0 %v1400
    %1750 = vmatprep.subr.bf16.mxu0 %v1410
    %1751 = vmatpush1.bf16.msra.mxu0 %v1409
    %1752 = vmatprep.subr.bf16.mxu0 %v1419
    %1753 = vmatpush1.bf16.msra.mxu0 %v1418
    %1754 = vmatprep.subr.bf16.mxu0 %v1428
    %1755 = vmatpush1.bf16.msra.mxu0 %v1427
    %1756 = vmatprep.mubr.bf16.mxu0 %v525
    %1757 = vmatmul.mubr.bf16.gmra.mrb[0].mxu0 %v524
    %v1758 = vpop.f32.mrb[0].mxu0
    %v1759 = vadd.f32 0.0, %v1758
    %v1760 = vpop.f32.mrb[0].mxu0
    %v1761 = vadd.f32 0.0, %v1760
    %v1762 = vpop.f32.mrb[0].mxu0
    %v1763 = vadd.f32 0.0, %v1762
    %v1764 = vpop.f32.mrb[0].mxu0
    %v1765 = vadd.f32 0.0, %v1764
    %1766 = vmatprep.mubr.bf16.mxu0 %v528
    %1767 = vmatmul.mubr.bf16.gmra.mrb[0].mxu0 %v527
    %v1768 = vpop.f32.mrb[0].mxu0
    %v1769 = vadd.f32 0.0, %v1768
    %v1770 = vpop.f32.mrb[0].mxu0
    %v1771 = vadd.f32 0.0, %v1770
    %v1772 = vpop.f32.mrb[0].mxu0
    %v1773 = vadd.f32 0.0, %v1772
    %v1774 = vpop.f32.mrb[0].mxu0
    %v1775 = vadd.f32 0.0, %v1774
    %1776 = vmatprep.mubr.bf16.mxu0 %v531
    %1777 = vmatmul.mubr.bf16.gmra.mrb[0].mxu0 %v530
    %v1778 = vpop.f32.mrb[0].mxu0
    %v1779 = vadd.f32 0.0, %v1778
    %v1780 = vpop.f32.mrb[0].mxu0
    %v1781 = vadd.f32 0.0, %v1780
    %v1782 = vpop.f32.mrb[0].mxu0
    %v1783 = vadd.f32 0.0, %v1782
    %v1784 = vpop.f32.mrb[0].mxu0
    %v1785 = vadd.f32 0.0, %v1784
    %1786 = vmatprep.mubr.bf16.mxu0 %v534
    %1787 = vmatmul.mubr.bf16.gmra.mrb[0].mxu0 %v533
    %v1788 = vpop.f32.mrb[0].mxu0
    %v1789 = vadd.f32 0.0, %v1788
    %v1790 = vpop.f32.mrb[0].mxu0
    %v1791 = vadd.f32 0.0, %v1790
    %v1792 = vpop.f32.mrb[0].mxu0
    %v1793 = vadd.f32 0.0, %v1792
    %v1794 = vpop.f32.mrb[0].mxu0
    %v1795 = vadd.f32 0.0, %v1794
    %1796 = vmatprep.mubr.bf16.mxu0 %v537
    %1797 = vmatmul.mubr.bf16.gmra.mrb[0].mxu0 %v536
    %v1798 = vpop.f32.mrb[0].mxu0
    %v1799 = vadd.f32 0.0, %v1798
    %v1800 = vpop.f32.mrb[0].mxu0
    %v1801 = vadd.f32 0.0, %v1800
    %v1802 = vpop.f32.mrb[0].mxu0
    %v1803 = vadd.f32 0.0, %v1802
    %v1804 = vpop.f32.mrb[0].mxu0
    %v1805 = vadd.f32 0.0, %v1804
    %1806 = vmatprep.mubr.bf16.mxu0 %v540
    %1807 = vmatmul.mubr.bf16.gmra.mrb[0].mxu0 %v539
    %v1808 = vpop.f32.mrb[0].mxu0
    %v1809 = vadd.f32 0.0, %v1808
    %v1810 = vpop.f32.mrb[0].mxu0
    %v1811 = vadd.f32 0.0, %v1810
    %v1812 = vpop.f32.mrb[0].mxu0
    %v1813 = vadd.f32 0.0, %v1812
    %v1814 = vpop.f32.mrb[0].mxu0
    %v1815 = vadd.f32 0.0, %v1814
    %1816 = vmatprep.mubr.bf16.mxu0 %v543
    %1817 = vmatmul.mubr.bf16.gmra.mrb[0].mxu0 %v542
    %v1818 = vpop.f32.mrb[0].mxu0
    %v1819 = vadd.f32 0.0, %v1818
    %v1820 = vpop.f32.mrb[0].mxu0
    %v1821 = vadd.f32 0.0, %v1820
    %v1822 = vpop.f32.mrb[0].mxu0
    %v1823 = vadd.f32 0.0, %v1822
    %v1824 = vpop.f32.mrb[0].mxu0
    %v1825 = vadd.f32 0.0, %v1824
    %1826 = vmatprep.mubr.bf16.mxu0 %v546
    %1827 = vmatmul.mubr.bf16.gmra.mrb[0].mxu0 %v545
    %v1828 = vpop.f32.mrb[0].mxu0
    %v1829 = vadd.f32 0.0, %v1828
    %v1830 = vpop.f32.mrb[0].mxu0
    %v1831 = vadd.f32 0.0, %v1830
    %v1832 = vpop.f32.mrb[0].mxu0
    %v1833 = vadd.f32 0.0, %v1832
    %v1834 = vpop.f32.mrb[0].mxu0
    %v1835 = vadd.f32 0.0, %v1834
    %1836 = vmatprep.mubr.bf16.mxu0 %v549
    %1837 = vmatmul.mubr.bf16.gmra.mrb[0].mxu0 %v548
    %v1838 = vpop.f32.mrb[0].mxu0
    %v1839 = vadd.f32 0.0, %v1838
    %v1840 = vpop.f32.mrb[0].mxu0
    %v1841 = vadd.f32 0.0, %v1840
    %v1842 = vpop.f32.mrb[0].mxu0
    %v1843 = vadd.f32 0.0, %v1842
    %v1844 = vpop.f32.mrb[0].mxu0
    %v1845 = vadd.f32 0.0, %v1844
    %1846 = vmatprep.mubr.bf16.mxu0 %v552
    %1847 = vmatmul.mubr.bf16.gmra.mrb[0].mxu0 %v551
    %v1848 = vpop.f32.mrb[0].mxu0
    %v1849 = vadd.f32 0.0, %v1848
    %v1850 = vpop.f32.mrb[0].mxu0
    %v1851 = vadd.f32 0.0, %v1850
    %v1852 = vpop.f32.mrb[0].mxu0
    %v1853 = vadd.f32 0.0, %v1852
    %v1854 = vpop.f32.mrb[0].mxu0
    %v1855 = vadd.f32 0.0, %v1854
    %1856 = vmatprep.mubr.bf16.mxu0 %v555
    %1857 = vmatmul.mubr.bf16.gmra.mrb[0].mxu0 %v554
    %v1858 = vpop.f32.mrb[0].mxu0
    %v1859 = vadd.f32 0.0, %v1858
    %v1860 = vpop.f32.mrb[0].mxu0
    %v1861 = vadd.f32 0.0, %v1860
    %v1862 = vpop.f32.mrb[0].mxu0
    %v1863 = vadd.f32 0.0, %v1862
    %v1864 = vpop.f32.mrb[0].mxu0
    %v1865 = vadd.f32 0.0, %v1864
    %1866 = vmatprep.mubr.bf16.mxu0 %v558
    %1867 = vmatmul.mubr.bf16.gmra.mrb[0].mxu0 %v557
    %v1868 = vpop.f32.mrb[0].mxu0
    %v1869 = vadd.f32 0.0, %v1868
    %v1870 = vpop.f32.mrb[0].mxu0
    %v1871 = vadd.f32 0.0, %v1870
    %v1872 = vpop.f32.mrb[0].mxu0
    %v1873 = vadd.f32 0.0, %v1872
    %v1874 = vpop.f32.mrb[0].mxu0
    %v1875 = vadd.f32 0.0, %v1874
    %1876 = vmatprep.mubr.bf16.mxu0 %v561
    %1877 = vmatmul.mubr.bf16.gmra.mrb[0].mxu0 %v560
    %v1878 = vpop.f32.mrb[0].mxu0
    %v1879 = vadd.f32 0.0, %v1878
    %v1880 = vpop.f32.mrb[0].mxu0
    %v1881 = vadd.f32 0.0, %v1880
    %v1882 = vpop.f32.mrb[0].mxu0
    %v1883 = vadd.f32 0.0, %v1882
    %v1884 = vpop.f32.mrb[0].mxu0
    %v1885 = vadd.f32 0.0, %v1884
    %1886 = vmatprep.mubr.bf16.mxu0 %v564
    %1887 = vmatmul.mubr.bf16.gmra.mrb[0].mxu0 %v563
    %v1888 = vpop.f32.mrb[0].mxu0
    %v1889 = vadd.f32 0.0, %v1888
    %v1890 = vpop.f32.mrb[0].mxu0
    %v1891 = vadd.f32 0.0, %v1890
    %v1892 = vpop.f32.mrb[0].mxu0
    %v1893 = vadd.f32 0.0, %v1892
    %v1894 = vpop.f32.mrb[0].mxu0
    %v1895 = vadd.f32 0.0, %v1894
    %1896 = vmatprep.mubr.bf16.mxu0 %v567
    %1897 = vmatmul.mubr.bf16.gmra.mrb[0].mxu0 %v566
    %v1898 = vpop.f32.mrb[0].mxu0
    %v1899 = vadd.f32 0.0, %v1898
    %v1900 = vpop.f32.mrb[0].mxu0
    %v1901 = vadd.f32 0.0, %v1900
    %v1902 = vpop.f32.mrb[0].mxu0
    %v1903 = vadd.f32 0.0, %v1902
    %v1904 = vpop.f32.mrb[0].mxu0
    %v1905 = vadd.f32 0.0, %v1904
    %1906 = vmatprep.mubr.bf16.mxu0 %v570
    %1907 = vmatmul.mubr.bf16.gmra.mrb[0].mxu0 %v569
    %v1908 = vpop.f32.mrb[0].mxu0
    %v1909 = vadd.f32 0.0, %v1908
    %v1910 = vpop.f32.mrb[0].mxu0
    %v1911 = vadd.f32 0.0, %v1910
    %v1912 = vpop.f32.mrb[0].mxu0
    %v1913 = vadd.f32 0.0, %v1912
    %v1914 = vpop.f32.mrb[0].mxu0
    %v1915 = vadd.f32 0.0, %v1914
    %1916 = vdwg.mxu0
    %1917 = vmatprep.subr.bf16.mxu0 %v1437
    %1918 = vmatpush1.bf16.msra.mxu0 %v1436
    %1919 = vmatprep.subr.bf16.mxu0 %v1446
    %1920 = vmatpush1.bf16.msra.mxu0 %v1445
    %1921 = vmatprep.subr.bf16.mxu0 %v1455
    %1922 = vmatpush1.bf16.msra.mxu0 %v1454
    %1923 = vmatprep.subr.bf16.mxu0 %v1464
    %1924 = vmatpush1.bf16.msra.mxu0 %v1463
    %1925 = vmatprep.subr.bf16.mxu0 %v1473
    %1926 = vmatpush1.bf16.msra.mxu0 %v1472
    %1927 = vmatprep.subr.bf16.mxu0 %v1482
    %1928 = vmatpush1.bf16.msra.mxu0 %v1481
    %1929 = vmatprep.subr.bf16.mxu0 %v1491
    %1930 = vmatpush1.bf16.msra.mxu0 %v1490
    %1931 = vmatprep.subr.bf16.mxu0 %v1500
    %1932 = vmatpush1.bf16.msra.mxu0 %v1499
    %1933 = vmatprep.subr.bf16.mxu0 0
    %1934 = vmatpush1.bf16.msra.mxu0 0
    %1935 = vmatprep.subr.bf16.mxu0 0
    %1936 = vmatpush1.bf16.msra.mxu0 0
    %1937 = vmatprep.subr.bf16.mxu0 0
    %1938 = vmatpush1.bf16.msra.mxu0 0
    %1939 = vmatprep.subr.bf16.mxu0 0
    %1940 = vmatpush1.bf16.msra.mxu0 0
    %1941 = vmatprep.subr.bf16.mxu0 0
    %1942 = vmatpush1.bf16.msra.mxu0 0
    %1943 = vmatprep.subr.bf16.mxu0 0
    %1944 = vmatpush1.bf16.msra.mxu0 0
    %1945 = vmatprep.subr.bf16.mxu0 0
    %1946 = vmatpush1.bf16.msra.mxu0 0
    %1947 = vmatprep.subr.bf16.mxu0 0
    %1948 = vmatpush1.bf16.msra.mxu0 0
    %1949 = vmatprep.mubr.bf16.mxu0 0
    %1950 = vmatmul.mubr.bf16.gmra.mrb[0].mxu0 %v526
    %v1951 = vpop.f32.mrb[0].mxu0
    %v1952 = vadd.f32 %v1759, %v1951
    %v1953 = vpop.f32.mrb[0].mxu0
    %v1954 = vadd.f32 %v1761, %v1953
    %v1955 = vpop.f32.mrb[0].mxu0
    %v1956 = vadd.f32 %v1763, %v1955
    %v1957 = vpop.f32.mrb[0].mxu0
    %v1958 = vadd.f32 %v1765, %v1957
    %1959 = vmatprep.mubr.bf16.mxu0 0
    %1960 = vmatmul.mubr.bf16.gmra.mrb[0].mxu0 %v529
    %v1961 = vpop.f32.mrb[0].mxu0
    %v1962 = vadd.f32 %v1769, %v1961
    %v1963 = vpop.f32.mrb[0].mxu0
    %v1964 = vadd.f32 %v1771, %v1963
    %v1965 = vpop.f32.mrb[0].mxu0
    %v1966 = vadd.f32 %v1773, %v1965
    %v1967 = vpop.f32.mrb[0].mxu0
    %v1968 = vadd.f32 %v1775, %v1967
    %1969 = vmatprep.mubr.bf16.mxu0 0
    %1970 = vmatmul.mubr.bf16.gmra.mrb[0].mxu0 %v532
    %v1971 = vpop.f32.mrb[0].mxu0
    %v1972 = vadd.f32 %v1779, %v1971
    %v1973 = vpop.f32.mrb[0].mxu0
    %v1974 = vadd.f32 %v1781, %v1973
    %v1975 = vpop.f32.mrb[0].mxu0
    %v1976 = vadd.f32 %v1783, %v1975
    %v1977 = vpop.f32.mrb[0].mxu0
    %v1978 = vadd.f32 %v1785, %v1977
    %1979 = vmatprep.mubr.bf16.mxu0 0
    %1980 = vmatmul.mubr.bf16.gmra.mrb[0].mxu0 %v535
    %v1981 = vpop.f32.mrb[0].mxu0
    %v1982 = vadd.f32 %v1789, %v1981
    %v1983 = vpop.f32.mrb[0].mxu0
    %v1984 = vadd.f32 %v1791, %v1983
    %v1985 = vpop.f32.mrb[0].mxu0
    %v1986 = vadd.f32 %v1793, %v1985
    %v1987 = vpop.f32.mrb[0].mxu0
    %v1988 = vadd.f32 %v1795, %v1987
    %1989 = vmatprep.mubr.bf16.mxu0 0
    %1990 = vmatmul.mubr.bf16.gmra.mrb[0].mxu0 %v538
    %v1991 = vpop.f32.mrb[0].mxu0
    %v1992 = vadd.f32 %v1799, %v1991
    %v1993 = vpop.f32.mrb[0].mxu0
    %v1994 = vadd.f32 %v1801, %v1993
    %v1995 = vpop.f32.mrb[0].mxu0
    %v1996 = vadd.f32 %v1803, %v1995
    %v1997 = vpop.f32.mrb[0].mxu0
    %v1998 = vadd.f32 %v1805, %v1997
    %1999 = vmatprep.mubr.bf16.mxu0 0
    %2000 = vmatmul.mubr.bf16.gmra.mrb[0].mxu0 %v541
    %v2001 = vpop.f32.mrb[0].mxu0
    %v2002 = vadd.f32 %v1809, %v2001
    %v2003 = vpop.f32.mrb[0].mxu0
    %v2004 = vadd.f32 %v1811, %v2003
    %v2005 = vpop.f32.mrb[0].mxu0
    %v2006 = vadd.f32 %v1813, %v2005
    %v2007 = vpop.f32.mrb[0].mxu0
    %v2008 = vadd.f32 %v1815, %v2007
    %2009 = vmatprep.mubr.bf16.mxu0 0
    %2010 = vmatmul.mubr.bf16.gmra.mrb[0].mxu0 %v544
    %v2011 = vpop.f32.mrb[0].mxu0
    %v2012 = vadd.f32 %v1819, %v2011
    %v2013 = vpop.f32.mrb[0].mxu0
    %v2014 = vadd.f32 %v1821, %v2013
    %v2015 = vpop.f32.mrb[0].mxu0
    %v2016 = vadd.f32 %v1823, %v2015
    %v2017 = vpop.f32.mrb[0].mxu0
    %v2018 = vadd.f32 %v1825, %v2017
    %2019 = vmatprep.mubr.bf16.mxu0 0
    %2020 = vmatmul.mubr.bf16.gmra.mrb[0].mxu0 %v547
    %v2021 = vpop.f32.mrb[0].mxu0
    %v2022 = vadd.f32 %v1829, %v2021
    %v2023 = vpop.f32.mrb[0].mxu0
    %v2024 = vadd.f32 %v1831, %v2023
    %v2025 = vpop.f32.mrb[0].mxu0
    %v2026 = vadd.f32 %v1833, %v2025
    %v2027 = vpop.f32.mrb[0].mxu0
    %v2028 = vadd.f32 %v1835, %v2027
    %2029 = vmatprep.mubr.bf16.mxu0 0
    %2030 = vmatmul.mubr.bf16.gmra.mrb[0].mxu0 %v550
    %v2031 = vpop.f32.mrb[0].mxu0
    %v2032 = vadd.f32 %v1839, %v2031
    %v2033 = vpop.f32.mrb[0].mxu0
    %v2034 = vadd.f32 %v1841, %v2033
    %v2035 = vpop.f32.mrb[0].mxu0
    %v2036 = vadd.f32 %v1843, %v2035
    %v2037 = vpop.f32.mrb[0].mxu0
    %v2038 = vadd.f32 %v1845, %v2037
    %2039 = vmatprep.mubr.bf16.mxu0 0
    %2040 = vmatmul.mubr.bf16.gmra.mrb[0].mxu0 %v553
    %v2041 = vpop.f32.mrb[0].mxu0
    %v2042 = vadd.f32 %v1849, %v2041
    %v2043 = vpop.f32.mrb[0].mxu0
    %v2044 = vadd.f32 %v1851, %v2043
    %v2045 = vpop.f32.mrb[0].mxu0
    %v2046 = vadd.f32 %v1853, %v2045
    %v2047 = vpop.f32.mrb[0].mxu0
    %v2048 = vadd.f32 %v1855, %v2047
    %2049 = vmatprep.mubr.bf16.mxu0 0
    %2050 = vmatmul.mubr.bf16.gmra.mrb[0].mxu0 %v556
    %v2051 = vpop.f32.mrb[0].mxu0
    %v2052 = vadd.f32 %v1859, %v2051
    %v2053 = vpop.f32.mrb[0].mxu0
    %v2054 = vadd.f32 %v1861, %v2053
    %v2055 = vpop.f32.mrb[0].mxu0
    %v2056 = vadd.f32 %v1863, %v2055
    %v2057 = vpop.f32.mrb[0].mxu0
    %v2058 = vadd.f32 %v1865, %v2057
    %2059 = vmatprep.mubr.bf16.mxu0 0
    %2060 = vmatmul.mubr.bf16.gmra.mrb[0].mxu0 %v559
    %v2061 = vpop.f32.mrb[0].mxu0
    %v2062 = vadd.f32 %v1869, %v2061
    %v2063 = vpop.f32.mrb[0].mxu0
    %v2064 = vadd.f32 %v1871, %v2063
    %v2065 = vpop.f32.mrb[0].mxu0
    %v2066 = vadd.f32 %v1873, %v2065
    %v2067 = vpop.f32.mrb[0].mxu0
    %v2068 = vadd.f32 %v1875, %v2067
    %2069 = vmatprep.mubr.bf16.mxu0 0
    %2070 = vmatmul.mubr.bf16.gmra.mrb[0].mxu0 %v562
    %v2071 = vpop.f32.mrb[0].mxu0
    %v2072 = vadd.f32 %v1879, %v2071
    %v2073 = vpop.f32.mrb[0].mxu0
    %v2074 = vadd.f32 %v1881, %v2073
    %v2075 = vpop.f32.mrb[0].mxu0
    %v2076 = vadd.f32 %v1883, %v2075
    %v2077 = vpop.f32.mrb[0].mxu0
    %v2078 = vadd.f32 %v1885, %v2077
    %2079 = vmatprep.mubr.bf16.mxu0 0
    %2080 = vmatmul.mubr.bf16.gmra.mrb[0].mxu0 %v565
    %v2081 = vpop.f32.mrb[0].mxu0
    %v2082 = vadd.f32 %v1889, %v2081
    %v2083 = vpop.f32.mrb[0].mxu0
    %v2084 = vadd.f32 %v1891, %v2083
    %v2085 = vpop.f32.mrb[0].mxu0
    %v2086 = vadd.f32 %v1893, %v2085
    %v2087 = vpop.f32.mrb[0].mxu0
    %v2088 = vadd.f32 %v1895, %v2087
    %2089 = vmatprep.mubr.bf16.mxu0 0
    %2090 = vmatmul.mubr.bf16.gmra.mrb[0].mxu0 %v568
    %v2091 = vpop.f32.mrb[0].mxu0
    %v2092 = vadd.f32 %v1899, %v2091
    %v2093 = vpop.f32.mrb[0].mxu0
    %v2094 = vadd.f32 %v1901, %v2093
    %v2095 = vpop.f32.mrb[0].mxu0
    %v2096 = vadd.f32 %v1903, %v2095
    %v2097 = vpop.f32.mrb[0].mxu0
    %v2098 = vadd.f32 %v1905, %v2097
    %2099 = vmatprep.mubr.bf16.mxu0 0
    %2100 = vmatmul.mubr.bf16.gmra.mrb[0].mxu0 %v571
    %v2101 = vpop.f32.mrb[0].mxu0
    %v2102 = vadd.f32 %v1909, %v2101
    %v2103 = vpop.f32.mrb[0].mxu0
    %v2104 = vadd.f32 %v1911, %v2103
    %v2105 = vpop.f32.mrb[0].mxu0
    %v2106 = vadd.f32 %v1913, %v2105
    %v2107 = vpop.f32.mrb[0].mxu0
    %v2108 = vadd.f32 %v1915, %v2107
    %2109 = vdwg.mxu0
    %2110 = vmatprep.subr.bf16.mxu0 %v1295
    %2111 = vmatpush1.bf16.msra.mxu0 %v1294
    %2112 = vmatprep.subr.bf16.mxu0 %v1304
    %2113 = vmatpush1.bf16.msra.mxu0 %v1303
    %2114 = vmatprep.subr.bf16.mxu0 %v1313
    %2115 = vmatpush1.bf16.msra.mxu0 %v1312
    %2116 = vmatprep.subr.bf16.mxu0 %v1322
    %2117 = vmatpush1.bf16.msra.mxu0 %v1321
    %2118 = vmatprep.subr.bf16.mxu0 %v1331
    %2119 = vmatpush1.bf16.msra.mxu0 %v1330
    %2120 = vmatprep.subr.bf16.mxu0 %v1340
    %2121 = vmatpush1.bf16.msra.mxu0 %v1339
    %2122 = vmatprep.subr.bf16.mxu0 %v1349
    %2123 = vmatpush1.bf16.msra.mxu0 %v1348
    %2124 = vmatprep.subr.bf16.mxu0 %v1358
    %2125 = vmatpush1.bf16.msra.mxu0 %v1357
    %2126 = vmatprep.subr.bf16.mxu0 %v1367
    %2127 = vmatpush1.bf16.msra.mxu0 %v1366
    %2128 = vmatprep.subr.bf16.mxu0 %v1376
    %2129 = vmatpush1.bf16.msra.mxu0 %v1375
    %2130 = vmatprep.subr.bf16.mxu0 %v1385
    %2131 = vmatpush1.bf16.msra.mxu0 %v1384
    %2132 = vmatprep.subr.bf16.mxu0 %v1394
    %2133 = vmatpush1.bf16.msra.mxu0 %v1393
    %2134 = vmatprep.subr.bf16.mxu0 %v1403
    %2135 = vmatpush1.bf16.msra.mxu0 %v1402
    %2136 = vmatprep.subr.bf16.mxu0 %v1412
    %2137 = vmatpush1.bf16.msra.mxu0 %v1411
    %2138 = vmatprep.subr.bf16.mxu0 %v1421
    %2139 = vmatpush1.bf16.msra.mxu0 %v1420
    %2140 = vmatprep.subr.bf16.mxu0 %v1430
    %2141 = vmatpush1.bf16.msra.mxu0 %v1429
    %2142 = vmatprep.mubr.bf16.mxu0 %v525
    %2143 = vmatmul.mubr.bf16.gmra.mrb[0].mxu0 %v524
    %v2144 = vpop.f32.mrb[0].mxu0
    %v2145 = vadd.f32 0.0, %v2144
    %v2146 = vpop.f32.mrb[0].mxu0
    %v2147 = vadd.f32 0.0, %v2146
    %v2148 = vpop.f32.mrb[0].mxu0
    %v2149 = vadd.f32 0.0, %v2148
    %v2150 = vpop.f32.mrb[0].mxu0
    %v2151 = vadd.f32 0.0, %v2150
    %2152 = vmatprep.mubr.bf16.mxu0 %v528
    %2153 = vmatmul.mubr.bf16.gmra.mrb[0].mxu0 %v527
    %v2154 = vpop.f32.mrb[0].mxu0
    %v2155 = vadd.f32 0.0, %v2154
    %v2156 = vpop.f32.mrb[0].mxu0
    %v2157 = vadd.f32 0.0, %v2156
    %v2158 = vpop.f32.mrb[0].mxu0
    %v2159 = vadd.f32 0.0, %v2158
    %v2160 = vpop.f32.mrb[0].mxu0
    %v2161 = vadd.f32 0.0, %v2160
    %2162 = vmatprep.mubr.bf16.mxu0 %v531
    %2163 = vmatmul.mubr.bf16.gmra.mrb[0].mxu0 %v530
    %v2164 = vpop.f32.mrb[0].mxu0
    %v2165 = vadd.f32 0.0, %v2164
    %v2166 = vpop.f32.mrb[0].mxu0
    %v2167 = vadd.f32 0.0, %v2166
    %v2168 = vpop.f32.mrb[0].mxu0
    %v2169 = vadd.f32 0.0, %v2168
    %v2170 = vpop.f32.mrb[0].mxu0
    %v2171 = vadd.f32 0.0, %v2170
    %2172 = vmatprep.mubr.bf16.mxu0 %v534
    %2173 = vmatmul.mubr.bf16.gmra.mrb[0].mxu0 %v533
    %v2174 = vpop.f32.mrb[0].mxu0
    %v2175 = vadd.f32 0.0, %v2174
    %v2176 = vpop.f32.mrb[0].mxu0
    %v2177 = vadd.f32 0.0, %v2176
    %v2178 = vpop.f32.mrb[0].mxu0
    %v2179 = vadd.f32 0.0, %v2178
    %v2180 = vpop.f32.mrb[0].mxu0
    %v2181 = vadd.f32 0.0, %v2180
    %2182 = vmatprep.mubr.bf16.mxu0 %v537
    %2183 = vmatmul.mubr.bf16.gmra.mrb[0].mxu0 %v536
    %v2184 = vpop.f32.mrb[0].mxu0
    %v2185 = vadd.f32 0.0, %v2184
    %v2186 = vpop.f32.mrb[0].mxu0
    %v2187 = vadd.f32 0.0, %v2186
    %v2188 = vpop.f32.mrb[0].mxu0
    %v2189 = vadd.f32 0.0, %v2188
    %v2190 = vpop.f32.mrb[0].mxu0
    %v2191 = vadd.f32 0.0, %v2190
    %2192 = vmatprep.mubr.bf16.mxu0 %v540
    %2193 = vmatmul.mubr.bf16.gmra.mrb[0].mxu0 %v539
    %v2194 = vpop.f32.mrb[0].mxu0
    %v2195 = vadd.f32 0.0, %v2194
    %v2196 = vpop.f32.mrb[0].mxu0
    %v2197 = vadd.f32 0.0, %v2196
    %v2198 = vpop.f32.mrb[0].mxu0
    %v2199 = vadd.f32 0.0, %v2198
    %v2200 = vpop.f32.mrb[0].mxu0
    %v2201 = vadd.f32 0.0, %v2200
    %2202 = vmatprep.mubr.bf16.mxu0 %v543
    %2203 = vmatmul.mubr.bf16.gmra.mrb[0].mxu0 %v542
    %v2204 = vpop.f32.mrb[0].mxu0
    %v2205 = vadd.f32 0.0, %v2204
    %v2206 = vpop.f32.mrb[0].mxu0
    %v2207 = vadd.f32 0.0, %v2206
    %v2208 = vpop.f32.mrb[0].mxu0
    %v2209 = vadd.f32 0.0, %v2208
    %v2210 = vpop.f32.mrb[0].mxu0
    %v2211 = vadd.f32 0.0, %v2210
    %2212 = vmatprep.mubr.bf16.mxu0 %v546
    %2213 = vmatmul.mubr.bf16.gmra.mrb[0].mxu0 %v545
    %v2214 = vpop.f32.mrb[0].mxu0
    %v2215 = vadd.f32 0.0, %v2214
    %v2216 = vpop.f32.mrb[0].mxu0
    %v2217 = vadd.f32 0.0, %v2216
    %v2218 = vpop.f32.mrb[0].mxu0
    %v2219 = vadd.f32 0.0, %v2218
    %v2220 = vpop.f32.mrb[0].mxu0
    %v2221 = vadd.f32 0.0, %v2220
    %2222 = vmatprep.mubr.bf16.mxu0 %v549
    %2223 = vmatmul.mubr.bf16.gmra.mrb[0].mxu0 %v548
    %v2224 = vpop.f32.mrb[0].mxu0
    %v2225 = vadd.f32 0.0, %v2224
    %v2226 = vpop.f32.mrb[0].mxu0
    %v2227 = vadd.f32 0.0, %v2226
    %v2228 = vpop.f32.mrb[0].mxu0
    %v2229 = vadd.f32 0.0, %v2228
    %v2230 = vpop.f32.mrb[0].mxu0
    %v2231 = vadd.f32 0.0, %v2230
    %2232 = vmatprep.mubr.bf16.mxu0 %v552
    %2233 = vmatmul.mubr.bf16.gmra.mrb[0].mxu0 %v551
    %v2234 = vpop.f32.mrb[0].mxu0
    %v2235 = vadd.f32 0.0, %v2234
    %v2236 = vpop.f32.mrb[0].mxu0
    %v2237 = vadd.f32 0.0, %v2236
    %v2238 = vpop.f32.mrb[0].mxu0
    %v2239 = vadd.f32 0.0, %v2238
    %v2240 = vpop.f32.mrb[0].mxu0
    %v2241 = vadd.f32 0.0, %v2240
    %2242 = vmatprep.mubr.bf16.mxu0 %v555
    %2243 = vmatmul.mubr.bf16.gmra.mrb[0].mxu0 %v554
    %v2244 = vpop.f32.mrb[0].mxu0
    %v2245 = vadd.f32 0.0, %v2244
    %v2246 = vpop.f32.mrb[0].mxu0
    %v2247 = vadd.f32 0.0, %v2246
    %v2248 = vpop.f32.mrb[0].mxu0
    %v2249 = vadd.f32 0.0, %v2248
    %v2250 = vpop.f32.mrb[0].mxu0
    %v2251 = vadd.f32 0.0, %v2250
    %2252 = vmatprep.mubr.bf16.mxu0 %v558
    %2253 = vmatmul.mubr.bf16.gmra.mrb[0].mxu0 %v557
    %v2254 = vpop.f32.mrb[0].mxu0
    %v2255 = vadd.f32 0.0, %v2254
    %v2256 = vpop.f32.mrb[0].mxu0
    %v2257 = vadd.f32 0.0, %v2256
    %v2258 = vpop.f32.mrb[0].mxu0
    %v2259 = vadd.f32 0.0, %v2258
    %v2260 = vpop.f32.mrb[0].mxu0
    %v2261 = vadd.f32 0.0, %v2260
    %2262 = vmatprep.mubr.bf16.mxu0 %v561
    %2263 = vmatmul.mubr.bf16.gmra.mrb[0].mxu0 %v560
    %v2264 = vpop.f32.mrb[0].mxu0
    %v2265 = vadd.f32 0.0, %v2264
    %v2266 = vpop.f32.mrb[0].mxu0
    %v2267 = vadd.f32 0.0, %v2266
    %v2268 = vpop.f32.mrb[0].mxu0
    %v2269 = vadd.f32 0.0, %v2268
    %v2270 = vpop.f32.mrb[0].mxu0
    %v2271 = vadd.f32 0.0, %v2270
    %2272 = vmatprep.mubr.bf16.mxu0 %v564
    %2273 = vmatmul.mubr.bf16.gmra.mrb[0].mxu0 %v563
    %v2274 = vpop.f32.mrb[0].mxu0
    %v2275 = vadd.f32 0.0, %v2274
    %v2276 = vpop.f32.mrb[0].mxu0
    %v2277 = vadd.f32 0.0, %v2276
    %v2278 = vpop.f32.mrb[0].mxu0
    %v2279 = vadd.f32 0.0, %v2278
    %v2280 = vpop.f32.mrb[0].mxu0
    %v2281 = vadd.f32 0.0, %v2280
    %2282 = vmatprep.mubr.bf16.mxu0 %v567
    %2283 = vmatmul.mubr.bf16.gmra.mrb[0].mxu0 %v566
    %v2284 = vpop.f32.mrb[0].mxu0
    %v2285 = vadd.f32 0.0, %v2284
    %v2286 = vpop.f32.mrb[0].mxu0
    %v2287 = vadd.f32 0.0, %v2286
    %v2288 = vpop.f32.mrb[0].mxu0
    %v2289 = vadd.f32 0.0, %v2288
    %v2290 = vpop.f32.mrb[0].mxu0
    %v2291 = vadd.f32 0.0, %v2290
    %2292 = vmatprep.mubr.bf16.mxu0 %v570
    %2293 = vmatmul.mubr.bf16.gmra.mrb[0].mxu0 %v569
    %v2294 = vpop.f32.mrb[0].mxu0
    %v2295 = vadd.f32 0.0, %v2294
    %v2296 = vpop.f32.mrb[0].mxu0
    %v2297 = vadd.f32 0.0, %v2296
    %v2298 = vpop.f32.mrb[0].mxu0
    %v2299 = vadd.f32 0.0, %v2298
    %v2300 = vpop.f32.mrb[0].mxu0
    %v2301 = vadd.f32 0.0, %v2300
    %2302 = vdwg.mxu0
    %2303 = vmatprep.subr.bf16.mxu0 %v1439
    %2304 = vmatpush1.bf16.msra.mxu0 %v1438
    %2305 = vmatprep.subr.bf16.mxu0 %v1448
    %2306 = vmatpush1.bf16.msra.mxu0 %v1447
    %2307 = vmatprep.subr.bf16.mxu0 %v1457
    %2308 = vmatpush1.bf16.msra.mxu0 %v1456
    %2309 = vmatprep.subr.bf16.mxu0 %v1466
    %2310 = vmatpush1.bf16.msra.mxu0 %v1465
    %2311 = vmatprep.subr.bf16.mxu0 %v1475
    %2312 = vmatpush1.bf16.msra.mxu0 %v1474
    %2313 = vmatprep.subr.bf16.mxu0 %v1484
    %2314 = vmatpush1.bf16.msra.mxu0 %v1483
    %2315 = vmatprep.subr.bf16.mxu0 %v1493
    %2316 = vmatpush1.bf16.msra.mxu0 %v1492
    %2317 = vmatprep.subr.bf16.mxu0 %v1502
    %2318 = vmatpush1.bf16.msra.mxu0 %v1501
    %2319 = vmatprep.subr.bf16.mxu0 0
    %2320 = vmatpush1.bf16.msra.mxu0 0
    %2321 = vmatprep.subr.bf16.mxu0 0
    %2322 = vmatpush1.bf16.msra.mxu0 0
    %2323 = vmatprep.subr.bf16.mxu0 0
    %2324 = vmatpush1.bf16.msra.mxu0 0
    %2325 = vmatprep.subr.bf16.mxu0 0
    %2326 = vmatpush1.bf16.msra.mxu0 0
    %2327 = vmatprep.subr.bf16.mxu0 0
    %2328 = vmatpush1.bf16.msra.mxu0 0
    %2329 = vmatprep.subr.bf16.mxu0 0
    %2330 = vmatpush1.bf16.msra.mxu0 0
    %2331 = vmatprep.subr.bf16.mxu0 0
    %2332 = vmatpush1.bf16.msra.mxu0 0
    %2333 = vmatprep.subr.bf16.mxu0 0
    %2334 = vmatpush1.bf16.msra.mxu0 0
    %2335 = vmatprep.mubr.bf16.mxu0 0
    %2336 = vmatmul.mubr.bf16.gmra.mrb[0].mxu0 %v526
    %v2337 = vpop.f32.mrb[0].mxu0
    %v2338 = vadd.f32 %v2145, %v2337
    %v2339 = vpop.f32.mrb[0].mxu0
    %v2340 = vadd.f32 %v2147, %v2339
    %v2341 = vpop.f32.mrb[0].mxu0
    %v2342 = vadd.f32 %v2149, %v2341
    %v2343 = vpop.f32.mrb[0].mxu0
    %v2344 = vadd.f32 %v2151, %v2343
    %2345 = vmatprep.mubr.bf16.mxu0 0
    %2346 = vmatmul.mubr.bf16.gmra.mrb[0].mxu0 %v529
    %v2347 = vpop.f32.mrb[0].mxu0
    %v2348 = vadd.f32 %v2155, %v2347
    %v2349 = vpop.f32.mrb[0].mxu0
    %v2350 = vadd.f32 %v2157, %v2349
    %v2351 = vpop.f32.mrb[0].mxu0
    %v2352 = vadd.f32 %v2159, %v2351
    %v2353 = vpop.f32.mrb[0].mxu0
    %v2354 = vadd.f32 %v2161, %v2353
    %2355 = vmatprep.mubr.bf16.mxu0 0
    %2356 = vmatmul.mubr.bf16.gmra.mrb[0].mxu0 %v532
    %v2357 = vpop.f32.mrb[0].mxu0
    %v2358 = vadd.f32 %v2165, %v2357
    %v2359 = vpop.f32.mrb[0].mxu0
    %v2360 = vadd.f32 %v2167, %v2359
    %v2361 = vpop.f32.mrb[0].mxu0
    %v2362 = vadd.f32 %v2169, %v2361
    %v2363 = vpop.f32.mrb[0].mxu0
    %v2364 = vadd.f32 %v2171, %v2363
    %2365 = vmatprep.mubr.bf16.mxu0 0
    %2366 = vmatmul.mubr.bf16.gmra.mrb[0].mxu0 %v535
    %v2367 = vpop.f32.mrb[0].mxu0
    %v2368 = vadd.f32 %v2175, %v2367
    %v2369 = vpop.f32.mrb[0].mxu0
    %v2370 = vadd.f32 %v2177, %v2369
    %v2371 = vpop.f32.mrb[0].mxu0
    %v2372 = vadd.f32 %v2179, %v2371
    %v2373 = vpop.f32.mrb[0].mxu0
    %v2374 = vadd.f32 %v2181, %v2373
    %2375 = vmatprep.mubr.bf16.mxu0 0
    %2376 = vmatmul.mubr.bf16.gmra.mrb[0].mxu0 %v538
    %v2377 = vpop.f32.mrb[0].mxu0
    %v2378 = vadd.f32 %v2185, %v2377
    %v2379 = vpop.f32.mrb[0].mxu0
    %v2380 = vadd.f32 %v2187, %v2379
    %v2381 = vpop.f32.mrb[0].mxu0
    %v2382 = vadd.f32 %v2189, %v2381
    %v2383 = vpop.f32.mrb[0].mxu0
    %v2384 = vadd.f32 %v2191, %v2383
    %2385 = vmatprep.mubr.bf16.mxu0 0
    %2386 = vmatmul.mubr.bf16.gmra.mrb[0].mxu0 %v541
    %v2387 = vpop.f32.mrb[0].mxu0
    %v2388 = vadd.f32 %v2195, %v2387
    %v2389 = vpop.f32.mrb[0].mxu0
    %v2390 = vadd.f32 %v2197, %v2389
    %v2391 = vpop.f32.mrb[0].mxu0
    %v2392 = vadd.f32 %v2199, %v2391
    %v2393 = vpop.f32.mrb[0].mxu0
    %v2394 = vadd.f32 %v2201, %v2393
    %2395 = vmatprep.mubr.bf16.mxu0 0
    %2396 = vmatmul.mubr.bf16.gmra.mrb[0].mxu0 %v544
    %v2397 = vpop.f32.mrb[0].mxu0
    %v2398 = vadd.f32 %v2205, %v2397
    %v2399 = vpop.f32.mrb[0].mxu0
    %v2400 = vadd.f32 %v2207, %v2399
    %v2401 = vpop.f32.mrb[0].mxu0
    %v2402 = vadd.f32 %v2209, %v2401
    %v2403 = vpop.f32.mrb[0].mxu0
    %v2404 = vadd.f32 %v2211, %v2403
    %2405 = vmatprep.mubr.bf16.mxu0 0
    %2406 = vmatmul.mubr.bf16.gmra.mrb[0].mxu0 %v547
    %v2407 = vpop.f32.mrb[0].mxu0
    %v2408 = vadd.f32 %v2215, %v2407
    %v2409 = vpop.f32.mrb[0].mxu0
    %v2410 = vadd.f32 %v2217, %v2409
    %v2411 = vpop.f32.mrb[0].mxu0
    %v2412 = vadd.f32 %v2219, %v2411
    %v2413 = vpop.f32.mrb[0].mxu0
    %v2414 = vadd.f32 %v2221, %v2413
    %2415 = vmatprep.mubr.bf16.mxu0 0
    %2416 = vmatmul.mubr.bf16.gmra.mrb[0].mxu0 %v550
    %v2417 = vpop.f32.mrb[0].mxu0
    %v2418 = vadd.f32 %v2225, %v2417
    %v2419 = vpop.f32.mrb[0].mxu0
    %v2420 = vadd.f32 %v2227, %v2419
    %v2421 = vpop.f32.mrb[0].mxu0
    %v2422 = vadd.f32 %v2229, %v2421
    %v2423 = vpop.f32.mrb[0].mxu0
    %v2424 = vadd.f32 %v2231, %v2423
    %2425 = vmatprep.mubr.bf16.mxu0 0
    %2426 = vmatmul.mubr.bf16.gmra.mrb[0].mxu0 %v553
    %v2427 = vpop.f32.mrb[0].mxu0
    %v2428 = vadd.f32 %v2235, %v2427
    %v2429 = vpop.f32.mrb[0].mxu0
    %v2430 = vadd.f32 %v2237, %v2429
    %v2431 = vpop.f32.mrb[0].mxu0
    %v2432 = vadd.f32 %v2239, %v2431
    %v2433 = vpop.f32.mrb[0].mxu0
    %v2434 = vadd.f32 %v2241, %v2433
    %2435 = vmatprep.mubr.bf16.mxu0 0
    %2436 = vmatmul.mubr.bf16.gmra.mrb[0].mxu0 %v556
    %v2437 = vpop.f32.mrb[0].mxu0
    %v2438 = vadd.f32 %v2245, %v2437
    %v2439 = vpop.f32.mrb[0].mxu0
    %v2440 = vadd.f32 %v2247, %v2439
    %v2441 = vpop.f32.mrb[0].mxu0
    %v2442 = vadd.f32 %v2249, %v2441
    %v2443 = vpop.f32.mrb[0].mxu0
    %v2444 = vadd.f32 %v2251, %v2443
    %2445 = vmatprep.mubr.bf16.mxu0 0
    %2446 = vmatmul.mubr.bf16.gmra.mrb[0].mxu0 %v559
    %v2447 = vpop.f32.mrb[0].mxu0
    %v2448 = vadd.f32 %v2255, %v2447
    %v2449 = vpop.f32.mrb[0].mxu0
    %v2450 = vadd.f32 %v2257, %v2449
    %v2451 = vpop.f32.mrb[0].mxu0
    %v2452 = vadd.f32 %v2259, %v2451
    %v2453 = vpop.f32.mrb[0].mxu0
    %v2454 = vadd.f32 %v2261, %v2453
    %2455 = vmatprep.mubr.bf16.mxu0 0
    %2456 = vmatmul.mubr.bf16.gmra.mrb[0].mxu0 %v562
    %v2457 = vpop.f32.mrb[0].mxu0
    %v2458 = vadd.f32 %v2265, %v2457
    %v2459 = vpop.f32.mrb[0].mxu0
    %v2460 = vadd.f32 %v2267, %v2459
    %v2461 = vpop.f32.mrb[0].mxu0
    %v2462 = vadd.f32 %v2269, %v2461
    %v2463 = vpop.f32.mrb[0].mxu0
    %v2464 = vadd.f32 %v2271, %v2463
    %2465 = vmatprep.mubr.bf16.mxu0 0
    %2466 = vmatmul.mubr.bf16.gmra.mrb[0].mxu0 %v565
    %v2467 = vpop.f32.mrb[0].mxu0
    %v2468 = vadd.f32 %v2275, %v2467
    %v2469 = vpop.f32.mrb[0].mxu0
    %v2470 = vadd.f32 %v2277, %v2469
    %v2471 = vpop.f32.mrb[0].mxu0
    %v2472 = vadd.f32 %v2279, %v2471
    %v2473 = vpop.f32.mrb[0].mxu0
    %v2474 = vadd.f32 %v2281, %v2473
    %2475 = vmatprep.mubr.bf16.mxu0 0
    %2476 = vmatmul.mubr.bf16.gmra.mrb[0].mxu0 %v568
    %v2477 = vpop.f32.mrb[0].mxu0
    %v2478 = vadd.f32 %v2285, %v2477
    %v2479 = vpop.f32.mrb[0].mxu0
    %v2480 = vadd.f32 %v2287, %v2479
    %v2481 = vpop.f32.mrb[0].mxu0
    %v2482 = vadd.f32 %v2289, %v2481
    %v2483 = vpop.f32.mrb[0].mxu0
    %v2484 = vadd.f32 %v2291, %v2483
    %2485 = vmatprep.mubr.bf16.mxu0 0
    %2486 = vmatmul.mubr.bf16.gmra.mrb[0].mxu0 %v571
    %v2487 = vpop.f32.mrb[0].mxu0
    %v2488 = vadd.f32 %v2295, %v2487
    %v2489 = vpop.f32.mrb[0].mxu0
    %v2490 = vadd.f32 %v2297, %v2489
    %v2491 = vpop.f32.mrb[0].mxu0
    %v2492 = vadd.f32 %v2299, %v2491
    %v2493 = vpop.f32.mrb[0].mxu0
    %v2494 = vadd.f32 %v2301, %v2493
    %2495 = vdwg.mxu0
    %2496 = vmatprep.subr.bf16.mxu0 %v1297
    %2497 = vmatpush1.bf16.msra.mxu0 %v1296
    %2498 = vmatprep.subr.bf16.mxu0 %v1306
    %2499 = vmatpush1.bf16.msra.mxu0 %v1305
    %2500 = vmatprep.subr.bf16.mxu0 %v1315
    %2501 = vmatpush1.bf16.msra.mxu0 %v1314
    %2502 = vmatprep.subr.bf16.mxu0 %v1324
    %2503 = vmatpush1.bf16.msra.mxu0 %v1323
    %2504 = vmatprep.subr.bf16.mxu0 %v1333
    %2505 = vmatpush1.bf16.msra.mxu0 %v1332
    %2506 = vmatprep.subr.bf16.mxu0 %v1342
    %2507 = vmatpush1.bf16.msra.mxu0 %v1341
    %2508 = vmatprep.subr.bf16.mxu0 %v1351
    %2509 = vmatpush1.bf16.msra.mxu0 %v1350
    %2510 = vmatprep.subr.bf16.mxu0 %v1360
    %2511 = vmatpush1.bf16.msra.mxu0 %v1359
    %2512 = vmatprep.subr.bf16.mxu0 %v1369
    %2513 = vmatpush1.bf16.msra.mxu0 %v1368
    %2514 = vmatprep.subr.bf16.mxu0 %v1378
    %2515 = vmatpush1.bf16.msra.mxu0 %v1377
    %2516 = vmatprep.subr.bf16.mxu0 %v1387
    %2517 = vmatpush1.bf16.msra.mxu0 %v1386
    %2518 = vmatprep.subr.bf16.mxu0 %v1396
    %2519 = vmatpush1.bf16.msra.mxu0 %v1395
    %2520 = vmatprep.subr.bf16.mxu0 %v1405
    %2521 = vmatpush1.bf16.msra.mxu0 %v1404
    %2522 = vmatprep.subr.bf16.mxu0 %v1414
    %2523 = vmatpush1.bf16.msra.mxu0 %v1413
    %2524 = vmatprep.subr.bf16.mxu0 %v1423
    %2525 = vmatpush1.bf16.msra.mxu0 %v1422
    %2526 = vmatprep.subr.bf16.mxu0 %v1432
    %2527 = vmatpush1.bf16.msra.mxu0 %v1431
    %2528 = vmatprep.mubr.bf16.mxu0 %v525
    %2529 = vmatmul.mubr.bf16.gmra.mrb[0].mxu0 %v524
    %v2530 = vpop.f32.mrb[0].mxu0
    %v2531 = vadd.f32 0.0, %v2530
    %v2532 = vpop.f32.mrb[0].mxu0
    %v2533 = vadd.f32 0.0, %v2532
    %v2534 = vpop.f32.mrb[0].mxu0
    %v2535 = vadd.f32 0.0, %v2534
    %v2536 = vpop.f32.mrb[0].mxu0
    %v2537 = vadd.f32 0.0, %v2536
    %2538 = vmatprep.mubr.bf16.mxu0 %v528
    %2539 = vmatmul.mubr.bf16.gmra.mrb[0].mxu0 %v527
    %v2540 = vpop.f32.mrb[0].mxu0
    %v2541 = vadd.f32 0.0, %v2540
    %v2542 = vpop.f32.mrb[0].mxu0
    %v2543 = vadd.f32 0.0, %v2542
    %v2544 = vpop.f32.mrb[0].mxu0
    %v2545 = vadd.f32 0.0, %v2544
    %v2546 = vpop.f32.mrb[0].mxu0
    %v2547 = vadd.f32 0.0, %v2546
    %2548 = vmatprep.mubr.bf16.mxu0 %v531
    %2549 = vmatmul.mubr.bf16.gmra.mrb[0].mxu0 %v530
    %v2550 = vpop.f32.mrb[0].mxu0
    %v2551 = vadd.f32 0.0, %v2550
    %v2552 = vpop.f32.mrb[0].mxu0
    %v2553 = vadd.f32 0.0, %v2552
    %v2554 = vpop.f32.mrb[0].mxu0
    %v2555 = vadd.f32 0.0, %v2554
    %v2556 = vpop.f32.mrb[0].mxu0
    %v2557 = vadd.f32 0.0, %v2556
    %2558 = vmatprep.mubr.bf16.mxu0 %v534
    %2559 = vmatmul.mubr.bf16.gmra.mrb[0].mxu0 %v533
    %v2560 = vpop.f32.mrb[0].mxu0
    %v2561 = vadd.f32 0.0, %v2560
    %v2562 = vpop.f32.mrb[0].mxu0
    %v2563 = vadd.f32 0.0, %v2562
    %v2564 = vpop.f32.mrb[0].mxu0
    %v2565 = vadd.f32 0.0, %v2564
    %v2566 = vpop.f32.mrb[0].mxu0
    %v2567 = vadd.f32 0.0, %v2566
    %2568 = vmatprep.mubr.bf16.mxu0 %v537
    %2569 = vmatmul.mubr.bf16.gmra.mrb[0].mxu0 %v536
    %v2570 = vpop.f32.mrb[0].mxu0
    %v2571 = vadd.f32 0.0, %v2570
    %v2572 = vpop.f32.mrb[0].mxu0
    %v2573 = vadd.f32 0.0, %v2572
    %v2574 = vpop.f32.mrb[0].mxu0
    %v2575 = vadd.f32 0.0, %v2574
    %v2576 = vpop.f32.mrb[0].mxu0
    %v2577 = vadd.f32 0.0, %v2576
    %2578 = vmatprep.mubr.bf16.mxu0 %v540
    %2579 = vmatmul.mubr.bf16.gmra.mrb[0].mxu0 %v539
    %v2580 = vpop.f32.mrb[0].mxu0
    %v2581 = vadd.f32 0.0, %v2580
    %v2582 = vpop.f32.mrb[0].mxu0
    %v2583 = vadd.f32 0.0, %v2582
    %v2584 = vpop.f32.mrb[0].mxu0
    %v2585 = vadd.f32 0.0, %v2584
    %v2586 = vpop.f32.mrb[0].mxu0
    %v2587 = vadd.f32 0.0, %v2586
    %2588 = vmatprep.mubr.bf16.mxu0 %v543
    %2589 = vmatmul.mubr.bf16.gmra.mrb[0].mxu0 %v542
    %v2590 = vpop.f32.mrb[0].mxu0
    %v2591 = vadd.f32 0.0, %v2590
    %v2592 = vpop.f32.mrb[0].mxu0
    %v2593 = vadd.f32 0.0, %v2592
    %v2594 = vpop.f32.mrb[0].mxu0
    %v2595 = vadd.f32 0.0, %v2594
    %v2596 = vpop.f32.mrb[0].mxu0
    %v2597 = vadd.f32 0.0, %v2596
    %2598 = vmatprep.mubr.bf16.mxu0 %v546
    %2599 = vmatmul.mubr.bf16.gmra.mrb[0].mxu0 %v545
    %v2600 = vpop.f32.mrb[0].mxu0
    %v2601 = vadd.f32 0.0, %v2600
    %v2602 = vpop.f32.mrb[0].mxu0
    %v2603 = vadd.f32 0.0, %v2602
    %v2604 = vpop.f32.mrb[0].mxu0
    %v2605 = vadd.f32 0.0, %v2604
    %v2606 = vpop.f32.mrb[0].mxu0
    %v2607 = vadd.f32 0.0, %v2606
    %2608 = vmatprep.mubr.bf16.mxu0 %v549
    %2609 = vmatmul.mubr.bf16.gmra.mrb[0].mxu0 %v548
    %v2610 = vpop.f32.mrb[0].mxu0
    %v2611 = vadd.f32 0.0, %v2610
    %v2612 = vpop.f32.mrb[0].mxu0
    %v2613 = vadd.f32 0.0, %v2612
    %v2614 = vpop.f32.mrb[0].mxu0
    %v2615 = vadd.f32 0.0, %v2614
    %v2616 = vpop.f32.mrb[0].mxu0
    %v2617 = vadd.f32 0.0, %v2616
    %2618 = vmatprep.mubr.bf16.mxu0 %v552
    %2619 = vmatmul.mubr.bf16.gmra.mrb[0].mxu0 %v551
    %v2620 = vpop.f32.mrb[0].mxu0
    %v2621 = vadd.f32 0.0, %v2620
    %v2622 = vpop.f32.mrb[0].mxu0
    %v2623 = vadd.f32 0.0, %v2622
    %v2624 = vpop.f32.mrb[0].mxu0
    %v2625 = vadd.f32 0.0, %v2624
    %v2626 = vpop.f32.mrb[0].mxu0
    %v2627 = vadd.f32 0.0, %v2626
    %2628 = vmatprep.mubr.bf16.mxu0 %v555
    %2629 = vmatmul.mubr.bf16.gmra.mrb[0].mxu0 %v554
    %v2630 = vpop.f32.mrb[0].mxu0
    %v2631 = vadd.f32 0.0, %v2630
    %v2632 = vpop.f32.mrb[0].mxu0
    %v2633 = vadd.f32 0.0, %v2632
    %v2634 = vpop.f32.mrb[0].mxu0
    %v2635 = vadd.f32 0.0, %v2634
    %v2636 = vpop.f32.mrb[0].mxu0
    %v2637 = vadd.f32 0.0, %v2636
    %2638 = vmatprep.mubr.bf16.mxu0 %v558
    %2639 = vmatmul.mubr.bf16.gmra.mrb[0].mxu0 %v557
    %v2640 = vpop.f32.mrb[0].mxu0
    %v2641 = vadd.f32 0.0, %v2640
    %v2642 = vpop.f32.mrb[0].mxu0
    %v2643 = vadd.f32 0.0, %v2642
    %v2644 = vpop.f32.mrb[0].mxu0
    %v2645 = vadd.f32 0.0, %v2644
    %v2646 = vpop.f32.mrb[0].mxu0
    %v2647 = vadd.f32 0.0, %v2646
    %2648 = vmatprep.mubr.bf16.mxu0 %v561
    %2649 = vmatmul.mubr.bf16.gmra.mrb[0].mxu0 %v560
    %v2650 = vpop.f32.mrb[0].mxu0
    %v2651 = vadd.f32 0.0, %v2650
    %v2652 = vpop.f32.mrb[0].mxu0
    %v2653 = vadd.f32 0.0, %v2652
    %v2654 = vpop.f32.mrb[0].mxu0
    %v2655 = vadd.f32 0.0, %v2654
    %v2656 = vpop.f32.mrb[0].mxu0
    %v2657 = vadd.f32 0.0, %v2656
    %2658 = vmatprep.mubr.bf16.mxu0 %v564
    %2659 = vmatmul.mubr.bf16.gmra.mrb[0].mxu0 %v563
    %v2660 = vpop.f32.mrb[0].mxu0
    %v2661 = vadd.f32 0.0, %v2660
    %v2662 = vpop.f32.mrb[0].mxu0
    %v2663 = vadd.f32 0.0, %v2662
    %v2664 = vpop.f32.mrb[0].mxu0
    %v2665 = vadd.f32 0.0, %v2664
    %v2666 = vpop.f32.mrb[0].mxu0
    %v2667 = vadd.f32 0.0, %v2666
    %2668 = vmatprep.mubr.bf16.mxu0 %v567
    %2669 = vmatmul.mubr.bf16.gmra.mrb[0].mxu0 %v566
    %v2670 = vpop.f32.mrb[0].mxu0
    %v2671 = vadd.f32 0.0, %v2670
    %v2672 = vpop.f32.mrb[0].mxu0
    %v2673 = vadd.f32 0.0, %v2672
    %v2674 = vpop.f32.mrb[0].mxu0
    %v2675 = vadd.f32 0.0, %v2674
    %v2676 = vpop.f32.mrb[0].mxu0
    %v2677 = vadd.f32 0.0, %v2676
    %2678 = vmatprep.mubr.bf16.mxu0 %v570
    %2679 = vmatmul.mubr.bf16.gmra.mrb[0].mxu0 %v569
    %v2680 = vpop.f32.mrb[0].mxu0
    %v2681 = vadd.f32 0.0, %v2680
    %v2682 = vpop.f32.mrb[0].mxu0
    %v2683 = vadd.f32 0.0, %v2682
    %v2684 = vpop.f32.mrb[0].mxu0
    %v2685 = vadd.f32 0.0, %v2684
    %v2686 = vpop.f32.mrb[0].mxu0
    %v2687 = vadd.f32 0.0, %v2686
    %2688 = vdwg.mxu0
    %2689 = vmatprep.subr.bf16.mxu0 %v1441
    %2690 = vmatpush1.bf16.msra.mxu0 %v1440
    %2691 = vmatprep.subr.bf16.mxu0 %v1450
    %2692 = vmatpush1.bf16.msra.mxu0 %v1449
    %2693 = vmatprep.subr.bf16.mxu0 %v1459
    %2694 = vmatpush1.bf16.msra.mxu0 %v1458
    %2695 = vmatprep.subr.bf16.mxu0 %v1468
    %2696 = vmatpush1.bf16.msra.mxu0 %v1467
    %2697 = vmatprep.subr.bf16.mxu0 %v1477
    %2698 = vmatpush1.bf16.msra.mxu0 %v1476
    %2699 = vmatprep.subr.bf16.mxu0 %v1486
    %2700 = vmatpush1.bf16.msra.mxu0 %v1485
    %2701 = vmatprep.subr.bf16.mxu0 %v1495
    %2702 = vmatpush1.bf16.msra.mxu0 %v1494
    %2703 = vmatprep.subr.bf16.mxu0 %v1504
    %2704 = vmatpush1.bf16.msra.mxu0 %v1503
    %2705 = vmatprep.subr.bf16.mxu0 0
    %2706 = vmatpush1.bf16.msra.mxu0 0
    %2707 = vmatprep.subr.bf16.mxu0 0
    %2708 = vmatpush1.bf16.msra.mxu0 0
    %2709 = vmatprep.subr.bf16.mxu0 0
    %2710 = vmatpush1.bf16.msra.mxu0 0
    %2711 = vmatprep.subr.bf16.mxu0 0
    %2712 = vmatpush1.bf16.msra.mxu0 0
    %2713 = vmatprep.subr.bf16.mxu0 0
    %2714 = vmatpush1.bf16.msra.mxu0 0
    %2715 = vmatprep.subr.bf16.mxu0 0
    %2716 = vmatpush1.bf16.msra.mxu0 0
    %2717 = vmatprep.subr.bf16.mxu0 0
    %2718 = vmatpush1.bf16.msra.mxu0 0
    %2719 = vmatprep.subr.bf16.mxu0 0
    %2720 = vmatpush1.bf16.msra.mxu0 0
    %2721 = vmatprep.mubr.bf16.mxu0 0
    %2722 = vmatmul.mubr.bf16.gmra.mrb[0].mxu0 %v526
    %v2723 = vpop.f32.mrb[0].mxu0
    %v2724 = vadd.f32 %v2531, %v2723
    %v2725 = vpop.f32.mrb[0].mxu0
    %v2726 = vadd.f32 %v2533, %v2725
    %v2727 = vpop.f32.mrb[0].mxu0
    %v2728 = vadd.f32 %v2535, %v2727
    %v2729 = vpop.f32.mrb[0].mxu0
    %v2730 = vadd.f32 %v2537, %v2729
    %2731 = vmatprep.mubr.bf16.mxu0 0
    %2732 = vmatmul.mubr.bf16.gmra.mrb[0].mxu0 %v529
    %v2733 = vpop.f32.mrb[0].mxu0
    %v2734 = vadd.f32 %v2541, %v2733
    %v2735 = vpop.f32.mrb[0].mxu0
    %v2736 = vadd.f32 %v2543, %v2735
    %v2737 = vpop.f32.mrb[0].mxu0
    %v2738 = vadd.f32 %v2545, %v2737
    %v2739 = vpop.f32.mrb[0].mxu0
    %v2740 = vadd.f32 %v2547, %v2739
    %2741 = vmatprep.mubr.bf16.mxu0 0
    %2742 = vmatmul.mubr.bf16.gmra.mrb[0].mxu0 %v532
    %v2743 = vpop.f32.mrb[0].mxu0
    %v2744 = vadd.f32 %v2551, %v2743
    %v2745 = vpop.f32.mrb[0].mxu0
    %v2746 = vadd.f32 %v2553, %v2745
    %v2747 = vpop.f32.mrb[0].mxu0
    %v2748 = vadd.f32 %v2555, %v2747
    %v2749 = vpop.f32.mrb[0].mxu0
    %v2750 = vadd.f32 %v2557, %v2749
    %2751 = vmatprep.mubr.bf16.mxu0 0
    %2752 = vmatmul.mubr.bf16.gmra.mrb[0].mxu0 %v535
    %v2753 = vpop.f32.mrb[0].mxu0
    %v2754 = vadd.f32 %v2561, %v2753
    %v2755 = vpop.f32.mrb[0].mxu0
    %v2756 = vadd.f32 %v2563, %v2755
    %v2757 = vpop.f32.mrb[0].mxu0
    %v2758 = vadd.f32 %v2565, %v2757
    %v2759 = vpop.f32.mrb[0].mxu0
    %v2760 = vadd.f32 %v2567, %v2759
    %2761 = vmatprep.mubr.bf16.mxu0 0
    %2762 = vmatmul.mubr.bf16.gmra.mrb[0].mxu0 %v538
    %v2763 = vpop.f32.mrb[0].mxu0
    %v2764 = vadd.f32 %v2571, %v2763
    %v2765 = vpop.f32.mrb[0].mxu0
    %v2766 = vadd.f32 %v2573, %v2765
    %v2767 = vpop.f32.mrb[0].mxu0
    %v2768 = vadd.f32 %v2575, %v2767
    %v2769 = vpop.f32.mrb[0].mxu0
    %v2770 = vadd.f32 %v2577, %v2769
    %2771 = vmatprep.mubr.bf16.mxu0 0
    %2772 = vmatmul.mubr.bf16.gmra.mrb[0].mxu0 %v541
    %v2773 = vpop.f32.mrb[0].mxu0
    %v2774 = vadd.f32 %v2581, %v2773
    %v2775 = vpop.f32.mrb[0].mxu0
    %v2776 = vadd.f32 %v2583, %v2775
    %v2777 = vpop.f32.mrb[0].mxu0
    %v2778 = vadd.f32 %v2585, %v2777
    %v2779 = vpop.f32.mrb[0].mxu0
    %v2780 = vadd.f32 %v2587, %v2779
    %2781 = vmatprep.mubr.bf16.mxu0 0
    %2782 = vmatmul.mubr.bf16.gmra.mrb[0].mxu0 %v544
    %v2783 = vpop.f32.mrb[0].mxu0
    %v2784 = vadd.f32 %v2591, %v2783
    %v2785 = vpop.f32.mrb[0].mxu0
    %v2786 = vadd.f32 %v2593, %v2785
    %v2787 = vpop.f32.mrb[0].mxu0
    %v2788 = vadd.f32 %v2595, %v2787
    %v2789 = vpop.f32.mrb[0].mxu0
    %v2790 = vadd.f32 %v2597, %v2789
    %2791 = vmatprep.mubr.bf16.mxu0 0
    %2792 = vmatmul.mubr.bf16.gmra.mrb[0].mxu0 %v547
    %v2793 = vpop.f32.mrb[0].mxu0
    %v2794 = vadd.f32 %v2601, %v2793
    %v2795 = vpop.f32.mrb[0].mxu0
    %v2796 = vadd.f32 %v2603, %v2795
    %v2797 = vpop.f32.mrb[0].mxu0
    %v2798 = vadd.f32 %v2605, %v2797
    %v2799 = vpop.f32.mrb[0].mxu0
    %v2800 = vadd.f32 %v2607, %v2799
    %2801 = vmatprep.mubr.bf16.mxu0 0
    %2802 = vmatmul.mubr.bf16.gmra.mrb[0].mxu0 %v550
    %v2803 = vpop.f32.mrb[0].mxu0
    %v2804 = vadd.f32 %v2611, %v2803
    %v2805 = vpop.f32.mrb[0].mxu0
    %v2806 = vadd.f32 %v2613, %v2805
    %v2807 = vpop.f32.mrb[0].mxu0
    %v2808 = vadd.f32 %v2615, %v2807
    %v2809 = vpop.f32.mrb[0].mxu0
    %v2810 = vadd.f32 %v2617, %v2809
    %2811 = vmatprep.mubr.bf16.mxu0 0
    %2812 = vmatmul.mubr.bf16.gmra.mrb[0].mxu0 %v553
    %v2813 = vpop.f32.mrb[0].mxu0
    %v2814 = vadd.f32 %v2621, %v2813
    %v2815 = vpop.f32.mrb[0].mxu0
    %v2816 = vadd.f32 %v2623, %v2815
    %v2817 = vpop.f32.mrb[0].mxu0
    %v2818 = vadd.f32 %v2625, %v2817
    %v2819 = vpop.f32.mrb[0].mxu0
    %v2820 = vadd.f32 %v2627, %v2819
    %2821 = vmatprep.mubr.bf16.mxu0 0
    %2822 = vmatmul.mubr.bf16.gmra.mrb[0].mxu0 %v556
    %v2823 = vpop.f32.mrb[0].mxu0
    %v2824 = vadd.f32 %v2631, %v2823
    %v2825 = vpop.f32.mrb[0].mxu0
    %v2826 = vadd.f32 %v2633, %v2825
    %v2827 = vpop.f32.mrb[0].mxu0
    %v2828 = vadd.f32 %v2635, %v2827
    %v2829 = vpop.f32.mrb[0].mxu0
    %v2830 = vadd.f32 %v2637, %v2829
    %2831 = vmatprep.mubr.bf16.mxu0 0
    %2832 = vmatmul.mubr.bf16.gmra.mrb[0].mxu0 %v559
    %v2833 = vpop.f32.mrb[0].mxu0
    %v2834 = vadd.f32 %v2641, %v2833
    %v2835 = vpop.f32.mrb[0].mxu0
    %v2836 = vadd.f32 %v2643, %v2835
    %v2837 = vpop.f32.mrb[0].mxu0
    %v2838 = vadd.f32 %v2645, %v2837
    %v2839 = vpop.f32.mrb[0].mxu0
    %v2840 = vadd.f32 %v2647, %v2839
    %2841 = vmatprep.mubr.bf16.mxu0 0
    %2842 = vmatmul.mubr.bf16.gmra.mrb[0].mxu0 %v562
    %v2843 = vpop.f32.mrb[0].mxu0
    %v2844 = vadd.f32 %v2651, %v2843
    %v2845 = vpop.f32.mrb[0].mxu0
    %v2846 = vadd.f32 %v2653, %v2845
    %v2847 = vpop.f32.mrb[0].mxu0
    %v2848 = vadd.f32 %v2655, %v2847
    %v2849 = vpop.f32.mrb[0].mxu0
    %v2850 = vadd.f32 %v2657, %v2849
    %2851 = vmatprep.mubr.bf16.mxu0 0
    %2852 = vmatmul.mubr.bf16.gmra.mrb[0].mxu0 %v565
    %v2853 = vpop.f32.mrb[0].mxu0
    %v2854 = vadd.f32 %v2661, %v2853
    %v2855 = vpop.f32.mrb[0].mxu0
    %v2856 = vadd.f32 %v2663, %v2855
    %v2857 = vpop.f32.mrb[0].mxu0
    %v2858 = vadd.f32 %v2665, %v2857
    %v2859 = vpop.f32.mrb[0].mxu0
    %v2860 = vadd.f32 %v2667, %v2859
    %2861 = vmatprep.mubr.bf16.mxu0 0
    %2862 = vmatmul.mubr.bf16.gmra.mrb[0].mxu0 %v568
    %v2863 = vpop.f32.mrb[0].mxu0
    %v2864 = vadd.f32 %v2671, %v2863
    %v2865 = vpop.f32.mrb[0].mxu0
    %v2866 = vadd.f32 %v2673, %v2865
    %v2867 = vpop.f32.mrb[0].mxu0
    %v2868 = vadd.f32 %v2675, %v2867
    %v2869 = vpop.f32.mrb[0].mxu0
    %v2870 = vadd.f32 %v2677, %v2869
    %2871 = vmatprep.mubr.bf16.mxu0 0
    %2872 = vmatmul.mubr.bf16.gmra.mrb[0].mxu0 %v571
    %v2873 = vpop.f32.mrb[0].mxu0
    %v2874 = vadd.f32 %v2681, %v2873
    %v2875 = vpop.f32.mrb[0].mxu0
    %v2876 = vadd.f32 %v2683, %v2875
    %v2877 = vpop.f32.mrb[0].mxu0
    %v2878 = vadd.f32 %v2685, %v2877
    %v2879 = vpop.f32.mrb[0].mxu0
    %v2880 = vadd.f32 %v2687, %v2879
    %2881 = vdwg.mxu0
    %2882 = vmatprep.subr.bf16.mxu0 %v1299
    %2883 = vmatpush1.bf16.msra.mxu0 %v1298
    %2884 = vmatprep.subr.bf16.mxu0 %v1308
    %2885 = vmatpush1.bf16.msra.mxu0 %v1307
    %2886 = vmatprep.subr.bf16.mxu0 %v1317
    %2887 = vmatpush1.bf16.msra.mxu0 %v1316
    %2888 = vmatprep.subr.bf16.mxu0 %v1326
    %2889 = vmatpush1.bf16.msra.mxu0 %v1325
    %2890 = vmatprep.subr.bf16.mxu0 %v1335
    %2891 = vmatpush1.bf16.msra.mxu0 %v1334
    %2892 = vmatprep.subr.bf16.mxu0 %v1344
    %2893 = vmatpush1.bf16.msra.mxu0 %v1343
    %2894 = vmatprep.subr.bf16.mxu0 %v1353
    %2895 = vmatpush1.bf16.msra.mxu0 %v1352
    %2896 = vmatprep.subr.bf16.mxu0 %v1362
    %2897 = vmatpush1.bf16.msra.mxu0 %v1361
    %2898 = vmatprep.subr.bf16.mxu0 %v1371
    %2899 = vmatpush1.bf16.msra.mxu0 %v1370
    %2900 = vmatprep.subr.bf16.mxu0 %v1380
    %2901 = vmatpush1.bf16.msra.mxu0 %v1379
    %2902 = vmatprep.subr.bf16.mxu0 %v1389
    %2903 = vmatpush1.bf16.msra.mxu0 %v1388
    %2904 = vmatprep.subr.bf16.mxu0 %v1398
    %2905 = vmatpush1.bf16.msra.mxu0 %v1397
    %2906 = vmatprep.subr.bf16.mxu0 %v1407
    %2907 = vmatpush1.bf16.msra.mxu0 %v1406
    %2908 = vmatprep.subr.bf16.mxu0 %v1416
    %2909 = vmatpush1.bf16.msra.mxu0 %v1415
    %2910 = vmatprep.subr.bf16.mxu0 %v1425
    %2911 = vmatpush1.bf16.msra.mxu0 %v1424
    %2912 = vmatprep.subr.bf16.mxu0 %v1434
    %2913 = vmatpush1.bf16.msra.mxu0 %v1433
    %2914 = vmatprep.mubr.bf16.mxu0 %v525
    %2915 = vmatmul.mubr.bf16.gmra.mrb[0].mxu0 %v524
    %v2916 = vpop.f32.mrb[0].mxu0
    %v2917 = vadd.f32 0.0, %v2916
    %v2918 = vpop.f32.mrb[0].mxu0
    %v2919 = vadd.f32 0.0, %v2918
    %v2920 = vpop.f32.mrb[0].mxu0
    %v2921 = vadd.f32 0.0, %v2920
    %v2922 = vpop.f32.mrb[0].mxu0
    %v2923 = vadd.f32 0.0, %v2922
    %2924 = vmatprep.mubr.bf16.mxu0 %v528
    %2925 = vmatmul.mubr.bf16.gmra.mrb[0].mxu0 %v527
    %v2926 = vpop.f32.mrb[0].mxu0
    %v2927 = vadd.f32 0.0, %v2926
    %v2928 = vpop.f32.mrb[0].mxu0
    %v2929 = vadd.f32 0.0, %v2928
    %v2930 = vpop.f32.mrb[0].mxu0
    %v2931 = vadd.f32 0.0, %v2930
    %v2932 = vpop.f32.mrb[0].mxu0
    %v2933 = vadd.f32 0.0, %v2932
    %2934 = vmatprep.mubr.bf16.mxu0 %v531
    %2935 = vmatmul.mubr.bf16.gmra.mrb[0].mxu0 %v530
    %v2936 = vpop.f32.mrb[0].mxu0
    %v2937 = vadd.f32 0.0, %v2936
    %v2938 = vpop.f32.mrb[0].mxu0
    %v2939 = vadd.f32 0.0, %v2938
    %v2940 = vpop.f32.mrb[0].mxu0
    %v2941 = vadd.f32 0.0, %v2940
    %v2942 = vpop.f32.mrb[0].mxu0
    %v2943 = vadd.f32 0.0, %v2942
    %2944 = vmatprep.mubr.bf16.mxu0 %v534
    %2945 = vmatmul.mubr.bf16.gmra.mrb[0].mxu0 %v533
    %v2946 = vpop.f32.mrb[0].mxu0
    %v2947 = vadd.f32 0.0, %v2946
    %v2948 = vpop.f32.mrb[0].mxu0
    %v2949 = vadd.f32 0.0, %v2948
    %v2950 = vpop.f32.mrb[0].mxu0
    %v2951 = vadd.f32 0.0, %v2950
    %v2952 = vpop.f32.mrb[0].mxu0
    %v2953 = vadd.f32 0.0, %v2952
    %2954 = vmatprep.mubr.bf16.mxu0 %v537
    %2955 = vmatmul.mubr.bf16.gmra.mrb[0].mxu0 %v536
    %v2956 = vpop.f32.mrb[0].mxu0
    %v2957 = vadd.f32 0.0, %v2956
    %v2958 = vpop.f32.mrb[0].mxu0
    %v2959 = vadd.f32 0.0, %v2958
    %v2960 = vpop.f32.mrb[0].mxu0
    %v2961 = vadd.f32 0.0, %v2960
    %v2962 = vpop.f32.mrb[0].mxu0
    %v2963 = vadd.f32 0.0, %v2962
    %2964 = vmatprep.mubr.bf16.mxu0 %v540
    %2965 = vmatmul.mubr.bf16.gmra.mrb[0].mxu0 %v539
    %v2966 = vpop.f32.mrb[0].mxu0
    %v2967 = vadd.f32 0.0, %v2966
    %v2968 = vpop.f32.mrb[0].mxu0
    %v2969 = vadd.f32 0.0, %v2968
    %v2970 = vpop.f32.mrb[0].mxu0
    %v2971 = vadd.f32 0.0, %v2970
    %v2972 = vpop.f32.mrb[0].mxu0
    %v2973 = vadd.f32 0.0, %v2972
    %2974 = vmatprep.mubr.bf16.mxu0 %v543
    %2975 = vmatmul.mubr.bf16.gmra.mrb[0].mxu0 %v542
    %v2976 = vpop.f32.mrb[0].mxu0
    %v2977 = vadd.f32 0.0, %v2976
    %v2978 = vpop.f32.mrb[0].mxu0
    %v2979 = vadd.f32 0.0, %v2978
    %v2980 = vpop.f32.mrb[0].mxu0
    %v2981 = vadd.f32 0.0, %v2980
    %v2982 = vpop.f32.mrb[0].mxu0
    %v2983 = vadd.f32 0.0, %v2982
    %2984 = vmatprep.mubr.bf16.mxu0 %v546
    %2985 = vmatmul.mubr.bf16.gmra.mrb[0].mxu0 %v545
    %v2986 = vpop.f32.mrb[0].mxu0
    %v2987 = vadd.f32 0.0, %v2986
    %v2988 = vpop.f32.mrb[0].mxu0
    %v2989 = vadd.f32 0.0, %v2988
    %v2990 = vpop.f32.mrb[0].mxu0
    %v2991 = vadd.f32 0.0, %v2990
    %v2992 = vpop.f32.mrb[0].mxu0
    %v2993 = vadd.f32 0.0, %v2992
    %2994 = vmatprep.mubr.bf16.mxu0 %v549
    %2995 = vmatmul.mubr.bf16.gmra.mrb[0].mxu0 %v548
    %v2996 = vpop.f32.mrb[0].mxu0
    %v2997 = vadd.f32 0.0, %v2996
    %v2998 = vpop.f32.mrb[0].mxu0
    %v2999 = vadd.f32 0.0, %v2998
    %v3000 = vpop.f32.mrb[0].mxu0
    %v3001 = vadd.f32 0.0, %v3000
    %v3002 = vpop.f32.mrb[0].mxu0
    %v3003 = vadd.f32 0.0, %v3002
    %3004 = vmatprep.mubr.bf16.mxu0 %v552
    %3005 = vmatmul.mubr.bf16.gmra.mrb[0].mxu0 %v551
    %v3006 = vpop.f32.mrb[0].mxu0
    %v3007 = vadd.f32 0.0, %v3006
    %v3008 = vpop.f32.mrb[0].mxu0
    %v3009 = vadd.f32 0.0, %v3008
    %v3010 = vpop.f32.mrb[0].mxu0
    %v3011 = vadd.f32 0.0, %v3010
    %v3012 = vpop.f32.mrb[0].mxu0
    %v3013 = vadd.f32 0.0, %v3012
    %3014 = vmatprep.mubr.bf16.mxu0 %v555
    %3015 = vmatmul.mubr.bf16.gmra.mrb[0].mxu0 %v554
    %v3016 = vpop.f32.mrb[0].mxu0
    %v3017 = vadd.f32 0.0, %v3016
    %v3018 = vpop.f32.mrb[0].mxu0
    %v3019 = vadd.f32 0.0, %v3018
    %v3020 = vpop.f32.mrb[0].mxu0
    %v3021 = vadd.f32 0.0, %v3020
    %v3022 = vpop.f32.mrb[0].mxu0
    %v3023 = vadd.f32 0.0, %v3022
    %3024 = vmatprep.mubr.bf16.mxu0 %v558
    %3025 = vmatmul.mubr.bf16.gmra.mrb[0].mxu0 %v557
    %v3026 = vpop.f32.mrb[0].mxu0
    %v3027 = vadd.f32 0.0, %v3026
    %v3028 = vpop.f32.mrb[0].mxu0
    %v3029 = vadd.f32 0.0, %v3028
    %v3030 = vpop.f32.mrb[0].mxu0
    %v3031 = vadd.f32 0.0, %v3030
    %v3032 = vpop.f32.mrb[0].mxu0
    %v3033 = vadd.f32 0.0, %v3032
    %3034 = vmatprep.mubr.bf16.mxu0 %v561
    %3035 = vmatmul.mubr.bf16.gmra.mrb[0].mxu0 %v560
    %v3036 = vpop.f32.mrb[0].mxu0
    %v3037 = vadd.f32 0.0, %v3036
    %v3038 = vpop.f32.mrb[0].mxu0
    %v3039 = vadd.f32 0.0, %v3038
    %v3040 = vpop.f32.mrb[0].mxu0
    %v3041 = vadd.f32 0.0, %v3040
    %v3042 = vpop.f32.mrb[0].mxu0
    %v3043 = vadd.f32 0.0, %v3042
    %3044 = vmatprep.mubr.bf16.mxu0 %v564
    %3045 = vmatmul.mubr.bf16.gmra.mrb[0].mxu0 %v563
    %v3046 = vpop.f32.mrb[0].mxu0
    %v3047 = vadd.f32 0.0, %v3046
    %v3048 = vpop.f32.mrb[0].mxu0
    %v3049 = vadd.f32 0.0, %v3048
    %v3050 = vpop.f32.mrb[0].mxu0
    %v3051 = vadd.f32 0.0, %v3050
    %v3052 = vpop.f32.mrb[0].mxu0
    %v3053 = vadd.f32 0.0, %v3052
    %3054 = vmatprep.mubr.bf16.mxu0 %v567
    %3055 = vmatmul.mubr.bf16.gmra.mrb[0].mxu0 %v566
    %v3056 = vpop.f32.mrb[0].mxu0
    %v3057 = vadd.f32 0.0, %v3056
    %v3058 = vpop.f32.mrb[0].mxu0
    %v3059 = vadd.f32 0.0, %v3058
    %v3060 = vpop.f32.mrb[0].mxu0
    %v3061 = vadd.f32 0.0, %v3060
    %v3062 = vpop.f32.mrb[0].mxu0
    %v3063 = vadd.f32 0.0, %v3062
    %3064 = vmatprep.mubr.bf16.mxu0 %v570
    %3065 = vmatmul.mubr.bf16.gmra.mrb[0].mxu0 %v569
    %v3066 = vpop.f32.mrb[0].mxu0
    %v3067 = vadd.f32 0.0, %v3066
    %v3068 = vpop.f32.mrb[0].mxu0
    %v3069 = vadd.f32 0.0, %v3068
    %v3070 = vpop.f32.mrb[0].mxu0
    %v3071 = vadd.f32 0.0, %v3070
    %v3072 = vpop.f32.mrb[0].mxu0
    %v3073 = vadd.f32 0.0, %v3072
    %3074 = vdwg.mxu0
    %3075 = vmatprep.subr.bf16.mxu0 %v1443
    %3076 = vmatpush1.bf16.msra.mxu0 %v1442
    %3077 = vmatprep.subr.bf16.mxu0 %v1452
    %3078 = vmatpush1.bf16.msra.mxu0 %v1451
    %3079 = vmatprep.subr.bf16.mxu0 %v1461
    %3080 = vmatpush1.bf16.msra.mxu0 %v1460
    %3081 = vmatprep.subr.bf16.mxu0 %v1470
    %3082 = vmatpush1.bf16.msra.mxu0 %v1469
    %3083 = vmatprep.subr.bf16.mxu0 %v1479
    %3084 = vmatpush1.bf16.msra.mxu0 %v1478
    %3085 = vmatprep.subr.bf16.mxu0 %v1488
    %3086 = vmatpush1.bf16.msra.mxu0 %v1487
    %3087 = vmatprep.subr.bf16.mxu0 %v1497
    %3088 = vmatpush1.bf16.msra.mxu0 %v1496
    %3089 = vmatprep.subr.bf16.mxu0 %v1506
    %3090 = vmatpush1.bf16.msra.mxu0 %v1505
    %3091 = vmatprep.subr.bf16.mxu0 0
    %3092 = vmatpush1.bf16.msra.mxu0 0
    %3093 = vmatprep.subr.bf16.mxu0 0
    %3094 = vmatpush1.bf16.msra.mxu0 0
    %3095 = vmatprep.subr.bf16.mxu0 0
    %3096 = vmatpush1.bf16.msra.mxu0 0
    %3097 = vmatprep.subr.bf16.mxu0 0
    %3098 = vmatpush1.bf16.msra.mxu0 0
    %3099 = vmatprep.subr.bf16.mxu0 0
    %3100 = vmatpush1.bf16.msra.mxu0 0
    %3101 = vmatprep.subr.bf16.mxu0 0
    %3102 = vmatpush1.bf16.msra.mxu0 0
    %3103 = vmatprep.subr.bf16.mxu0 0
    %3104 = vmatpush1.bf16.msra.mxu0 0
    %3105 = vmatprep.subr.bf16.mxu0 0
    %3106 = vmatpush1.bf16.msra.mxu0 0
    %3107 = vmatprep.mubr.bf16.mxu0 0
    %3108 = vmatmul.mubr.bf16.gmra.mrb[0].mxu0 %v526
    %v3109 = vpop.f32.mrb[0].mxu0
    %v3110 = vadd.f32 %v2917, %v3109
    %v3111 = vpop.f32.mrb[0].mxu0
    %v3112 = vadd.f32 %v2919, %v3111
    %v3113 = vpop.f32.mrb[0].mxu0
    %v3114 = vadd.f32 %v2921, %v3113
    %v3115 = vpop.f32.mrb[0].mxu0
    %v3116 = vadd.f32 %v2923, %v3115
    %3117 = vmatprep.mubr.bf16.mxu0 0
    %3118 = vmatmul.mubr.bf16.gmra.mrb[0].mxu0 %v529
    %v3119 = vpop.f32.mrb[0].mxu0
    %v3120 = vadd.f32 %v2927, %v3119
    %v3121 = vpop.f32.mrb[0].mxu0
    %v3122 = vadd.f32 %v2929, %v3121
    %v3123 = vpop.f32.mrb[0].mxu0
    %v3124 = vadd.f32 %v2931, %v3123
    %v3125 = vpop.f32.mrb[0].mxu0
    %v3126 = vadd.f32 %v2933, %v3125
    %3127 = vmatprep.mubr.bf16.mxu0 0
    %3128 = vmatmul.mubr.bf16.gmra.mrb[0].mxu0 %v532
    %v3129 = vpop.f32.mrb[0].mxu0
    %v3130 = vadd.f32 %v2937, %v3129
    %v3131 = vpop.f32.mrb[0].mxu0
    %v3132 = vadd.f32 %v2939, %v3131
    %v3133 = vpop.f32.mrb[0].mxu0
    %v3134 = vadd.f32 %v2941, %v3133
    %v3135 = vpop.f32.mrb[0].mxu0
    %v3136 = vadd.f32 %v2943, %v3135
    %3137 = vmatprep.mubr.bf16.mxu0 0
    %3138 = vmatmul.mubr.bf16.gmra.mrb[0].mxu0 %v535
    %v3139 = vpop.f32.mrb[0].mxu0
    %v3140 = vadd.f32 %v2947, %v3139
    %v3141 = vpop.f32.mrb[0].mxu0
    %v3142 = vadd.f32 %v2949, %v3141
    %v3143 = vpop.f32.mrb[0].mxu0
    %v3144 = vadd.f32 %v2951, %v3143
    %v3145 = vpop.f32.mrb[0].mxu0
    %v3146 = vadd.f32 %v2953, %v3145
    %3147 = vmatprep.mubr.bf16.mxu0 0
    %3148 = vmatmul.mubr.bf16.gmra.mrb[0].mxu0 %v538
    %v3149 = vpop.f32.mrb[0].mxu0
    %v3150 = vadd.f32 %v2957, %v3149
    %v3151 = vpop.f32.mrb[0].mxu0
    %v3152 = vadd.f32 %v2959, %v3151
    %v3153 = vpop.f32.mrb[0].mxu0
    %v3154 = vadd.f32 %v2961, %v3153
    %v3155 = vpop.f32.mrb[0].mxu0
    %v3156 = vadd.f32 %v2963, %v3155
    %3157 = vmatprep.mubr.bf16.mxu0 0
    %3158 = vmatmul.mubr.bf16.gmra.mrb[0].mxu0 %v541
    %v3159 = vpop.f32.mrb[0].mxu0
    %v3160 = vadd.f32 %v2967, %v3159
    %v3161 = vpop.f32.mrb[0].mxu0
    %v3162 = vadd.f32 %v2969, %v3161
    %v3163 = vpop.f32.mrb[0].mxu0
    %v3164 = vadd.f32 %v2971, %v3163
    %v3165 = vpop.f32.mrb[0].mxu0
    %v3166 = vadd.f32 %v2973, %v3165
    %3167 = vmatprep.mubr.bf16.mxu0 0
    %3168 = vmatmul.mubr.bf16.gmra.mrb[0].mxu0 %v544
    %v3169 = vpop.f32.mrb[0].mxu0
    %v3170 = vadd.f32 %v2977, %v3169
    %v3171 = vpop.f32.mrb[0].mxu0
    %v3172 = vadd.f32 %v2979, %v3171
    %v3173 = vpop.f32.mrb[0].mxu0
    %v3174 = vadd.f32 %v2981, %v3173
    %v3175 = vpop.f32.mrb[0].mxu0
    %v3176 = vadd.f32 %v2983, %v3175
    %3177 = vmatprep.mubr.bf16.mxu0 0
    %3178 = vmatmul.mubr.bf16.gmra.mrb[0].mxu0 %v547
    %v3179 = vpop.f32.mrb[0].mxu0
    %v3180 = vadd.f32 %v2987, %v3179
    %v3181 = vpop.f32.mrb[0].mxu0
    %v3182 = vadd.f32 %v2989, %v3181
    %v3183 = vpop.f32.mrb[0].mxu0
    %v3184 = vadd.f32 %v2991, %v3183
    %v3185 = vpop.f32.mrb[0].mxu0
    %v3186 = vadd.f32 %v2993, %v3185
    %3187 = vmatprep.mubr.bf16.mxu0 0
    %3188 = vmatmul.mubr.bf16.gmra.mrb[0].mxu0 %v550
    %v3189 = vpop.f32.mrb[0].mxu0
    %v3190 = vadd.f32 %v2997, %v3189
    %v3191 = vpop.f32.mrb[0].mxu0
    %v3192 = vadd.f32 %v2999, %v3191
    %v3193 = vpop.f32.mrb[0].mxu0
    %v3194 = vadd.f32 %v3001, %v3193
    %v3195 = vpop.f32.mrb[0].mxu0
    %v3196 = vadd.f32 %v3003, %v3195
    %3197 = vmatprep.mubr.bf16.mxu0 0
    %3198 = vmatmul.mubr.bf16.gmra.mrb[0].mxu0 %v553
    %v3199 = vpop.f32.mrb[0].mxu0
    %v3200 = vadd.f32 %v3007, %v3199
    %v3201 = vpop.f32.mrb[0].mxu0
    %v3202 = vadd.f32 %v3009, %v3201
    %v3203 = vpop.f32.mrb[0].mxu0
    %v3204 = vadd.f32 %v3011, %v3203
    %v3205 = vpop.f32.mrb[0].mxu0
    %v3206 = vadd.f32 %v3013, %v3205
    %3207 = vmatprep.mubr.bf16.mxu0 0
    %3208 = vmatmul.mubr.bf16.gmra.mrb[0].mxu0 %v556
    %v3209 = vpop.f32.mrb[0].mxu0
    %v3210 = vadd.f32 %v3017, %v3209
    %v3211 = vpop.f32.mrb[0].mxu0
    %v3212 = vadd.f32 %v3019, %v3211
    %v3213 = vpop.f32.mrb[0].mxu0
    %v3214 = vadd.f32 %v3021, %v3213
    %v3215 = vpop.f32.mrb[0].mxu0
    %v3216 = vadd.f32 %v3023, %v3215
    %3217 = vmatprep.mubr.bf16.mxu0 0
    %3218 = vmatmul.mubr.bf16.gmra.mrb[0].mxu0 %v559
    %v3219 = vpop.f32.mrb[0].mxu0
    %v3220 = vadd.f32 %v3027, %v3219
    %v3221 = vpop.f32.mrb[0].mxu0
    %v3222 = vadd.f32 %v3029, %v3221
    %v3223 = vpop.f32.mrb[0].mxu0
    %v3224 = vadd.f32 %v3031, %v3223
    %v3225 = vpop.f32.mrb[0].mxu0
    %v3226 = vadd.f32 %v3033, %v3225
    %3227 = vmatprep.mubr.bf16.mxu0 0
    %3228 = vmatmul.mubr.bf16.gmra.mrb[0].mxu0 %v562
    %v3229 = vpop.f32.mrb[0].mxu0
    %v3230 = vadd.f32 %v3037, %v3229
    %v3231 = vpop.f32.mrb[0].mxu0
    %v3232 = vadd.f32 %v3039, %v3231
    %v3233 = vpop.f32.mrb[0].mxu0
    %v3234 = vadd.f32 %v3041, %v3233
    %v3235 = vpop.f32.mrb[0].mxu0
    %v3236 = vadd.f32 %v3043, %v3235
    %3237 = vmatprep.mubr.bf16.mxu0 0
    %3238 = vmatmul.mubr.bf16.gmra.mrb[0].mxu0 %v565
    %v3239 = vpop.f32.mrb[0].mxu0
    %v3240 = vadd.f32 %v3047, %v3239
    %v3241 = vpop.f32.mrb[0].mxu0
    %v3242 = vadd.f32 %v3049, %v3241
    %v3243 = vpop.f32.mrb[0].mxu0
    %v3244 = vadd.f32 %v3051, %v3243
    %v3245 = vpop.f32.mrb[0].mxu0
    %v3246 = vadd.f32 %v3053, %v3245
    %3247 = vmatprep.mubr.bf16.mxu0 0
    %3248 = vmatmul.mubr.bf16.gmra.mrb[0].mxu0 %v568
    %v3249 = vpop.f32.mrb[0].mxu0
    %v3250 = vadd.f32 %v3057, %v3249
    %v3251 = vpop.f32.mrb[0].mxu0
    %v3252 = vadd.f32 %v3059, %v3251
    %v3253 = vpop.f32.mrb[0].mxu0
    %v3254 = vadd.f32 %v3061, %v3253
    %v3255 = vpop.f32.mrb[0].mxu0
    %v3256 = vadd.f32 %v3063, %v3255
    %3257 = vmatprep.mubr.bf16.mxu0 0
    %3258 = vmatmul.mubr.bf16.gmra.mrb[0].mxu0 %v571
    %v3259 = vpop.f32.mrb[0].mxu0
    %v3260 = vadd.f32 %v3067, %v3259
    %v3261 = vpop.f32.mrb[0].mxu0
    %v3262 = vadd.f32 %v3069, %v3261
    %v3263 = vpop.f32.mrb[0].mxu0
    %v3264 = vadd.f32 %v3071, %v3263
    %v3265 = vpop.f32.mrb[0].mxu0
    %v3266 = vadd.f32 %v3073, %v3265
    %3267 = vdwg.mxu0
    %3268 = vmatprep.subr.bf16.mxu0 0
    %3269 = vmatpush1.bf16.msra.mxu0 %v1300
    %3270 = vmatprep.subr.bf16.mxu0 0
    %3271 = vmatpush1.bf16.msra.mxu0 %v1309
    %3272 = vmatprep.subr.bf16.mxu0 0
    %3273 = vmatpush1.bf16.msra.mxu0 %v1318
    %3274 = vmatprep.subr.bf16.mxu0 0
    %3275 = vmatpush1.bf16.msra.mxu0 %v1327
    %3276 = vmatprep.subr.bf16.mxu0 0
    %3277 = vmatpush1.bf16.msra.mxu0 %v1336
    %3278 = vmatprep.subr.bf16.mxu0 0
    %3279 = vmatpush1.bf16.msra.mxu0 %v1345
    %3280 = vmatprep.subr.bf16.mxu0 0
    %3281 = vmatpush1.bf16.msra.mxu0 %v1354
    %3282 = vmatprep.subr.bf16.mxu0 0
    %3283 = vmatpush1.bf16.msra.mxu0 %v1363
    %3284 = vmatprep.subr.bf16.mxu0 0
    %3285 = vmatpush1.bf16.msra.mxu0 %v1372
    %3286 = vmatprep.subr.bf16.mxu0 0
    %3287 = vmatpush1.bf16.msra.mxu0 %v1381
    %3288 = vmatprep.subr.bf16.mxu0 0
    %3289 = vmatpush1.bf16.msra.mxu0 %v1390
    %3290 = vmatprep.subr.bf16.mxu0 0
    %3291 = vmatpush1.bf16.msra.mxu0 %v1399
    %3292 = vmatprep.subr.bf16.mxu0 0
    %3293 = vmatpush1.bf16.msra.mxu0 %v1408
    %3294 = vmatprep.subr.bf16.mxu0 0
    %3295 = vmatpush1.bf16.msra.mxu0 %v1417
    %3296 = vmatprep.subr.bf16.mxu0 0
    %3297 = vmatpush1.bf16.msra.mxu0 %v1426
    %3298 = vmatprep.subr.bf16.mxu0 0
    %3299 = vmatpush1.bf16.msra.mxu0 %v1435
    %3300 = vmatprep.mubr.bf16.mxu0 %v525
    %3301 = vmatmul.mubr.bf16.gmra.mrb[0].mxu0 %v524
    %v3302 = vpop.f32.mrb[0].mxu0
    %v3303 = vadd.f32 0.0, %v3302
    %v3304 = vpop.f32.mrb[0].mxu0
    %v3305 = vpop.f32.mrb[0].mxu0
    %v3306 = vadd.f32 0.0, %v3305
    %v3307 = vpop.f32.mrb[0].mxu0
    %3308 = vmatprep.mubr.bf16.mxu0 %v528
    %3309 = vmatmul.mubr.bf16.gmra.mrb[0].mxu0 %v527
    %v3310 = vpop.f32.mrb[0].mxu0
    %v3311 = vadd.f32 0.0, %v3310
    %v3312 = vpop.f32.mrb[0].mxu0
    %v3313 = vpop.f32.mrb[0].mxu0
    %v3314 = vadd.f32 0.0, %v3313
    %v3315 = vpop.f32.mrb[0].mxu0
    %3316 = vmatprep.mubr.bf16.mxu0 %v531
    %3317 = vmatmul.mubr.bf16.gmra.mrb[0].mxu0 %v530
    %v3318 = vpop.f32.mrb[0].mxu0
    %v3319 = vadd.f32 0.0, %v3318
    %v3320 = vpop.f32.mrb[0].mxu0
    %v3321 = vpop.f32.mrb[0].mxu0
    %v3322 = vadd.f32 0.0, %v3321
    %v3323 = vpop.f32.mrb[0].mxu0
    %3324 = vmatprep.mubr.bf16.mxu0 %v534
    %3325 = vmatmul.mubr.bf16.gmra.mrb[0].mxu0 %v533
    %v3326 = vpop.f32.mrb[0].mxu0
    %v3327 = vadd.f32 0.0, %v3326
    %v3328 = vpop.f32.mrb[0].mxu0
    %v3329 = vpop.f32.mrb[0].mxu0
    %v3330 = vadd.f32 0.0, %v3329
    %v3331 = vpop.f32.mrb[0].mxu0
    %3332 = vmatprep.mubr.bf16.mxu0 %v537
    %3333 = vmatmul.mubr.bf16.gmra.mrb[0].mxu0 %v536
    %v3334 = vpop.f32.mrb[0].mxu0
    %v3335 = vadd.f32 0.0, %v3334
    %v3336 = vpop.f32.mrb[0].mxu0
    %v3337 = vpop.f32.mrb[0].mxu0
    %v3338 = vadd.f32 0.0, %v3337
    %v3339 = vpop.f32.mrb[0].mxu0
    %3340 = vmatprep.mubr.bf16.mxu0 %v540
    %3341 = vmatmul.mubr.bf16.gmra.mrb[0].mxu0 %v539
    %v3342 = vpop.f32.mrb[0].mxu0
    %v3343 = vadd.f32 0.0, %v3342
    %v3344 = vpop.f32.mrb[0].mxu0
    %v3345 = vpop.f32.mrb[0].mxu0
    %v3346 = vadd.f32 0.0, %v3345
    %v3347 = vpop.f32.mrb[0].mxu0
    %3348 = vmatprep.mubr.bf16.mxu0 %v543
    %3349 = vmatmul.mubr.bf16.gmra.mrb[0].mxu0 %v542
    %v3350 = vpop.f32.mrb[0].mxu0
    %v3351 = vadd.f32 0.0, %v3350
    %v3352 = vpop.f32.mrb[0].mxu0
    %v3353 = vpop.f32.mrb[0].mxu0
    %v3354 = vadd.f32 0.0, %v3353
    %v3355 = vpop.f32.mrb[0].mxu0
    %3356 = vmatprep.mubr.bf16.mxu0 %v546
    %3357 = vmatmul.mubr.bf16.gmra.mrb[0].mxu0 %v545
    %v3358 = vpop.f32.mrb[0].mxu0
    %v3359 = vadd.f32 0.0, %v3358
    %v3360 = vpop.f32.mrb[0].mxu0
    %v3361 = vpop.f32.mrb[0].mxu0
    %v3362 = vadd.f32 0.0, %v3361
    %v3363 = vpop.f32.mrb[0].mxu0
    %3364 = vmatprep.mubr.bf16.mxu0 %v549
    %3365 = vmatmul.mubr.bf16.gmra.mrb[0].mxu0 %v548
    %v3366 = vpop.f32.mrb[0].mxu0
    %v3367 = vadd.f32 0.0, %v3366
    %v3368 = vpop.f32.mrb[0].mxu0
    %v3369 = vpop.f32.mrb[0].mxu0
    %v3370 = vadd.f32 0.0, %v3369
    %v3371 = vpop.f32.mrb[0].mxu0
    %3372 = vmatprep.mubr.bf16.mxu0 %v552
    %3373 = vmatmul.mubr.bf16.gmra.mrb[0].mxu0 %v551
    %v3374 = vpop.f32.mrb[0].mxu0
    %v3375 = vadd.f32 0.0, %v3374
    %v3376 = vpop.f32.mrb[0].mxu0
    %v3377 = vpop.f32.mrb[0].mxu0
    %v3378 = vadd.f32 0.0, %v3377
    %v3379 = vpop.f32.mrb[0].mxu0
    %3380 = vmatprep.mubr.bf16.mxu0 %v555
    %3381 = vmatmul.mubr.bf16.gmra.mrb[0].mxu0 %v554
    %v3382 = vpop.f32.mrb[0].mxu0
    %v3383 = vadd.f32 0.0, %v3382
    %v3384 = vpop.f32.mrb[0].mxu0
    %v3385 = vpop.f32.mrb[0].mxu0
    %v3386 = vadd.f32 0.0, %v3385
    %v3387 = vpop.f32.mrb[0].mxu0
    %3388 = vmatprep.mubr.bf16.mxu0 %v558
    %3389 = vmatmul.mubr.bf16.gmra.mrb[0].mxu0 %v557
    %v3390 = vpop.f32.mrb[0].mxu0
    %v3391 = vadd.f32 0.0, %v3390
    %v3392 = vpop.f32.mrb[0].mxu0
    %v3393 = vpop.f32.mrb[0].mxu0
    %v3394 = vadd.f32 0.0, %v3393
    %v3395 = vpop.f32.mrb[0].mxu0
    %3396 = vmatprep.mubr.bf16.mxu0 %v561
    %3397 = vmatmul.mubr.bf16.gmra.mrb[0].mxu0 %v560
    %v3398 = vpop.f32.mrb[0].mxu0
    %v3399 = vadd.f32 0.0, %v3398
    %v3400 = vpop.f32.mrb[0].mxu0
    %v3401 = vpop.f32.mrb[0].mxu0
    %v3402 = vadd.f32 0.0, %v3401
    %v3403 = vpop.f32.mrb[0].mxu0
    %3404 = vmatprep.mubr.bf16.mxu0 %v564
    %3405 = vmatmul.mubr.bf16.gmra.mrb[0].mxu0 %v563
    %v3406 = vpop.f32.mrb[0].mxu0
    %v3407 = vadd.f32 0.0, %v3406
    %v3408 = vpop.f32.mrb[0].mxu0
    %v3409 = vpop.f32.mrb[0].mxu0
    %v3410 = vadd.f32 0.0, %v3409
    %v3411 = vpop.f32.mrb[0].mxu0
    %3412 = vmatprep.mubr.bf16.mxu0 %v567
    %3413 = vmatmul.mubr.bf16.gmra.mrb[0].mxu0 %v566
    %v3414 = vpop.f32.mrb[0].mxu0
    %v3415 = vadd.f32 0.0, %v3414
    %v3416 = vpop.f32.mrb[0].mxu0
    %v3417 = vpop.f32.mrb[0].mxu0
    %v3418 = vadd.f32 0.0, %v3417
    %v3419 = vpop.f32.mrb[0].mxu0
    %3420 = vmatprep.mubr.bf16.mxu0 %v570
    %3421 = vmatmul.mubr.bf16.gmra.mrb[0].mxu0 %v569
    %v3422 = vpop.f32.mrb[0].mxu0
    %v3423 = vadd.f32 0.0, %v3422
    %v3424 = vpop.f32.mrb[0].mxu0
    %v3425 = vpop.f32.mrb[0].mxu0
    %v3426 = vadd.f32 0.0, %v3425
    %v3427 = vpop.f32.mrb[0].mxu0
    %3428 = vdwg.mxu0
    %3429 = vmatprep.subr.bf16.mxu0 0
    %3430 = vmatpush1.bf16.msra.mxu0 %v1444
    %3431 = vmatprep.subr.bf16.mxu0 0
    %3432 = vmatpush1.bf16.msra.mxu0 %v1453
    %3433 = vmatprep.subr.bf16.mxu0 0
    %3434 = vmatpush1.bf16.msra.mxu0 %v1462
    %3435 = vmatprep.subr.bf16.mxu0 0
    %3436 = vmatpush1.bf16.msra.mxu0 %v1471
    %3437 = vmatprep.subr.bf16.mxu0 0
    %3438 = vmatpush1.bf16.msra.mxu0 %v1480
    %3439 = vmatprep.subr.bf16.mxu0 0
    %3440 = vmatpush1.bf16.msra.mxu0 %v1489
    %3441 = vmatprep.subr.bf16.mxu0 0
    %3442 = vmatpush1.bf16.msra.mxu0 %v1498
    %3443 = vmatprep.subr.bf16.mxu0 0
    %3444 = vmatpush1.bf16.msra.mxu0 %v1507
    %3445 = vmatprep.subr.bf16.mxu0 0
    %3446 = vmatpush1.bf16.msra.mxu0 0
    %3447 = vmatprep.subr.bf16.mxu0 0
    %3448 = vmatpush1.bf16.msra.mxu0 0
    %3449 = vmatprep.subr.bf16.mxu0 0
    %3450 = vmatpush1.bf16.msra.mxu0 0
    %3451 = vmatprep.subr.bf16.mxu0 0
    %3452 = vmatpush1.bf16.msra.mxu0 0
    %3453 = vmatprep.subr.bf16.mxu0 0
    %3454 = vmatpush1.bf16.msra.mxu0 0
    %3455 = vmatprep.subr.bf16.mxu0 0
    %3456 = vmatpush1.bf16.msra.mxu0 0
    %3457 = vmatprep.subr.bf16.mxu0 0
    %3458 = vmatpush1.bf16.msra.mxu0 0
    %3459 = vmatprep.subr.bf16.mxu0 0
    %3460 = vmatpush1.bf16.msra.mxu0 0
    %3461 = vmatprep.mubr.bf16.mxu0 0
    %3462 = vmatmul.mubr.bf16.gmra.mrb[0].mxu0 %v526
    %v3463 = vpop.f32.mrb[0].mxu0
    %v3464 = vadd.f32 %v3303, %v3463
    %v3465 = vpop.f32.mrb[0].mxu0
    %v3466 = vpop.f32.mrb[0].mxu0
    %v3467 = vadd.f32 %v3306, %v3466
    %v3468 = vpop.f32.mrb[0].mxu0
    %3469 = vmatprep.mubr.bf16.mxu0 0
    %3470 = vmatmul.mubr.bf16.gmra.mrb[0].mxu0 %v529
    %v3471 = vpop.f32.mrb[0].mxu0
    %v3472 = vadd.f32 %v3311, %v3471
    %v3473 = vpop.f32.mrb[0].mxu0
    %v3474 = vpop.f32.mrb[0].mxu0
    %v3475 = vadd.f32 %v3314, %v3474
    %v3476 = vpop.f32.mrb[0].mxu0
    %3477 = vmatprep.mubr.bf16.mxu0 0
    %3478 = vmatmul.mubr.bf16.gmra.mrb[0].mxu0 %v532
    %v3479 = vpop.f32.mrb[0].mxu0
    %v3480 = vadd.f32 %v3319, %v3479
    %v3481 = vpop.f32.mrb[0].mxu0
    %v3482 = vpop.f32.mrb[0].mxu0
    %v3483 = vadd.f32 %v3322, %v3482
    %v3484 = vpop.f32.mrb[0].mxu0
    %3485 = vmatprep.mubr.bf16.mxu0 0
    %3486 = vmatmul.mubr.bf16.gmra.mrb[0].mxu0 %v535
    %v3487 = vpop.f32.mrb[0].mxu0
    %v3488 = vadd.f32 %v3327, %v3487
    %v3489 = vpop.f32.mrb[0].mxu0
    %v3490 = vpop.f32.mrb[0].mxu0
    %v3491 = vadd.f32 %v3330, %v3490
    %v3492 = vpop.f32.mrb[0].mxu0
    %3493 = vmatprep.mubr.bf16.mxu0 0
    %3494 = vmatmul.mubr.bf16.gmra.mrb[0].mxu0 %v538
    %v3495 = vpop.f32.mrb[0].mxu0
    %v3496 = vadd.f32 %v3335, %v3495
    %v3497 = vpop.f32.mrb[0].mxu0
    %v3498 = vpop.f32.mrb[0].mxu0
    %v3499 = vadd.f32 %v3338, %v3498
    %v3500 = vpop.f32.mrb[0].mxu0
    %3501 = vmatprep.mubr.bf16.mxu0 0
    %3502 = vmatmul.mubr.bf16.gmra.mrb[0].mxu0 %v541
    %v3503 = vpop.f32.mrb[0].mxu0
    %v3504 = vadd.f32 %v3343, %v3503
    %v3505 = vpop.f32.mrb[0].mxu0
    %v3506 = vpop.f32.mrb[0].mxu0
    %v3507 = vadd.f32 %v3346, %v3506
    %v3508 = vpop.f32.mrb[0].mxu0
    %3509 = vmatprep.mubr.bf16.mxu0 0
    %3510 = vmatmul.mubr.bf16.gmra.mrb[0].mxu0 %v544
    %v3511 = vpop.f32.mrb[0].mxu0
    %v3512 = vadd.f32 %v3351, %v3511
    %v3513 = vpop.f32.mrb[0].mxu0
    %v3514 = vpop.f32.mrb[0].mxu0
    %v3515 = vadd.f32 %v3354, %v3514
    %v3516 = vpop.f32.mrb[0].mxu0
    %3517 = vmatprep.mubr.bf16.mxu0 0
    %3518 = vmatmul.mubr.bf16.gmra.mrb[0].mxu0 %v547
    %v3519 = vpop.f32.mrb[0].mxu0
    %v3520 = vadd.f32 %v3359, %v3519
    %v3521 = vpop.f32.mrb[0].mxu0
    %v3522 = vpop.f32.mrb[0].mxu0
    %v3523 = vadd.f32 %v3362, %v3522
    %v3524 = vpop.f32.mrb[0].mxu0
    %3525 = vmatprep.mubr.bf16.mxu0 0
    %3526 = vmatmul.mubr.bf16.gmra.mrb[0].mxu0 %v550
    %v3527 = vpop.f32.mrb[0].mxu0
    %v3528 = vadd.f32 %v3367, %v3527
    %v3529 = vpop.f32.mrb[0].mxu0
    %v3530 = vpop.f32.mrb[0].mxu0
    %v3531 = vadd.f32 %v3370, %v3530
    %v3532 = vpop.f32.mrb[0].mxu0
    %3533 = vmatprep.mubr.bf16.mxu0 0
    %3534 = vmatmul.mubr.bf16.gmra.mrb[0].mxu0 %v553
    %v3535 = vpop.f32.mrb[0].mxu0
    %v3536 = vadd.f32 %v3375, %v3535
    %v3537 = vpop.f32.mrb[0].mxu0
    %v3538 = vpop.f32.mrb[0].mxu0
    %v3539 = vadd.f32 %v3378, %v3538
    %v3540 = vpop.f32.mrb[0].mxu0
    %3541 = vmatprep.mubr.bf16.mxu0 0
    %3542 = vmatmul.mubr.bf16.gmra.mrb[0].mxu0 %v556
    %v3543 = vpop.f32.mrb[0].mxu0
    %v3544 = vadd.f32 %v3383, %v3543
    %v3545 = vpop.f32.mrb[0].mxu0
    %v3546 = vpop.f32.mrb[0].mxu0
    %v3547 = vadd.f32 %v3386, %v3546
    %v3548 = vpop.f32.mrb[0].mxu0
    %3549 = vmatprep.mubr.bf16.mxu0 0
    %3550 = vmatmul.mubr.bf16.gmra.mrb[0].mxu0 %v559
    %v3551 = vpop.f32.mrb[0].mxu0
    %v3552 = vadd.f32 %v3391, %v3551
    %v3553 = vpop.f32.mrb[0].mxu0
    %v3554 = vpop.f32.mrb[0].mxu0
    %v3555 = vadd.f32 %v3394, %v3554
    %v3556 = vpop.f32.mrb[0].mxu0
    %3557 = vmatprep.mubr.bf16.mxu0 0
    %3558 = vmatmul.mubr.bf16.gmra.mrb[0].mxu0 %v562
    %v3559 = vpop.f32.mrb[0].mxu0
    %v3560 = vadd.f32 %v3399, %v3559
    %v3561 = vpop.f32.mrb[0].mxu0
    %v3562 = vpop.f32.mrb[0].mxu0
    %v3563 = vadd.f32 %v3402, %v3562
    %v3564 = vpop.f32.mrb[0].mxu0
    %3565 = vmatprep.mubr.bf16.mxu0 0
    %3566 = vmatmul.mubr.bf16.gmra.mrb[0].mxu0 %v565
    %v3567 = vpop.f32.mrb[0].mxu0
    %v3568 = vadd.f32 %v3407, %v3567
    %v3569 = vpop.f32.mrb[0].mxu0
    %v3570 = vpop.f32.mrb[0].mxu0
    %v3571 = vadd.f32 %v3410, %v3570
    %v3572 = vpop.f32.mrb[0].mxu0
    %3573 = vmatprep.mubr.bf16.mxu0 0
    %3574 = vmatmul.mubr.bf16.gmra.mrb[0].mxu0 %v568
    %v3575 = vpop.f32.mrb[0].mxu0
    %v3576 = vadd.f32 %v3415, %v3575
    %v3577 = vpop.f32.mrb[0].mxu0
    %v3578 = vpop.f32.mrb[0].mxu0
    %v3579 = vadd.f32 %v3418, %v3578
    %v3580 = vpop.f32.mrb[0].mxu0
    %3581 = vmatprep.mubr.bf16.mxu0 0
    %3582 = vmatmul.mubr.bf16.gmra.mrb[0].mxu0 %v571
    %v3583 = vpop.f32.mrb[0].mxu0
    %v3584 = vadd.f32 %v3423, %v3583
    %v3585 = vpop.f32.mrb[0].mxu0
    %v3586 = vpop.f32.mrb[0].mxu0
    %v3587 = vadd.f32 %v3426, %v3586
    %v3588 = vpop.f32.mrb[0].mxu0
    %3589 = vdwg.mxu0
    %v3590 = vpack.c.bf16 %v1956, %v1952
    %v3591 = vpack.c.bf16 %v1958, %v1954
    %v3592 = vpack.c.bf16 %v2342, %v2338
    %v3593 = vpack.c.bf16 %v2344, %v2340
    %v3594 = vpack.c.bf16 %v2728, %v2724
    %v3595 = vpack.c.bf16 %v2730, %v2726
    %v3596 = vpack.c.bf16 %v3114, %v3110
    %v3597 = vpack.c.bf16 %v3116, %v3112
    %v3598 = vpack.c.bf16 %v3467, %v3464
    %v3599 = vpack.c.bf16 %v1966, %v1962
    %v3600 = vpack.c.bf16 %v1968, %v1964
    %v3601 = vpack.c.bf16 %v2352, %v2348
    %v3602 = vpack.c.bf16 %v2354, %v2350
    %v3603 = vpack.c.bf16 %v2738, %v2734
    %v3604 = vpack.c.bf16 %v2740, %v2736
    %v3605 = vpack.c.bf16 %v3124, %v3120
    %v3606 = vpack.c.bf16 %v3126, %v3122
    %v3607 = vpack.c.bf16 %v3475, %v3472
    %v3608 = vpack.c.bf16 %v1976, %v1972
    %v3609 = vpack.c.bf16 %v1978, %v1974
    %v3610 = vpack.c.bf16 %v2362, %v2358
    %v3611 = vpack.c.bf16 %v2364, %v2360
    %v3612 = vpack.c.bf16 %v2748, %v2744
    %v3613 = vpack.c.bf16 %v2750, %v2746
    %v3614 = vpack.c.bf16 %v3134, %v3130
    %v3615 = vpack.c.bf16 %v3136, %v3132
    %v3616 = vpack.c.bf16 %v3483, %v3480
    %v3617 = vpack.c.bf16 %v1986, %v1982
    %v3618 = vpack.c.bf16 %v1988, %v1984
    %v3619 = vpack.c.bf16 %v2372, %v2368
    %v3620 = vpack.c.bf16 %v2374, %v2370
    %v3621 = vpack.c.bf16 %v2758, %v2754
    %v3622 = vpack.c.bf16 %v2760, %v2756
    %v3623 = vpack.c.bf16 %v3144, %v3140
    %v3624 = vpack.c.bf16 %v3146, %v3142
    %v3625 = vpack.c.bf16 %v3491, %v3488
    %v3626 = vpack.c.bf16 %v1996, %v1992
    %v3627 = vpack.c.bf16 %v1998, %v1994
    %v3628 = vpack.c.bf16 %v2382, %v2378
    %v3629 = vpack.c.bf16 %v2384, %v2380
    %v3630 = vpack.c.bf16 %v2768, %v2764
    %v3631 = vpack.c.bf16 %v2770, %v2766
    %v3632 = vpack.c.bf16 %v3154, %v3150
    %v3633 = vpack.c.bf16 %v3156, %v3152
    %v3634 = vpack.c.bf16 %v3499, %v3496
    %v3635 = vpack.c.bf16 %v2006, %v2002
    %v3636 = vpack.c.bf16 %v2008, %v2004
    %v3637 = vpack.c.bf16 %v2392, %v2388
    %v3638 = vpack.c.bf16 %v2394, %v2390
    %v3639 = vpack.c.bf16 %v2778, %v2774
    %v3640 = vpack.c.bf16 %v2780, %v2776
    %v3641 = vpack.c.bf16 %v3164, %v3160
    %v3642 = vpack.c.bf16 %v3166, %v3162
    %v3643 = vpack.c.bf16 %v3507, %v3504
    %v3644 = vpack.c.bf16 %v2016, %v2012
    %v3645 = vpack.c.bf16 %v2018, %v2014
    %v3646 = vpack.c.bf16 %v2402, %v2398
    %v3647 = vpack.c.bf16 %v2404, %v2400
    %v3648 = vpack.c.bf16 %v2788, %v2784
    %v3649 = vpack.c.bf16 %v2790, %v2786
    %v3650 = vpack.c.bf16 %v3174, %v3170
    %v3651 = vpack.c.bf16 %v3176, %v3172
    %v3652 = vpack.c.bf16 %v3515, %v3512
    %v3653 = vpack.c.bf16 %v2026, %v2022
    %v3654 = vpack.c.bf16 %v2028, %v2024
    %v3655 = vpack.c.bf16 %v2412, %v2408
    %v3656 = vpack.c.bf16 %v2414, %v2410
    %v3657 = vpack.c.bf16 %v2798, %v2794
    %v3658 = vpack.c.bf16 %v2800, %v2796
    %v3659 = vpack.c.bf16 %v3184, %v3180
    %v3660 = vpack.c.bf16 %v3186, %v3182
    %v3661 = vpack.c.bf16 %v3523, %v3520
    %v3662 = vpack.c.bf16 %v2036, %v2032
    %v3663 = vpack.c.bf16 %v2038, %v2034
    %v3664 = vpack.c.bf16 %v2422, %v2418
    %v3665 = vpack.c.bf16 %v2424, %v2420
    %v3666 = vpack.c.bf16 %v2808, %v2804
    %v3667 = vpack.c.bf16 %v2810, %v2806
    %v3668 = vpack.c.bf16 %v3194, %v3190
    %v3669 = vpack.c.bf16 %v3196, %v3192
    %v3670 = vpack.c.bf16 %v3531, %v3528
    %v3671 = vpack.c.bf16 %v2046, %v2042
    %v3672 = vpack.c.bf16 %v2048, %v2044
    %v3673 = vpack.c.bf16 %v2432, %v2428
    %v3674 = vpack.c.bf16 %v2434, %v2430
    %v3675 = vpack.c.bf16 %v2818, %v2814
    %v3676 = vpack.c.bf16 %v2820, %v2816
    %v3677 = vpack.c.bf16 %v3204, %v3200
    %v3678 = vpack.c.bf16 %v3206, %v3202
    %v3679 = vpack.c.bf16 %v3539, %v3536
    %v3680 = vpack.c.bf16 %v2056, %v2052
    %v3681 = vpack.c.bf16 %v2058, %v2054
    %v3682 = vpack.c.bf16 %v2442, %v2438
    %v3683 = vpack.c.bf16 %v2444, %v2440
    %v3684 = vpack.c.bf16 %v2828, %v2824
    %v3685 = vpack.c.bf16 %v2830, %v2826
    %v3686 = vpack.c.bf16 %v3214, %v3210
    %v3687 = vpack.c.bf16 %v3216, %v3212
    %v3688 = vpack.c.bf16 %v3547, %v3544
    %v3689 = vpack.c.bf16 %v2066, %v2062
    %v3690 = vpack.c.bf16 %v2068, %v2064
    %v3691 = vpack.c.bf16 %v2452, %v2448
    %v3692 = vpack.c.bf16 %v2454, %v2450
    %v3693 = vpack.c.bf16 %v2838, %v2834
    %v3694 = vpack.c.bf16 %v2840, %v2836
    %v3695 = vpack.c.bf16 %v3224, %v3220
    %v3696 = vpack.c.bf16 %v3226, %v3222
    %v3697 = vpack.c.bf16 %v3555, %v3552
    %v3698 = vpack.c.bf16 %v2076, %v2072
    %v3699 = vpack.c.bf16 %v2078, %v2074
    %v3700 = vpack.c.bf16 %v2462, %v2458
    %v3701 = vpack.c.bf16 %v2464, %v2460
    %v3702 = vpack.c.bf16 %v2848, %v2844
    %v3703 = vpack.c.bf16 %v2850, %v2846
    %v3704 = vpack.c.bf16 %v3234, %v3230
    %v3705 = vpack.c.bf16 %v3236, %v3232
    %v3706 = vpack.c.bf16 %v3563, %v3560
    %v3707 = vpack.c.bf16 %v2086, %v2082
    %v3708 = vpack.c.bf16 %v2088, %v2084
    %v3709 = vpack.c.bf16 %v2472, %v2468
    %v3710 = vpack.c.bf16 %v2474, %v2470
    %v3711 = vpack.c.bf16 %v2858, %v2854
    %v3712 = vpack.c.bf16 %v2860, %v2856
    %v3713 = vpack.c.bf16 %v3244, %v3240
    %v3714 = vpack.c.bf16 %v3246, %v3242
    %v3715 = vpack.c.bf16 %v3571, %v3568
    %v3716 = vpack.c.bf16 %v2096, %v2092
    %v3717 = vpack.c.bf16 %v2098, %v2094
    %v3718 = vpack.c.bf16 %v2482, %v2478
    %v3719 = vpack.c.bf16 %v2484, %v2480
    %v3720 = vpack.c.bf16 %v2868, %v2864
    %v3721 = vpack.c.bf16 %v2870, %v2866
    %v3722 = vpack.c.bf16 %v3254, %v3250
    %v3723 = vpack.c.bf16 %v3256, %v3252
    %v3724 = vpack.c.bf16 %v3579, %v3576
    %v3725 = vpack.c.bf16 %v2106, %v2102
    %v3726 = vpack.c.bf16 %v2108, %v2104
    %v3727 = vpack.c.bf16 %v2492, %v2488
    %v3728 = vpack.c.bf16 %v2494, %v2490
    %v3729 = vpack.c.bf16 %v2878, %v2874
    %v3730 = vpack.c.bf16 %v2880, %v2876
    %v3731 = vpack.c.bf16 %v3264, %v3260
    %v3732 = vpack.c.bf16 %v3266, %v3262
    %v3733 = vpack.c.bf16 %v3587, %v3584
    %3734 = vst [vmem:[#allocation2] sm:$0xff] %v3590
    %3735 = vst [vmem:[#allocation2 + $0x8] sm:$0xff] %v3591
    %3736 = vst [vmem:[#allocation2 + $0x10] sm:$0xff] %v3592
    %3737 = vst [vmem:[#allocation2 + $0x18] sm:$0xff] %v3593
    %3738 = vst [vmem:[#allocation2 + $0x20] sm:$0xff] %v3594
    %3739 = vst [vmem:[#allocation2 + $0x28] sm:$0xff] %v3595
    %3740 = vst [vmem:[#allocation2 + $0x30] sm:$0xff] %v3596
    %3741 = vst [vmem:[#allocation2 + $0x38] sm:$0xff] %v3597
    %3742 = vst [vmem:[#allocation2 + $0x40] sm:$0xff] %v3598
    %3743 = vst [vmem:[#allocation2 + $0x48] sm:$0xff] %v3599
    %3744 = vst [vmem:[#allocation2 + $0x50] sm:$0xff] %v3600
    %3745 = vst [vmem:[#allocation2 + $0x58] sm:$0xff] %v3601
    %3746 = vst [vmem:[#allocation2 + $0x60] sm:$0xff] %v3602
    %3747 = vst [vmem:[#allocation2 + $0x68] sm:$0xff] %v3603
    %3748 = vst [vmem:[#allocation2 + $0x70] sm:$0xff] %v3604
    %3749 = vst [vmem:[#allocation2 + $0x78] sm:$0xff] %v3605
    %3750 = vst [vmem:[#allocation2 + $0x80] sm:$0xff] %v3606
    %3751 = vst [vmem:[#allocation2 + $0x88] sm:$0xff] %v3607
    %3752 = vst [vmem:[#allocation2 + $0x90] sm:$0xff] %v3608
    %3753 = vst [vmem:[#allocation2 + $0x98] sm:$0xff] %v3609
    %3754 = vst [vmem:[#allocation2 + $0xa0] sm:$0xff] %v3610
    %3755 = vst [vmem:[#allocation2 + $0xa8] sm:$0xff] %v3611
    %3756 = vst [vmem:[#allocation2 + $0xb0] sm:$0xff] %v3612
    %3757 = vst [vmem:[#allocation2 + $0xb8] sm:$0xff] %v3613
    %3758 = vst [vmem:[#allocation2 + $0xc0] sm:$0xff] %v3614
    %3759 = vst [vmem:[#allocation2 + $0xc8] sm:$0xff] %v3615
    %3760 = vst [vmem:[#allocation2 + $0xd0] sm:$0xff] %v3616
    %3761 = vst [vmem:[#allocation2 + $0xd8] sm:$0xff] %v3617
    %3762 = vst [vmem:[#allocation2 + $0xe0] sm:$0xff] %v3618
    %3763 = vst [vmem:[#allocation2 + $0xe8] sm:$0xff] %v3619
    %3764 = vst [vmem:[#allocation2 + $0xf0] sm:$0xff] %v3620
    %3765 = vst [vmem:[#allocation2 + $0xf8] sm:$0xff] %v3621
    %3766 = vst [vmem:[#allocation2 + $0x100] sm:$0xff] %v3622
    %3767 = vst [vmem:[#allocation2 + $0x108] sm:$0xff] %v3623
    %3768 = vst [vmem:[#allocation2 + $0x110] sm:$0xff] %v3624
    %3769 = vst [vmem:[#allocation2 + $0x118] sm:$0xff] %v3625
    %3770 = vst [vmem:[#allocation2 + $0x120] sm:$0xff] %v3626
    %3771 = vst [vmem:[#allocation2 + $0x128] sm:$0xff] %v3627
    %3772 = vst [vmem:[#allocation2 + $0x130] sm:$0xff] %v3628
    %3773 = vst [vmem:[#allocation2 + $0x138] sm:$0xff] %v3629
    %3774 = vst [vmem:[#allocation2 + $0x140] sm:$0xff] %v3630
    %3775 = vst [vmem:[#allocation2 + $0x148] sm:$0xff] %v3631
    %3776 = vst [vmem:[#allocation2 + $0x150] sm:$0xff] %v3632
    %3777 = vst [vmem:[#allocation2 + $0x158] sm:$0xff] %v3633
    %3778 = vst [vmem:[#allocation2 + $0x160] sm:$0xff] %v3634
    %3779 = vst [vmem:[#allocation2 + $0x168] sm:$0xff] %v3635
    %3780 = vst [vmem:[#allocation2 + $0x170] sm:$0xff] %v3636
    %3781 = vst [vmem:[#allocation2 + $0x178] sm:$0xff] %v3637
    %3782 = vst [vmem:[#allocation2 + $0x180] sm:$0xff] %v3638
    %3783 = vst [vmem:[#allocation2 + $0x188] sm:$0xff] %v3639
    %3784 = vst [vmem:[#allocation2 + $0x190] sm:$0xff] %v3640
    %3785 = vst [vmem:[#allocation2 + $0x198] sm:$0xff] %v3641
    %3786 = vst [vmem:[#allocation2 + $0x1a0] sm:$0xff] %v3642
    %3787 = vst [vmem:[#allocation2 + $0x1a8] sm:$0xff] %v3643
    %3788 = vst [vmem:[#allocation2 + $0x1b0] sm:$0xff] %v3644
    %3789 = vst [vmem:[#allocation2 + $0x1b8] sm:$0xff] %v3645
    %3790 = vst [vmem:[#allocation2 + $0x1c0] sm:$0xff] %v3646
    %3791 = vst [vmem:[#allocation2 + $0x1c8] sm:$0xff] %v3647
    %3792 = vst [vmem:[#allocation2 + $0x1d0] sm:$0xff] %v3648
    %3793 = vst [vmem:[#allocation2 + $0x1d8] sm:$0xff] %v3649
    %3794 = vst [vmem:[#allocation2 + $0x1e0] sm:$0xff] %v3650
    %3795 = vst [vmem:[#allocation2 + $0x1e8] sm:$0xff] %v3651
    %3796 = vst [vmem:[#allocation2 + $0x1f0] sm:$0xff] %v3652
    %3797 = vst [vmem:[#allocation2 + $0x1f8] sm:$0xff] %v3653
    %3798 = vst [vmem:[#allocation2 + $0x200] sm:$0xff] %v3654
    %3799 = vst [vmem:[#allocation2 + $0x208] sm:$0xff] %v3655
    %3800 = vst [vmem:[#allocation2 + $0x210] sm:$0xff] %v3656
    %3801 = vst [vmem:[#allocation2 + $0x218] sm:$0xff] %v3657
    %3802 = vst [vmem:[#allocation2 + $0x220] sm:$0xff] %v3658
    %3803 = vst [vmem:[#allocation2 + $0x228] sm:$0xff] %v3659
    %3804 = vst [vmem:[#allocation2 + $0x230] sm:$0xff] %v3660
    %3805 = vst [vmem:[#allocation2 + $0x238] sm:$0xff] %v3661
    %3806 = vst [vmem:[#allocation2 + $0x240] sm:$0xff] %v3662
    %3807 = vst [vmem:[#allocation2 + $0x248] sm:$0xff] %v3663
    %3808 = vst [vmem:[#allocation2 + $0x250] sm:$0xff] %v3664
    %3809 = vst [vmem:[#allocation2 + $0x258] sm:$0xff] %v3665
    %3810 = vst [vmem:[#allocation2 + $0x260] sm:$0xff] %v3666
    %3811 = vst [vmem:[#allocation2 + $0x268] sm:$0xff] %v3667
    %3812 = vst [vmem:[#allocation2 + $0x270] sm:$0xff] %v3668
    %3813 = vst [vmem:[#allocation2 + $0x278] sm:$0xff] %v3669
    %3814 = vst [vmem:[#allocation2 + $0x280] sm:$0xff] %v3670
    %3815 = vst [vmem:[#allocation2 + $0x288] sm:$0xff] %v3671
    %3816 = vst [vmem:[#allocation2 + $0x290] sm:$0xff] %v3672
    %3817 = vst [vmem:[#allocation2 + $0x298] sm:$0xff] %v3673
    %3818 = vst [vmem:[#allocation2 + $0x2a0] sm:$0xff] %v3674
    %3819 = vst [vmem:[#allocation2 + $0x2a8] sm:$0xff] %v3675
    %3820 = vst [vmem:[#allocation2 + $0x2b0] sm:$0xff] %v3676
    %3821 = vst [vmem:[#allocation2 + $0x2b8] sm:$0xff] %v3677
    %3822 = vst [vmem:[#allocation2 + $0x2c0] sm:$0xff] %v3678
    %3823 = vst [vmem:[#allocation2 + $0x2c8] sm:$0xff] %v3679
    %3824 = vst [vmem:[#allocation2 + $0x2d0] sm:$0xff] %v3680
    %3825 = vst [vmem:[#allocation2 + $0x2d8] sm:$0xff] %v3681
    %3826 = vst [vmem:[#allocation2 + $0x2e0] sm:$0xff] %v3682
    %3827 = vst [vmem:[#allocation2 + $0x2e8] sm:$0xff] %v3683
    %3828 = vst [vmem:[#allocation2 + $0x2f0] sm:$0xff] %v3684
    %3829 = vst [vmem:[#allocation2 + $0x2f8] sm:$0xff] %v3685
    %3830 = vst [vmem:[#allocation2 + $0x300] sm:$0xff] %v3686
    %3831 = vst [vmem:[#allocation2 + $0x308] sm:$0xff] %v3687
    %3832 = vst [vmem:[#allocation2 + $0x310] sm:$0xff] %v3688
    %3833 = vst [vmem:[#allocation2 + $0x318] sm:$0xff] %v3689
    %3834 = vst [vmem:[#allocation2 + $0x320] sm:$0xff] %v3690
    %3835 = vst [vmem:[#allocation2 + $0x328] sm:$0xff] %v3691
    %3836 = vst [vmem:[#allocation2 + $0x330] sm:$0xff] %v3692
    %3837 = vst [vmem:[#allocation2 + $0x338] sm:$0xff] %v3693
    %3838 = vst [vmem:[#allocation2 + $0x340] sm:$0xff] %v3694
    %3839 = vst [vmem:[#allocation2 + $0x348] sm:$0xff] %v3695
    %3840 = vst [vmem:[#allocation2 + $0x350] sm:$0xff] %v3696
    %3841 = vst [vmem:[#allocation2 + $0x358] sm:$0xff] %v3697
    %3842 = vst [vmem:[#allocation2 + $0x360] sm:$0xff] %v3698
    %3843 = vst [vmem:[#allocation2 + $0x368] sm:$0xff] %v3699
    %3844 = vst [vmem:[#allocation2 + $0x370] sm:$0xff] %v3700
    %3845 = vst [vmem:[#allocation2 + $0x378] sm:$0xff] %v3701
    %3846 = vst [vmem:[#allocation2 + $0x380] sm:$0xff] %v3702
    %3847 = vst [vmem:[#allocation2 + $0x388] sm:$0xff] %v3703
    %3848 = vst [vmem:[#allocation2 + $0x390] sm:$0xff] %v3704
    %3849 = vst [vmem:[#allocation2 + $0x398] sm:$0xff] %v3705
    %3850 = vst [vmem:[#allocation2 + $0x3a0] sm:$0xff] %v3706
    %3851 = vst [vmem:[#allocation2 + $0x3a8] sm:$0xff] %v3707
    %3852 = vst [vmem:[#allocation2 + $0x3b0] sm:$0xff] %v3708
    %3853 = vst [vmem:[#allocation2 + $0x3b8] sm:$0xff] %v3709
    %3854 = vst [vmem:[#allocation2 + $0x3c0] sm:$0xff] %v3710
    %3855 = vst [vmem:[#allocation2 + $0x3c8] sm:$0xff] %v3711
    %3856 = vst [vmem:[#allocation2 + $0x3d0] sm:$0xff] %v3712
    %3857 = vst [vmem:[#allocation2 + $0x3d8] sm:$0xff] %v3713
    %3858 = vst [vmem:[#allocation2 + $0x3e0] sm:$0xff] %v3714
    %3859 = vst [vmem:[#allocation2 + $0x3e8] sm:$0xff] %v3715
    %3860 = vst [vmem:[#allocation2 + $0x3f0] sm:$0xff] %v3716
    %3861 = vst [vmem:[#allocation2 + $0x3f8] sm:$0xff] %v3717
    %3862 = vst [vmem:[#allocation2 + $0x400] sm:$0xff] %v3718
    %3863 = vst [vmem:[#allocation2 + $0x408] sm:$0xff] %v3719
    %3864 = vst [vmem:[#allocation2 + $0x410] sm:$0xff] %v3720
    %3865 = vst [vmem:[#allocation2 + $0x418] sm:$0xff] %v3721
    %3866 = vst [vmem:[#allocation2 + $0x420] sm:$0xff] %v3722
    %3867 = vst [vmem:[#allocation2 + $0x428] sm:$0xff] %v3723
    %3868 = vst [vmem:[#allocation2 + $0x430] sm:$0xff] %v3724
    %3869 = vst [vmem:[#allocation2 + $0x438] sm:$0xff] %v3725
    %3870 = vst [vmem:[#allocation2 + $0x440] sm:$0xff] %v3726
    %3871 = vst [vmem:[#allocation2 + $0x448] sm:$0xff] %v3727
    %3872 = vst [vmem:[#allocation2 + $0x450] sm:$0xff] %v3728
    %3873 = vst [vmem:[#allocation2 + $0x458] sm:$0xff] %v3729
    %3874 = vst [vmem:[#allocation2 + $0x460] sm:$0xff] %v3730
    %3875 = vst [vmem:[#allocation2 + $0x468] sm:$0xff] %v3731
    %3876 = vst [vmem:[#allocation2 + $0x470] sm:$0xff] %v3732
    %3877 = vst [vmem:[#allocation2 + $0x478] sm:$0xff] %v3733
    %v3878 = vld [vmem:[#allocation2] sm:$0xff]
    %v3879 = vld [vmem:[#allocation2 + $0x48] sm:$0xff]
    %v3880 = vld [vmem:[#allocation2 + $0x90] sm:$0xff]
    %v3881 = vld [vmem:[#allocation2 + $0xd8] sm:$0xff]
    %v3882 = vld [vmem:[#allocation2 + $0x120] sm:$0xff]
    %v3883 = vld [vmem:[#allocation2 + $0x168] sm:$0xff]
    %v3884 = vld [vmem:[#allocation2 + $0x1b0] sm:$0xff]
    %v3885 = vld [vmem:[#allocation2 + $0x1f8] sm:$0xff]
    %v3886 = vld [vmem:[#allocation2 + $0x18] sm:$0xff]
    %v3887 = vld [vmem:[#allocation2 + $0x60] sm:$0xff]
    %v3888 = vld [vmem:[#allocation2 + $0xa8] sm:$0xff]
    %v3889 = vld [vmem:[#allocation2 + $0xf0] sm:$0xff]
    %v3890 = vld [vmem:[#allocation2 + $0x138] sm:$0xff]
    %v3891 = vld [vmem:[#allocation2 + $0x180] sm:$0xff]
    %v3892 = vld [vmem:[#allocation2 + $0x1c8] sm:$0xff]
    %v3893 = vld [vmem:[#allocation2 + $0x210] sm:$0xff]
    %v3894 = vld [vmem:[#allocation2 + $0x30] sm:$0xff]
    %v3895 = vld [vmem:[#allocation2 + $0x78] sm:$0xff]
    %v3896 = vld [vmem:[#allocation2 + $0xc0] sm:$0xff]
    %v3897 = vld [vmem:[#allocation2 + $0x108] sm:$0xff]
    %v3898 = vld [vmem:[#allocation2 + $0x150] sm:$0xff]
    %v3899 = vld [vmem:[#allocation2 + $0x198] sm:$0xff]
    %v3900 = vld [vmem:[#allocation2 + $0x1e0] sm:$0xff]
    %v3901 = vld [vmem:[#allocation2 + $0x228] sm:$0xff]
    %vm3902 = vcmask 523264
    %v3904 = vsel %vm3902, %v3878, 0
    %v3907 = vsel %vm3902, %v3879, 0
    %v3910 = vsel %vm3902, %v3880, 0
    %v3913 = vsel %vm3902, %v3881, 0
    %v3916 = vsel %vm3902, %v3882, 0
    %v3919 = vsel %vm3902, %v3883, 0
    %v3922 = vsel %vm3902, %v3884, 0
    %v3925 = vsel %vm3902, %v3885, 0
    %v3928 = vsel %vm3902, %v3886, 0
    %v3931 = vsel %vm3902, %v3887, 0
    %v3934 = vsel %vm3902, %v3888, 0
    %v3937 = vsel %vm3902, %v3889, 0
    %v3940 = vsel %vm3902, %v3890, 0
    %v3943 = vsel %vm3902, %v3891, 0
    %v3946 = vsel %vm3902, %v3892, 0
    %v3949 = vsel %vm3902, %v3893, 0
    %3951 = vmatprep.subr.bf16.mxu0 0
    %3952 = vmatpush1.bf16.xpose.msra.mxu0 %v3928
    %3953 = vmatprep.subr.bf16.mxu0 0
    %3954 = vmatpush1.bf16.xpose.msra.mxu0 %v3931
    %3955 = vmatprep.subr.bf16.mxu0 0
    %3956 = vmatpush1.bf16.xpose.msra.mxu0 %v3934
    %3957 = vmatprep.subr.bf16.mxu0 0
    %3958 = vmatpush1.bf16.xpose.msra.mxu0 %v3937
    %3959 = vmatprep.subr.bf16.mxu0 0
    %3960 = vmatpush1.bf16.xpose.msra.mxu0 %v3940
    %3961 = vmatprep.subr.bf16.mxu0 0
    %3962 = vmatpush1.bf16.xpose.msra.mxu0 %v3943
    %3963 = vmatprep.subr.bf16.mxu0 0
    %3964 = vmatpush1.bf16.xpose.msra.mxu0 %v3946
    %3965 = vmatprep.subr.bf16.mxu0 0
    %3966 = vmatpush1.bf16.xpose.msra.mxu0 %v3949
    %3967 = vmatprep.subr.bf16.mxu0 0
    %3968 = vmatpush1.bf16.xpose.msra.mxu0 0
    %3969 = vmatprep.subr.bf16.mxu0 0
    %3970 = vmatpush1.bf16.xpose.msra.mxu0 0
    %3971 = vmatprep.subr.bf16.mxu0 0
    %3972 = vmatpush1.bf16.xpose.msra.mxu0 0
    %3973 = vmatprep.subr.bf16.mxu0 0
    %3974 = vmatpush1.bf16.xpose.msra.mxu0 0
    %3975 = vmatprep.subr.bf16.mxu0 0
    %3976 = vmatpush1.bf16.xpose.msra.mxu0 0
    %3977 = vmatprep.subr.bf16.mxu0 0
    %3978 = vmatpush1.bf16.xpose.msra.mxu0 0
    %3979 = vmatprep.subr.bf16.mxu0 0
    %3980 = vmatpush1.bf16.xpose.msra.mxu0 0
    %3981 = vmatprep.subr.bf16.mxu0 0
    %3982 = vmatpush1.bf16.xpose.msra.mxu0 0
    %3983 = vmatprep.mubr.bf16.mxu0 0
    %3984 = vmatmul.mubr.bf16.gmra.mrb[0].mxu0 %v3904
    %v3985 = vpop.f32.mrb[0].mxu0
    %v3986 = vadd.f32 0.0, %v3985
    %v3987 = vpop.f32.mrb[0].mxu0
    %v3988 = vpop.f32.mrb[0].mxu0
    %v3989 = vadd.f32 0.0, %v3988
    %v3990 = vpop.f32.mrb[0].mxu0
    %3991 = vmatprep.mubr.bf16.mxu0 0
    %3992 = vmatmul.mubr.bf16.gmra.mrb[0].mxu0 %v3907
    %v3993 = vpop.f32.mrb[0].mxu0
    %v3994 = vadd.f32 0.0, %v3993
    %v3995 = vpop.f32.mrb[0].mxu0
    %v3996 = vpop.f32.mrb[0].mxu0
    %v3997 = vadd.f32 0.0, %v3996
    %v3998 = vpop.f32.mrb[0].mxu0
    %3999 = vmatprep.mubr.bf16.mxu0 0
    %4000 = vmatmul.mubr.bf16.gmra.mrb[0].mxu0 %v3910
    %v4001 = vpop.f32.mrb[0].mxu0
    %v4002 = vadd.f32 0.0, %v4001
    %v4003 = vpop.f32.mrb[0].mxu0
    %v4004 = vpop.f32.mrb[0].mxu0
    %v4005 = vadd.f32 0.0, %v4004
    %v4006 = vpop.f32.mrb[0].mxu0
    %4007 = vmatprep.mubr.bf16.mxu0 0
    %4008 = vmatmul.mubr.bf16.gmra.mrb[0].mxu0 %v3913
    %v4009 = vpop.f32.mrb[0].mxu0
    %v4010 = vadd.f32 0.0, %v4009
    %v4011 = vpop.f32.mrb[0].mxu0
    %v4012 = vpop.f32.mrb[0].mxu0
    %v4013 = vadd.f32 0.0, %v4012
    %v4014 = vpop.f32.mrb[0].mxu0
    %4015 = vmatprep.mubr.bf16.mxu0 0
    %4016 = vmatmul.mubr.bf16.gmra.mrb[0].mxu0 %v3916
    %v4017 = vpop.f32.mrb[0].mxu0
    %v4018 = vadd.f32 0.0, %v4017
    %v4019 = vpop.f32.mrb[0].mxu0
    %v4020 = vpop.f32.mrb[0].mxu0
    %v4021 = vadd.f32 0.0, %v4020
    %v4022 = vpop.f32.mrb[0].mxu0
    %4023 = vmatprep.mubr.bf16.mxu0 0
    %4024 = vmatmul.mubr.bf16.gmra.mrb[0].mxu0 %v3919
    %v4025 = vpop.f32.mrb[0].mxu0
    %v4026 = vadd.f32 0.0, %v4025
    %v4027 = vpop.f32.mrb[0].mxu0
    %v4028 = vpop.f32.mrb[0].mxu0
    %v4029 = vadd.f32 0.0, %v4028
    %v4030 = vpop.f32.mrb[0].mxu0
    %4031 = vmatprep.mubr.bf16.mxu0 0
    %4032 = vmatmul.mubr.bf16.gmra.mrb[0].mxu0 %v3922
    %v4033 = vpop.f32.mrb[0].mxu0
    %v4034 = vadd.f32 0.0, %v4033
    %v4035 = vpop.f32.mrb[0].mxu0
    %v4036 = vpop.f32.mrb[0].mxu0
    %v4037 = vadd.f32 0.0, %v4036
    %v4038 = vpop.f32.mrb[0].mxu0
    %4039 = vmatprep.mubr.bf16.mxu0 0
    %4040 = vmatmul.mubr.bf16.gmra.mrb[0].mxu0 %v3925
    %v4041 = vpop.f32.mrb[0].mxu0
    %v4042 = vadd.f32 0.0, %v4041
    %v4043 = vpop.f32.mrb[0].mxu0
    %v4044 = vpop.f32.mrb[0].mxu0
    %v4045 = vadd.f32 0.0, %v4044
    %v4046 = vpop.f32.mrb[0].mxu0
    %4047 = vdwg.mxu0
    %4048 = vmax.xlane.f32.xlu0 %v3986
    %v4049 = vpop.xlane.xlu0 %4048
    %4050 = vmax.xlane.f32.xlu0 %v3989
    %v4051 = vpop.xlane.xlu0 %4050
    %4052 = vmax.xlane.f32.xlu0 %v3994
    %v4053 = vpop.xlane.xlu0 %4052
    %4054 = vmax.xlane.f32.xlu0 %v3997
    %v4055 = vpop.xlane.xlu0 %4054
    %4056 = vmax.xlane.f32.xlu0 %v4002
    %v4057 = vpop.xlane.xlu0 %4056
    %4058 = vmax.xlane.f32.xlu0 %v4005
    %v4059 = vpop.xlane.xlu0 %4058
    %4060 = vmax.xlane.f32.xlu0 %v4010
    %v4061 = vpop.xlane.xlu0 %4060
    %4062 = vmax.xlane.f32.xlu0 %v4013
    %v4063 = vpop.xlane.xlu0 %4062
    %4064 = vmax.xlane.f32.xlu0 %v4018
    %v4065 = vpop.xlane.xlu0 %4064
    %4066 = vmax.xlane.f32.xlu0 %v4021
    %v4067 = vpop.xlane.xlu0 %4066
    %4068 = vmax.xlane.f32.xlu0 %v4026
    %v4069 = vpop.xlane.xlu0 %4068
    %4070 = vmax.xlane.f32.xlu0 %v4029
    %v4071 = vpop.xlane.xlu0 %4070
    %4072 = vmax.xlane.f32.xlu0 %v4034
    %v4073 = vpop.xlane.xlu0 %4072
    %4074 = vmax.xlane.f32.xlu0 %v4037
    %v4075 = vpop.xlane.xlu0 %4074
    %4076 = vmax.xlane.f32.xlu0 %v4042
    %v4077 = vpop.xlane.xlu0 %4076
    %4078 = vmax.xlane.f32.xlu0 %v4045
    %v4079 = vpop.xlane.xlu0 %4078
    %v4080 = vsub.f32 %v3986, %v4049
    %v4081 = vsub.f32 %v3989, %v4051
    %v4082 = vsub.f32 %v3994, %v4053
    %v4083 = vsub.f32 %v3997, %v4055
    %v4084 = vsub.f32 %v4002, %v4057
    %v4085 = vsub.f32 %v4005, %v4059
    %v4086 = vsub.f32 %v4010, %v4061
    %v4087 = vsub.f32 %v4013, %v4063
    %v4088 = vsub.f32 %v4018, %v4065
    %v4089 = vsub.f32 %v4021, %v4067
    %v4090 = vsub.f32 %v4026, %v4069
    %v4091 = vsub.f32 %v4029, %v4071
    %v4092 = vsub.f32 %v4034, %v4073
    %v4093 = vsub.f32 %v4037, %v4075
    %v4094 = vsub.f32 %v4042, %v4077
    %v4095 = vsub.f32 %v4045, %v4079
    %v4096 = vmul.f32 %v4080, 1.442695
    %v4097 = vpow.pop %v4096
    %v4098 = vmul.f32 %v4081, 1.442695
    %v4099 = vpow.pop %v4098
    %v4100 = vmul.f32 %v4082, 1.442695
    %v4101 = vpow.pop %v4100
    %v4102 = vmul.f32 %v4083, 1.442695
    %v4103 = vpow.pop %v4102
    %v4104 = vmul.f32 %v4084, 1.442695
    %v4105 = vpow.pop %v4104
    %v4106 = vmul.f32 %v4085, 1.442695
    %v4107 = vpow.pop %v4106
    %v4108 = vmul.f32 %v4086, 1.442695
    %v4109 = vpow.pop %v4108
    %v4110 = vmul.f32 %v4087, 1.442695
    %v4111 = vpow.pop %v4110
    %v4112 = vmul.f32 %v4088, 1.442695
    %v4113 = vpow.pop %v4112
    %v4114 = vmul.f32 %v4089, 1.442695
    %v4115 = vpow.pop %v4114
    %v4116 = vmul.f32 %v4090, 1.442695
    %v4117 = vpow.pop %v4116
    %v4118 = vmul.f32 %v4091, 1.442695
    %v4119 = vpow.pop %v4118
    %v4120 = vmul.f32 %v4092, 1.442695
    %v4121 = vpow.pop %v4120
    %v4122 = vmul.f32 %v4093, 1.442695
    %v4123 = vpow.pop %v4122
    %v4124 = vmul.f32 %v4094, 1.442695
    %v4125 = vpow.pop %v4124
    %v4126 = vmul.f32 %v4095, 1.442695
    %v4127 = vpow.pop %v4126
    %4128 = vadd.xlane.f32.xlu0 %v4097
    %v4129 = vpop.xlane.xlu0 %4128
    %4130 = vadd.xlane.f32.xlu0 %v4099
    %v4131 = vpop.xlane.xlu0 %4130
    %4132 = vadd.xlane.f32.xlu0 %v4101
    %v4133 = vpop.xlane.xlu0 %4132
    %4134 = vadd.xlane.f32.xlu0 %v4103
    %v4135 = vpop.xlane.xlu0 %4134
    %4136 = vadd.xlane.f32.xlu0 %v4105
    %v4137 = vpop.xlane.xlu0 %4136
    %4138 = vadd.xlane.f32.xlu0 %v4107
    %v4139 = vpop.xlane.xlu0 %4138
    %4140 = vadd.xlane.f32.xlu0 %v4109
    %v4141 = vpop.xlane.xlu0 %4140
    %4142 = vadd.xlane.f32.xlu0 %v4111
    %v4143 = vpop.xlane.xlu0 %4142
    %4144 = vadd.xlane.f32.xlu0 %v4113
    %v4145 = vpop.xlane.xlu0 %4144
    %4146 = vadd.xlane.f32.xlu0 %v4115
    %v4147 = vpop.xlane.xlu0 %4146
    %4148 = vadd.xlane.f32.xlu0 %v4117
    %v4149 = vpop.xlane.xlu0 %4148
    %4150 = vadd.xlane.f32.xlu0 %v4119
    %v4151 = vpop.xlane.xlu0 %4150
    %4152 = vadd.xlane.f32.xlu0 %v4121
    %v4153 = vpop.xlane.xlu0 %4152
    %4154 = vadd.xlane.f32.xlu0 %v4123
    %v4155 = vpop.xlane.xlu0 %4154
    %4156 = vadd.xlane.f32.xlu0 %v4125
    %v4157 = vpop.xlane.xlu0 %4156
    %4158 = vadd.xlane.f32.xlu0 %v4127
    %v4159 = vpop.xlane.xlu0 %4158
    %v4160 = vrcp.pop %v4129
    %v4161 = vrcp.pop %v4131
    %v4162 = vrcp.pop %v4133
    %v4163 = vrcp.pop %v4135
    %v4164 = vrcp.pop %v4137
    %v4165 = vrcp.pop %v4139
    %v4166 = vrcp.pop %v4141
    %v4167 = vrcp.pop %v4143
    %v4168 = vrcp.pop %v4145
    %v4169 = vrcp.pop %v4147
    %v4170 = vrcp.pop %v4149
    %v4171 = vrcp.pop %v4151
    %v4172 = vrcp.pop %v4153
    %v4173 = vrcp.pop %v4155
    %v4174 = vrcp.pop %v4157
    %v4175 = vrcp.pop %v4159
    %v4176 = vmul.f32 %v4097, %v4160
    %v4177 = vmul.f32 %v4099, %v4161
    %v4178 = vmul.f32 %v4101, %v4162
    %v4179 = vmul.f32 %v4103, %v4163
    %v4180 = vmul.f32 %v4105, %v4164
    %v4181 = vmul.f32 %v4107, %v4165
    %v4182 = vmul.f32 %v4109, %v4166
    %v4183 = vmul.f32 %v4111, %v4167
    %v4184 = vmul.f32 %v4113, %v4168
    %v4185 = vmul.f32 %v4115, %v4169
    %v4186 = vmul.f32 %v4117, %v4170
    %v4187 = vmul.f32 %v4119, %v4171
    %v4188 = vmul.f32 %v4121, %v4172
    %v4189 = vmul.f32 %v4123, %v4173
    %v4190 = vmul.f32 %v4125, %v4174
    %v4191 = vmul.f32 %v4127, %v4175
    %v4192 = vpack.c.bf16 %v4177, %v4176
    %v4193 = vpack.c.bf16 %v4179, %v4178
    %v4194 = vpack.c.bf16 %v4181, %v4180
    %v4195 = vpack.c.bf16 %v4183, %v4182
    %v4196 = vpack.c.bf16 %v4185, %v4184
    %v4197 = vpack.c.bf16 %v4187, %v4186
    %v4198 = vpack.c.bf16 %v4189, %v4188
    %v4199 = vpack.c.bf16 %v4191, %v4190
    %4200 = vmatprep.subr.bf16.mxu0 0
    %4201 = vmatpush1.bf16.msra.mxu0 %v3894
    %4202 = vmatprep.subr.bf16.mxu0 0
    %4203 = vmatpush1.bf16.msra.mxu0 %v3895
    %4204 = vmatprep.subr.bf16.mxu0 0
    %4205 = vmatpush1.bf16.msra.mxu0 %v3896
    %4206 = vmatprep.subr.bf16.mxu0 0
    %4207 = vmatpush1.bf16.msra.mxu0 %v3897
    %4208 = vmatprep.subr.bf16.mxu0 0
    %4209 = vmatpush1.bf16.msra.mxu0 %v3898
    %4210 = vmatprep.subr.bf16.mxu0 0
    %4211 = vmatpush1.bf16.msra.mxu0 %v3899
    %4212 = vmatprep.subr.bf16.mxu0 0
    %4213 = vmatpush1.bf16.msra.mxu0 %v3900
    %4214 = vmatprep.subr.bf16.mxu0 0
    %4215 = vmatpush1.bf16.msra.mxu0 %v3901
    %4216 = vmatprep.subr.bf16.mxu0 0
    %4217 = vmatpush1.bf16.msra.mxu0 0
    %4218 = vmatprep.subr.bf16.mxu0 0
    %4219 = vmatpush1.bf16.msra.mxu0 0
    %4220 = vmatprep.subr.bf16.mxu0 0
    %4221 = vmatpush1.bf16.msra.mxu0 0
    %4222 = vmatprep.subr.bf16.mxu0 0
    %4223 = vmatpush1.bf16.msra.mxu0 0
    %4224 = vmatprep.subr.bf16.mxu0 0
    %4225 = vmatpush1.bf16.msra.mxu0 0
    %4226 = vmatprep.subr.bf16.mxu0 0
    %4227 = vmatpush1.bf16.msra.mxu0 0
    %4228 = vmatprep.subr.bf16.mxu0 0
    %4229 = vmatpush1.bf16.msra.mxu0 0
    %4230 = vmatprep.subr.bf16.mxu0 0
    %4231 = vmatpush1.bf16.msra.mxu0 0
    %4232 = vmatprep.mubr.bf16.mxu0 0
    %4233 = vmatmul.mubr.bf16.gmra.mrb[0].mxu0 %v4192
    %v4234 = vpop.f32.mrb[0].mxu0
    %v4235 = vadd.f32 0.0, %v4234
    %v4236 = vpop.f32.mrb[0].mxu0
    %v4237 = vpop.f32.mrb[0].mxu0
    %v4238 = vadd.f32 0.0, %v4237
    %v4239 = vpop.f32.mrb[0].mxu0
    %4240 = vmatprep.mubr.bf16.mxu0 0
    %4241 = vmatmul.mubr.bf16.gmra.mrb[0].mxu0 %v4193
    %v4242 = vpop.f32.mrb[0].mxu0
    %v4243 = vadd.f32 0.0, %v4242
    %v4244 = vpop.f32.mrb[0].mxu0
    %v4245 = vpop.f32.mrb[0].mxu0
    %v4246 = vadd.f32 0.0, %v4245
    %v4247 = vpop.f32.mrb[0].mxu0
    %4248 = vmatprep.mubr.bf16.mxu0 0
    %4249 = vmatmul.mubr.bf16.gmra.mrb[0].mxu0 %v4194
    %v4250 = vpop.f32.mrb[0].mxu0
    %v4251 = vadd.f32 0.0, %v4250
    %v4252 = vpop.f32.mrb[0].mxu0
    %v4253 = vpop.f32.mrb[0].mxu0
    %v4254 = vadd.f32 0.0, %v4253
    %v4255 = vpop.f32.mrb[0].mxu0
    %4256 = vmatprep.mubr.bf16.mxu0 0
    %4257 = vmatmul.mubr.bf16.gmra.mrb[0].mxu0 %v4195
    %v4258 = vpop.f32.mrb[0].mxu0
    %v4259 = vadd.f32 0.0, %v4258
    %v4260 = vpop.f32.mrb[0].mxu0
    %v4261 = vpop.f32.mrb[0].mxu0
    %v4262 = vadd.f32 0.0, %v4261
    %v4263 = vpop.f32.mrb[0].mxu0
    %4264 = vmatprep.mubr.bf16.mxu0 0
    %4265 = vmatmul.mubr.bf16.gmra.mrb[0].mxu0 %v4196
    %v4266 = vpop.f32.mrb[0].mxu0
    %v4267 = vadd.f32 0.0, %v4266
    %v4268 = vpop.f32.mrb[0].mxu0
    %v4269 = vpop.f32.mrb[0].mxu0
    %v4270 = vadd.f32 0.0, %v4269
    %v4271 = vpop.f32.mrb[0].mxu0
    %4272 = vmatprep.mubr.bf16.mxu0 0
    %4273 = vmatmul.mubr.bf16.gmra.mrb[0].mxu0 %v4197
    %v4274 = vpop.f32.mrb[0].mxu0
    %v4275 = vadd.f32 0.0, %v4274
    %v4276 = vpop.f32.mrb[0].mxu0
    %v4277 = vpop.f32.mrb[0].mxu0
    %v4278 = vadd.f32 0.0, %v4277
    %v4279 = vpop.f32.mrb[0].mxu0
    %4280 = vmatprep.mubr.bf16.mxu0 0
    %4281 = vmatmul.mubr.bf16.gmra.mrb[0].mxu0 %v4198
    %v4282 = vpop.f32.mrb[0].mxu0
    %v4283 = vadd.f32 0.0, %v4282
    %v4284 = vpop.f32.mrb[0].mxu0
    %v4285 = vpop.f32.mrb[0].mxu0
    %v4286 = vadd.f32 0.0, %v4285
    %v4287 = vpop.f32.mrb[0].mxu0
    %4288 = vmatprep.mubr.bf16.mxu0 0
    %4289 = vmatmul.mubr.bf16.gmra.mrb[0].mxu0 %v4199
    %v4290 = vpop.f32.mrb[0].mxu0
    %v4291 = vadd.f32 0.0, %v4290
    %v4292 = vpop.f32.mrb[0].mxu0
    %v4293 = vpop.f32.mrb[0].mxu0
    %v4294 = vadd.f32 0.0, %v4293
    %v4295 = vpop.f32.mrb[0].mxu0
    %4296 = vdwg.mxu0
    %v4297 = vpack.c.bf16 %v4238, %v4235
    %v4298 = vpack.c.bf16 %v4246, %v4243
    %v4299 = vpack.c.bf16 %v4254, %v4251
    %v4300 = vpack.c.bf16 %v4262, %v4259
    %v4301 = vpack.c.bf16 %v4270, %v4267
    %v4302 = vpack.c.bf16 %v4278, %v4275
    %v4303 = vpack.c.bf16 %v4286, %v4283
    %v4304 = vpack.c.bf16 %v4294, %v4291
    %4305 = vst.msk [vmem:[#allocation3] sm:$0xff] %vm3902, %v4297
    %4306 = vst.msk [vmem:[#allocation3 + $0x18] sm:$0xff] %vm3902, %v4298
    %4307 = vst.msk [vmem:[#allocation3 + $0x30] sm:$0xff] %vm3902, %v4299
    %4308 = vst.msk [vmem:[#allocation3 + $0x48] sm:$0xff] %vm3902, %v4300
    %4309 = vst.msk [vmem:[#allocation3 + $0x60] sm:$0xff] %vm3902, %v4301
    %4310 = vst.msk [vmem:[#allocation3 + $0x78] sm:$0xff] %vm3902, %v4302
    %4311 = vst.msk [vmem:[#allocation3 + $0x90] sm:$0xff] %vm3902, %v4303
    %4312 = vst.msk [vmem:[#allocation3 + $0xa8] sm:$0xff] %vm3902, %v4304
    %v4313 = vld [vmem:[#allocation2] sm:$0xff]
    %v4314 = vld [vmem:[#allocation2 + $0x48] sm:$0xff]
    %v4315 = vld [vmem:[#allocation2 + $0x90] sm:$0xff]
    %v4316 = vld [vmem:[#allocation2 + $0xd8] sm:$0xff]
    %v4317 = vld [vmem:[#allocation2 + $0x120] sm:$0xff]
    %v4318 = vld [vmem:[#allocation2 + $0x168] sm:$0xff]
    %v4319 = vld [vmem:[#allocation2 + $0x1b0] sm:$0xff]
    %v4320 = vld [vmem:[#allocation2 + $0x1f8] sm:$0xff]
    %v4321 = vld [vmem:[#allocation2 + $0x18] sm:$0xff]
    %v4322 = vld [vmem:[#allocation2 + $0x60] sm:$0xff]
    %v4323 = vld [vmem:[#allocation2 + $0xa8] sm:$0xff]
    %v4324 = vld [vmem:[#allocation2 + $0xf0] sm:$0xff]
    %v4325 = vld [vmem:[#allocation2 + $0x138] sm:$0xff]
    %v4326 = vld [vmem:[#allocation2 + $0x180] sm:$0xff]
    %v4327 = vld [vmem:[#allocation2 + $0x1c8] sm:$0xff]
    %v4328 = vld [vmem:[#allocation2 + $0x210] sm:$0xff]
    %v4329 = vld [vmem:[#allocation2 + $0x30] sm:$0xff]
    %v4330 = vld [vmem:[#allocation2 + $0x78] sm:$0xff]
    %v4331 = vld [vmem:[#allocation2 + $0xc0] sm:$0xff]
    %v4332 = vld [vmem:[#allocation2 + $0x108] sm:$0xff]
    %v4333 = vld [vmem:[#allocation2 + $0x150] sm:$0xff]
    %v4334 = vld [vmem:[#allocation2 + $0x198] sm:$0xff]
    %v4335 = vld [vmem:[#allocation2 + $0x1e0] sm:$0xff]
    %v4336 = vld [vmem:[#allocation2 + $0x228] sm:$0xff]
    %4345 = vrot.lane.b32.xlu0 %v4313, 64
    %v4346 = vpop.permute.xlu0 %4345
    %4347 = vrot.lane.b32.xlu0 %v4314, 64
    %v4348 = vpop.permute.xlu0 %4347
    %4349 = vrot.lane.b32.xlu0 %v4315, 64
    %v4350 = vpop.permute.xlu0 %4349
    %4351 = vrot.lane.b32.xlu0 %v4316, 64
    %v4352 = vpop.permute.xlu0 %4351
    %4353 = vrot.lane.b32.xlu0 %v4317, 64
    %v4354 = vpop.permute.xlu0 %4353
    %4355 = vrot.lane.b32.xlu0 %v4318, 64
    %v4356 = vpop.permute.xlu0 %4355
    %4357 = vrot.lane.b32.xlu0 %v4319, 64
    %v4358 = vpop.permute.xlu0 %4357
    %4359 = vrot.lane.b32.xlu0 %v4320, 64
    %v4360 = vpop.permute.xlu0 %4359
    %4369 = vrot.lane.b32.xlu0 %v4321, 64
    %v4370 = vpop.permute.xlu0 %4369
    %4371 = vrot.lane.b32.xlu0 %v4322, 64
    %v4372 = vpop.permute.xlu0 %4371
    %4373 = vrot.lane.b32.xlu0 %v4323, 64
    %v4374 = vpop.permute.xlu0 %4373
    %4375 = vrot.lane.b32.xlu0 %v4324, 64
    %v4376 = vpop.permute.xlu0 %4375
    %4377 = vrot.lane.b32.xlu0 %v4325, 64
    %v4378 = vpop.permute.xlu0 %4377
    %4379 = vrot.lane.b32.xlu0 %v4326, 64
    %v4380 = vpop.permute.xlu0 %4379
    %4381 = vrot.lane.b32.xlu0 %v4327, 64
    %v4382 = vpop.permute.xlu0 %4381
    %4383 = vrot.lane.b32.xlu0 %v4328, 64
    %v4384 = vpop.permute.xlu0 %4383
    %v4386 = vsel %vm3902, %v4346, 0
    %v4389 = vsel %vm3902, %v4348, 0
    %v4392 = vsel %vm3902, %v4350, 0
    %v4395 = vsel %vm3902, %v4352, 0
    %v4398 = vsel %vm3902, %v4354, 0
    %v4401 = vsel %vm3902, %v4356, 0
    %v4404 = vsel %vm3902, %v4358, 0
    %v4407 = vsel %vm3902, %v4360, 0
    %v4410 = vsel %vm3902, %v4370, 0
    %v4413 = vsel %vm3902, %v4372, 0
    %v4416 = vsel %vm3902, %v4374, 0
    %v4419 = vsel %vm3902, %v4376, 0
    %v4422 = vsel %vm3902, %v4378, 0
    %v4425 = vsel %vm3902, %v4380, 0
    %v4428 = vsel %vm3902, %v4382, 0
    %v4431 = vsel %vm3902, %v4384, 0
    %4433 = vmatprep.subr.bf16.mxu0 0
    %4434 = vmatpush1.bf16.xpose.msra.mxu0 %v4410
    %4435 = vmatprep.subr.bf16.mxu0 0
    %4436 = vmatpush1.bf16.xpose.msra.mxu0 %v4413
    %4437 = vmatprep.subr.bf16.mxu0 0
    %4438 = vmatpush1.bf16.xpose.msra.mxu0 %v4416
    %4439 = vmatprep.subr.bf16.mxu0 0
    %4440 = vmatpush1.bf16.xpose.msra.mxu0 %v4419
    %4441 = vmatprep.subr.bf16.mxu0 0
    %4442 = vmatpush1.bf16.xpose.msra.mxu0 %v4422
    %4443 = vmatprep.subr.bf16.mxu0 0
    %4444 = vmatpush1.bf16.xpose.msra.mxu0 %v4425
    %4445 = vmatprep.subr.bf16.mxu0 0
    %4446 = vmatpush1.bf16.xpose.msra.mxu0 %v4428
    %4447 = vmatprep.subr.bf16.mxu0 0
    %4448 = vmatpush1.bf16.xpose.msra.mxu0 %v4431
    %4449 = vmatprep.subr.bf16.mxu0 0
    %4450 = vmatpush1.bf16.xpose.msra.mxu0 0
    %4451 = vmatprep.subr.bf16.mxu0 0
    %4452 = vmatpush1.bf16.xpose.msra.mxu0 0
    %4453 = vmatprep.subr.bf16.mxu0 0
    %4454 = vmatpush1.bf16.xpose.msra.mxu0 0
    %4455 = vmatprep.subr.bf16.mxu0 0
    %4456 = vmatpush1.bf16.xpose.msra.mxu0 0
    %4457 = vmatprep.subr.bf16.mxu0 0
    %4458 = vmatpush1.bf16.xpose.msra.mxu0 0
    %4459 = vmatprep.subr.bf16.mxu0 0
    %4460 = vmatpush1.bf16.xpose.msra.mxu0 0
    %4461 = vmatprep.subr.bf16.mxu0 0
    %4462 = vmatpush1.bf16.xpose.msra.mxu0 0
    %4463 = vmatprep.subr.bf16.mxu0 0
    %4464 = vmatpush1.bf16.xpose.msra.mxu0 0
    %4465 = vmatprep.mubr.bf16.mxu0 0
    %4466 = vmatmul.mubr.bf16.gmra.mrb[0].mxu0 %v4386
    %v4467 = vpop.f32.mrb[0].mxu0
    %v4468 = vadd.f32 0.0, %v4467
    %v4469 = vpop.f32.mrb[0].mxu0
    %v4470 = vpop.f32.mrb[0].mxu0
    %v4471 = vadd.f32 0.0, %v4470
    %v4472 = vpop.f32.mrb[0].mxu0
    %4473 = vmatprep.mubr.bf16.mxu0 0
    %4474 = vmatmul.mubr.bf16.gmra.mrb[0].mxu0 %v4389
    %v4475 = vpop.f32.mrb[0].mxu0
    %v4476 = vadd.f32 0.0, %v4475
    %v4477 = vpop.f32.mrb[0].mxu0
    %v4478 = vpop.f32.mrb[0].mxu0
    %v4479 = vadd.f32 0.0, %v4478
    %v4480 = vpop.f32.mrb[0].mxu0
    %4481 = vmatprep.mubr.bf16.mxu0 0
    %4482 = vmatmul.mubr.bf16.gmra.mrb[0].mxu0 %v4392
    %v4483 = vpop.f32.mrb[0].mxu0
    %v4484 = vadd.f32 0.0, %v4483
    %v4485 = vpop.f32.mrb[0].mxu0
    %v4486 = vpop.f32.mrb[0].mxu0
    %v4487 = vadd.f32 0.0, %v4486
    %v4488 = vpop.f32.mrb[0].mxu0
    %4489 = vmatprep.mubr.bf16.mxu0 0
    %4490 = vmatmul.mubr.bf16.gmra.mrb[0].mxu0 %v4395
    %v4491 = vpop.f32.mrb[0].mxu0
    %v4492 = vadd.f32 0.0, %v4491
    %v4493 = vpop.f32.mrb[0].mxu0
    %v4494 = vpop.f32.mrb[0].mxu0
    %v4495 = vadd.f32 0.0, %v4494
    %v4496 = vpop.f32.mrb[0].mxu0
    %4497 = vmatprep.mubr.bf16.mxu0 0
    %4498 = vmatmul.mubr.bf16.gmra.mrb[0].mxu0 %v4398
    %v4499 = vpop.f32.mrb[0].mxu0
    %v4500 = vadd.f32 0.0, %v4499
    %v4501 = vpop.f32.mrb[0].mxu0
    %v4502 = vpop.f32.mrb[0].mxu0
    %v4503 = vadd.f32 0.0, %v4502
    %v4504 = vpop.f32.mrb[0].mxu0
    %4505 = vmatprep.mubr.bf16.mxu0 0
    %4506 = vmatmul.mubr.bf16.gmra.mrb[0].mxu0 %v4401
    %v4507 = vpop.f32.mrb[0].mxu0
    %v4508 = vadd.f32 0.0, %v4507
    %v4509 = vpop.f32.mrb[0].mxu0
    %v4510 = vpop.f32.mrb[0].mxu0
    %v4511 = vadd.f32 0.0, %v4510
    %v4512 = vpop.f32.mrb[0].mxu0
    %4513 = vmatprep.mubr.bf16.mxu0 0
    %4514 = vmatmul.mubr.bf16.gmra.mrb[0].mxu0 %v4404
    %v4515 = vpop.f32.mrb[0].mxu0
    %v4516 = vadd.f32 0.0, %v4515
    %v4517 = vpop.f32.mrb[0].mxu0
    %v4518 = vpop.f32.mrb[0].mxu0
    %v4519 = vadd.f32 0.0, %v4518
    %v4520 = vpop.f32.mrb[0].mxu0
    %4521 = vmatprep.mubr.bf16.mxu0 0
    %4522 = vmatmul.mubr.bf16.gmra.mrb[0].mxu0 %v4407
    %v4523 = vpop.f32.mrb[0].mxu0
    %v4524 = vadd.f32 0.0, %v4523
    %v4525 = vpop.f32.mrb[0].mxu0
    %v4526 = vpop.f32.mrb[0].mxu0
    %v4527 = vadd.f32 0.0, %v4526
    %v4528 = vpop.f32.mrb[0].mxu0
    %4529 = vdwg.mxu0
    %4530 = vmax.xlane.f32.xlu0 %v4468
    %v4531 = vpop.xlane.xlu0 %4530
    %4532 = vmax.xlane.f32.xlu0 %v4471
    %v4533 = vpop.xlane.xlu0 %4532
    %4534 = vmax.xlane.f32.xlu0 %v4476
    %v4535 = vpop.xlane.xlu0 %4534
    %4536 = vmax.xlane.f32.xlu0 %v4479
    %v4537 = vpop.xlane.xlu0 %4536
    %4538 = vmax.xlane.f32.xlu0 %v4484
    %v4539 = vpop.xlane.xlu0 %4538
    %4540 = vmax.xlane.f32.xlu0 %v4487
    %v4541 = vpop.xlane.xlu0 %4540
    %4542 = vmax.xlane.f32.xlu0 %v4492
    %v4543 = vpop.xlane.xlu0 %4542
    %4544 = vmax.xlane.f32.xlu0 %v4495
    %v4545 = vpop.xlane.xlu0 %4544
    %4546 = vmax.xlane.f32.xlu0 %v4500
    %v4547 = vpop.xlane.xlu0 %4546
    %4548 = vmax.xlane.f32.xlu0 %v4503
    %v4549 = vpop.xlane.xlu0 %4548
    %4550 = vmax.xlane.f32.xlu0 %v4508
    %v4551 = vpop.xlane.xlu0 %4550
    %4552 = vmax.xlane.f32.xlu0 %v4511
    %v4553 = vpop.xlane.xlu0 %4552
    %4554 = vmax.xlane.f32.xlu0 %v4516
    %v4555 = vpop.xlane.xlu0 %4554
    %4556 = vmax.xlane.f32.xlu0 %v4519
    %v4557 = vpop.xlane.xlu0 %4556
    %4558 = vmax.xlane.f32.xlu0 %v4524
    %v4559 = vpop.xlane.xlu0 %4558
    %4560 = vmax.xlane.f32.xlu0 %v4527
    %v4561 = vpop.xlane.xlu0 %4560
    %v4562 = vsub.f32 %v4468, %v4531
    %v4563 = vsub.f32 %v4471, %v4533
    %v4564 = vsub.f32 %v4476, %v4535
    %v4565 = vsub.f32 %v4479, %v4537
    %v4566 = vsub.f32 %v4484, %v4539
    %v4567 = vsub.f32 %v4487, %v4541
    %v4568 = vsub.f32 %v4492, %v4543
    %v4569 = vsub.f32 %v4495, %v4545
    %v4570 = vsub.f32 %v4500, %v4547
    %v4571 = vsub.f32 %v4503, %v4549
    %v4572 = vsub.f32 %v4508, %v4551
    %v4573 = vsub.f32 %v4511, %v4553
    %v4574 = vsub.f32 %v4516, %v4555
    %v4575 = vsub.f32 %v4519, %v4557
    %v4576 = vsub.f32 %v4524, %v4559
    %v4577 = vsub.f32 %v4527, %v4561
    %v4578 = vmul.f32 %v4562, 1.442695
    %v4579 = vpow.pop %v4578
    %v4580 = vmul.f32 %v4563, 1.442695
    %v4581 = vpow.pop %v4580
    %v4582 = vmul.f32 %v4564, 1.442695
    %v4583 = vpow.pop %v4582
    %v4584 = vmul.f32 %v4565, 1.442695
    %v4585 = vpow.pop %v4584
    %v4586 = vmul.f32 %v4566, 1.442695
    %v4587 = vpow.pop %v4586
    %v4588 = vmul.f32 %v4567, 1.442695
    %v4589 = vpow.pop %v4588
    %v4590 = vmul.f32 %v4568, 1.442695
    %v4591 = vpow.pop %v4590
    %v4592 = vmul.f32 %v4569, 1.442695
    %v4593 = vpow.pop %v4592
    %v4594 = vmul.f32 %v4570, 1.442695
    %v4595 = vpow.pop %v4594
    %v4596 = vmul.f32 %v4571, 1.442695
    %v4597 = vpow.pop %v4596
    %v4598 = vmul.f32 %v4572, 1.442695
    %v4599 = vpow.pop %v4598
    %v4600 = vmul.f32 %v4573, 1.442695
    %v4601 = vpow.pop %v4600
    %v4602 = vmul.f32 %v4574, 1.442695
    %v4603 = vpow.pop %v4602
    %v4604 = vmul.f32 %v4575, 1.442695
    %v4605 = vpow.pop %v4604
    %v4606 = vmul.f32 %v4576, 1.442695
    %v4607 = vpow.pop %v4606
    %v4608 = vmul.f32 %v4577, 1.442695
    %v4609 = vpow.pop %v4608
    %4610 = vadd.xlane.f32.xlu0 %v4579
    %v4611 = vpop.xlane.xlu0 %4610
    %4612 = vadd.xlane.f32.xlu0 %v4581
    %v4613 = vpop.xlane.xlu0 %4612
    %4614 = vadd.xlane.f32.xlu0 %v4583
    %v4615 = vpop.xlane.xlu0 %4614
    %4616 = vadd.xlane.f32.xlu0 %v4585
    %v4617 = vpop.xlane.xlu0 %4616
    %4618 = vadd.xlane.f32.xlu0 %v4587
    %v4619 = vpop.xlane.xlu0 %4618
    %4620 = vadd.xlane.f32.xlu0 %v4589
    %v4621 = vpop.xlane.xlu0 %4620
    %4622 = vadd.xlane.f32.xlu0 %v4591
    %v4623 = vpop.xlane.xlu0 %4622
    %4624 = vadd.xlane.f32.xlu0 %v4593
    %v4625 = vpop.xlane.xlu0 %4624
    %4626 = vadd.xlane.f32.xlu0 %v4595
    %v4627 = vpop.xlane.xlu0 %4626
    %4628 = vadd.xlane.f32.xlu0 %v4597
    %v4629 = vpop.xlane.xlu0 %4628
    %4630 = vadd.xlane.f32.xlu0 %v4599
    %v4631 = vpop.xlane.xlu0 %4630
    %4632 = vadd.xlane.f32.xlu0 %v4601
    %v4633 = vpop.xlane.xlu0 %4632
    %4634 = vadd.xlane.f32.xlu0 %v4603
    %v4635 = vpop.xlane.xlu0 %4634
    %4636 = vadd.xlane.f32.xlu0 %v4605
    %v4637 = vpop.xlane.xlu0 %4636
    %4638 = vadd.xlane.f32.xlu0 %v4607
    %v4639 = vpop.xlane.xlu0 %4638
    %4640 = vadd.xlane.f32.xlu0 %v4609
    %v4641 = vpop.xlane.xlu0 %4640
    %v4642 = vrcp.pop %v4611
    %v4643 = vrcp.pop %v4613
    %v4644 = vrcp.pop %v4615
    %v4645 = vrcp.pop %v4617
    %v4646 = vrcp.pop %v4619
    %v4647 = vrcp.pop %v4621
    %v4648 = vrcp.pop %v4623
    %v4649 = vrcp.pop %v4625
    %v4650 = vrcp.pop %v4627
    %v4651 = vrcp.pop %v4629
    %v4652 = vrcp.pop %v4631
    %v4653 = vrcp.pop %v4633
    %v4654 = vrcp.pop %v4635
    %v4655 = vrcp.pop %v4637
    %v4656 = vrcp.pop %v4639
    %v4657 = vrcp.pop %v4641
    %v4658 = vmul.f32 %v4579, %v4642
    %v4659 = vmul.f32 %v4581, %v4643
    %v4660 = vmul.f32 %v4583, %v4644
    %v4661 = vmul.f32 %v4585, %v4645
    %v4662 = vmul.f32 %v4587, %v4646
    %v4663 = vmul.f32 %v4589, %v4647
    %v4664 = vmul.f32 %v4591, %v4648
    %v4665 = vmul.f32 %v4593, %v4649
    %v4666 = vmul.f32 %v4595, %v4650
    %v4667 = vmul.f32 %v4597, %v4651
    %v4668 = vmul.f32 %v4599, %v4652
    %v4669 = vmul.f32 %v4601, %v4653
    %v4670 = vmul.f32 %v4603, %v4654
    %v4671 = vmul.f32 %v4605, %v4655
    %v4672 = vmul.f32 %v4607, %v4656
    %v4673 = vmul.f32 %v4609, %v4657
    %v4674 = vpack.c.bf16 %v4659, %v4658
    %v4675 = vpack.c.bf16 %v4661, %v4660
    %v4676 = vpack.c.bf16 %v4663, %v4662
    %v4677 = vpack.c.bf16 %v4665, %v4664
    %v4678 = vpack.c.bf16 %v4667, %v4666
    %v4679 = vpack.c.bf16 %v4669, %v4668
    %v4680 = vpack.c.bf16 %v4671, %v4670
    %v4681 = vpack.c.bf16 %v4673, %v4672
    %4690 = vrot.lane.b32.xlu0 %v4329, 64
    %v4691 = vpop.permute.xlu0 %4690
    %4692 = vrot.lane.b32.xlu0 %v4330, 64
    %v4693 = vpop.permute.xlu0 %4692
    %4694 = vrot.lane.b32.xlu0 %v4331, 64
    %v4695 = vpop.permute.xlu0 %4694
    %4696 = vrot.lane.b32.xlu0 %v4332, 64
    %v4697 = vpop.permute.xlu0 %4696
    %4698 = vrot.lane.b32.xlu0 %v4333, 64
    %v4699 = vpop.permute.xlu0 %4698
    %4700 = vrot.lane.b32.xlu0 %v4334, 64
    %v4701 = vpop.permute.xlu0 %4700
    %4702 = vrot.lane.b32.xlu0 %v4335, 64
    %v4703 = vpop.permute.xlu0 %4702
    %4704 = vrot.lane.b32.xlu0 %v4336, 64
    %v4705 = vpop.permute.xlu0 %4704
    %4714 = vmatprep.subr.bf16.mxu0 0
    %4715 = vmatpush1.bf16.msra.mxu0 %v4691
    %4716 = vmatprep.subr.bf16.mxu0 0
    %4717 = vmatpush1.bf16.msra.mxu0 %v4693
    %4718 = vmatprep.subr.bf16.mxu0 0
    %4719 = vmatpush1.bf16.msra.mxu0 %v4695
    %4720 = vmatprep.subr.bf16.mxu0 0
    %4721 = vmatpush1.bf16.msra.mxu0 %v4697
    %4722 = vmatprep.subr.bf16.mxu0 0
    %4723 = vmatpush1.bf16.msra.mxu0 %v4699
    %4724 = vmatprep.subr.bf16.mxu0 0
    %4725 = vmatpush1.bf16.msra.mxu0 %v4701
    %4726 = vmatprep.subr.bf16.mxu0 0
    %4727 = vmatpush1.bf16.msra.mxu0 %v4703
    %4728 = vmatprep.subr.bf16.mxu0 0
    %4729 = vmatpush1.bf16.msra.mxu0 %v4705
    %4730 = vmatprep.subr.bf16.mxu0 0
    %4731 = vmatpush1.bf16.msra.mxu0 0
    %4732 = vmatprep.subr.bf16.mxu0 0
    %4733 = vmatpush1.bf16.msra.mxu0 0
    %4734 = vmatprep.subr.bf16.mxu0 0
    %4735 = vmatpush1.bf16.msra.mxu0 0
    %4736 = vmatprep.subr.bf16.mxu0 0
    %4737 = vmatpush1.bf16.msra.mxu0 0
    %4738 = vmatprep.subr.bf16.mxu0 0
    %4739 = vmatpush1.bf16.msra.mxu0 0
    %4740 = vmatprep.subr.bf16.mxu0 0
    %4741 = vmatpush1.bf16.msra.mxu0 0
    %4742 = vmatprep.subr.bf16.mxu0 0
    %4743 = vmatpush1.bf16.msra.mxu0 0
    %4744 = vmatprep.subr.bf16.mxu0 0
    %4745 = vmatpush1.bf16.msra.mxu0 0
    %4746 = vmatprep.mubr.bf16.mxu0 0
    %4747 = vmatmul.mubr.bf16.gmra.mrb[0].mxu0 %v4674
    %v4748 = vpop.f32.mrb[0].mxu0
    %v4749 = vadd.f32 0.0, %v4748
    %v4750 = vpop.f32.mrb[0].mxu0
    %v4751 = vpop.f32.mrb[0].mxu0
    %v4752 = vadd.f32 0.0, %v4751
    %v4753 = vpop.f32.mrb[0].mxu0
    %4754 = vmatprep.mubr.bf16.mxu0 0
    %4755 = vmatmul.mubr.bf16.gmra.mrb[0].mxu0 %v4675
    %v4756 = vpop.f32.mrb[0].mxu0
    %v4757 = vadd.f32 0.0, %v4756
    %v4758 = vpop.f32.mrb[0].mxu0
    %v4759 = vpop.f32.mrb[0].mxu0
    %v4760 = vadd.f32 0.0, %v4759
    %v4761 = vpop.f32.mrb[0].mxu0
    %4762 = vmatprep.mubr.bf16.mxu0 0
    %4763 = vmatmul.mubr.bf16.gmra.mrb[0].mxu0 %v4676
    %v4764 = vpop.f32.mrb[0].mxu0
    %v4765 = vadd.f32 0.0, %v4764
    %v4766 = vpop.f32.mrb[0].mxu0
    %v4767 = vpop.f32.mrb[0].mxu0
    %v4768 = vadd.f32 0.0, %v4767
    %v4769 = vpop.f32.mrb[0].mxu0
    %4770 = vmatprep.mubr.bf16.mxu0 0
    %4771 = vmatmul.mubr.bf16.gmra.mrb[0].mxu0 %v4677
    %v4772 = vpop.f32.mrb[0].mxu0
    %v4773 = vadd.f32 0.0, %v4772
    %v4774 = vpop.f32.mrb[0].mxu0
    %v4775 = vpop.f32.mrb[0].mxu0
    %v4776 = vadd.f32 0.0, %v4775
    %v4777 = vpop.f32.mrb[0].mxu0
    %4778 = vmatprep.mubr.bf16.mxu0 0
    %4779 = vmatmul.mubr.bf16.gmra.mrb[0].mxu0 %v4678
    %v4780 = vpop.f32.mrb[0].mxu0
    %v4781 = vadd.f32 0.0, %v4780
    %v4782 = vpop.f32.mrb[0].mxu0
    %v4783 = vpop.f32.mrb[0].mxu0
    %v4784 = vadd.f32 0.0, %v4783
    %v4785 = vpop.f32.mrb[0].mxu0
    %4786 = vmatprep.mubr.bf16.mxu0 0
    %4787 = vmatmul.mubr.bf16.gmra.mrb[0].mxu0 %v4679
    %v4788 = vpop.f32.mrb[0].mxu0
    %v4789 = vadd.f32 0.0, %v4788
    %v4790 = vpop.f32.mrb[0].mxu0
    %v4791 = vpop.f32.mrb[0].mxu0
    %v4792 = vadd.f32 0.0, %v4791
    %v4793 = vpop.f32.mrb[0].mxu0
    %4794 = vmatprep.mubr.bf16.mxu0 0
    %4795 = vmatmul.mubr.bf16.gmra.mrb[0].mxu0 %v4680
    %v4796 = vpop.f32.mrb[0].mxu0
    %v4797 = vadd.f32 0.0, %v4796
    %v4798 = vpop.f32.mrb[0].mxu0
    %v4799 = vpop.f32.mrb[0].mxu0
    %v4800 = vadd.f32 0.0, %v4799
    %v4801 = vpop.f32.mrb[0].mxu0
    %4802 = vmatprep.mubr.bf16.mxu0 0
    %4803 = vmatmul.mubr.bf16.gmra.mrb[0].mxu0 %v4681
    %v4804 = vpop.f32.mrb[0].mxu0
    %v4805 = vadd.f32 0.0, %v4804
    %v4806 = vpop.f32.mrb[0].mxu0
    %v4807 = vpop.f32.mrb[0].mxu0
    %v4808 = vadd.f32 0.0, %v4807
    %v4809 = vpop.f32.mrb[0].mxu0
    %4810 = vdwg.mxu0
    %v4811 = vpack.c.bf16 %v4752, %v4749
    %v4812 = vpack.c.bf16 %v4760, %v4757
    %v4813 = vpack.c.bf16 %v4768, %v4765
    %v4814 = vpack.c.bf16 %v4776, %v4773
    %v4815 = vpack.c.bf16 %v4784, %v4781
    %v4816 = vpack.c.bf16 %v4792, %v4789
    %v4817 = vpack.c.bf16 %v4800, %v4797
    %v4818 = vpack.c.bf16 %v4808, %v4805
    %4827 = vrot.lane.b32.xlu0 %v4811, 64
    %v4828 = vpop.permute.xlu0 %4827
    %4829 = vrot.lane.b32.xlu0 %v4812, 64
    %v4830 = vpop.permute.xlu0 %4829
    %4831 = vrot.lane.b32.xlu0 %v4813, 64
    %v4832 = vpop.permute.xlu0 %4831
    %4833 = vrot.lane.b32.xlu0 %v4814, 64
    %v4834 = vpop.permute.xlu0 %4833
    %4835 = vrot.lane.b32.xlu0 %v4815, 64
    %v4836 = vpop.permute.xlu0 %4835
    %4837 = vrot.lane.b32.xlu0 %v4816, 64
    %v4838 = vpop.permute.xlu0 %4837
    %4839 = vrot.lane.b32.xlu0 %v4817, 64
    %v4840 = vpop.permute.xlu0 %4839
    %4841 = vrot.lane.b32.xlu0 %v4818, 64
    %v4842 = vpop.permute.xlu0 %4841
    %vm4851 = vcmask 1048064
    %4852 = vst.msk [vmem:[#allocation3] sm:$0xff] %vm4851, %v4828
    %4853 = vst.msk [vmem:[#allocation3 + $0x18] sm:$0xff] %vm4851, %v4830
    %4854 = vst.msk [vmem:[#allocation3 + $0x30] sm:$0xff] %vm4851, %v4832
    %4855 = vst.msk [vmem:[#allocation3 + $0x48] sm:$0xff] %vm4851, %v4834
    %4856 = vst.msk [vmem:[#allocation3 + $0x60] sm:$0xff] %vm4851, %v4836
    %4857 = vst.msk [vmem:[#allocation3 + $0x78] sm:$0xff] %vm4851, %v4838
    %4858 = vst.msk [vmem:[#allocation3 + $0x90] sm:$0xff] %vm4851, %v4840
    %4859 = vst.msk [vmem:[#allocation3 + $0xa8] sm:$0xff] %vm4851, %v4842
    %v4860 = vld [vmem:[#allocation2 + $0x8] sm:$0xff]
    %v4861 = vld [vmem:[#allocation2 + $0x50] sm:$0xff]
    %v4862 = vld [vmem:[#allocation2 + $0x98] sm:$0xff]
    %v4863 = vld [vmem:[#allocation2 + $0xe0] sm:$0xff]
    %v4864 = vld [vmem:[#allocation2 + $0x128] sm:$0xff]
    %v4865 = vld [vmem:[#allocation2 + $0x170] sm:$0xff]
    %v4866 = vld [vmem:[#allocation2 + $0x1b8] sm:$0xff]
    %v4867 = vld [vmem:[#allocation2 + $0x200] sm:$0xff]
    %v4868 = vld [vmem:[#allocation2 + $0x20] sm:$0xff]
    %v4869 = vld [vmem:[#allocation2 + $0x68] sm:$0xff]
    %v4870 = vld [vmem:[#allocation2 + $0xb0] sm:$0xff]
    %v4871 = vld [vmem:[#allocation2 + $0xf8] sm:$0xff]
    %v4872 = vld [vmem:[#allocation2 + $0x140] sm:$0xff]
    %v4873 = vld [vmem:[#allocation2 + $0x188] sm:$0xff]
    %v4874 = vld [vmem:[#allocation2 + $0x1d0] sm:$0xff]
    %v4875 = vld [vmem:[#allocation2 + $0x218] sm:$0xff]
    %v4876 = vld [vmem:[#allocation2 + $0x38] sm:$0xff]
    %v4877 = vld [vmem:[#allocation2 + $0x80] sm:$0xff]
    %v4878 = vld [vmem:[#allocation2 + $0xc8] sm:$0xff]
    %v4879 = vld [vmem:[#allocation2 + $0x110] sm:$0xff]
    %v4880 = vld [vmem:[#allocation2 + $0x158] sm:$0xff]
    %v4881 = vld [vmem:[#allocation2 + $0x1a0] sm:$0xff]
    %v4882 = vld [vmem:[#allocation2 + $0x1e8] sm:$0xff]
    %v4883 = vld [vmem:[#allocation2 + $0x230] sm:$0xff]
    %v4885 = vsel %vm3902, %v4860, 0
    %v4888 = vsel %vm3902, %v4861, 0
    %v4891 = vsel %vm3902, %v4862, 0
    %v4894 = vsel %vm3902, %v4863, 0
    %v4897 = vsel %vm3902, %v4864, 0
    %v4900 = vsel %vm3902, %v4865, 0
    %v4903 = vsel %vm3902, %v4866, 0
    %v4906 = vsel %vm3902, %v4867, 0
    %v4909 = vsel %vm3902, %v4868, 0
    %v4912 = vsel %vm3902, %v4869, 0
    %v4915 = vsel %vm3902, %v4870, 0
    %v4918 = vsel %vm3902, %v4871, 0
    %v4921 = vsel %vm3902, %v4872, 0
    %v4924 = vsel %vm3902, %v4873, 0
    %v4927 = vsel %vm3902, %v4874, 0
    %v4930 = vsel %vm3902, %v4875, 0
    %4932 = vmatprep.subr.bf16.mxu0 0
    %4933 = vmatpush1.bf16.xpose.msra.mxu0 %v4909
    %4934 = vmatprep.subr.bf16.mxu0 0
    %4935 = vmatpush1.bf16.xpose.msra.mxu0 %v4912
    %4936 = vmatprep.subr.bf16.mxu0 0
    %4937 = vmatpush1.bf16.xpose.msra.mxu0 %v4915
    %4938 = vmatprep.subr.bf16.mxu0 0
    %4939 = vmatpush1.bf16.xpose.msra.mxu0 %v4918
    %4940 = vmatprep.subr.bf16.mxu0 0
    %4941 = vmatpush1.bf16.xpose.msra.mxu0 %v4921
    %4942 = vmatprep.subr.bf16.mxu0 0
    %4943 = vmatpush1.bf16.xpose.msra.mxu0 %v4924
    %4944 = vmatprep.subr.bf16.mxu0 0
    %4945 = vmatpush1.bf16.xpose.msra.mxu0 %v4927
    %4946 = vmatprep.subr.bf16.mxu0 0
    %4947 = vmatpush1.bf16.xpose.msra.mxu0 %v4930
    %4948 = vmatprep.subr.bf16.mxu0 0
    %4949 = vmatpush1.bf16.xpose.msra.mxu0 0
    %4950 = vmatprep.subr.bf16.mxu0 0
    %4951 = vmatpush1.bf16.xpose.msra.mxu0 0
    %4952 = vmatprep.subr.bf16.mxu0 0
    %4953 = vmatpush1.bf16.xpose.msra.mxu0 0
    %4954 = vmatprep.subr.bf16.mxu0 0
    %4955 = vmatpush1.bf16.xpose.msra.mxu0 0
    %4956 = vmatprep.subr.bf16.mxu0 0
    %4957 = vmatpush1.bf16.xpose.msra.mxu0 0
    %4958 = vmatprep.subr.bf16.mxu0 0
    %4959 = vmatpush1.bf16.xpose.msra.mxu0 0
    %4960 = vmatprep.subr.bf16.mxu0 0
    %4961 = vmatpush1.bf16.xpose.msra.mxu0 0
    %4962 = vmatprep.subr.bf16.mxu0 0
    %4963 = vmatpush1.bf16.xpose.msra.mxu0 0
    %4964 = vmatprep.mubr.bf16.mxu0 0
    %4965 = vmatmul.mubr.bf16.gmra.mrb[0].mxu0 %v4885
    %v4966 = vpop.f32.mrb[0].mxu0
    %v4967 = vadd.f32 0.0, %v4966
    %v4968 = vpop.f32.mrb[0].mxu0
    %v4969 = vpop.f32.mrb[0].mxu0
    %v4970 = vadd.f32 0.0, %v4969
    %v4971 = vpop.f32.mrb[0].mxu0
    %4972 = vmatprep.mubr.bf16.mxu0 0
    %4973 = vmatmul.mubr.bf16.gmra.mrb[0].mxu0 %v4888
    %v4974 = vpop.f32.mrb[0].mxu0
    %v4975 = vadd.f32 0.0, %v4974
    %v4976 = vpop.f32.mrb[0].mxu0
    %v4977 = vpop.f32.mrb[0].mxu0
    %v4978 = vadd.f32 0.0, %v4977
    %v4979 = vpop.f32.mrb[0].mxu0
    %4980 = vmatprep.mubr.bf16.mxu0 0
    %4981 = vmatmul.mubr.bf16.gmra.mrb[0].mxu0 %v4891
    %v4982 = vpop.f32.mrb[0].mxu0
    %v4983 = vadd.f32 0.0, %v4982
    %v4984 = vpop.f32.mrb[0].mxu0
    %v4985 = vpop.f32.mrb[0].mxu0
    %v4986 = vadd.f32 0.0, %v4985
    %v4987 = vpop.f32.mrb[0].mxu0
    %4988 = vmatprep.mubr.bf16.mxu0 0
    %4989 = vmatmul.mubr.bf16.gmra.mrb[0].mxu0 %v4894
    %v4990 = vpop.f32.mrb[0].mxu0
    %v4991 = vadd.f32 0.0, %v4990
    %v4992 = vpop.f32.mrb[0].mxu0
    %v4993 = vpop.f32.mrb[0].mxu0
    %v4994 = vadd.f32 0.0, %v4993
    %v4995 = vpop.f32.mrb[0].mxu0
    %4996 = vmatprep.mubr.bf16.mxu0 0
    %4997 = vmatmul.mubr.bf16.gmra.mrb[0].mxu0 %v4897
    %v4998 = vpop.f32.mrb[0].mxu0
    %v4999 = vadd.f32 0.0, %v4998
    %v5000 = vpop.f32.mrb[0].mxu0
    %v5001 = vpop.f32.mrb[0].mxu0
    %v5002 = vadd.f32 0.0, %v5001
    %v5003 = vpop.f32.mrb[0].mxu0
    %5004 = vmatprep.mubr.bf16.mxu0 0
    %5005 = vmatmul.mubr.bf16.gmra.mrb[0].mxu0 %v4900
    %v5006 = vpop.f32.mrb[0].mxu0
    %v5007 = vadd.f32 0.0, %v5006
    %v5008 = vpop.f32.mrb[0].mxu0
    %v5009 = vpop.f32.mrb[0].mxu0
    %v5010 = vadd.f32 0.0, %v5009
    %v5011 = vpop.f32.mrb[0].mxu0
    %5012 = vmatprep.mubr.bf16.mxu0 0
    %5013 = vmatmul.mubr.bf16.gmra.mrb[0].mxu0 %v4903
    %v5014 = vpop.f32.mrb[0].mxu0
    %v5015 = vadd.f32 0.0, %v5014
    %v5016 = vpop.f32.mrb[0].mxu0
    %v5017 = vpop.f32.mrb[0].mxu0
    %v5018 = vadd.f32 0.0, %v5017
    %v5019 = vpop.f32.mrb[0].mxu0
    %5020 = vmatprep.mubr.bf16.mxu0 0
    %5021 = vmatmul.mubr.bf16.gmra.mrb[0].mxu0 %v4906
    %v5022 = vpop.f32.mrb[0].mxu0
    %v5023 = vadd.f32 0.0, %v5022
    %v5024 = vpop.f32.mrb[0].mxu0
    %v5025 = vpop.f32.mrb[0].mxu0
    %v5026 = vadd.f32 0.0, %v5025
    %v5027 = vpop.f32.mrb[0].mxu0
    %5028 = vdwg.mxu0
    %5029 = vmax.xlane.f32.xlu0 %v4967
    %v5030 = vpop.xlane.xlu0 %5029
    %5031 = vmax.xlane.f32.xlu0 %v4970
    %v5032 = vpop.xlane.xlu0 %5031
    %5033 = vmax.xlane.f32.xlu0 %v4975
    %v5034 = vpop.xlane.xlu0 %5033
    %5035 = vmax.xlane.f32.xlu0 %v4978
    %v5036 = vpop.xlane.xlu0 %5035
    %5037 = vmax.xlane.f32.xlu0 %v4983
    %v5038 = vpop.xlane.xlu0 %5037
    %5039 = vmax.xlane.f32.xlu0 %v4986
    %v5040 = vpop.xlane.xlu0 %5039
    %5041 = vmax.xlane.f32.xlu0 %v4991
    %v5042 = vpop.xlane.xlu0 %5041
    %5043 = vmax.xlane.f32.xlu0 %v4994
    %v5044 = vpop.xlane.xlu0 %5043
    %5045 = vmax.xlane.f32.xlu0 %v4999
    %v5046 = vpop.xlane.xlu0 %5045
    %5047 = vmax.xlane.f32.xlu0 %v5002
    %v5048 = vpop.xlane.xlu0 %5047
    %5049 = vmax.xlane.f32.xlu0 %v5007
    %v5050 = vpop.xlane.xlu0 %5049
    %5051 = vmax.xlane.f32.xlu0 %v5010
    %v5052 = vpop.xlane.xlu0 %5051
    %5053 = vmax.xlane.f32.xlu0 %v5015
    %v5054 = vpop.xlane.xlu0 %5053
    %5055 = vmax.xlane.f32.xlu0 %v5018
    %v5056 = vpop.xlane.xlu0 %5055
    %5057 = vmax.xlane.f32.xlu0 %v5023
    %v5058 = vpop.xlane.xlu0 %5057
    %5059 = vmax.xlane.f32.xlu0 %v5026
    %v5060 = vpop.xlane.xlu0 %5059
    %v5061 = vsub.f32 %v4967, %v5030
    %v5062 = vsub.f32 %v4970, %v5032
    %v5063 = vsub.f32 %v4975, %v5034
    %v5064 = vsub.f32 %v4978, %v5036
    %v5065 = vsub.f32 %v4983, %v5038
    %v5066 = vsub.f32 %v4986, %v5040
    %v5067 = vsub.f32 %v4991, %v5042
    %v5068 = vsub.f32 %v4994, %v5044
    %v5069 = vsub.f32 %v4999, %v5046
    %v5070 = vsub.f32 %v5002, %v5048
    %v5071 = vsub.f32 %v5007, %v5050
    %v5072 = vsub.f32 %v5010, %v5052
    %v5073 = vsub.f32 %v5015, %v5054
    %v5074 = vsub.f32 %v5018, %v5056
    %v5075 = vsub.f32 %v5023, %v5058
    %v5076 = vsub.f32 %v5026, %v5060
    %v5077 = vmul.f32 %v5061, 1.442695
    %v5078 = vpow.pop %v5077
    %v5079 = vmul.f32 %v5062, 1.442695
    %v5080 = vpow.pop %v5079
    %v5081 = vmul.f32 %v5063, 1.442695
    %v5082 = vpow.pop %v5081
    %v5083 = vmul.f32 %v5064, 1.442695
    %v5084 = vpow.pop %v5083
    %v5085 = vmul.f32 %v5065, 1.442695
    %v5086 = vpow.pop %v5085
    %v5087 = vmul.f32 %v5066, 1.442695
    %v5088 = vpow.pop %v5087
    %v5089 = vmul.f32 %v5067, 1.442695
    %v5090 = vpow.pop %v5089
    %v5091 = vmul.f32 %v5068, 1.442695
    %v5092 = vpow.pop %v5091
    %v5093 = vmul.f32 %v5069, 1.442695
    %v5094 = vpow.pop %v5093
    %v5095 = vmul.f32 %v5070, 1.442695
    %v5096 = vpow.pop %v5095
    %v5097 = vmul.f32 %v5071, 1.442695
    %v5098 = vpow.pop %v5097
    %v5099 = vmul.f32 %v5072, 1.442695
    %v5100 = vpow.pop %v5099
    %v5101 = vmul.f32 %v5073, 1.442695
    %v5102 = vpow.pop %v5101
    %v5103 = vmul.f32 %v5074, 1.442695
    %v5104 = vpow.pop %v5103
    %v5105 = vmul.f32 %v5075, 1.442695
    %v5106 = vpow.pop %v5105
    %v5107 = vmul.f32 %v5076, 1.442695
    %v5108 = vpow.pop %v5107
    %5109 = vadd.xlane.f32.xlu0 %v5078
    %v5110 = vpop.xlane.xlu0 %5109
    %5111 = vadd.xlane.f32.xlu0 %v5080
    %v5112 = vpop.xlane.xlu0 %5111
    %5113 = vadd.xlane.f32.xlu0 %v5082
    %v5114 = vpop.xlane.xlu0 %5113
    %5115 = vadd.xlane.f32.xlu0 %v5084
    %v5116 = vpop.xlane.xlu0 %5115
    %5117 = vadd.xlane.f32.xlu0 %v5086
    %v5118 = vpop.xlane.xlu0 %5117
    %5119 = vadd.xlane.f32.xlu0 %v5088
    %v5120 = vpop.xlane.xlu0 %5119
    %5121 = vadd.xlane.f32.xlu0 %v5090
    %v5122 = vpop.xlane.xlu0 %5121
    %5123 = vadd.xlane.f32.xlu0 %v5092
    %v5124 = vpop.xlane.xlu0 %5123
    %5125 = vadd.xlane.f32.xlu0 %v5094
    %v5126 = vpop.xlane.xlu0 %5125
    %5127 = vadd.xlane.f32.xlu0 %v5096
    %v5128 = vpop.xlane.xlu0 %5127
    %5129 = vadd.xlane.f32.xlu0 %v5098
    %v5130 = vpop.xlane.xlu0 %5129
    %5131 = vadd.xlane.f32.xlu0 %v5100
    %v5132 = vpop.xlane.xlu0 %5131
    %5133 = vadd.xlane.f32.xlu0 %v5102
    %v5134 = vpop.xlane.xlu0 %5133
    %5135 = vadd.xlane.f32.xlu0 %v5104
    %v5136 = vpop.xlane.xlu0 %5135
    %5137 = vadd.xlane.f32.xlu0 %v5106
    %v5138 = vpop.xlane.xlu0 %5137
    %5139 = vadd.xlane.f32.xlu0 %v5108
    %v5140 = vpop.xlane.xlu0 %5139
    %v5141 = vrcp.pop %v5110
    %v5142 = vrcp.pop %v5112
    %v5143 = vrcp.pop %v5114
    %v5144 = vrcp.pop %v5116
    %v5145 = vrcp.pop %v5118
    %v5146 = vrcp.pop %v5120
    %v5147 = vrcp.pop %v5122
    %v5148 = vrcp.pop %v5124
    %v5149 = vrcp.pop %v5126
    %v5150 = vrcp.pop %v5128
    %v5151 = vrcp.pop %v5130
    %v5152 = vrcp.pop %v5132
    %v5153 = vrcp.pop %v5134
    %v5154 = vrcp.pop %v5136
    %v5155 = vrcp.pop %v5138
    %v5156 = vrcp.pop %v5140
    %v5157 = vmul.f32 %v5078, %v5141
    %v5158 = vmul.f32 %v5080, %v5142
    %v5159 = vmul.f32 %v5082, %v5143
    %v5160 = vmul.f32 %v5084, %v5144
    %v5161 = vmul.f32 %v5086, %v5145
    %v5162 = vmul.f32 %v5088, %v5146
    %v5163 = vmul.f32 %v5090, %v5147
    %v5164 = vmul.f32 %v5092, %v5148
    %v5165 = vmul.f32 %v5094, %v5149
    %v5166 = vmul.f32 %v5096, %v5150
    %v5167 = vmul.f32 %v5098, %v5151
    %v5168 = vmul.f32 %v5100, %v5152
    %v5169 = vmul.f32 %v5102, %v5153
    %v5170 = vmul.f32 %v5104, %v5154
    %v5171 = vmul.f32 %v5106, %v5155
    %v5172 = vmul.f32 %v5108, %v5156
    %v5173 = vpack.c.bf16 %v5158, %v5157
    %v5174 = vpack.c.bf16 %v5160, %v5159
    %v5175 = vpack.c.bf16 %v5162, %v5161
    %v5176 = vpack.c.bf16 %v5164, %v5163
    %v5177 = vpack.c.bf16 %v5166, %v5165
    %v5178 = vpack.c.bf16 %v5168, %v5167
    %v5179 = vpack.c.bf16 %v5170, %v5169
    %v5180 = vpack.c.bf16 %v5172, %v5171
    %5181 = vmatprep.subr.bf16.mxu0 0
    %5182 = vmatpush1.bf16.msra.mxu0 %v4876
    %5183 = vmatprep.subr.bf16.mxu0 0
    %5184 = vmatpush1.bf16.msra.mxu0 %v4877
    %5185 = vmatprep.subr.bf16.mxu0 0
    %5186 = vmatpush1.bf16.msra.mxu0 %v4878
    %5187 = vmatprep.subr.bf16.mxu0 0
    %5188 = vmatpush1.bf16.msra.mxu0 %v4879
    %5189 = vmatprep.subr.bf16.mxu0 0
    %5190 = vmatpush1.bf16.msra.mxu0 %v4880
    %5191 = vmatprep.subr.bf16.mxu0 0
    %5192 = vmatpush1.bf16.msra.mxu0 %v4881
    %5193 = vmatprep.subr.bf16.mxu0 0
    %5194 = vmatpush1.bf16.msra.mxu0 %v4882
    %5195 = vmatprep.subr.bf16.mxu0 0
    %5196 = vmatpush1.bf16.msra.mxu0 %v4883
    %5197 = vmatprep.subr.bf16.mxu0 0
    %5198 = vmatpush1.bf16.msra.mxu0 0
    %5199 = vmatprep.subr.bf16.mxu0 0
    %5200 = vmatpush1.bf16.msra.mxu0 0
    %5201 = vmatprep.subr.bf16.mxu0 0
    %5202 = vmatpush1.bf16.msra.mxu0 0
    %5203 = vmatprep.subr.bf16.mxu0 0
    %5204 = vmatpush1.bf16.msra.mxu0 0
    %5205 = vmatprep.subr.bf16.mxu0 0
    %5206 = vmatpush1.bf16.msra.mxu0 0
    %5207 = vmatprep.subr.bf16.mxu0 0
    %5208 = vmatpush1.bf16.msra.mxu0 0
    %5209 = vmatprep.subr.bf16.mxu0 0
    %5210 = vmatpush1.bf16.msra.mxu0 0
    %5211 = vmatprep.subr.bf16.mxu0 0
    %5212 = vmatpush1.bf16.msra.mxu0 0
    %5213 = vmatprep.mubr.bf16.mxu0 0
    %5214 = vmatmul.mubr.bf16.gmra.mrb[0].mxu0 %v5173
    %v5215 = vpop.f32.mrb[0].mxu0
    %v5216 = vadd.f32 0.0, %v5215
    %v5217 = vpop.f32.mrb[0].mxu0
    %v5218 = vpop.f32.mrb[0].mxu0
    %v5219 = vadd.f32 0.0, %v5218
    %v5220 = vpop.f32.mrb[0].mxu0
    %5221 = vmatprep.mubr.bf16.mxu0 0
    %5222 = vmatmul.mubr.bf16.gmra.mrb[0].mxu0 %v5174
    %v5223 = vpop.f32.mrb[0].mxu0
    %v5224 = vadd.f32 0.0, %v5223
    %v5225 = vpop.f32.mrb[0].mxu0
    %v5226 = vpop.f32.mrb[0].mxu0
    %v5227 = vadd.f32 0.0, %v5226
    %v5228 = vpop.f32.mrb[0].mxu0
    %5229 = vmatprep.mubr.bf16.mxu0 0
    %5230 = vmatmul.mubr.bf16.gmra.mrb[0].mxu0 %v5175
    %v5231 = vpop.f32.mrb[0].mxu0
    %v5232 = vadd.f32 0.0, %v5231
    %v5233 = vpop.f32.mrb[0].mxu0
    %v5234 = vpop.f32.mrb[0].mxu0
    %v5235 = vadd.f32 0.0, %v5234
    %v5236 = vpop.f32.mrb[0].mxu0
    %5237 = vmatprep.mubr.bf16.mxu0 0
    %5238 = vmatmul.mubr.bf16.gmra.mrb[0].mxu0 %v5176
    %v5239 = vpop.f32.mrb[0].mxu0
    %v5240 = vadd.f32 0.0, %v5239
    %v5241 = vpop.f32.mrb[0].mxu0
    %v5242 = vpop.f32.mrb[0].mxu0
    %v5243 = vadd.f32 0.0, %v5242
    %v5244 = vpop.f32.mrb[0].mxu0
    %5245 = vmatprep.mubr.bf16.mxu0 0
    %5246 = vmatmul.mubr.bf16.gmra.mrb[0].mxu0 %v5177
    %v5247 = vpop.f32.mrb[0].mxu0
    %v5248 = vadd.f32 0.0, %v5247
    %v5249 = vpop.f32.mrb[0].mxu0
    %v5250 = vpop.f32.mrb[0].mxu0
    %v5251 = vadd.f32 0.0, %v5250
    %v5252 = vpop.f32.mrb[0].mxu0
    %5253 = vmatprep.mubr.bf16.mxu0 0
    %5254 = vmatmul.mubr.bf16.gmra.mrb[0].mxu0 %v5178
    %v5255 = vpop.f32.mrb[0].mxu0
    %v5256 = vadd.f32 0.0, %v5255
    %v5257 = vpop.f32.mrb[0].mxu0
    %v5258 = vpop.f32.mrb[0].mxu0
    %v5259 = vadd.f32 0.0, %v5258
    %v5260 = vpop.f32.mrb[0].mxu0
    %5261 = vmatprep.mubr.bf16.mxu0 0
    %5262 = vmatmul.mubr.bf16.gmra.mrb[0].mxu0 %v5179
    %v5263 = vpop.f32.mrb[0].mxu0
    %v5264 = vadd.f32 0.0, %v5263
    %v5265 = vpop.f32.mrb[0].mxu0
    %v5266 = vpop.f32.mrb[0].mxu0
    %v5267 = vadd.f32 0.0, %v5266
    %v5268 = vpop.f32.mrb[0].mxu0
    %5269 = vmatprep.mubr.bf16.mxu0 0
    %5270 = vmatmul.mubr.bf16.gmra.mrb[0].mxu0 %v5180
    %v5271 = vpop.f32.mrb[0].mxu0
    %v5272 = vadd.f32 0.0, %v5271
    %v5273 = vpop.f32.mrb[0].mxu0
    %v5274 = vpop.f32.mrb[0].mxu0
    %v5275 = vadd.f32 0.0, %v5274
    %v5276 = vpop.f32.mrb[0].mxu0
    %5277 = vdwg.mxu0
    %v5278 = vpack.c.bf16 %v5219, %v5216
    %v5279 = vpack.c.bf16 %v5227, %v5224
    %v5280 = vpack.c.bf16 %v5235, %v5232
    %v5281 = vpack.c.bf16 %v5243, %v5240
    %v5282 = vpack.c.bf16 %v5251, %v5248
    %v5283 = vpack.c.bf16 %v5259, %v5256
    %v5284 = vpack.c.bf16 %v5267, %v5264
    %v5285 = vpack.c.bf16 %v5275, %v5272
    %5286 = vst.msk [vmem:[#allocation3 + $0x8] sm:$0xff] %vm3902, %v5278
    %5287 = vst.msk [vmem:[#allocation3 + $0x20] sm:$0xff] %vm3902, %v5279
    %5288 = vst.msk [vmem:[#allocation3 + $0x38] sm:$0xff] %vm3902, %v5280
    %5289 = vst.msk [vmem:[#allocation3 + $0x50] sm:$0xff] %vm3902, %v5281
    %5290 = vst.msk [vmem:[#allocation3 + $0x68] sm:$0xff] %vm3902, %v5282
    %5291 = vst.msk [vmem:[#allocation3 + $0x80] sm:$0xff] %vm3902, %v5283
    %5292 = vst.msk [vmem:[#allocation3 + $0x98] sm:$0xff] %vm3902, %v5284
    %5293 = vst.msk [vmem:[#allocation3 + $0xb0] sm:$0xff] %vm3902, %v5285
    %v5294 = vld [vmem:[#allocation2 + $0x8] sm:$0xff]
    %v5295 = vld [vmem:[#allocation2 + $0x50] sm:$0xff]
    %v5296 = vld [vmem:[#allocation2 + $0x98] sm:$0xff]
    %v5297 = vld [vmem:[#allocation2 + $0xe0] sm:$0xff]
    %v5298 = vld [vmem:[#allocation2 + $0x128] sm:$0xff]
    %v5299 = vld [vmem:[#allocation2 + $0x170] sm:$0xff]
    %v5300 = vld [vmem:[#allocation2 + $0x1b8] sm:$0xff]
    %v5301 = vld [vmem:[#allocation2 + $0x200] sm:$0xff]
    %v5302 = vld [vmem:[#allocation2 + $0x20] sm:$0xff]
    %v5303 = vld [vmem:[#allocation2 + $0x68] sm:$0xff]
    %v5304 = vld [vmem:[#allocation2 + $0xb0] sm:$0xff]
    %v5305 = vld [vmem:[#allocation2 + $0xf8] sm:$0xff]
    %v5306 = vld [vmem:[#allocation2 + $0x140] sm:$0xff]
    %v5307 = vld [vmem:[#allocation2 + $0x188] sm:$0xff]
    %v5308 = vld [vmem:[#allocation2 + $0x1d0] sm:$0xff]
    %v5309 = vld [vmem:[#allocation2 + $0x218] sm:$0xff]
    %v5310 = vld [vmem:[#allocation2 + $0x38] sm:$0xff]
    %v5311 = vld [vmem:[#allocation2 + $0x80] sm:$0xff]
    %v5312 = vld [vmem:[#allocation2 + $0xc8] sm:$0xff]
    %v5313 = vld [vmem:[#allocation2 + $0x110] sm:$0xff]
    %v5314 = vld [vmem:[#allocation2 + $0x158] sm:$0xff]
    %v5315 = vld [vmem:[#allocation2 + $0x1a0] sm:$0xff]
    %v5316 = vld [vmem:[#allocation2 + $0x1e8] sm:$0xff]
    %v5317 = vld [vmem:[#allocation2 + $0x230] sm:$0xff]
    %5326 = vrot.lane.b32.xlu0 %v5294, 64
    %v5327 = vpop.permute.xlu0 %5326
    %5328 = vrot.lane.b32.xlu0 %v5295, 64
    %v5329 = vpop.permute.xlu0 %5328
    %5330 = vrot.lane.b32.xlu0 %v5296, 64
    %v5331 = vpop.permute.xlu0 %5330
    %5332 = vrot.lane.b32.xlu0 %v5297, 64
    %v5333 = vpop.permute.xlu0 %5332
    %5334 = vrot.lane.b32.xlu0 %v5298, 64
    %v5335 = vpop.permute.xlu0 %5334
    %5336 = vrot.lane.b32.xlu0 %v5299, 64
    %v5337 = vpop.permute.xlu0 %5336
    %5338 = vrot.lane.b32.xlu0 %v5300, 64
    %v5339 = vpop.permute.xlu0 %5338
    %5340 = vrot.lane.b32.xlu0 %v5301, 64
    %v5341 = vpop.permute.xlu0 %5340
    %5350 = vrot.lane.b32.xlu0 %v5302, 64
    %v5351 = vpop.permute.xlu0 %5350
    %5352 = vrot.lane.b32.xlu0 %v5303, 64
    %v5353 = vpop.permute.xlu0 %5352
    %5354 = vrot.lane.b32.xlu0 %v5304, 64
    %v5355 = vpop.permute.xlu0 %5354
    %5356 = vrot.lane.b32.xlu0 %v5305, 64
    %v5357 = vpop.permute.xlu0 %5356
    %5358 = vrot.lane.b32.xlu0 %v5306, 64
    %v5359 = vpop.permute.xlu0 %5358
    %5360 = vrot.lane.b32.xlu0 %v5307, 64
    %v5361 = vpop.permute.xlu0 %5360
    %5362 = vrot.lane.b32.xlu0 %v5308, 64
    %v5363 = vpop.permute.xlu0 %5362
    %5364 = vrot.lane.b32.xlu0 %v5309, 64
    %v5365 = vpop.permute.xlu0 %5364
    %v5367 = vsel %vm3902, %v5327, 0
    %v5370 = vsel %vm3902, %v5329, 0
    %v5373 = vsel %vm3902, %v5331, 0
    %v5376 = vsel %vm3902, %v5333, 0
    %v5379 = vsel %vm3902, %v5335, 0
    %v5382 = vsel %vm3902, %v5337, 0
    %v5385 = vsel %vm3902, %v5339, 0
    %v5388 = vsel %vm3902, %v5341, 0
    %v5391 = vsel %vm3902, %v5351, 0
    %v5394 = vsel %vm3902, %v5353, 0
    %v5397 = vsel %vm3902, %v5355, 0
    %v5400 = vsel %vm3902, %v5357, 0
    %v5403 = vsel %vm3902, %v5359, 0
    %v5406 = vsel %vm3902, %v5361, 0
    %v5409 = vsel %vm3902, %v5363, 0
    %v5412 = vsel %vm3902, %v5365, 0
    %5414 = vmatprep.subr.bf16.mxu0 0
    %5415 = vmatpush1.bf16.xpose.msra.mxu0 %v5391
    %5416 = vmatprep.subr.bf16.mxu0 0
    %5417 = vmatpush1.bf16.xpose.msra.mxu0 %v5394
    %5418 = vmatprep.subr.bf16.mxu0 0
    %5419 = vmatpush1.bf16.xpose.msra.mxu0 %v5397
    %5420 = vmatprep.subr.bf16.mxu0 0
    %5421 = vmatpush1.bf16.xpose.msra.mxu0 %v5400
    %5422 = vmatprep.subr.bf16.mxu0 0
    %5423 = vmatpush1.bf16.xpose.msra.mxu0 %v5403
    %5424 = vmatprep.subr.bf16.mxu0 0
    %5425 = vmatpush1.bf16.xpose.msra.mxu0 %v5406
    %5426 = vmatprep.subr.bf16.mxu0 0
    %5427 = vmatpush1.bf16.xpose.msra.mxu0 %v5409
    %5428 = vmatprep.subr.bf16.mxu0 0
    %5429 = vmatpush1.bf16.xpose.msra.mxu0 %v5412
    %5430 = vmatprep.subr.bf16.mxu0 0
    %5431 = vmatpush1.bf16.xpose.msra.mxu0 0
    %5432 = vmatprep.subr.bf16.mxu0 0
    %5433 = vmatpush1.bf16.xpose.msra.mxu0 0
    %5434 = vmatprep.subr.bf16.mxu0 0
    %5435 = vmatpush1.bf16.xpose.msra.mxu0 0
    %5436 = vmatprep.subr.bf16.mxu0 0
    %5437 = vmatpush1.bf16.xpose.msra.mxu0 0
    %5438 = vmatprep.subr.bf16.mxu0 0
    %5439 = vmatpush1.bf16.xpose.msra.mxu0 0
    %5440 = vmatprep.subr.bf16.mxu0 0
    %5441 = vmatpush1.bf16.xpose.msra.mxu0 0
    %5442 = vmatprep.subr.bf16.mxu0 0
    %5443 = vmatpush1.bf16.xpose.msra.mxu0 0
    %5444 = vmatprep.subr.bf16.mxu0 0
    %5445 = vmatpush1.bf16.xpose.msra.mxu0 0
    %5446 = vmatprep.mubr.bf16.mxu0 0
    %5447 = vmatmul.mubr.bf16.gmra.mrb[0].mxu0 %v5367
    %v5448 = vpop.f32.mrb[0].mxu0
    %v5449 = vadd.f32 0.0, %v5448
    %v5450 = vpop.f32.mrb[0].mxu0
    %v5451 = vpop.f32.mrb[0].mxu0
    %v5452 = vadd.f32 0.0, %v5451
    %v5453 = vpop.f32.mrb[0].mxu0
    %5454 = vmatprep.mubr.bf16.mxu0 0
    %5455 = vmatmul.mubr.bf16.gmra.mrb[0].mxu0 %v5370
    %v5456 = vpop.f32.mrb[0].mxu0
    %v5457 = vadd.f32 0.0, %v5456
    %v5458 = vpop.f32.mrb[0].mxu0
    %v5459 = vpop.f32.mrb[0].mxu0
    %v5460 = vadd.f32 0.0, %v5459
    %v5461 = vpop.f32.mrb[0].mxu0
    %5462 = vmatprep.mubr.bf16.mxu0 0
    %5463 = vmatmul.mubr.bf16.gmra.mrb[0].mxu0 %v5373
    %v5464 = vpop.f32.mrb[0].mxu0
    %v5465 = vadd.f32 0.0, %v5464
    %v5466 = vpop.f32.mrb[0].mxu0
    %v5467 = vpop.f32.mrb[0].mxu0
    %v5468 = vadd.f32 0.0, %v5467
    %v5469 = vpop.f32.mrb[0].mxu0
    %5470 = vmatprep.mubr.bf16.mxu0 0
    %5471 = vmatmul.mubr.bf16.gmra.mrb[0].mxu0 %v5376
    %v5472 = vpop.f32.mrb[0].mxu0
    %v5473 = vadd.f32 0.0, %v5472
    %v5474 = vpop.f32.mrb[0].mxu0
    %v5475 = vpop.f32.mrb[0].mxu0
    %v5476 = vadd.f32 0.0, %v5475
    %v5477 = vpop.f32.mrb[0].mxu0
    %5478 = vmatprep.mubr.bf16.mxu0 0
    %5479 = vmatmul.mubr.bf16.gmra.mrb[0].mxu0 %v5379
    %v5480 = vpop.f32.mrb[0].mxu0
    %v5481 = vadd.f32 0.0, %v5480
    %v5482 = vpop.f32.mrb[0].mxu0
    %v5483 = vpop.f32.mrb[0].mxu0
    %v5484 = vadd.f32 0.0, %v5483
    %v5485 = vpop.f32.mrb[0].mxu0
    %5486 = vmatprep.mubr.bf16.mxu0 0
    %5487 = vmatmul.mubr.bf16.gmra.mrb[0].mxu0 %v5382
    %v5488 = vpop.f32.mrb[0].mxu0
    %v5489 = vadd.f32 0.0, %v5488
    %v5490 = vpop.f32.mrb[0].mxu0
    %v5491 = vpop.f32.mrb[0].mxu0
    %v5492 = vadd.f32 0.0, %v5491
    %v5493 = vpop.f32.mrb[0].mxu0
    %5494 = vmatprep.mubr.bf16.mxu0 0
    %5495 = vmatmul.mubr.bf16.gmra.mrb[0].mxu0 %v5385
    %v5496 = vpop.f32.mrb[0].mxu0
    %v5497 = vadd.f32 0.0, %v5496
    %v5498 = vpop.f32.mrb[0].mxu0
    %v5499 = vpop.f32.mrb[0].mxu0
    %v5500 = vadd.f32 0.0, %v5499
    %v5501 = vpop.f32.mrb[0].mxu0
    %5502 = vmatprep.mubr.bf16.mxu0 0
    %5503 = vmatmul.mubr.bf16.gmra.mrb[0].mxu0 %v5388
    %v5504 = vpop.f32.mrb[0].mxu0
    %v5505 = vadd.f32 0.0, %v5504
    %v5506 = vpop.f32.mrb[0].mxu0
    %v5507 = vpop.f32.mrb[0].mxu0
    %v5508 = vadd.f32 0.0, %v5507
    %v5509 = vpop.f32.mrb[0].mxu0
    %5510 = vdwg.mxu0
    %5511 = vmax.xlane.f32.xlu0 %v5449
    %v5512 = vpop.xlane.xlu0 %5511
    %5513 = vmax.xlane.f32.xlu0 %v5452
    %v5514 = vpop.xlane.xlu0 %5513
    %5515 = vmax.xlane.f32.xlu0 %v5457
    %v5516 = vpop.xlane.xlu0 %5515
    %5517 = vmax.xlane.f32.xlu0 %v5460
    %v5518 = vpop.xlane.xlu0 %5517
    %5519 = vmax.xlane.f32.xlu0 %v5465
    %v5520 = vpop.xlane.xlu0 %5519
    %5521 = vmax.xlane.f32.xlu0 %v5468
    %v5522 = vpop.xlane.xlu0 %5521
    %5523 = vmax.xlane.f32.xlu0 %v5473
    %v5524 = vpop.xlane.xlu0 %5523
    %5525 = vmax.xlane.f32.xlu0 %v5476
    %v5526 = vpop.xlane.xlu0 %5525
    %5527 = vmax.xlane.f32.xlu0 %v5481
    %v5528 = vpop.xlane.xlu0 %5527
    %5529 = vmax.xlane.f32.xlu0 %v5484
    %v5530 = vpop.xlane.xlu0 %5529
    %5531 = vmax.xlane.f32.xlu0 %v5489
    %v5532 = vpop.xlane.xlu0 %5531
    %5533 = vmax.xlane.f32.xlu0 %v5492
    %v5534 = vpop.xlane.xlu0 %5533
    %5535 = vmax.xlane.f32.xlu0 %v5497
    %v5536 = vpop.xlane.xlu0 %5535
    %5537 = vmax.xlane.f32.xlu0 %v5500
    %v5538 = vpop.xlane.xlu0 %5537
    %5539 = vmax.xlane.f32.xlu0 %v5505
    %v5540 = vpop.xlane.xlu0 %5539
    %5541 = vmax.xlane.f32.xlu0 %v5508
    %v5542 = vpop.xlane.xlu0 %5541
    %v5543 = vsub.f32 %v5449, %v5512
    %v5544 = vsub.f32 %v5452, %v5514
    %v5545 = vsub.f32 %v5457, %v5516
    %v5546 = vsub.f32 %v5460, %v5518
    %v5547 = vsub.f32 %v5465, %v5520
    %v5548 = vsub.f32 %v5468, %v5522
    %v5549 = vsub.f32 %v5473, %v5524
    %v5550 = vsub.f32 %v5476, %v5526
    %v5551 = vsub.f32 %v5481, %v5528
    %v5552 = vsub.f32 %v5484, %v5530
    %v5553 = vsub.f32 %v5489, %v5532
    %v5554 = vsub.f32 %v5492, %v5534
    %v5555 = vsub.f32 %v5497, %v5536
    %v5556 = vsub.f32 %v5500, %v5538
    %v5557 = vsub.f32 %v5505, %v5540
    %v5558 = vsub.f32 %v5508, %v5542
    %v5559 = vmul.f32 %v5543, 1.442695
    %v5560 = vpow.pop %v5559
    %v5561 = vmul.f32 %v5544, 1.442695
    %v5562 = vpow.pop %v5561
    %v5563 = vmul.f32 %v5545, 1.442695
    %v5564 = vpow.pop %v5563
    %v5565 = vmul.f32 %v5546, 1.442695
    %v5566 = vpow.pop %v5565
    %v5567 = vmul.f32 %v5547, 1.442695
    %v5568 = vpow.pop %v5567
    %v5569 = vmul.f32 %v5548, 1.442695
    %v5570 = vpow.pop %v5569
    %v5571 = vmul.f32 %v5549, 1.442695
    %v5572 = vpow.pop %v5571
    %v5573 = vmul.f32 %v5550, 1.442695
    %v5574 = vpow.pop %v5573
    %v5575 = vmul.f32 %v5551, 1.442695
    %v5576 = vpow.pop %v5575
    %v5577 = vmul.f32 %v5552, 1.442695
    %v5578 = vpow.pop %v5577
    %v5579 = vmul.f32 %v5553, 1.442695
    %v5580 = vpow.pop %v5579
    %v5581 = vmul.f32 %v5554, 1.442695
    %v5582 = vpow.pop %v5581
    %v5583 = vmul.f32 %v5555, 1.442695
    %v5584 = vpow.pop %v5583
    %v5585 = vmul.f32 %v5556, 1.442695
    %v5586 = vpow.pop %v5585
    %v5587 = vmul.f32 %v5557, 1.442695
    %v5588 = vpow.pop %v5587
    %v5589 = vmul.f32 %v5558, 1.442695
    %v5590 = vpow.pop %v5589
    %5591 = vadd.xlane.f32.xlu0 %v5560
    %v5592 = vpop.xlane.xlu0 %5591
    %5593 = vadd.xlane.f32.xlu0 %v5562
    %v5594 = vpop.xlane.xlu0 %5593
    %5595 = vadd.xlane.f32.xlu0 %v5564
    %v5596 = vpop.xlane.xlu0 %5595
    %5597 = vadd.xlane.f32.xlu0 %v5566
    %v5598 = vpop.xlane.xlu0 %5597
    %5599 = vadd.xlane.f32.xlu0 %v5568
    %v5600 = vpop.xlane.xlu0 %5599
    %5601 = vadd.xlane.f32.xlu0 %v5570
    %v5602 = vpop.xlane.xlu0 %5601
    %5603 = vadd.xlane.f32.xlu0 %v5572
    %v5604 = vpop.xlane.xlu0 %5603
    %5605 = vadd.xlane.f32.xlu0 %v5574
    %v5606 = vpop.xlane.xlu0 %5605
    %5607 = vadd.xlane.f32.xlu0 %v5576
    %v5608 = vpop.xlane.xlu0 %5607
    %5609 = vadd.xlane.f32.xlu0 %v5578
    %v5610 = vpop.xlane.xlu0 %5609
    %5611 = vadd.xlane.f32.xlu0 %v5580
    %v5612 = vpop.xlane.xlu0 %5611
    %5613 = vadd.xlane.f32.xlu0 %v5582
    %v5614 = vpop.xlane.xlu0 %5613
    %5615 = vadd.xlane.f32.xlu0 %v5584
    %v5616 = vpop.xlane.xlu0 %5615
    %5617 = vadd.xlane.f32.xlu0 %v5586
    %v5618 = vpop.xlane.xlu0 %5617
    %5619 = vadd.xlane.f32.xlu0 %v5588
    %v5620 = vpop.xlane.xlu0 %5619
    %5621 = vadd.xlane.f32.xlu0 %v5590
    %v5622 = vpop.xlane.xlu0 %5621
    %v5623 = vrcp.pop %v5592
    %v5624 = vrcp.pop %v5594
    %v5625 = vrcp.pop %v5596
    %v5626 = vrcp.pop %v5598
    %v5627 = vrcp.pop %v5600
    %v5628 = vrcp.pop %v5602
    %v5629 = vrcp.pop %v5604
    %v5630 = vrcp.pop %v5606
    %v5631 = vrcp.pop %v5608
    %v5632 = vrcp.pop %v5610
    %v5633 = vrcp.pop %v5612
    %v5634 = vrcp.pop %v5614
    %v5635 = vrcp.pop %v5616
    %v5636 = vrcp.pop %v5618
    %v5637 = vrcp.pop %v5620
    %v5638 = vrcp.pop %v5622
    %v5639 = vmul.f32 %v5560, %v5623
    %v5640 = vmul.f32 %v5562, %v5624
    %v5641 = vmul.f32 %v5564, %v5625
    %v5642 = vmul.f32 %v5566, %v5626
    %v5643 = vmul.f32 %v5568, %v5627
    %v5644 = vmul.f32 %v5570, %v5628
    %v5645 = vmul.f32 %v5572, %v5629
    %v5646 = vmul.f32 %v5574, %v5630
    %v5647 = vmul.f32 %v5576, %v5631
    %v5648 = vmul.f32 %v5578, %v5632
    %v5649 = vmul.f32 %v5580, %v5633
    %v5650 = vmul.f32 %v5582, %v5634
    %v5651 = vmul.f32 %v5584, %v5635
    %v5652 = vmul.f32 %v5586, %v5636
    %v5653 = vmul.f32 %v5588, %v5637
    %v5654 = vmul.f32 %v5590, %v5638
    %v5655 = vpack.c.bf16 %v5640, %v5639
    %v5656 = vpack.c.bf16 %v5642, %v5641
    %v5657 = vpack.c.bf16 %v5644, %v5643
    %v5658 = vpack.c.bf16 %v5646, %v5645
    %v5659 = vpack.c.bf16 %v5648, %v5647
    %v5660 = vpack.c.bf16 %v5650, %v5649
    %v5661 = vpack.c.bf16 %v5652, %v5651
    %v5662 = vpack.c.bf16 %v5654, %v5653
    %5671 = vrot.lane.b32.xlu0 %v5310, 64
    %v5672 = vpop.permute.xlu0 %5671
    %5673 = vrot.lane.b32.xlu0 %v5311, 64
    %v5674 = vpop.permute.xlu0 %5673
    %5675 = vrot.lane.b32.xlu0 %v5312, 64
    %v5676 = vpop.permute.xlu0 %5675
    %5677 = vrot.lane.b32.xlu0 %v5313, 64
    %v5678 = vpop.permute.xlu0 %5677
    %5679 = vrot.lane.b32.xlu0 %v5314, 64
    %v5680 = vpop.permute.xlu0 %5679
    %5681 = vrot.lane.b32.xlu0 %v5315, 64
    %v5682 = vpop.permute.xlu0 %5681
    %5683 = vrot.lane.b32.xlu0 %v5316, 64
    %v5684 = vpop.permute.xlu0 %5683
    %5685 = vrot.lane.b32.xlu0 %v5317, 64
    %v5686 = vpop.permute.xlu0 %5685
    %5695 = vmatprep.subr.bf16.mxu0 0
    %5696 = vmatpush1.bf16.msra.mxu0 %v5672
    %5697 = vmatprep.subr.bf16.mxu0 0
    %5698 = vmatpush1.bf16.msra.mxu0 %v5674
    %5699 = vmatprep.subr.bf16.mxu0 0
    %5700 = vmatpush1.bf16.msra.mxu0 %v5676
    %5701 = vmatprep.subr.bf16.mxu0 0
    %5702 = vmatpush1.bf16.msra.mxu0 %v5678
    %5703 = vmatprep.subr.bf16.mxu0 0
    %5704 = vmatpush1.bf16.msra.mxu0 %v5680
    %5705 = vmatprep.subr.bf16.mxu0 0
    %5706 = vmatpush1.bf16.msra.mxu0 %v5682
    %5707 = vmatprep.subr.bf16.mxu0 0
    %5708 = vmatpush1.bf16.msra.mxu0 %v5684
    %5709 = vmatprep.subr.bf16.mxu0 0
    %5710 = vmatpush1.bf16.msra.mxu0 %v5686
    %5711 = vmatprep.subr.bf16.mxu0 0
    %5712 = vmatpush1.bf16.msra.mxu0 0
    %5713 = vmatprep.subr.bf16.mxu0 0
    %5714 = vmatpush1.bf16.msra.mxu0 0
    %5715 = vmatprep.subr.bf16.mxu0 0
    %5716 = vmatpush1.bf16.msra.mxu0 0
    %5717 = vmatprep.subr.bf16.mxu0 0
    %5718 = vmatpush1.bf16.msra.mxu0 0
    %5719 = vmatprep.subr.bf16.mxu0 0
    %5720 = vmatpush1.bf16.msra.mxu0 0
    %5721 = vmatprep.subr.bf16.mxu0 0
    %5722 = vmatpush1.bf16.msra.mxu0 0
    %5723 = vmatprep.subr.bf16.mxu0 0
    %5724 = vmatpush1.bf16.msra.mxu0 0
    %5725 = vmatprep.subr.bf16.mxu0 0
    %5726 = vmatpush1.bf16.msra.mxu0 0
    %5727 = vmatprep.mubr.bf16.mxu0 0
    %5728 = vmatmul.mubr.bf16.gmra.mrb[0].mxu0 %v5655
    %v5729 = vpop.f32.mrb[0].mxu0
    %v5730 = vadd.f32 0.0, %v5729
    %v5731 = vpop.f32.mrb[0].mxu0
    %v5732 = vpop.f32.mrb[0].mxu0
    %v5733 = vadd.f32 0.0, %v5732
    %v5734 = vpop.f32.mrb[0].mxu0
    %5735 = vmatprep.mubr.bf16.mxu0 0
    %5736 = vmatmul.mubr.bf16.gmra.mrb[0].mxu0 %v5656
    %v5737 = vpop.f32.mrb[0].mxu0
    %v5738 = vadd.f32 0.0, %v5737
    %v5739 = vpop.f32.mrb[0].mxu0
    %v5740 = vpop.f32.mrb[0].mxu0
    %v5741 = vadd.f32 0.0, %v5740
    %v5742 = vpop.f32.mrb[0].mxu0
    %5743 = vmatprep.mubr.bf16.mxu0 0
    %5744 = vmatmul.mubr.bf16.gmra.mrb[0].mxu0 %v5657
    %v5745 = vpop.f32.mrb[0].mxu0
    %v5746 = vadd.f32 0.0, %v5745
    %v5747 = vpop.f32.mrb[0].mxu0
    %v5748 = vpop.f32.mrb[0].mxu0
    %v5749 = vadd.f32 0.0, %v5748
    %v5750 = vpop.f32.mrb[0].mxu0
    %5751 = vmatprep.mubr.bf16.mxu0 0
    %5752 = vmatmul.mubr.bf16.gmra.mrb[0].mxu0 %v5658
    %v5753 = vpop.f32.mrb[0].mxu0
    %v5754 = vadd.f32 0.0, %v5753
    %v5755 = vpop.f32.mrb[0].mxu0
    %v5756 = vpop.f32.mrb[0].mxu0
    %v5757 = vadd.f32 0.0, %v5756
    %v5758 = vpop.f32.mrb[0].mxu0
    %5759 = vmatprep.mubr.bf16.mxu0 0
    %5760 = vmatmul.mubr.bf16.gmra.mrb[0].mxu0 %v5659
    %v5761 = vpop.f32.mrb[0].mxu0
    %v5762 = vadd.f32 0.0, %v5761
    %v5763 = vpop.f32.mrb[0].mxu0
    %v5764 = vpop.f32.mrb[0].mxu0
    %v5765 = vadd.f32 0.0, %v5764
    %v5766 = vpop.f32.mrb[0].mxu0
    %5767 = vmatprep.mubr.bf16.mxu0 0
    %5768 = vmatmul.mubr.bf16.gmra.mrb[0].mxu0 %v5660
    %v5769 = vpop.f32.mrb[0].mxu0
    %v5770 = vadd.f32 0.0, %v5769
    %v5771 = vpop.f32.mrb[0].mxu0
    %v5772 = vpop.f32.mrb[0].mxu0
    %v5773 = vadd.f32 0.0, %v5772
    %v5774 = vpop.f32.mrb[0].mxu0
    %5775 = vmatprep.mubr.bf16.mxu0 0
    %5776 = vmatmul.mubr.bf16.gmra.mrb[0].mxu0 %v5661
    %v5777 = vpop.f32.mrb[0].mxu0
    %v5778 = vadd.f32 0.0, %v5777
    %v5779 = vpop.f32.mrb[0].mxu0
    %v5780 = vpop.f32.mrb[0].mxu0
    %v5781 = vadd.f32 0.0, %v5780
    %v5782 = vpop.f32.mrb[0].mxu0
    %5783 = vmatprep.mubr.bf16.mxu0 0
    %5784 = vmatmul.mubr.bf16.gmra.mrb[0].mxu0 %v5662
    %v5785 = vpop.f32.mrb[0].mxu0
    %v5786 = vadd.f32 0.0, %v5785
    %v5787 = vpop.f32.mrb[0].mxu0
    %v5788 = vpop.f32.mrb[0].mxu0
    %v5789 = vadd.f32 0.0, %v5788
    %v5790 = vpop.f32.mrb[0].mxu0
    %5791 = vdwg.mxu0
    %v5792 = vpack.c.bf16 %v5733, %v5730
    %v5793 = vpack.c.bf16 %v5741, %v5738
    %v5794 = vpack.c.bf16 %v5749, %v5746
    %v5795 = vpack.c.bf16 %v5757, %v5754
    %v5796 = vpack.c.bf16 %v5765, %v5762
    %v5797 = vpack.c.bf16 %v5773, %v5770
    %v5798 = vpack.c.bf16 %v5781, %v5778
    %v5799 = vpack.c.bf16 %v5789, %v5786
    %5808 = vrot.lane.b32.xlu0 %v5792, 64
    %v5809 = vpop.permute.xlu0 %5808
    %5810 = vrot.lane.b32.xlu0 %v5793, 64
    %v5811 = vpop.permute.xlu0 %5810
    %5812 = vrot.lane.b32.xlu0 %v5794, 64
    %v5813 = vpop.permute.xlu0 %5812
    %5814 = vrot.lane.b32.xlu0 %v5795, 64
    %v5815 = vpop.permute.xlu0 %5814
    %5816 = vrot.lane.b32.xlu0 %v5796, 64
    %v5817 = vpop.permute.xlu0 %5816
    %5818 = vrot.lane.b32.xlu0 %v5797, 64
    %v5819 = vpop.permute.xlu0 %5818
    %5820 = vrot.lane.b32.xlu0 %v5798, 64
    %v5821 = vpop.permute.xlu0 %5820
    %5822 = vrot.lane.b32.xlu0 %v5799, 64
    %v5823 = vpop.permute.xlu0 %5822
    %5832 = vst.msk [vmem:[#allocation3 + $0x8] sm:$0xff] %vm4851, %v5809
    %5833 = vst.msk [vmem:[#allocation3 + $0x20] sm:$0xff] %vm4851, %v5811
    %5834 = vst.msk [vmem:[#allocation3 + $0x38] sm:$0xff] %vm4851, %v5813
    %5835 = vst.msk [vmem:[#allocation3 + $0x50] sm:$0xff] %vm4851, %v5815
    %5836 = vst.msk [vmem:[#allocation3 + $0x68] sm:$0xff] %vm4851, %v5817
    %5837 = vst.msk [vmem:[#allocation3 + $0x80] sm:$0xff] %vm4851, %v5819
    %5838 = vst.msk [vmem:[#allocation3 + $0x98] sm:$0xff] %vm4851, %v5821
    %5839 = vst.msk [vmem:[#allocation3 + $0xb0] sm:$0xff] %vm4851, %v5823
    %v5840 = vld [vmem:[#allocation2 + $0x10] sm:$0xff]
    %v5841 = vld [vmem:[#allocation2 + $0x58] sm:$0xff]
    %v5842 = vld [vmem:[#allocation2 + $0xa0] sm:$0xff]
    %v5843 = vld [vmem:[#allocation2 + $0xe8] sm:$0xff]
    %v5844 = vld [vmem:[#allocation2 + $0x130] sm:$0xff]
    %v5845 = vld [vmem:[#allocation2 + $0x178] sm:$0xff]
    %v5846 = vld [vmem:[#allocation2 + $0x1c0] sm:$0xff]
    %v5847 = vld [vmem:[#allocation2 + $0x208] sm:$0xff]
    %v5848 = vld [vmem:[#allocation2 + $0x28] sm:$0xff]
    %v5849 = vld [vmem:[#allocation2 + $0x70] sm:$0xff]
    %v5850 = vld [vmem:[#allocation2 + $0xb8] sm:$0xff]
    %v5851 = vld [vmem:[#allocation2 + $0x100] sm:$0xff]
    %v5852 = vld [vmem:[#allocation2 + $0x148] sm:$0xff]
    %v5853 = vld [vmem:[#allocation2 + $0x190] sm:$0xff]
    %v5854 = vld [vmem:[#allocation2 + $0x1d8] sm:$0xff]
    %v5855 = vld [vmem:[#allocation2 + $0x220] sm:$0xff]
    %v5856 = vld [vmem:[#allocation2 + $0x40] sm:$0xff]
    %v5857 = vld [vmem:[#allocation2 + $0x88] sm:$0xff]
    %v5858 = vld [vmem:[#allocation2 + $0xd0] sm:$0xff]
    %v5859 = vld [vmem:[#allocation2 + $0x118] sm:$0xff]
    %v5860 = vld [vmem:[#allocation2 + $0x160] sm:$0xff]
    %v5861 = vld [vmem:[#allocation2 + $0x1a8] sm:$0xff]
    %v5862 = vld [vmem:[#allocation2 + $0x1f0] sm:$0xff]
    %v5863 = vld [vmem:[#allocation2 + $0x238] sm:$0xff]
    %v5865 = vsel %vm3902, %v5840, 0
    %v5868 = vsel %vm3902, %v5841, 0
    %v5871 = vsel %vm3902, %v5842, 0
    %v5874 = vsel %vm3902, %v5843, 0
    %v5877 = vsel %vm3902, %v5844, 0
    %v5880 = vsel %vm3902, %v5845, 0
    %v5883 = vsel %vm3902, %v5846, 0
    %v5886 = vsel %vm3902, %v5847, 0
    %v5889 = vsel %vm3902, %v5848, 0
    %v5892 = vsel %vm3902, %v5849, 0
    %v5895 = vsel %vm3902, %v5850, 0
    %v5898 = vsel %vm3902, %v5851, 0
    %v5901 = vsel %vm3902, %v5852, 0
    %v5904 = vsel %vm3902, %v5853, 0
    %v5907 = vsel %vm3902, %v5854, 0
    %v5910 = vsel %vm3902, %v5855, 0
    %5912 = vmatprep.subr.bf16.mxu0 0
    %5913 = vmatpush1.bf16.xpose.msra.mxu0 %v5889
    %5914 = vmatprep.subr.bf16.mxu0 0
    %5915 = vmatpush1.bf16.xpose.msra.mxu0 %v5892
    %5916 = vmatprep.subr.bf16.mxu0 0
    %5917 = vmatpush1.bf16.xpose.msra.mxu0 %v5895
    %5918 = vmatprep.subr.bf16.mxu0 0
    %5919 = vmatpush1.bf16.xpose.msra.mxu0 %v5898
    %5920 = vmatprep.subr.bf16.mxu0 0
    %5921 = vmatpush1.bf16.xpose.msra.mxu0 %v5901
    %5922 = vmatprep.subr.bf16.mxu0 0
    %5923 = vmatpush1.bf16.xpose.msra.mxu0 %v5904
    %5924 = vmatprep.subr.bf16.mxu0 0
    %5925 = vmatpush1.bf16.xpose.msra.mxu0 %v5907
    %5926 = vmatprep.subr.bf16.mxu0 0
    %5927 = vmatpush1.bf16.xpose.msra.mxu0 %v5910
    %5928 = vmatprep.subr.bf16.mxu0 0
    %5929 = vmatpush1.bf16.xpose.msra.mxu0 0
    %5930 = vmatprep.subr.bf16.mxu0 0
    %5931 = vmatpush1.bf16.xpose.msra.mxu0 0
    %5932 = vmatprep.subr.bf16.mxu0 0
    %5933 = vmatpush1.bf16.xpose.msra.mxu0 0
    %5934 = vmatprep.subr.bf16.mxu0 0
    %5935 = vmatpush1.bf16.xpose.msra.mxu0 0
    %5936 = vmatprep.subr.bf16.mxu0 0
    %5937 = vmatpush1.bf16.xpose.msra.mxu0 0
    %5938 = vmatprep.subr.bf16.mxu0 0
    %5939 = vmatpush1.bf16.xpose.msra.mxu0 0
    %5940 = vmatprep.subr.bf16.mxu0 0
    %5941 = vmatpush1.bf16.xpose.msra.mxu0 0
    %5942 = vmatprep.subr.bf16.mxu0 0
    %5943 = vmatpush1.bf16.xpose.msra.mxu0 0
    %5944 = vmatprep.mubr.bf16.mxu0 0
    %5945 = vmatmul.mubr.bf16.gmra.mrb[0].mxu0 %v5865
    %v5946 = vpop.f32.mrb[0].mxu0
    %v5947 = vadd.f32 0.0, %v5946
    %v5948 = vpop.f32.mrb[0].mxu0
    %v5949 = vpop.f32.mrb[0].mxu0
    %v5950 = vadd.f32 0.0, %v5949
    %v5951 = vpop.f32.mrb[0].mxu0
    %5952 = vmatprep.mubr.bf16.mxu0 0
    %5953 = vmatmul.mubr.bf16.gmra.mrb[0].mxu0 %v5868
    %v5954 = vpop.f32.mrb[0].mxu0
    %v5955 = vadd.f32 0.0, %v5954
    %v5956 = vpop.f32.mrb[0].mxu0
    %v5957 = vpop.f32.mrb[0].mxu0
    %v5958 = vadd.f32 0.0, %v5957
    %v5959 = vpop.f32.mrb[0].mxu0
    %5960 = vmatprep.mubr.bf16.mxu0 0
    %5961 = vmatmul.mubr.bf16.gmra.mrb[0].mxu0 %v5871
    %v5962 = vpop.f32.mrb[0].mxu0
    %v5963 = vadd.f32 0.0, %v5962
    %v5964 = vpop.f32.mrb[0].mxu0
    %v5965 = vpop.f32.mrb[0].mxu0
    %v5966 = vadd.f32 0.0, %v5965
    %v5967 = vpop.f32.mrb[0].mxu0
    %5968 = vmatprep.mubr.bf16.mxu0 0
    %5969 = vmatmul.mubr.bf16.gmra.mrb[0].mxu0 %v5874
    %v5970 = vpop.f32.mrb[0].mxu0
    %v5971 = vadd.f32 0.0, %v5970
    %v5972 = vpop.f32.mrb[0].mxu0
    %v5973 = vpop.f32.mrb[0].mxu0
    %v5974 = vadd.f32 0.0, %v5973
    %v5975 = vpop.f32.mrb[0].mxu0
    %5976 = vmatprep.mubr.bf16.mxu0 0
    %5977 = vmatmul.mubr.bf16.gmra.mrb[0].mxu0 %v5877
    %v5978 = vpop.f32.mrb[0].mxu0
    %v5979 = vadd.f32 0.0, %v5978
    %v5980 = vpop.f32.mrb[0].mxu0
    %v5981 = vpop.f32.mrb[0].mxu0
    %v5982 = vadd.f32 0.0, %v5981
    %v5983 = vpop.f32.mrb[0].mxu0
    %5984 = vmatprep.mubr.bf16.mxu0 0
    %5985 = vmatmul.mubr.bf16.gmra.mrb[0].mxu0 %v5880
    %v5986 = vpop.f32.mrb[0].mxu0
    %v5987 = vadd.f32 0.0, %v5986
    %v5988 = vpop.f32.mrb[0].mxu0
    %v5989 = vpop.f32.mrb[0].mxu0
    %v5990 = vadd.f32 0.0, %v5989
    %v5991 = vpop.f32.mrb[0].mxu0
    %5992 = vmatprep.mubr.bf16.mxu0 0
    %5993 = vmatmul.mubr.bf16.gmra.mrb[0].mxu0 %v5883
    %v5994 = vpop.f32.mrb[0].mxu0
    %v5995 = vadd.f32 0.0, %v5994
    %v5996 = vpop.f32.mrb[0].mxu0
    %v5997 = vpop.f32.mrb[0].mxu0
    %v5998 = vadd.f32 0.0, %v5997
    %v5999 = vpop.f32.mrb[0].mxu0
    %6000 = vmatprep.mubr.bf16.mxu0 0
    %6001 = vmatmul.mubr.bf16.gmra.mrb[0].mxu0 %v5886
    %v6002 = vpop.f32.mrb[0].mxu0
    %v6003 = vadd.f32 0.0, %v6002
    %v6004 = vpop.f32.mrb[0].mxu0
    %v6005 = vpop.f32.mrb[0].mxu0
    %v6006 = vadd.f32 0.0, %v6005
    %v6007 = vpop.f32.mrb[0].mxu0
    %6008 = vdwg.mxu0
    %6009 = vmax.xlane.f32.xlu0 %v5947
    %v6010 = vpop.xlane.xlu0 %6009
    %6011 = vmax.xlane.f32.xlu0 %v5950
    %v6012 = vpop.xlane.xlu0 %6011
    %6013 = vmax.xlane.f32.xlu0 %v5955
    %v6014 = vpop.xlane.xlu0 %6013
    %6015 = vmax.xlane.f32.xlu0 %v5958
    %v6016 = vpop.xlane.xlu0 %6015
    %6017 = vmax.xlane.f32.xlu0 %v5963
    %v6018 = vpop.xlane.xlu0 %6017
    %6019 = vmax.xlane.f32.xlu0 %v5966
    %v6020 = vpop.xlane.xlu0 %6019
    %6021 = vmax.xlane.f32.xlu0 %v5971
    %v6022 = vpop.xlane.xlu0 %6021
    %6023 = vmax.xlane.f32.xlu0 %v5974
    %v6024 = vpop.xlane.xlu0 %6023
    %6025 = vmax.xlane.f32.xlu0 %v5979
    %v6026 = vpop.xlane.xlu0 %6025
    %6027 = vmax.xlane.f32.xlu0 %v5982
    %v6028 = vpop.xlane.xlu0 %6027
    %6029 = vmax.xlane.f32.xlu0 %v5987
    %v6030 = vpop.xlane.xlu0 %6029
    %6031 = vmax.xlane.f32.xlu0 %v5990
    %v6032 = vpop.xlane.xlu0 %6031
    %6033 = vmax.xlane.f32.xlu0 %v5995
    %v6034 = vpop.xlane.xlu0 %6033
    %6035 = vmax.xlane.f32.xlu0 %v5998
    %v6036 = vpop.xlane.xlu0 %6035
    %6037 = vmax.xlane.f32.xlu0 %v6003
    %v6038 = vpop.xlane.xlu0 %6037
    %6039 = vmax.xlane.f32.xlu0 %v6006
    %v6040 = vpop.xlane.xlu0 %6039
    %v6041 = vsub.f32 %v5947, %v6010
    %v6042 = vsub.f32 %v5950, %v6012
    %v6043 = vsub.f32 %v5955, %v6014
    %v6044 = vsub.f32 %v5958, %v6016
    %v6045 = vsub.f32 %v5963, %v6018
    %v6046 = vsub.f32 %v5966, %v6020
    %v6047 = vsub.f32 %v5971, %v6022
    %v6048 = vsub.f32 %v5974, %v6024
    %v6049 = vsub.f32 %v5979, %v6026
    %v6050 = vsub.f32 %v5982, %v6028
    %v6051 = vsub.f32 %v5987, %v6030
    %v6052 = vsub.f32 %v5990, %v6032
    %v6053 = vsub.f32 %v5995, %v6034
    %v6054 = vsub.f32 %v5998, %v6036
    %v6055 = vsub.f32 %v6003, %v6038
    %v6056 = vsub.f32 %v6006, %v6040
    %v6057 = vmul.f32 %v6041, 1.442695
    %v6058 = vpow.pop %v6057
    %v6059 = vmul.f32 %v6042, 1.442695
    %v6060 = vpow.pop %v6059
    %v6061 = vmul.f32 %v6043, 1.442695
    %v6062 = vpow.pop %v6061
    %v6063 = vmul.f32 %v6044, 1.442695
    %v6064 = vpow.pop %v6063
    %v6065 = vmul.f32 %v6045, 1.442695
    %v6066 = vpow.pop %v6065
    %v6067 = vmul.f32 %v6046, 1.442695
    %v6068 = vpow.pop %v6067
    %v6069 = vmul.f32 %v6047, 1.442695
    %v6070 = vpow.pop %v6069
    %v6071 = vmul.f32 %v6048, 1.442695
    %v6072 = vpow.pop %v6071
    %v6073 = vmul.f32 %v6049, 1.442695
    %v6074 = vpow.pop %v6073
    %v6075 = vmul.f32 %v6050, 1.442695
    %v6076 = vpow.pop %v6075
    %v6077 = vmul.f32 %v6051, 1.442695
    %v6078 = vpow.pop %v6077
    %v6079 = vmul.f32 %v6052, 1.442695
    %v6080 = vpow.pop %v6079
    %v6081 = vmul.f32 %v6053, 1.442695
    %v6082 = vpow.pop %v6081
    %v6083 = vmul.f32 %v6054, 1.442695
    %v6084 = vpow.pop %v6083
    %v6085 = vmul.f32 %v6055, 1.442695
    %v6086 = vpow.pop %v6085
    %v6087 = vmul.f32 %v6056, 1.442695
    %v6088 = vpow.pop %v6087
    %6089 = vadd.xlane.f32.xlu0 %v6058
    %v6090 = vpop.xlane.xlu0 %6089
    %6091 = vadd.xlane.f32.xlu0 %v6060
    %v6092 = vpop.xlane.xlu0 %6091
    %6093 = vadd.xlane.f32.xlu0 %v6062
    %v6094 = vpop.xlane.xlu0 %6093
    %6095 = vadd.xlane.f32.xlu0 %v6064
    %v6096 = vpop.xlane.xlu0 %6095
    %6097 = vadd.xlane.f32.xlu0 %v6066
    %v6098 = vpop.xlane.xlu0 %6097
    %6099 = vadd.xlane.f32.xlu0 %v6068
    %v6100 = vpop.xlane.xlu0 %6099
    %6101 = vadd.xlane.f32.xlu0 %v6070
    %v6102 = vpop.xlane.xlu0 %6101
    %6103 = vadd.xlane.f32.xlu0 %v6072
    %v6104 = vpop.xlane.xlu0 %6103
    %6105 = vadd.xlane.f32.xlu0 %v6074
    %v6106 = vpop.xlane.xlu0 %6105
    %6107 = vadd.xlane.f32.xlu0 %v6076
    %v6108 = vpop.xlane.xlu0 %6107
    %6109 = vadd.xlane.f32.xlu0 %v6078
    %v6110 = vpop.xlane.xlu0 %6109
    %6111 = vadd.xlane.f32.xlu0 %v6080
    %v6112 = vpop.xlane.xlu0 %6111
    %6113 = vadd.xlane.f32.xlu0 %v6082
    %v6114 = vpop.xlane.xlu0 %6113
    %6115 = vadd.xlane.f32.xlu0 %v6084
    %v6116 = vpop.xlane.xlu0 %6115
    %6117 = vadd.xlane.f32.xlu0 %v6086
    %v6118 = vpop.xlane.xlu0 %6117
    %6119 = vadd.xlane.f32.xlu0 %v6088
    %v6120 = vpop.xlane.xlu0 %6119
    %v6121 = vrcp.pop %v6090
    %v6122 = vrcp.pop %v6092
    %v6123 = vrcp.pop %v6094
    %v6124 = vrcp.pop %v6096
    %v6125 = vrcp.pop %v6098
    %v6126 = vrcp.pop %v6100
    %v6127 = vrcp.pop %v6102
    %v6128 = vrcp.pop %v6104
    %v6129 = vrcp.pop %v6106
    %v6130 = vrcp.pop %v6108
    %v6131 = vrcp.pop %v6110
    %v6132 = vrcp.pop %v6112
    %v6133 = vrcp.pop %v6114
    %v6134 = vrcp.pop %v6116
    %v6135 = vrcp.pop %v6118
    %v6136 = vrcp.pop %v6120
    %v6137 = vmul.f32 %v6058, %v6121
    %v6138 = vmul.f32 %v6060, %v6122
    %v6139 = vmul.f32 %v6062, %v6123
    %v6140 = vmul.f32 %v6064, %v6124
    %v6141 = vmul.f32 %v6066, %v6125
    %v6142 = vmul.f32 %v6068, %v6126
    %v6143 = vmul.f32 %v6070, %v6127
    %v6144 = vmul.f32 %v6072, %v6128
    %v6145 = vmul.f32 %v6074, %v6129
    %v6146 = vmul.f32 %v6076, %v6130
    %v6147 = vmul.f32 %v6078, %v6131
    %v6148 = vmul.f32 %v6080, %v6132
    %v6149 = vmul.f32 %v6082, %v6133
    %v6150 = vmul.f32 %v6084, %v6134
    %v6151 = vmul.f32 %v6086, %v6135
    %v6152 = vmul.f32 %v6088, %v6136
    %v6153 = vpack.c.bf16 %v6138, %v6137
    %v6154 = vpack.c.bf16 %v6140, %v6139
    %v6155 = vpack.c.bf16 %v6142, %v6141
    %v6156 = vpack.c.bf16 %v6144, %v6143
    %v6157 = vpack.c.bf16 %v6146, %v6145
    %v6158 = vpack.c.bf16 %v6148, %v6147
    %v6159 = vpack.c.bf16 %v6150, %v6149
    %v6160 = vpack.c.bf16 %v6152, %v6151
    %6161 = vmatprep.subr.bf16.mxu0 0
    %6162 = vmatpush1.bf16.msra.mxu0 %v5856
    %6163 = vmatprep.subr.bf16.mxu0 0
    %6164 = vmatpush1.bf16.msra.mxu0 %v5857
    %6165 = vmatprep.subr.bf16.mxu0 0
    %6166 = vmatpush1.bf16.msra.mxu0 %v5858
    %6167 = vmatprep.subr.bf16.mxu0 0
    %6168 = vmatpush1.bf16.msra.mxu0 %v5859
    %6169 = vmatprep.subr.bf16.mxu0 0
    %6170 = vmatpush1.bf16.msra.mxu0 %v5860
    %6171 = vmatprep.subr.bf16.mxu0 0
    %6172 = vmatpush1.bf16.msra.mxu0 %v5861
    %6173 = vmatprep.subr.bf16.mxu0 0
    %6174 = vmatpush1.bf16.msra.mxu0 %v5862
    %6175 = vmatprep.subr.bf16.mxu0 0
    %6176 = vmatpush1.bf16.msra.mxu0 %v5863
    %6177 = vmatprep.subr.bf16.mxu0 0
    %6178 = vmatpush1.bf16.msra.mxu0 0
    %6179 = vmatprep.subr.bf16.mxu0 0
    %6180 = vmatpush1.bf16.msra.mxu0 0
    %6181 = vmatprep.subr.bf16.mxu0 0
    %6182 = vmatpush1.bf16.msra.mxu0 0
    %6183 = vmatprep.subr.bf16.mxu0 0
    %6184 = vmatpush1.bf16.msra.mxu0 0
    %6185 = vmatprep.subr.bf16.mxu0 0
    %6186 = vmatpush1.bf16.msra.mxu0 0
    %6187 = vmatprep.subr.bf16.mxu0 0
    %6188 = vmatpush1.bf16.msra.mxu0 0
    %6189 = vmatprep.subr.bf16.mxu0 0
    %6190 = vmatpush1.bf16.msra.mxu0 0
    %6191 = vmatprep.subr.bf16.mxu0 0
    %6192 = vmatpush1.bf16.msra.mxu0 0
    %6193 = vmatprep.mubr.bf16.mxu0 0
    %6194 = vmatmul.mubr.bf16.gmra.mrb[0].mxu0 %v6153
    %v6195 = vpop.f32.mrb[0].mxu0
    %v6196 = vadd.f32 0.0, %v6195
    %v6197 = vpop.f32.mrb[0].mxu0
    %v6198 = vpop.f32.mrb[0].mxu0
    %v6199 = vadd.f32 0.0, %v6198
    %v6200 = vpop.f32.mrb[0].mxu0
    %6201 = vmatprep.mubr.bf16.mxu0 0
    %6202 = vmatmul.mubr.bf16.gmra.mrb[0].mxu0 %v6154
    %v6203 = vpop.f32.mrb[0].mxu0
    %v6204 = vadd.f32 0.0, %v6203
    %v6205 = vpop.f32.mrb[0].mxu0
    %v6206 = vpop.f32.mrb[0].mxu0
    %v6207 = vadd.f32 0.0, %v6206
    %v6208 = vpop.f32.mrb[0].mxu0
    %6209 = vmatprep.mubr.bf16.mxu0 0
    %6210 = vmatmul.mubr.bf16.gmra.mrb[0].mxu0 %v6155
    %v6211 = vpop.f32.mrb[0].mxu0
    %v6212 = vadd.f32 0.0, %v6211
    %v6213 = vpop.f32.mrb[0].mxu0
    %v6214 = vpop.f32.mrb[0].mxu0
    %v6215 = vadd.f32 0.0, %v6214
    %v6216 = vpop.f32.mrb[0].mxu0
    %6217 = vmatprep.mubr.bf16.mxu0 0
    %6218 = vmatmul.mubr.bf16.gmra.mrb[0].mxu0 %v6156
    %v6219 = vpop.f32.mrb[0].mxu0
    %v6220 = vadd.f32 0.0, %v6219
    %v6221 = vpop.f32.mrb[0].mxu0
    %v6222 = vpop.f32.mrb[0].mxu0
    %v6223 = vadd.f32 0.0, %v6222
    %v6224 = vpop.f32.mrb[0].mxu0
    %6225 = vmatprep.mubr.bf16.mxu0 0
    %6226 = vmatmul.mubr.bf16.gmra.mrb[0].mxu0 %v6157
    %v6227 = vpop.f32.mrb[0].mxu0
    %v6228 = vadd.f32 0.0, %v6227
    %v6229 = vpop.f32.mrb[0].mxu0
    %v6230 = vpop.f32.mrb[0].mxu0
    %v6231 = vadd.f32 0.0, %v6230
    %v6232 = vpop.f32.mrb[0].mxu0
    %6233 = vmatprep.mubr.bf16.mxu0 0
    %6234 = vmatmul.mubr.bf16.gmra.mrb[0].mxu0 %v6158
    %v6235 = vpop.f32.mrb[0].mxu0
    %v6236 = vadd.f32 0.0, %v6235
    %v6237 = vpop.f32.mrb[0].mxu0
    %v6238 = vpop.f32.mrb[0].mxu0
    %v6239 = vadd.f32 0.0, %v6238
    %v6240 = vpop.f32.mrb[0].mxu0
    %6241 = vmatprep.mubr.bf16.mxu0 0
    %6242 = vmatmul.mubr.bf16.gmra.mrb[0].mxu0 %v6159
    %v6243 = vpop.f32.mrb[0].mxu0
    %v6244 = vadd.f32 0.0, %v6243
    %v6245 = vpop.f32.mrb[0].mxu0
    %v6246 = vpop.f32.mrb[0].mxu0
    %v6247 = vadd.f32 0.0, %v6246
    %v6248 = vpop.f32.mrb[0].mxu0
    %6249 = vmatprep.mubr.bf16.mxu0 0
    %6250 = vmatmul.mubr.bf16.gmra.mrb[0].mxu0 %v6160
    %v6251 = vpop.f32.mrb[0].mxu0
    %v6252 = vadd.f32 0.0, %v6251
    %v6253 = vpop.f32.mrb[0].mxu0
    %v6254 = vpop.f32.mrb[0].mxu0
    %v6255 = vadd.f32 0.0, %v6254
    %v6256 = vpop.f32.mrb[0].mxu0
    %6257 = vdwg.mxu0
    %v6258 = vpack.c.bf16 %v6199, %v6196
    %v6259 = vpack.c.bf16 %v6207, %v6204
    %v6260 = vpack.c.bf16 %v6215, %v6212
    %v6261 = vpack.c.bf16 %v6223, %v6220
    %v6262 = vpack.c.bf16 %v6231, %v6228
    %v6263 = vpack.c.bf16 %v6239, %v6236
    %v6264 = vpack.c.bf16 %v6247, %v6244
    %v6265 = vpack.c.bf16 %v6255, %v6252
    %6266 = vst.msk [vmem:[#allocation3 + $0x10] sm:$0xff] %vm3902, %v6258
    %6267 = vst.msk [vmem:[#allocation3 + $0x28] sm:$0xff] %vm3902, %v6259
    %6268 = vst.msk [vmem:[#allocation3 + $0x40] sm:$0xff] %vm3902, %v6260
    %6269 = vst.msk [vmem:[#allocation3 + $0x58] sm:$0xff] %vm3902, %v6261
    %6270 = vst.msk [vmem:[#allocation3 + $0x70] sm:$0xff] %vm3902, %v6262
    %6271 = vst.msk [vmem:[#allocation3 + $0x88] sm:$0xff] %vm3902, %v6263
    %6272 = vst.msk [vmem:[#allocation3 + $0xa0] sm:$0xff] %vm3902, %v6264
    %6273 = vst.msk [vmem:[#allocation3 + $0xb8] sm:$0xff] %vm3902, %v6265
    %v6274 = vld [vmem:[#allocation2 + $0x10] sm:$0xff]
    %v6275 = vld [vmem:[#allocation2 + $0x58] sm:$0xff]
    %v6276 = vld [vmem:[#allocation2 + $0xa0] sm:$0xff]
    %v6277 = vld [vmem:[#allocation2 + $0xe8] sm:$0xff]
    %v6278 = vld [vmem:[#allocation2 + $0x130] sm:$0xff]
    %v6279 = vld [vmem:[#allocation2 + $0x178] sm:$0xff]
    %v6280 = vld [vmem:[#allocation2 + $0x1c0] sm:$0xff]
    %v6281 = vld [vmem:[#allocation2 + $0x208] sm:$0xff]
    %v6282 = vld [vmem:[#allocation2 + $0x28] sm:$0xff]
    %v6283 = vld [vmem:[#allocation2 + $0x70] sm:$0xff]
    %v6284 = vld [vmem:[#allocation2 + $0xb8] sm:$0xff]
    %v6285 = vld [vmem:[#allocation2 + $0x100] sm:$0xff]
    %v6286 = vld [vmem:[#allocation2 + $0x148] sm:$0xff]
    %v6287 = vld [vmem:[#allocation2 + $0x190] sm:$0xff]
    %v6288 = vld [vmem:[#allocation2 + $0x1d8] sm:$0xff]
    %v6289 = vld [vmem:[#allocation2 + $0x220] sm:$0xff]
    %v6290 = vld [vmem:[#allocation2 + $0x40] sm:$0xff]
    %v6291 = vld [vmem:[#allocation2 + $0x88] sm:$0xff]
    %v6292 = vld [vmem:[#allocation2 + $0xd0] sm:$0xff]
    %v6293 = vld [vmem:[#allocation2 + $0x118] sm:$0xff]
    %v6294 = vld [vmem:[#allocation2 + $0x160] sm:$0xff]
    %v6295 = vld [vmem:[#allocation2 + $0x1a8] sm:$0xff]
    %v6296 = vld [vmem:[#allocation2 + $0x1f0] sm:$0xff]
    %v6297 = vld [vmem:[#allocation2 + $0x238] sm:$0xff]
    %6306 = vrot.lane.b32.xlu0 %v6274, 64
    %v6307 = vpop.permute.xlu0 %6306
    %6308 = vrot.lane.b32.xlu0 %v6275, 64
    %v6309 = vpop.permute.xlu0 %6308
    %6310 = vrot.lane.b32.xlu0 %v6276, 64
    %v6311 = vpop.permute.xlu0 %6310
    %6312 = vrot.lane.b32.xlu0 %v6277, 64
    %v6313 = vpop.permute.xlu0 %6312
    %6314 = vrot.lane.b32.xlu0 %v6278, 64
    %v6315 = vpop.permute.xlu0 %6314
    %6316 = vrot.lane.b32.xlu0 %v6279, 64
    %v6317 = vpop.permute.xlu0 %6316
    %6318 = vrot.lane.b32.xlu0 %v6280, 64
    %v6319 = vpop.permute.xlu0 %6318
    %6320 = vrot.lane.b32.xlu0 %v6281, 64
    %v6321 = vpop.permute.xlu0 %6320
    %6330 = vrot.lane.b32.xlu0 %v6282, 64
    %v6331 = vpop.permute.xlu0 %6330
    %6332 = vrot.lane.b32.xlu0 %v6283, 64
    %v6333 = vpop.permute.xlu0 %6332
    %6334 = vrot.lane.b32.xlu0 %v6284, 64
    %v6335 = vpop.permute.xlu0 %6334
    %6336 = vrot.lane.b32.xlu0 %v6285, 64
    %v6337 = vpop.permute.xlu0 %6336
    %6338 = vrot.lane.b32.xlu0 %v6286, 64
    %v6339 = vpop.permute.xlu0 %6338
    %6340 = vrot.lane.b32.xlu0 %v6287, 64
    %v6341 = vpop.permute.xlu0 %6340
    %6342 = vrot.lane.b32.xlu0 %v6288, 64
    %v6343 = vpop.permute.xlu0 %6342
    %6344 = vrot.lane.b32.xlu0 %v6289, 64
    %v6345 = vpop.permute.xlu0 %6344
    %v6347 = vsel %vm3902, %v6307, 0
    %v6350 = vsel %vm3902, %v6309, 0
    %v6353 = vsel %vm3902, %v6311, 0
    %v6356 = vsel %vm3902, %v6313, 0
    %v6359 = vsel %vm3902, %v6315, 0
    %v6362 = vsel %vm3902, %v6317, 0
    %v6365 = vsel %vm3902, %v6319, 0
    %v6368 = vsel %vm3902, %v6321, 0
    %v6371 = vsel %vm3902, %v6331, 0
    %v6374 = vsel %vm3902, %v6333, 0
    %v6377 = vsel %vm3902, %v6335, 0
    %v6380 = vsel %vm3902, %v6337, 0
    %v6383 = vsel %vm3902, %v6339, 0
    %v6386 = vsel %vm3902, %v6341, 0
    %v6389 = vsel %vm3902, %v6343, 0
    %v6392 = vsel %vm3902, %v6345, 0
    %6394 = vmatprep.subr.bf16.mxu0 0
    %6395 = vmatpush1.bf16.xpose.msra.mxu0 %v6371
    %6396 = vmatprep.subr.bf16.mxu0 0
    %6397 = vmatpush1.bf16.xpose.msra.mxu0 %v6374
    %6398 = vmatprep.subr.bf16.mxu0 0
    %6399 = vmatpush1.bf16.xpose.msra.mxu0 %v6377
    %6400 = vmatprep.subr.bf16.mxu0 0
    %6401 = vmatpush1.bf16.xpose.msra.mxu0 %v6380
    %6402 = vmatprep.subr.bf16.mxu0 0
    %6403 = vmatpush1.bf16.xpose.msra.mxu0 %v6383
    %6404 = vmatprep.subr.bf16.mxu0 0
    %6405 = vmatpush1.bf16.xpose.msra.mxu0 %v6386
    %6406 = vmatprep.subr.bf16.mxu0 0
    %6407 = vmatpush1.bf16.xpose.msra.mxu0 %v6389
    %6408 = vmatprep.subr.bf16.mxu0 0
    %6409 = vmatpush1.bf16.xpose.msra.mxu0 %v6392
    %6410 = vmatprep.subr.bf16.mxu0 0
    %6411 = vmatpush1.bf16.xpose.msra.mxu0 0
    %6412 = vmatprep.subr.bf16.mxu0 0
    %6413 = vmatpush1.bf16.xpose.msra.mxu0 0
    %6414 = vmatprep.subr.bf16.mxu0 0
    %6415 = vmatpush1.bf16.xpose.msra.mxu0 0
    %6416 = vmatprep.subr.bf16.mxu0 0
    %6417 = vmatpush1.bf16.xpose.msra.mxu0 0
    %6418 = vmatprep.subr.bf16.mxu0 0
    %6419 = vmatpush1.bf16.xpose.msra.mxu0 0
    %6420 = vmatprep.subr.bf16.mxu0 0
    %6421 = vmatpush1.bf16.xpose.msra.mxu0 0
    %6422 = vmatprep.subr.bf16.mxu0 0
    %6423 = vmatpush1.bf16.xpose.msra.mxu0 0
    %6424 = vmatprep.subr.bf16.mxu0 0
    %6425 = vmatpush1.bf16.xpose.msra.mxu0 0
    %6426 = vmatprep.mubr.bf16.mxu0 0
    %6427 = vmatmul.mubr.bf16.gmra.mrb[0].mxu0 %v6347
    %v6428 = vpop.f32.mrb[0].mxu0
    %v6429 = vadd.f32 0.0, %v6428
    %v6430 = vpop.f32.mrb[0].mxu0
    %v6431 = vpop.f32.mrb[0].mxu0
    %v6432 = vadd.f32 0.0, %v6431
    %v6433 = vpop.f32.mrb[0].mxu0
    %6434 = vmatprep.mubr.bf16.mxu0 0
    %6435 = vmatmul.mubr.bf16.gmra.mrb[0].mxu0 %v6350
    %v6436 = vpop.f32.mrb[0].mxu0
    %v6437 = vadd.f32 0.0, %v6436
    %v6438 = vpop.f32.mrb[0].mxu0
    %v6439 = vpop.f32.mrb[0].mxu0
    %v6440 = vadd.f32 0.0, %v6439
    %v6441 = vpop.f32.mrb[0].mxu0
    %6442 = vmatprep.mubr.bf16.mxu0 0
    %6443 = vmatmul.mubr.bf16.gmra.mrb[0].mxu0 %v6353
    %v6444 = vpop.f32.mrb[0].mxu0
    %v6445 = vadd.f32 0.0, %v6444
    %v6446 = vpop.f32.mrb[0].mxu0
    %v6447 = vpop.f32.mrb[0].mxu0
    %v6448 = vadd.f32 0.0, %v6447
    %v6449 = vpop.f32.mrb[0].mxu0
    %6450 = vmatprep.mubr.bf16.mxu0 0
    %6451 = vmatmul.mubr.bf16.gmra.mrb[0].mxu0 %v6356
    %v6452 = vpop.f32.mrb[0].mxu0
    %v6453 = vadd.f32 0.0, %v6452
    %v6454 = vpop.f32.mrb[0].mxu0
    %v6455 = vpop.f32.mrb[0].mxu0
    %v6456 = vadd.f32 0.0, %v6455
    %v6457 = vpop.f32.mrb[0].mxu0
    %6458 = vmatprep.mubr.bf16.mxu0 0
    %6459 = vmatmul.mubr.bf16.gmra.mrb[0].mxu0 %v6359
    %v6460 = vpop.f32.mrb[0].mxu0
    %v6461 = vadd.f32 0.0, %v6460
    %v6462 = vpop.f32.mrb[0].mxu0
    %v6463 = vpop.f32.mrb[0].mxu0
    %v6464 = vadd.f32 0.0, %v6463
    %v6465 = vpop.f32.mrb[0].mxu0
    %6466 = vmatprep.mubr.bf16.mxu0 0
    %6467 = vmatmul.mubr.bf16.gmra.mrb[0].mxu0 %v6362
    %v6468 = vpop.f32.mrb[0].mxu0
    %v6469 = vadd.f32 0.0, %v6468
    %v6470 = vpop.f32.mrb[0].mxu0
    %v6471 = vpop.f32.mrb[0].mxu0
    %v6472 = vadd.f32 0.0, %v6471
    %v6473 = vpop.f32.mrb[0].mxu0
    %6474 = vmatprep.mubr.bf16.mxu0 0
    %6475 = vmatmul.mubr.bf16.gmra.mrb[0].mxu0 %v6365
    %v6476 = vpop.f32.mrb[0].mxu0
    %v6477 = vadd.f32 0.0, %v6476
    %v6478 = vpop.f32.mrb[0].mxu0
    %v6479 = vpop.f32.mrb[0].mxu0
    %v6480 = vadd.f32 0.0, %v6479
    %v6481 = vpop.f32.mrb[0].mxu0
    %6482 = vmatprep.mubr.bf16.mxu0 0
    %6483 = vmatmul.mubr.bf16.gmra.mrb[0].mxu0 %v6368
    %v6484 = vpop.f32.mrb[0].mxu0
    %v6485 = vadd.f32 0.0, %v6484
    %v6486 = vpop.f32.mrb[0].mxu0
    %v6487 = vpop.f32.mrb[0].mxu0
    %v6488 = vadd.f32 0.0, %v6487
    %v6489 = vpop.f32.mrb[0].mxu0
    %6490 = vdwg.mxu0
    %6491 = vmax.xlane.f32.xlu0 %v6429
    %v6492 = vpop.xlane.xlu0 %6491
    %6493 = vmax.xlane.f32.xlu0 %v6432
    %v6494 = vpop.xlane.xlu0 %6493
    %6495 = vmax.xlane.f32.xlu0 %v6437
    %v6496 = vpop.xlane.xlu0 %6495
    %6497 = vmax.xlane.f32.xlu0 %v6440
    %v6498 = vpop.xlane.xlu0 %6497
    %6499 = vmax.xlane.f32.xlu0 %v6445
    %v6500 = vpop.xlane.xlu0 %6499
    %6501 = vmax.xlane.f32.xlu0 %v6448
    %v6502 = vpop.xlane.xlu0 %6501
    %6503 = vmax.xlane.f32.xlu0 %v6453
    %v6504 = vpop.xlane.xlu0 %6503
    %6505 = vmax.xlane.f32.xlu0 %v6456
    %v6506 = vpop.xlane.xlu0 %6505
    %6507 = vmax.xlane.f32.xlu0 %v6461
    %v6508 = vpop.xlane.xlu0 %6507
    %6509 = vmax.xlane.f32.xlu0 %v6464
    %v6510 = vpop.xlane.xlu0 %6509
    %6511 = vmax.xlane.f32.xlu0 %v6469
    %v6512 = vpop.xlane.xlu0 %6511
    %6513 = vmax.xlane.f32.xlu0 %v6472
    %v6514 = vpop.xlane.xlu0 %6513
    %6515 = vmax.xlane.f32.xlu0 %v6477
    %v6516 = vpop.xlane.xlu0 %6515
    %6517 = vmax.xlane.f32.xlu0 %v6480
    %v6518 = vpop.xlane.xlu0 %6517
    %6519 = vmax.xlane.f32.xlu0 %v6485
    %v6520 = vpop.xlane.xlu0 %6519
    %6521 = vmax.xlane.f32.xlu0 %v6488
    %v6522 = vpop.xlane.xlu0 %6521
    %v6523 = vsub.f32 %v6429, %v6492
    %v6524 = vsub.f32 %v6432, %v6494
    %v6525 = vsub.f32 %v6437, %v6496
    %v6526 = vsub.f32 %v6440, %v6498
    %v6527 = vsub.f32 %v6445, %v6500
    %v6528 = vsub.f32 %v6448, %v6502
    %v6529 = vsub.f32 %v6453, %v6504
    %v6530 = vsub.f32 %v6456, %v6506
    %v6531 = vsub.f32 %v6461, %v6508
    %v6532 = vsub.f32 %v6464, %v6510
    %v6533 = vsub.f32 %v6469, %v6512
    %v6534 = vsub.f32 %v6472, %v6514
    %v6535 = vsub.f32 %v6477, %v6516
    %v6536 = vsub.f32 %v6480, %v6518
    %v6537 = vsub.f32 %v6485, %v6520
    %v6538 = vsub.f32 %v6488, %v6522
    %v6539 = vmul.f32 %v6523, 1.442695
    %v6540 = vpow.pop %v6539
    %v6541 = vmul.f32 %v6524, 1.442695
    %v6542 = vpow.pop %v6541
    %v6543 = vmul.f32 %v6525, 1.442695
    %v6544 = vpow.pop %v6543
    %v6545 = vmul.f32 %v6526, 1.442695
    %v6546 = vpow.pop %v6545
    %v6547 = vmul.f32 %v6527, 1.442695
    %v6548 = vpow.pop %v6547
    %v6549 = vmul.f32 %v6528, 1.442695
    %v6550 = vpow.pop %v6549
    %v6551 = vmul.f32 %v6529, 1.442695
    %v6552 = vpow.pop %v6551
    %v6553 = vmul.f32 %v6530, 1.442695
    %v6554 = vpow.pop %v6553
    %v6555 = vmul.f32 %v6531, 1.442695
    %v6556 = vpow.pop %v6555
    %v6557 = vmul.f32 %v6532, 1.442695
    %v6558 = vpow.pop %v6557
    %v6559 = vmul.f32 %v6533, 1.442695
    %v6560 = vpow.pop %v6559
    %v6561 = vmul.f32 %v6534, 1.442695
    %v6562 = vpow.pop %v6561
    %v6563 = vmul.f32 %v6535, 1.442695
    %v6564 = vpow.pop %v6563
    %v6565 = vmul.f32 %v6536, 1.442695
    %v6566 = vpow.pop %v6565
    %v6567 = vmul.f32 %v6537, 1.442695
    %v6568 = vpow.pop %v6567
    %v6569 = vmul.f32 %v6538, 1.442695
    %v6570 = vpow.pop %v6569
    %6571 = vadd.xlane.f32.xlu0 %v6540
    %v6572 = vpop.xlane.xlu0 %6571
    %6573 = vadd.xlane.f32.xlu0 %v6542
    %v6574 = vpop.xlane.xlu0 %6573
    %6575 = vadd.xlane.f32.xlu0 %v6544
    %v6576 = vpop.xlane.xlu0 %6575
    %6577 = vadd.xlane.f32.xlu0 %v6546
    %v6578 = vpop.xlane.xlu0 %6577
    %6579 = vadd.xlane.f32.xlu0 %v6548
    %v6580 = vpop.xlane.xlu0 %6579
    %6581 = vadd.xlane.f32.xlu0 %v6550
    %v6582 = vpop.xlane.xlu0 %6581
    %6583 = vadd.xlane.f32.xlu0 %v6552
    %v6584 = vpop.xlane.xlu0 %6583
    %6585 = vadd.xlane.f32.xlu0 %v6554
    %v6586 = vpop.xlane.xlu0 %6585
    %6587 = vadd.xlane.f32.xlu0 %v6556
    %v6588 = vpop.xlane.xlu0 %6587
    %6589 = vadd.xlane.f32.xlu0 %v6558
    %v6590 = vpop.xlane.xlu0 %6589
    %6591 = vadd.xlane.f32.xlu0 %v6560
    %v6592 = vpop.xlane.xlu0 %6591
    %6593 = vadd.xlane.f32.xlu0 %v6562
    %v6594 = vpop.xlane.xlu0 %6593
    %6595 = vadd.xlane.f32.xlu0 %v6564
    %v6596 = vpop.xlane.xlu0 %6595
    %6597 = vadd.xlane.f32.xlu0 %v6566
    %v6598 = vpop.xlane.xlu0 %6597
    %6599 = vadd.xlane.f32.xlu0 %v6568
    %v6600 = vpop.xlane.xlu0 %6599
    %6601 = vadd.xlane.f32.xlu0 %v6570
    %v6602 = vpop.xlane.xlu0 %6601
    %v6603 = vrcp.pop %v6572
    %v6604 = vrcp.pop %v6574
    %v6605 = vrcp.pop %v6576
    %v6606 = vrcp.pop %v6578
    %v6607 = vrcp.pop %v6580
    %v6608 = vrcp.pop %v6582
    %v6609 = vrcp.pop %v6584
    %v6610 = vrcp.pop %v6586
    %v6611 = vrcp.pop %v6588
    %v6612 = vrcp.pop %v6590
    %v6613 = vrcp.pop %v6592
    %v6614 = vrcp.pop %v6594
    %v6615 = vrcp.pop %v6596
    %v6616 = vrcp.pop %v6598
    %v6617 = vrcp.pop %v6600
    %v6618 = vrcp.pop %v6602
    %v6619 = vmul.f32 %v6540, %v6603
    %v6620 = vmul.f32 %v6542, %v6604
    %v6621 = vmul.f32 %v6544, %v6605
    %v6622 = vmul.f32 %v6546, %v6606
    %v6623 = vmul.f32 %v6548, %v6607
    %v6624 = vmul.f32 %v6550, %v6608
    %v6625 = vmul.f32 %v6552, %v6609
    %v6626 = vmul.f32 %v6554, %v6610
    %v6627 = vmul.f32 %v6556, %v6611
    %v6628 = vmul.f32 %v6558, %v6612
    %v6629 = vmul.f32 %v6560, %v6613
    %v6630 = vmul.f32 %v6562, %v6614
    %v6631 = vmul.f32 %v6564, %v6615
    %v6632 = vmul.f32 %v6566, %v6616
    %v6633 = vmul.f32 %v6568, %v6617
    %v6634 = vmul.f32 %v6570, %v6618
    %v6635 = vpack.c.bf16 %v6620, %v6619
    %v6636 = vpack.c.bf16 %v6622, %v6621
    %v6637 = vpack.c.bf16 %v6624, %v6623
    %v6638 = vpack.c.bf16 %v6626, %v6625
    %v6639 = vpack.c.bf16 %v6628, %v6627
    %v6640 = vpack.c.bf16 %v6630, %v6629
    %v6641 = vpack.c.bf16 %v6632, %v6631
    %v6642 = vpack.c.bf16 %v6634, %v6633
    %6651 = vrot.lane.b32.xlu0 %v6290, 64
    %v6652 = vpop.permute.xlu0 %6651
    %6653 = vrot.lane.b32.xlu0 %v6291, 64
    %v6654 = vpop.permute.xlu0 %6653
    %6655 = vrot.lane.b32.xlu0 %v6292, 64
    %v6656 = vpop.permute.xlu0 %6655
    %6657 = vrot.lane.b32.xlu0 %v6293, 64
    %v6658 = vpop.permute.xlu0 %6657
    %6659 = vrot.lane.b32.xlu0 %v6294, 64
    %v6660 = vpop.permute.xlu0 %6659
    %6661 = vrot.lane.b32.xlu0 %v6295, 64
    %v6662 = vpop.permute.xlu0 %6661
    %6663 = vrot.lane.b32.xlu0 %v6296, 64
    %v6664 = vpop.permute.xlu0 %6663
    %6665 = vrot.lane.b32.xlu0 %v6297, 64
    %v6666 = vpop.permute.xlu0 %6665
    %6675 = vmatprep.subr.bf16.mxu0 0
    %6676 = vmatpush1.bf16.msra.mxu0 %v6652
    %6677 = vmatprep.subr.bf16.mxu0 0
    %6678 = vmatpush1.bf16.msra.mxu0 %v6654
    %6679 = vmatprep.subr.bf16.mxu0 0
    %6680 = vmatpush1.bf16.msra.mxu0 %v6656
    %6681 = vmatprep.subr.bf16.mxu0 0
    %6682 = vmatpush1.bf16.msra.mxu0 %v6658
    %6683 = vmatprep.subr.bf16.mxu0 0
    %6684 = vmatpush1.bf16.msra.mxu0 %v6660
    %6685 = vmatprep.subr.bf16.mxu0 0
    %6686 = vmatpush1.bf16.msra.mxu0 %v6662
    %6687 = vmatprep.subr.bf16.mxu0 0
    %6688 = vmatpush1.bf16.msra.mxu0 %v6664
    %6689 = vmatprep.subr.bf16.mxu0 0
    %6690 = vmatpush1.bf16.msra.mxu0 %v6666
    %6691 = vmatprep.subr.bf16.mxu0 0
    %6692 = vmatpush1.bf16.msra.mxu0 0
    %6693 = vmatprep.subr.bf16.mxu0 0
    %6694 = vmatpush1.bf16.msra.mxu0 0
    %6695 = vmatprep.subr.bf16.mxu0 0
    %6696 = vmatpush1.bf16.msra.mxu0 0
    %6697 = vmatprep.subr.bf16.mxu0 0
    %6698 = vmatpush1.bf16.msra.mxu0 0
    %6699 = vmatprep.subr.bf16.mxu0 0
    %6700 = vmatpush1.bf16.msra.mxu0 0
    %6701 = vmatprep.subr.bf16.mxu0 0
    %6702 = vmatpush1.bf16.msra.mxu0 0
    %6703 = vmatprep.subr.bf16.mxu0 0
    %6704 = vmatpush1.bf16.msra.mxu0 0
    %6705 = vmatprep.subr.bf16.mxu0 0
    %6706 = vmatpush1.bf16.msra.mxu0 0
    %6707 = vmatprep.mubr.bf16.mxu0 0
    %6708 = vmatmul.mubr.bf16.gmra.mrb[0].mxu0 %v6635
    %v6709 = vpop.f32.mrb[0].mxu0
    %v6710 = vadd.f32 0.0, %v6709
    %v6711 = vpop.f32.mrb[0].mxu0
    %v6712 = vpop.f32.mrb[0].mxu0
    %v6713 = vadd.f32 0.0, %v6712
    %v6714 = vpop.f32.mrb[0].mxu0
    %6715 = vmatprep.mubr.bf16.mxu0 0
    %6716 = vmatmul.mubr.bf16.gmra.mrb[0].mxu0 %v6636
    %v6717 = vpop.f32.mrb[0].mxu0
    %v6718 = vadd.f32 0.0, %v6717
    %v6719 = vpop.f32.mrb[0].mxu0
    %v6720 = vpop.f32.mrb[0].mxu0
    %v6721 = vadd.f32 0.0, %v6720
    %v6722 = vpop.f32.mrb[0].mxu0
    %6723 = vmatprep.mubr.bf16.mxu0 0
    %6724 = vmatmul.mubr.bf16.gmra.mrb[0].mxu0 %v6637
    %v6725 = vpop.f32.mrb[0].mxu0
    %v6726 = vadd.f32 0.0, %v6725
    %v6727 = vpop.f32.mrb[0].mxu0
    %v6728 = vpop.f32.mrb[0].mxu0
    %v6729 = vadd.f32 0.0, %v6728
    %v6730 = vpop.f32.mrb[0].mxu0
    %6731 = vmatprep.mubr.bf16.mxu0 0
    %6732 = vmatmul.mubr.bf16.gmra.mrb[0].mxu0 %v6638
    %v6733 = vpop.f32.mrb[0].mxu0
    %v6734 = vadd.f32 0.0, %v6733
    %v6735 = vpop.f32.mrb[0].mxu0
    %v6736 = vpop.f32.mrb[0].mxu0
    %v6737 = vadd.f32 0.0, %v6736
    %v6738 = vpop.f32.mrb[0].mxu0
    %6739 = vmatprep.mubr.bf16.mxu0 0
    %6740 = vmatmul.mubr.bf16.gmra.mrb[0].mxu0 %v6639
    %v6741 = vpop.f32.mrb[0].mxu0
    %v6742 = vadd.f32 0.0, %v6741
    %v6743 = vpop.f32.mrb[0].mxu0
    %v6744 = vpop.f32.mrb[0].mxu0
    %v6745 = vadd.f32 0.0, %v6744
    %v6746 = vpop.f32.mrb[0].mxu0
    %6747 = vmatprep.mubr.bf16.mxu0 0
    %6748 = vmatmul.mubr.bf16.gmra.mrb[0].mxu0 %v6640
    %v6749 = vpop.f32.mrb[0].mxu0
    %v6750 = vadd.f32 0.0, %v6749
    %v6751 = vpop.f32.mrb[0].mxu0
    %v6752 = vpop.f32.mrb[0].mxu0
    %v6753 = vadd.f32 0.0, %v6752
    %v6754 = vpop.f32.mrb[0].mxu0
    %6755 = vmatprep.mubr.bf16.mxu0 0
    %6756 = vmatmul.mubr.bf16.gmra.mrb[0].mxu0 %v6641
    %v6757 = vpop.f32.mrb[0].mxu0
    %v6758 = vadd.f32 0.0, %v6757
    %v6759 = vpop.f32.mrb[0].mxu0
    %v6760 = vpop.f32.mrb[0].mxu0
    %v6761 = vadd.f32 0.0, %v6760
    %v6762 = vpop.f32.mrb[0].mxu0
    %6763 = vmatprep.mubr.bf16.mxu0 0
    %6764 = vmatmul.mubr.bf16.gmra.mrb[0].mxu0 %v6642
    %v6765 = vpop.f32.mrb[0].mxu0
    %v6766 = vadd.f32 0.0, %v6765
    %v6767 = vpop.f32.mrb[0].mxu0
    %v6768 = vpop.f32.mrb[0].mxu0
    %v6769 = vadd.f32 0.0, %v6768
    %v6770 = vpop.f32.mrb[0].mxu0
    %6771 = vdwg.mxu0
    %v6772 = vpack.c.bf16 %v6713, %v6710
    %v6773 = vpack.c.bf16 %v6721, %v6718
    %v6774 = vpack.c.bf16 %v6729, %v6726
    %v6775 = vpack.c.bf16 %v6737, %v6734
    %v6776 = vpack.c.bf16 %v6745, %v6742
    %v6777 = vpack.c.bf16 %v6753, %v6750
    %v6778 = vpack.c.bf16 %v6761, %v6758
    %v6779 = vpack.c.bf16 %v6769, %v6766
    %6788 = vrot.lane.b32.xlu0 %v6772, 64
    %v6789 = vpop.permute.xlu0 %6788
    %6790 = vrot.lane.b32.xlu0 %v6773, 64
    %v6791 = vpop.permute.xlu0 %6790
    %6792 = vrot.lane.b32.xlu0 %v6774, 64
    %v6793 = vpop.permute.xlu0 %6792
    %6794 = vrot.lane.b32.xlu0 %v6775, 64
    %v6795 = vpop.permute.xlu0 %6794
    %6796 = vrot.lane.b32.xlu0 %v6776, 64
    %v6797 = vpop.permute.xlu0 %6796
    %6798 = vrot.lane.b32.xlu0 %v6777, 64
    %v6799 = vpop.permute.xlu0 %6798
    %6800 = vrot.lane.b32.xlu0 %v6778, 64
    %v6801 = vpop.permute.xlu0 %6800
    %6802 = vrot.lane.b32.xlu0 %v6779, 64
    %v6803 = vpop.permute.xlu0 %6802
    %6812 = vst.msk [vmem:[#allocation3 + $0x10] sm:$0xff] %vm4851, %v6789
    %6813 = vst.msk [vmem:[#allocation3 + $0x28] sm:$0xff] %vm4851, %v6791
    %6814 = vst.msk [vmem:[#allocation3 + $0x40] sm:$0xff] %vm4851, %v6793
    %6815 = vst.msk [vmem:[#allocation3 + $0x58] sm:$0xff] %vm4851, %v6795
    %6816 = vst.msk [vmem:[#allocation3 + $0x70] sm:$0xff] %vm4851, %v6797
    %6817 = vst.msk [vmem:[#allocation3 + $0x88] sm:$0xff] %vm4851, %v6799
    %6818 = vst.msk [vmem:[#allocation3 + $0xa0] sm:$0xff] %vm4851, %v6801
    %6819 = vst.msk [vmem:[#allocation3 + $0xb8] sm:$0xff] %vm4851, %v6803
    %v6820 = vld [vmem:[#allocation2 + $0x240] sm:$0xff]
    %v6821 = vld [vmem:[#allocation2 + $0x288] sm:$0xff]
    %v6822 = vld [vmem:[#allocation2 + $0x2d0] sm:$0xff]
    %v6823 = vld [vmem:[#allocation2 + $0x318] sm:$0xff]
    %v6824 = vld [vmem:[#allocation2 + $0x360] sm:$0xff]
    %v6825 = vld [vmem:[#allocation2 + $0x3a8] sm:$0xff]
    %v6826 = vld [vmem:[#allocation2 + $0x3f0] sm:$0xff]
    %v6827 = vld [vmem:[#allocation2 + $0x438] sm:$0xff]
    %v6828 = vld [vmem:[#allocation2 + $0x258] sm:$0xff]
    %v6829 = vld [vmem:[#allocation2 + $0x2a0] sm:$0xff]
    %v6830 = vld [vmem:[#allocation2 + $0x2e8] sm:$0xff]
    %v6831 = vld [vmem:[#allocation2 + $0x330] sm:$0xff]
    %v6832 = vld [vmem:[#allocation2 + $0x378] sm:$0xff]
    %v6833 = vld [vmem:[#allocation2 + $0x3c0] sm:$0xff]
    %v6834 = vld [vmem:[#allocation2 + $0x408] sm:$0xff]
    %v6835 = vld [vmem:[#allocation2 + $0x450] sm:$0xff]
    %v6836 = vld [vmem:[#allocation2 + $0x270] sm:$0xff]
    %v6837 = vld [vmem:[#allocation2 + $0x2b8] sm:$0xff]
    %v6838 = vld [vmem:[#allocation2 + $0x300] sm:$0xff]
    %v6839 = vld [vmem:[#allocation2 + $0x348] sm:$0xff]
    %v6840 = vld [vmem:[#allocation2 + $0x390] sm:$0xff]
    %v6841 = vld [vmem:[#allocation2 + $0x3d8] sm:$0xff]
    %v6842 = vld [vmem:[#allocation2 + $0x420] sm:$0xff]
    %v6843 = vld [vmem:[#allocation2 + $0x468] sm:$0xff]
    %v6845 = vsel %vm3902, %v6820, 0
    %v6848 = vsel %vm3902, %v6821, 0
    %v6851 = vsel %vm3902, %v6822, 0
    %v6854 = vsel %vm3902, %v6823, 0
    %v6857 = vsel %vm3902, %v6824, 0
    %v6860 = vsel %vm3902, %v6825, 0
    %v6863 = vsel %vm3902, %v6826, 0
    %v6866 = vsel %vm3902, %v6827, 0
    %v6869 = vsel %vm3902, %v6828, 0
    %v6872 = vsel %vm3902, %v6829, 0
    %v6875 = vsel %vm3902, %v6830, 0
    %v6878 = vsel %vm3902, %v6831, 0
    %v6881 = vsel %vm3902, %v6832, 0
    %v6884 = vsel %vm3902, %v6833, 0
    %v6887 = vsel %vm3902, %v6834, 0
    %v6890 = vsel %vm3902, %v6835, 0
    %6892 = vmatprep.subr.bf16.mxu0 0
    %6893 = vmatpush1.bf16.xpose.msra.mxu0 %v6869
    %6894 = vmatprep.subr.bf16.mxu0 0
    %6895 = vmatpush1.bf16.xpose.msra.mxu0 %v6872
    %6896 = vmatprep.subr.bf16.mxu0 0
    %6897 = vmatpush1.bf16.xpose.msra.mxu0 %v6875
    %6898 = vmatprep.subr.bf16.mxu0 0
    %6899 = vmatpush1.bf16.xpose.msra.mxu0 %v6878
    %6900 = vmatprep.subr.bf16.mxu0 0
    %6901 = vmatpush1.bf16.xpose.msra.mxu0 %v6881
    %6902 = vmatprep.subr.bf16.mxu0 0
    %6903 = vmatpush1.bf16.xpose.msra.mxu0 %v6884
    %6904 = vmatprep.subr.bf16.mxu0 0
    %6905 = vmatpush1.bf16.xpose.msra.mxu0 %v6887
    %6906 = vmatprep.subr.bf16.mxu0 0
    %6907 = vmatpush1.bf16.xpose.msra.mxu0 %v6890
    %6908 = vmatprep.subr.bf16.mxu0 0
    %6909 = vmatpush1.bf16.xpose.msra.mxu0 0
    %6910 = vmatprep.subr.bf16.mxu0 0
    %6911 = vmatpush1.bf16.xpose.msra.mxu0 0
    %6912 = vmatprep.subr.bf16.mxu0 0
    %6913 = vmatpush1.bf16.xpose.msra.mxu0 0
    %6914 = vmatprep.subr.bf16.mxu0 0
    %6915 = vmatpush1.bf16.xpose.msra.mxu0 0
    %6916 = vmatprep.subr.bf16.mxu0 0
    %6917 = vmatpush1.bf16.xpose.msra.mxu0 0
    %6918 = vmatprep.subr.bf16.mxu0 0
    %6919 = vmatpush1.bf16.xpose.msra.mxu0 0
    %6920 = vmatprep.subr.bf16.mxu0 0
    %6921 = vmatpush1.bf16.xpose.msra.mxu0 0
    %6922 = vmatprep.subr.bf16.mxu0 0
    %6923 = vmatpush1.bf16.xpose.msra.mxu0 0
    %6924 = vmatprep.mubr.bf16.mxu0 0
    %6925 = vmatmul.mubr.bf16.gmra.mrb[0].mxu0 %v6845
    %v6926 = vpop.f32.mrb[0].mxu0
    %v6927 = vadd.f32 0.0, %v6926
    %v6928 = vpop.f32.mrb[0].mxu0
    %v6929 = vpop.f32.mrb[0].mxu0
    %v6930 = vadd.f32 0.0, %v6929
    %v6931 = vpop.f32.mrb[0].mxu0
    %6932 = vmatprep.mubr.bf16.mxu0 0
    %6933 = vmatmul.mubr.bf16.gmra.mrb[0].mxu0 %v6848
    %v6934 = vpop.f32.mrb[0].mxu0
    %v6935 = vadd.f32 0.0, %v6934
    %v6936 = vpop.f32.mrb[0].mxu0
    %v6937 = vpop.f32.mrb[0].mxu0
    %v6938 = vadd.f32 0.0, %v6937
    %v6939 = vpop.f32.mrb[0].mxu0
    %6940 = vmatprep.mubr.bf16.mxu0 0
    %6941 = vmatmul.mubr.bf16.gmra.mrb[0].mxu0 %v6851
    %v6942 = vpop.f32.mrb[0].mxu0
    %v6943 = vadd.f32 0.0, %v6942
    %v6944 = vpop.f32.mrb[0].mxu0
    %v6945 = vpop.f32.mrb[0].mxu0
    %v6946 = vadd.f32 0.0, %v6945
    %v6947 = vpop.f32.mrb[0].mxu0
    %6948 = vmatprep.mubr.bf16.mxu0 0
    %6949 = vmatmul.mubr.bf16.gmra.mrb[0].mxu0 %v6854
    %v6950 = vpop.f32.mrb[0].mxu0
    %v6951 = vadd.f32 0.0, %v6950
    %v6952 = vpop.f32.mrb[0].mxu0
    %v6953 = vpop.f32.mrb[0].mxu0
    %v6954 = vadd.f32 0.0, %v6953
    %v6955 = vpop.f32.mrb[0].mxu0
    %6956 = vmatprep.mubr.bf16.mxu0 0
    %6957 = vmatmul.mubr.bf16.gmra.mrb[0].mxu0 %v6857
    %v6958 = vpop.f32.mrb[0].mxu0
    %v6959 = vadd.f32 0.0, %v6958
    %v6960 = vpop.f32.mrb[0].mxu0
    %v6961 = vpop.f32.mrb[0].mxu0
    %v6962 = vadd.f32 0.0, %v6961
    %v6963 = vpop.f32.mrb[0].mxu0
    %6964 = vmatprep.mubr.bf16.mxu0 0
    %6965 = vmatmul.mubr.bf16.gmra.mrb[0].mxu0 %v6860
    %v6966 = vpop.f32.mrb[0].mxu0
    %v6967 = vadd.f32 0.0, %v6966
    %v6968 = vpop.f32.mrb[0].mxu0
    %v6969 = vpop.f32.mrb[0].mxu0
    %v6970 = vadd.f32 0.0, %v6969
    %v6971 = vpop.f32.mrb[0].mxu0
    %6972 = vmatprep.mubr.bf16.mxu0 0
    %6973 = vmatmul.mubr.bf16.gmra.mrb[0].mxu0 %v6863
    %v6974 = vpop.f32.mrb[0].mxu0
    %v6975 = vadd.f32 0.0, %v6974
    %v6976 = vpop.f32.mrb[0].mxu0
    %v6977 = vpop.f32.mrb[0].mxu0
    %v6978 = vadd.f32 0.0, %v6977
    %v6979 = vpop.f32.mrb[0].mxu0
    %6980 = vmatprep.mubr.bf16.mxu0 0
    %6981 = vmatmul.mubr.bf16.gmra.mrb[0].mxu0 %v6866
    %v6982 = vpop.f32.mrb[0].mxu0
    %v6983 = vadd.f32 0.0, %v6982
    %v6984 = vpop.f32.mrb[0].mxu0
    %v6985 = vpop.f32.mrb[0].mxu0
    %v6986 = vadd.f32 0.0, %v6985
    %v6987 = vpop.f32.mrb[0].mxu0
    %6988 = vdwg.mxu0
    %6989 = vmax.xlane.f32.xlu0 %v6927
    %v6990 = vpop.xlane.xlu0 %6989
    %6991 = vmax.xlane.f32.xlu0 %v6930
    %v6992 = vpop.xlane.xlu0 %6991
    %6993 = vmax.xlane.f32.xlu0 %v6935
    %v6994 = vpop.xlane.xlu0 %6993
    %6995 = vmax.xlane.f32.xlu0 %v6938
    %v6996 = vpop.xlane.xlu0 %6995
    %6997 = vmax.xlane.f32.xlu0 %v6943
    %v6998 = vpop.xlane.xlu0 %6997
    %6999 = vmax.xlane.f32.xlu0 %v6946
    %v7000 = vpop.xlane.xlu0 %6999
    %7001 = vmax.xlane.f32.xlu0 %v6951
    %v7002 = vpop.xlane.xlu0 %7001
    %7003 = vmax.xlane.f32.xlu0 %v6954
    %v7004 = vpop.xlane.xlu0 %7003
    %7005 = vmax.xlane.f32.xlu0 %v6959
    %v7006 = vpop.xlane.xlu0 %7005
    %7007 = vmax.xlane.f32.xlu0 %v6962
    %v7008 = vpop.xlane.xlu0 %7007
    %7009 = vmax.xlane.f32.xlu0 %v6967
    %v7010 = vpop.xlane.xlu0 %7009
    %7011 = vmax.xlane.f32.xlu0 %v6970
    %v7012 = vpop.xlane.xlu0 %7011
    %7013 = vmax.xlane.f32.xlu0 %v6975
    %v7014 = vpop.xlane.xlu0 %7013
    %7015 = vmax.xlane.f32.xlu0 %v6978
    %v7016 = vpop.xlane.xlu0 %7015
    %7017 = vmax.xlane.f32.xlu0 %v6983
    %v7018 = vpop.xlane.xlu0 %7017
    %7019 = vmax.xlane.f32.xlu0 %v6986
    %v7020 = vpop.xlane.xlu0 %7019
    %v7021 = vsub.f32 %v6927, %v6990
    %v7022 = vsub.f32 %v6930, %v6992
    %v7023 = vsub.f32 %v6935, %v6994
    %v7024 = vsub.f32 %v6938, %v6996
    %v7025 = vsub.f32 %v6943, %v6998
    %v7026 = vsub.f32 %v6946, %v7000
    %v7027 = vsub.f32 %v6951, %v7002
    %v7028 = vsub.f32 %v6954, %v7004
    %v7029 = vsub.f32 %v6959, %v7006
    %v7030 = vsub.f32 %v6962, %v7008
    %v7031 = vsub.f32 %v6967, %v7010
    %v7032 = vsub.f32 %v6970, %v7012
    %v7033 = vsub.f32 %v6975, %v7014
    %v7034 = vsub.f32 %v6978, %v7016
    %v7035 = vsub.f32 %v6983, %v7018
    %v7036 = vsub.f32 %v6986, %v7020
    %v7037 = vmul.f32 %v7021, 1.442695
    %v7038 = vpow.pop %v7037
    %v7039 = vmul.f32 %v7022, 1.442695
    %v7040 = vpow.pop %v7039
    %v7041 = vmul.f32 %v7023, 1.442695
    %v7042 = vpow.pop %v7041
    %v7043 = vmul.f32 %v7024, 1.442695
    %v7044 = vpow.pop %v7043
    %v7045 = vmul.f32 %v7025, 1.442695
    %v7046 = vpow.pop %v7045
    %v7047 = vmul.f32 %v7026, 1.442695
    %v7048 = vpow.pop %v7047
    %v7049 = vmul.f32 %v7027, 1.442695
    %v7050 = vpow.pop %v7049
    %v7051 = vmul.f32 %v7028, 1.442695
    %v7052 = vpow.pop %v7051
    %v7053 = vmul.f32 %v7029, 1.442695
    %v7054 = vpow.pop %v7053
    %v7055 = vmul.f32 %v7030, 1.442695
    %v7056 = vpow.pop %v7055
    %v7057 = vmul.f32 %v7031, 1.442695
    %v7058 = vpow.pop %v7057
    %v7059 = vmul.f32 %v7032, 1.442695
    %v7060 = vpow.pop %v7059
    %v7061 = vmul.f32 %v7033, 1.442695
    %v7062 = vpow.pop %v7061
    %v7063 = vmul.f32 %v7034, 1.442695
    %v7064 = vpow.pop %v7063
    %v7065 = vmul.f32 %v7035, 1.442695
    %v7066 = vpow.pop %v7065
    %v7067 = vmul.f32 %v7036, 1.442695
    %v7068 = vpow.pop %v7067
    %7069 = vadd.xlane.f32.xlu0 %v7038
    %v7070 = vpop.xlane.xlu0 %7069
    %7071 = vadd.xlane.f32.xlu0 %v7040
    %v7072 = vpop.xlane.xlu0 %7071
    %7073 = vadd.xlane.f32.xlu0 %v7042
    %v7074 = vpop.xlane.xlu0 %7073
    %7075 = vadd.xlane.f32.xlu0 %v7044
    %v7076 = vpop.xlane.xlu0 %7075
    %7077 = vadd.xlane.f32.xlu0 %v7046
    %v7078 = vpop.xlane.xlu0 %7077
    %7079 = vadd.xlane.f32.xlu0 %v7048
    %v7080 = vpop.xlane.xlu0 %7079
    %7081 = vadd.xlane.f32.xlu0 %v7050
    %v7082 = vpop.xlane.xlu0 %7081
    %7083 = vadd.xlane.f32.xlu0 %v7052
    %v7084 = vpop.xlane.xlu0 %7083
    %7085 = vadd.xlane.f32.xlu0 %v7054
    %v7086 = vpop.xlane.xlu0 %7085
    %7087 = vadd.xlane.f32.xlu0 %v7056
    %v7088 = vpop.xlane.xlu0 %7087
    %7089 = vadd.xlane.f32.xlu0 %v7058
    %v7090 = vpop.xlane.xlu0 %7089
    %7091 = vadd.xlane.f32.xlu0 %v7060
    %v7092 = vpop.xlane.xlu0 %7091
    %7093 = vadd.xlane.f32.xlu0 %v7062
    %v7094 = vpop.xlane.xlu0 %7093
    %7095 = vadd.xlane.f32.xlu0 %v7064
    %v7096 = vpop.xlane.xlu0 %7095
    %7097 = vadd.xlane.f32.xlu0 %v7066
    %v7098 = vpop.xlane.xlu0 %7097
    %7099 = vadd.xlane.f32.xlu0 %v7068
    %v7100 = vpop.xlane.xlu0 %7099
    %v7101 = vrcp.pop %v7070
    %v7102 = vrcp.pop %v7072
    %v7103 = vrcp.pop %v7074
    %v7104 = vrcp.pop %v7076
    %v7105 = vrcp.pop %v7078
    %v7106 = vrcp.pop %v7080
    %v7107 = vrcp.pop %v7082
    %v7108 = vrcp.pop %v7084
    %v7109 = vrcp.pop %v7086
    %v7110 = vrcp.pop %v7088
    %v7111 = vrcp.pop %v7090
    %v7112 = vrcp.pop %v7092
    %v7113 = vrcp.pop %v7094
    %v7114 = vrcp.pop %v7096
    %v7115 = vrcp.pop %v7098
    %v7116 = vrcp.pop %v7100
    %v7117 = vmul.f32 %v7038, %v7101
    %v7118 = vmul.f32 %v7040, %v7102
    %v7119 = vmul.f32 %v7042, %v7103
    %v7120 = vmul.f32 %v7044, %v7104
    %v7121 = vmul.f32 %v7046, %v7105
    %v7122 = vmul.f32 %v7048, %v7106
    %v7123 = vmul.f32 %v7050, %v7107
    %v7124 = vmul.f32 %v7052, %v7108
    %v7125 = vmul.f32 %v7054, %v7109
    %v7126 = vmul.f32 %v7056, %v7110
    %v7127 = vmul.f32 %v7058, %v7111
    %v7128 = vmul.f32 %v7060, %v7112
    %v7129 = vmul.f32 %v7062, %v7113
    %v7130 = vmul.f32 %v7064, %v7114
    %v7131 = vmul.f32 %v7066, %v7115
    %v7132 = vmul.f32 %v7068, %v7116
    %v7133 = vpack.c.bf16 %v7118, %v7117
    %v7134 = vpack.c.bf16 %v7120, %v7119
    %v7135 = vpack.c.bf16 %v7122, %v7121
    %v7136 = vpack.c.bf16 %v7124, %v7123
    %v7137 = vpack.c.bf16 %v7126, %v7125
    %v7138 = vpack.c.bf16 %v7128, %v7127
    %v7139 = vpack.c.bf16 %v7130, %v7129
    %v7140 = vpack.c.bf16 %v7132, %v7131
    %7141 = vmatprep.subr.bf16.mxu0 0
    %7142 = vmatpush1.bf16.msra.mxu0 %v6836
    %7143 = vmatprep.subr.bf16.mxu0 0
    %7144 = vmatpush1.bf16.msra.mxu0 %v6837
    %7145 = vmatprep.subr.bf16.mxu0 0
    %7146 = vmatpush1.bf16.msra.mxu0 %v6838
    %7147 = vmatprep.subr.bf16.mxu0 0
    %7148 = vmatpush1.bf16.msra.mxu0 %v6839
    %7149 = vmatprep.subr.bf16.mxu0 0
    %7150 = vmatpush1.bf16.msra.mxu0 %v6840
    %7151 = vmatprep.subr.bf16.mxu0 0
    %7152 = vmatpush1.bf16.msra.mxu0 %v6841
    %7153 = vmatprep.subr.bf16.mxu0 0
    %7154 = vmatpush1.bf16.msra.mxu0 %v6842
    %7155 = vmatprep.subr.bf16.mxu0 0
    %7156 = vmatpush1.bf16.msra.mxu0 %v6843
    %7157 = vmatprep.subr.bf16.mxu0 0
    %7158 = vmatpush1.bf16.msra.mxu0 0
    %7159 = vmatprep.subr.bf16.mxu0 0
    %7160 = vmatpush1.bf16.msra.mxu0 0
    %7161 = vmatprep.subr.bf16.mxu0 0
    %7162 = vmatpush1.bf16.msra.mxu0 0
    %7163 = vmatprep.subr.bf16.mxu0 0
    %7164 = vmatpush1.bf16.msra.mxu0 0
    %7165 = vmatprep.subr.bf16.mxu0 0
    %7166 = vmatpush1.bf16.msra.mxu0 0
    %7167 = vmatprep.subr.bf16.mxu0 0
    %7168 = vmatpush1.bf16.msra.mxu0 0
    %7169 = vmatprep.subr.bf16.mxu0 0
    %7170 = vmatpush1.bf16.msra.mxu0 0
    %7171 = vmatprep.subr.bf16.mxu0 0
    %7172 = vmatpush1.bf16.msra.mxu0 0
    %7173 = vmatprep.mubr.bf16.mxu0 0
    %7174 = vmatmul.mubr.bf16.gmra.mrb[0].mxu0 %v7133
    %v7175 = vpop.f32.mrb[0].mxu0
    %v7176 = vadd.f32 0.0, %v7175
    %v7177 = vpop.f32.mrb[0].mxu0
    %v7178 = vpop.f32.mrb[0].mxu0
    %v7179 = vadd.f32 0.0, %v7178
    %v7180 = vpop.f32.mrb[0].mxu0
    %7181 = vmatprep.mubr.bf16.mxu0 0
    %7182 = vmatmul.mubr.bf16.gmra.mrb[0].mxu0 %v7134
    %v7183 = vpop.f32.mrb[0].mxu0
    %v7184 = vadd.f32 0.0, %v7183
    %v7185 = vpop.f32.mrb[0].mxu0
    %v7186 = vpop.f32.mrb[0].mxu0
    %v7187 = vadd.f32 0.0, %v7186
    %v7188 = vpop.f32.mrb[0].mxu0
    %7189 = vmatprep.mubr.bf16.mxu0 0
    %7190 = vmatmul.mubr.bf16.gmra.mrb[0].mxu0 %v7135
    %v7191 = vpop.f32.mrb[0].mxu0
    %v7192 = vadd.f32 0.0, %v7191
    %v7193 = vpop.f32.mrb[0].mxu0
    %v7194 = vpop.f32.mrb[0].mxu0
    %v7195 = vadd.f32 0.0, %v7194
    %v7196 = vpop.f32.mrb[0].mxu0
    %7197 = vmatprep.mubr.bf16.mxu0 0
    %7198 = vmatmul.mubr.bf16.gmra.mrb[0].mxu0 %v7136
    %v7199 = vpop.f32.mrb[0].mxu0
    %v7200 = vadd.f32 0.0, %v7199
    %v7201 = vpop.f32.mrb[0].mxu0
    %v7202 = vpop.f32.mrb[0].mxu0
    %v7203 = vadd.f32 0.0, %v7202
    %v7204 = vpop.f32.mrb[0].mxu0
    %7205 = vmatprep.mubr.bf16.mxu0 0
    %7206 = vmatmul.mubr.bf16.gmra.mrb[0].mxu0 %v7137
    %v7207 = vpop.f32.mrb[0].mxu0
    %v7208 = vadd.f32 0.0, %v7207
    %v7209 = vpop.f32.mrb[0].mxu0
    %v7210 = vpop.f32.mrb[0].mxu0
    %v7211 = vadd.f32 0.0, %v7210
    %v7212 = vpop.f32.mrb[0].mxu0
    %7213 = vmatprep.mubr.bf16.mxu0 0
    %7214 = vmatmul.mubr.bf16.gmra.mrb[0].mxu0 %v7138
    %v7215 = vpop.f32.mrb[0].mxu0
    %v7216 = vadd.f32 0.0, %v7215
    %v7217 = vpop.f32.mrb[0].mxu0
    %v7218 = vpop.f32.mrb[0].mxu0
    %v7219 = vadd.f32 0.0, %v7218
    %v7220 = vpop.f32.mrb[0].mxu0
    %7221 = vmatprep.mubr.bf16.mxu0 0
    %7222 = vmatmul.mubr.bf16.gmra.mrb[0].mxu0 %v7139
    %v7223 = vpop.f32.mrb[0].mxu0
    %v7224 = vadd.f32 0.0, %v7223
    %v7225 = vpop.f32.mrb[0].mxu0
    %v7226 = vpop.f32.mrb[0].mxu0
    %v7227 = vadd.f32 0.0, %v7226
    %v7228 = vpop.f32.mrb[0].mxu0
    %7229 = vmatprep.mubr.bf16.mxu0 0
    %7230 = vmatmul.mubr.bf16.gmra.mrb[0].mxu0 %v7140
    %v7231 = vpop.f32.mrb[0].mxu0
    %v7232 = vadd.f32 0.0, %v7231
    %v7233 = vpop.f32.mrb[0].mxu0
    %v7234 = vpop.f32.mrb[0].mxu0
    %v7235 = vadd.f32 0.0, %v7234
    %v7236 = vpop.f32.mrb[0].mxu0
    %7237 = vdwg.mxu0
    %v7238 = vpack.c.bf16 %v7179, %v7176
    %v7239 = vpack.c.bf16 %v7187, %v7184
    %v7240 = vpack.c.bf16 %v7195, %v7192
    %v7241 = vpack.c.bf16 %v7203, %v7200
    %v7242 = vpack.c.bf16 %v7211, %v7208
    %v7243 = vpack.c.bf16 %v7219, %v7216
    %v7244 = vpack.c.bf16 %v7227, %v7224
    %v7245 = vpack.c.bf16 %v7235, %v7232
    %7246 = vst.msk [vmem:[#allocation3 + $0xc0] sm:$0xff] %vm3902, %v7238
    %7247 = vst.msk [vmem:[#allocation3 + $0xd8] sm:$0xff] %vm3902, %v7239
    %7248 = vst.msk [vmem:[#allocation3 + $0xf0] sm:$0xff] %vm3902, %v7240
    %7249 = vst.msk [vmem:[#allocation3 + $0x108] sm:$0xff] %vm3902, %v7241
    %7250 = vst.msk [vmem:[#allocation3 + $0x120] sm:$0xff] %vm3902, %v7242
    %7251 = vst.msk [vmem:[#allocation3 + $0x138] sm:$0xff] %vm3902, %v7243
    %7252 = vst.msk [vmem:[#allocation3 + $0x150] sm:$0xff] %vm3902, %v7244
    %7253 = vst.msk [vmem:[#allocation3 + $0x168] sm:$0xff] %vm3902, %v7245
    %v7254 = vld [vmem:[#allocation2 + $0x240] sm:$0xff]
    %v7255 = vld [vmem:[#allocation2 + $0x288] sm:$0xff]
    %v7256 = vld [vmem:[#allocation2 + $0x2d0] sm:$0xff]
    %v7257 = vld [vmem:[#allocation2 + $0x318] sm:$0xff]
    %v7258 = vld [vmem:[#allocation2 + $0x360] sm:$0xff]
    %v7259 = vld [vmem:[#allocation2 + $0x3a8] sm:$0xff]
    %v7260 = vld [vmem:[#allocation2 + $0x3f0] sm:$0xff]
    %v7261 = vld [vmem:[#allocation2 + $0x438] sm:$0xff]
    %v7262 = vld [vmem:[#allocation2 + $0x258] sm:$0xff]
    %v7263 = vld [vmem:[#allocation2 + $0x2a0] sm:$0xff]
    %v7264 = vld [vmem:[#allocation2 + $0x2e8] sm:$0xff]
    %v7265 = vld [vmem:[#allocation2 + $0x330] sm:$0xff]
    %v7266 = vld [vmem:[#allocation2 + $0x378] sm:$0xff]
    %v7267 = vld [vmem:[#allocation2 + $0x3c0] sm:$0xff]
    %v7268 = vld [vmem:[#allocation2 + $0x408] sm:$0xff]
    %v7269 = vld [vmem:[#allocation2 + $0x450] sm:$0xff]
    %v7270 = vld [vmem:[#allocation2 + $0x270] sm:$0xff]
    %v7271 = vld [vmem:[#allocation2 + $0x2b8] sm:$0xff]
    %v7272 = vld [vmem:[#allocation2 + $0x300] sm:$0xff]
    %v7273 = vld [vmem:[#allocation2 + $0x348] sm:$0xff]
    %v7274 = vld [vmem:[#allocation2 + $0x390] sm:$0xff]
    %v7275 = vld [vmem:[#allocation2 + $0x3d8] sm:$0xff]
    %v7276 = vld [vmem:[#allocation2 + $0x420] sm:$0xff]
    %v7277 = vld [vmem:[#allocation2 + $0x468] sm:$0xff]
    %7286 = vrot.lane.b32.xlu0 %v7254, 64
    %v7287 = vpop.permute.xlu0 %7286
    %7288 = vrot.lane.b32.xlu0 %v7255, 64
    %v7289 = vpop.permute.xlu0 %7288
    %7290 = vrot.lane.b32.xlu0 %v7256, 64
    %v7291 = vpop.permute.xlu0 %7290
    %7292 = vrot.lane.b32.xlu0 %v7257, 64
    %v7293 = vpop.permute.xlu0 %7292
    %7294 = vrot.lane.b32.xlu0 %v7258, 64
    %v7295 = vpop.permute.xlu0 %7294
    %7296 = vrot.lane.b32.xlu0 %v7259, 64
    %v7297 = vpop.permute.xlu0 %7296
    %7298 = vrot.lane.b32.xlu0 %v7260, 64
    %v7299 = vpop.permute.xlu0 %7298
    %7300 = vrot.lane.b32.xlu0 %v7261, 64
    %v7301 = vpop.permute.xlu0 %7300
    %7310 = vrot.lane.b32.xlu0 %v7262, 64
    %v7311 = vpop.permute.xlu0 %7310
    %7312 = vrot.lane.b32.xlu0 %v7263, 64
    %v7313 = vpop.permute.xlu0 %7312
    %7314 = vrot.lane.b32.xlu0 %v7264, 64
    %v7315 = vpop.permute.xlu0 %7314
    %7316 = vrot.lane.b32.xlu0 %v7265, 64
    %v7317 = vpop.permute.xlu0 %7316
    %7318 = vrot.lane.b32.xlu0 %v7266, 64
    %v7319 = vpop.permute.xlu0 %7318
    %7320 = vrot.lane.b32.xlu0 %v7267, 64
    %v7321 = vpop.permute.xlu0 %7320
    %7322 = vrot.lane.b32.xlu0 %v7268, 64
    %v7323 = vpop.permute.xlu0 %7322
    %7324 = vrot.lane.b32.xlu0 %v7269, 64
    %v7325 = vpop.permute.xlu0 %7324
    %v7327 = vsel %vm3902, %v7287, 0
    %v7330 = vsel %vm3902, %v7289, 0
    %v7333 = vsel %vm3902, %v7291, 0
    %v7336 = vsel %vm3902, %v7293, 0
    %v7339 = vsel %vm3902, %v7295, 0
    %v7342 = vsel %vm3902, %v7297, 0
    %v7345 = vsel %vm3902, %v7299, 0
    %v7348 = vsel %vm3902, %v7301, 0
    %v7351 = vsel %vm3902, %v7311, 0
    %v7354 = vsel %vm3902, %v7313, 0
    %v7357 = vsel %vm3902, %v7315, 0
    %v7360 = vsel %vm3902, %v7317, 0
    %v7363 = vsel %vm3902, %v7319, 0
    %v7366 = vsel %vm3902, %v7321, 0
    %v7369 = vsel %vm3902, %v7323, 0
    %v7372 = vsel %vm3902, %v7325, 0
    %7374 = vmatprep.subr.bf16.mxu0 0
    %7375 = vmatpush1.bf16.xpose.msra.mxu0 %v7351
    %7376 = vmatprep.subr.bf16.mxu0 0
    %7377 = vmatpush1.bf16.xpose.msra.mxu0 %v7354
    %7378 = vmatprep.subr.bf16.mxu0 0
    %7379 = vmatpush1.bf16.xpose.msra.mxu0 %v7357
    %7380 = vmatprep.subr.bf16.mxu0 0
    %7381 = vmatpush1.bf16.xpose.msra.mxu0 %v7360
    %7382 = vmatprep.subr.bf16.mxu0 0
    %7383 = vmatpush1.bf16.xpose.msra.mxu0 %v7363
    %7384 = vmatprep.subr.bf16.mxu0 0
    %7385 = vmatpush1.bf16.xpose.msra.mxu0 %v7366
    %7386 = vmatprep.subr.bf16.mxu0 0
    %7387 = vmatpush1.bf16.xpose.msra.mxu0 %v7369
    %7388 = vmatprep.subr.bf16.mxu0 0
    %7389 = vmatpush1.bf16.xpose.msra.mxu0 %v7372
    %7390 = vmatprep.subr.bf16.mxu0 0
    %7391 = vmatpush1.bf16.xpose.msra.mxu0 0
    %7392 = vmatprep.subr.bf16.mxu0 0
    %7393 = vmatpush1.bf16.xpose.msra.mxu0 0
    %7394 = vmatprep.subr.bf16.mxu0 0
    %7395 = vmatpush1.bf16.xpose.msra.mxu0 0
    %7396 = vmatprep.subr.bf16.mxu0 0
    %7397 = vmatpush1.bf16.xpose.msra.mxu0 0
    %7398 = vmatprep.subr.bf16.mxu0 0
    %7399 = vmatpush1.bf16.xpose.msra.mxu0 0
    %7400 = vmatprep.subr.bf16.mxu0 0
    %7401 = vmatpush1.bf16.xpose.msra.mxu0 0
    %7402 = vmatprep.subr.bf16.mxu0 0
    %7403 = vmatpush1.bf16.xpose.msra.mxu0 0
    %7404 = vmatprep.subr.bf16.mxu0 0
    %7405 = vmatpush1.bf16.xpose.msra.mxu0 0
    %7406 = vmatprep.mubr.bf16.mxu0 0
    %7407 = vmatmul.mubr.bf16.gmra.mrb[0].mxu0 %v7327
    %v7408 = vpop.f32.mrb[0].mxu0
    %v7409 = vadd.f32 0.0, %v7408
    %v7410 = vpop.f32.mrb[0].mxu0
    %v7411 = vpop.f32.mrb[0].mxu0
    %v7412 = vadd.f32 0.0, %v7411
    %v7413 = vpop.f32.mrb[0].mxu0
    %7414 = vmatprep.mubr.bf16.mxu0 0
    %7415 = vmatmul.mubr.bf16.gmra.mrb[0].mxu0 %v7330
    %v7416 = vpop.f32.mrb[0].mxu0
    %v7417 = vadd.f32 0.0, %v7416
    %v7418 = vpop.f32.mrb[0].mxu0
    %v7419 = vpop.f32.mrb[0].mxu0
    %v7420 = vadd.f32 0.0, %v7419
    %v7421 = vpop.f32.mrb[0].mxu0
    %7422 = vmatprep.mubr.bf16.mxu0 0
    %7423 = vmatmul.mubr.bf16.gmra.mrb[0].mxu0 %v7333
    %v7424 = vpop.f32.mrb[0].mxu0
    %v7425 = vadd.f32 0.0, %v7424
    %v7426 = vpop.f32.mrb[0].mxu0
    %v7427 = vpop.f32.mrb[0].mxu0
    %v7428 = vadd.f32 0.0, %v7427
    %v7429 = vpop.f32.mrb[0].mxu0
    %7430 = vmatprep.mubr.bf16.mxu0 0
    %7431 = vmatmul.mubr.bf16.gmra.mrb[0].mxu0 %v7336
    %v7432 = vpop.f32.mrb[0].mxu0
    %v7433 = vadd.f32 0.0, %v7432
    %v7434 = vpop.f32.mrb[0].mxu0
    %v7435 = vpop.f32.mrb[0].mxu0
    %v7436 = vadd.f32 0.0, %v7435
    %v7437 = vpop.f32.mrb[0].mxu0
    %7438 = vmatprep.mubr.bf16.mxu0 0
    %7439 = vmatmul.mubr.bf16.gmra.mrb[0].mxu0 %v7339
    %v7440 = vpop.f32.mrb[0].mxu0
    %v7441 = vadd.f32 0.0, %v7440
    %v7442 = vpop.f32.mrb[0].mxu0
    %v7443 = vpop.f32.mrb[0].mxu0
    %v7444 = vadd.f32 0.0, %v7443
    %v7445 = vpop.f32.mrb[0].mxu0
    %7446 = vmatprep.mubr.bf16.mxu0 0
    %7447 = vmatmul.mubr.bf16.gmra.mrb[0].mxu0 %v7342
    %v7448 = vpop.f32.mrb[0].mxu0
    %v7449 = vadd.f32 0.0, %v7448
    %v7450 = vpop.f32.mrb[0].mxu0
    %v7451 = vpop.f32.mrb[0].mxu0
    %v7452 = vadd.f32 0.0, %v7451
    %v7453 = vpop.f32.mrb[0].mxu0
    %7454 = vmatprep.mubr.bf16.mxu0 0
    %7455 = vmatmul.mubr.bf16.gmra.mrb[0].mxu0 %v7345
    %v7456 = vpop.f32.mrb[0].mxu0
    %v7457 = vadd.f32 0.0, %v7456
    %v7458 = vpop.f32.mrb[0].mxu0
    %v7459 = vpop.f32.mrb[0].mxu0
    %v7460 = vadd.f32 0.0, %v7459
    %v7461 = vpop.f32.mrb[0].mxu0
    %7462 = vmatprep.mubr.bf16.mxu0 0
    %7463 = vmatmul.mubr.bf16.gmra.mrb[0].mxu0 %v7348
    %v7464 = vpop.f32.mrb[0].mxu0
    %v7465 = vadd.f32 0.0, %v7464
    %v7466 = vpop.f32.mrb[0].mxu0
    %v7467 = vpop.f32.mrb[0].mxu0
    %v7468 = vadd.f32 0.0, %v7467
    %v7469 = vpop.f32.mrb[0].mxu0
    %7470 = vdwg.mxu0
    %7471 = vmax.xlane.f32.xlu0 %v7409
    %v7472 = vpop.xlane.xlu0 %7471
    %7473 = vmax.xlane.f32.xlu0 %v7412
    %v7474 = vpop.xlane.xlu0 %7473
    %7475 = vmax.xlane.f32.xlu0 %v7417
    %v7476 = vpop.xlane.xlu0 %7475
    %7477 = vmax.xlane.f32.xlu0 %v7420
    %v7478 = vpop.xlane.xlu0 %7477
    %7479 = vmax.xlane.f32.xlu0 %v7425
    %v7480 = vpop.xlane.xlu0 %7479
    %7481 = vmax.xlane.f32.xlu0 %v7428
    %v7482 = vpop.xlane.xlu0 %7481
    %7483 = vmax.xlane.f32.xlu0 %v7433
    %v7484 = vpop.xlane.xlu0 %7483
    %7485 = vmax.xlane.f32.xlu0 %v7436
    %v7486 = vpop.xlane.xlu0 %7485
    %7487 = vmax.xlane.f32.xlu0 %v7441
    %v7488 = vpop.xlane.xlu0 %7487
    %7489 = vmax.xlane.f32.xlu0 %v7444
    %v7490 = vpop.xlane.xlu0 %7489
    %7491 = vmax.xlane.f32.xlu0 %v7449
    %v7492 = vpop.xlane.xlu0 %7491
    %7493 = vmax.xlane.f32.xlu0 %v7452
    %v7494 = vpop.xlane.xlu0 %7493
    %7495 = vmax.xlane.f32.xlu0 %v7457
    %v7496 = vpop.xlane.xlu0 %7495
    %7497 = vmax.xlane.f32.xlu0 %v7460
    %v7498 = vpop.xlane.xlu0 %7497
    %7499 = vmax.xlane.f32.xlu0 %v7465
    %v7500 = vpop.xlane.xlu0 %7499
    %7501 = vmax.xlane.f32.xlu0 %v7468
    %v7502 = vpop.xlane.xlu0 %7501
    %v7503 = vsub.f32 %v7409, %v7472
    %v7504 = vsub.f32 %v7412, %v7474
    %v7505 = vsub.f32 %v7417, %v7476
    %v7506 = vsub.f32 %v7420, %v7478
    %v7507 = vsub.f32 %v7425, %v7480
    %v7508 = vsub.f32 %v7428, %v7482
    %v7509 = vsub.f32 %v7433, %v7484
    %v7510 = vsub.f32 %v7436, %v7486
    %v7511 = vsub.f32 %v7441, %v7488
    %v7512 = vsub.f32 %v7444, %v7490
    %v7513 = vsub.f32 %v7449, %v7492
    %v7514 = vsub.f32 %v7452, %v7494
    %v7515 = vsub.f32 %v7457, %v7496
    %v7516 = vsub.f32 %v7460, %v7498
    %v7517 = vsub.f32 %v7465, %v7500
    %v7518 = vsub.f32 %v7468, %v7502
    %v7519 = vmul.f32 %v7503, 1.442695
    %v7520 = vpow.pop %v7519
    %v7521 = vmul.f32 %v7504, 1.442695
    %v7522 = vpow.pop %v7521
    %v7523 = vmul.f32 %v7505, 1.442695
    %v7524 = vpow.pop %v7523
    %v7525 = vmul.f32 %v7506, 1.442695
    %v7526 = vpow.pop %v7525
    %v7527 = vmul.f32 %v7507, 1.442695
    %v7528 = vpow.pop %v7527
    %v7529 = vmul.f32 %v7508, 1.442695
    %v7530 = vpow.pop %v7529
    %v7531 = vmul.f32 %v7509, 1.442695
    %v7532 = vpow.pop %v7531
    %v7533 = vmul.f32 %v7510, 1.442695
    %v7534 = vpow.pop %v7533
    %v7535 = vmul.f32 %v7511, 1.442695
    %v7536 = vpow.pop %v7535
    %v7537 = vmul.f32 %v7512, 1.442695
    %v7538 = vpow.pop %v7537
    %v7539 = vmul.f32 %v7513, 1.442695
    %v7540 = vpow.pop %v7539
    %v7541 = vmul.f32 %v7514, 1.442695
    %v7542 = vpow.pop %v7541
    %v7543 = vmul.f32 %v7515, 1.442695
    %v7544 = vpow.pop %v7543
    %v7545 = vmul.f32 %v7516, 1.442695
    %v7546 = vpow.pop %v7545
    %v7547 = vmul.f32 %v7517, 1.442695
    %v7548 = vpow.pop %v7547
    %v7549 = vmul.f32 %v7518, 1.442695
    %v7550 = vpow.pop %v7549
    %7551 = vadd.xlane.f32.xlu0 %v7520
    %v7552 = vpop.xlane.xlu0 %7551
    %7553 = vadd.xlane.f32.xlu0 %v7522
    %v7554 = vpop.xlane.xlu0 %7553
    %7555 = vadd.xlane.f32.xlu0 %v7524
    %v7556 = vpop.xlane.xlu0 %7555
    %7557 = vadd.xlane.f32.xlu0 %v7526
    %v7558 = vpop.xlane.xlu0 %7557
    %7559 = vadd.xlane.f32.xlu0 %v7528
    %v7560 = vpop.xlane.xlu0 %7559
    %7561 = vadd.xlane.f32.xlu0 %v7530
    %v7562 = vpop.xlane.xlu0 %7561
    %7563 = vadd.xlane.f32.xlu0 %v7532
    %v7564 = vpop.xlane.xlu0 %7563
    %7565 = vadd.xlane.f32.xlu0 %v7534
    %v7566 = vpop.xlane.xlu0 %7565
    %7567 = vadd.xlane.f32.xlu0 %v7536
    %v7568 = vpop.xlane.xlu0 %7567
    %7569 = vadd.xlane.f32.xlu0 %v7538
    %v7570 = vpop.xlane.xlu0 %7569
    %7571 = vadd.xlane.f32.xlu0 %v7540
    %v7572 = vpop.xlane.xlu0 %7571
    %7573 = vadd.xlane.f32.xlu0 %v7542
    %v7574 = vpop.xlane.xlu0 %7573
    %7575 = vadd.xlane.f32.xlu0 %v7544
    %v7576 = vpop.xlane.xlu0 %7575
    %7577 = vadd.xlane.f32.xlu0 %v7546
    %v7578 = vpop.xlane.xlu0 %7577
    %7579 = vadd.xlane.f32.xlu0 %v7548
    %v7580 = vpop.xlane.xlu0 %7579
    %7581 = vadd.xlane.f32.xlu0 %v7550
    %v7582 = vpop.xlane.xlu0 %7581
    %v7583 = vrcp.pop %v7552
    %v7584 = vrcp.pop %v7554
    %v7585 = vrcp.pop %v7556
    %v7586 = vrcp.pop %v7558
    %v7587 = vrcp.pop %v7560
    %v7588 = vrcp.pop %v7562
    %v7589 = vrcp.pop %v7564
    %v7590 = vrcp.pop %v7566
    %v7591 = vrcp.pop %v7568
    %v7592 = vrcp.pop %v7570
    %v7593 = vrcp.pop %v7572
    %v7594 = vrcp.pop %v7574
    %v7595 = vrcp.pop %v7576
    %v7596 = vrcp.pop %v7578
    %v7597 = vrcp.pop %v7580
    %v7598 = vrcp.pop %v7582
    %v7599 = vmul.f32 %v7520, %v7583
    %v7600 = vmul.f32 %v7522, %v7584
    %v7601 = vmul.f32 %v7524, %v7585
    %v7602 = vmul.f32 %v7526, %v7586
    %v7603 = vmul.f32 %v7528, %v7587
    %v7604 = vmul.f32 %v7530, %v7588
    %v7605 = vmul.f32 %v7532, %v7589
    %v7606 = vmul.f32 %v7534, %v7590
    %v7607 = vmul.f32 %v7536, %v7591
    %v7608 = vmul.f32 %v7538, %v7592
    %v7609 = vmul.f32 %v7540, %v7593
    %v7610 = vmul.f32 %v7542, %v7594
    %v7611 = vmul.f32 %v7544, %v7595
    %v7612 = vmul.f32 %v7546, %v7596
    %v7613 = vmul.f32 %v7548, %v7597
    %v7614 = vmul.f32 %v7550, %v7598
    %v7615 = vpack.c.bf16 %v7600, %v7599
    %v7616 = vpack.c.bf16 %v7602, %v7601
    %v7617 = vpack.c.bf16 %v7604, %v7603
    %v7618 = vpack.c.bf16 %v7606, %v7605
    %v7619 = vpack.c.bf16 %v7608, %v7607
    %v7620 = vpack.c.bf16 %v7610, %v7609
    %v7621 = vpack.c.bf16 %v7612, %v7611
    %v7622 = vpack.c.bf16 %v7614, %v7613
    %7631 = vrot.lane.b32.xlu0 %v7270, 64
    %v7632 = vpop.permute.xlu0 %7631
    %7633 = vrot.lane.b32.xlu0 %v7271, 64
    %v7634 = vpop.permute.xlu0 %7633
    %7635 = vrot.lane.b32.xlu0 %v7272, 64
    %v7636 = vpop.permute.xlu0 %7635
    %7637 = vrot.lane.b32.xlu0 %v7273, 64
    %v7638 = vpop.permute.xlu0 %7637
    %7639 = vrot.lane.b32.xlu0 %v7274, 64
    %v7640 = vpop.permute.xlu0 %7639
    %7641 = vrot.lane.b32.xlu0 %v7275, 64
    %v7642 = vpop.permute.xlu0 %7641
    %7643 = vrot.lane.b32.xlu0 %v7276, 64
    %v7644 = vpop.permute.xlu0 %7643
    %7645 = vrot.lane.b32.xlu0 %v7277, 64
    %v7646 = vpop.permute.xlu0 %7645
    %7655 = vmatprep.subr.bf16.mxu0 0
    %7656 = vmatpush1.bf16.msra.mxu0 %v7632
    %7657 = vmatprep.subr.bf16.mxu0 0
    %7658 = vmatpush1.bf16.msra.mxu0 %v7634
    %7659 = vmatprep.subr.bf16.mxu0 0
    %7660 = vmatpush1.bf16.msra.mxu0 %v7636
    %7661 = vmatprep.subr.bf16.mxu0 0
    %7662 = vmatpush1.bf16.msra.mxu0 %v7638
    %7663 = vmatprep.subr.bf16.mxu0 0
    %7664 = vmatpush1.bf16.msra.mxu0 %v7640
    %7665 = vmatprep.subr.bf16.mxu0 0
    %7666 = vmatpush1.bf16.msra.mxu0 %v7642
    %7667 = vmatprep.subr.bf16.mxu0 0
    %7668 = vmatpush1.bf16.msra.mxu0 %v7644
    %7669 = vmatprep.subr.bf16.mxu0 0
    %7670 = vmatpush1.bf16.msra.mxu0 %v7646
    %7671 = vmatprep.subr.bf16.mxu0 0
    %7672 = vmatpush1.bf16.msra.mxu0 0
    %7673 = vmatprep.subr.bf16.mxu0 0
    %7674 = vmatpush1.bf16.msra.mxu0 0
    %7675 = vmatprep.subr.bf16.mxu0 0
    %7676 = vmatpush1.bf16.msra.mxu0 0
    %7677 = vmatprep.subr.bf16.mxu0 0
    %7678 = vmatpush1.bf16.msra.mxu0 0
    %7679 = vmatprep.subr.bf16.mxu0 0
    %7680 = vmatpush1.bf16.msra.mxu0 0
    %7681 = vmatprep.subr.bf16.mxu0 0
    %7682 = vmatpush1.bf16.msra.mxu0 0
    %7683 = vmatprep.subr.bf16.mxu0 0
    %7684 = vmatpush1.bf16.msra.mxu0 0
    %7685 = vmatprep.subr.bf16.mxu0 0
    %7686 = vmatpush1.bf16.msra.mxu0 0
    %7687 = vmatprep.mubr.bf16.mxu0 0
    %7688 = vmatmul.mubr.bf16.gmra.mrb[0].mxu0 %v7615
    %v7689 = vpop.f32.mrb[0].mxu0
    %v7690 = vadd.f32 0.0, %v7689
    %v7691 = vpop.f32.mrb[0].mxu0
    %v7692 = vpop.f32.mrb[0].mxu0
    %v7693 = vadd.f32 0.0, %v7692
    %v7694 = vpop.f32.mrb[0].mxu0
    %7695 = vmatprep.mubr.bf16.mxu0 0
    %7696 = vmatmul.mubr.bf16.gmra.mrb[0].mxu0 %v7616
    %v7697 = vpop.f32.mrb[0].mxu0
    %v7698 = vadd.f32 0.0, %v7697
    %v7699 = vpop.f32.mrb[0].mxu0
    %v7700 = vpop.f32.mrb[0].mxu0
    %v7701 = vadd.f32 0.0, %v7700
    %v7702 = vpop.f32.mrb[0].mxu0
    %7703 = vmatprep.mubr.bf16.mxu0 0
    %7704 = vmatmul.mubr.bf16.gmra.mrb[0].mxu0 %v7617
    %v7705 = vpop.f32.mrb[0].mxu0
    %v7706 = vadd.f32 0.0, %v7705
    %v7707 = vpop.f32.mrb[0].mxu0
    %v7708 = vpop.f32.mrb[0].mxu0
    %v7709 = vadd.f32 0.0, %v7708
    %v7710 = vpop.f32.mrb[0].mxu0
    %7711 = vmatprep.mubr.bf16.mxu0 0
    %7712 = vmatmul.mubr.bf16.gmra.mrb[0].mxu0 %v7618
    %v7713 = vpop.f32.mrb[0].mxu0
    %v7714 = vadd.f32 0.0, %v7713
    %v7715 = vpop.f32.mrb[0].mxu0
    %v7716 = vpop.f32.mrb[0].mxu0
    %v7717 = vadd.f32 0.0, %v7716
    %v7718 = vpop.f32.mrb[0].mxu0
    %7719 = vmatprep.mubr.bf16.mxu0 0
    %7720 = vmatmul.mubr.bf16.gmra.mrb[0].mxu0 %v7619
    %v7721 = vpop.f32.mrb[0].mxu0
    %v7722 = vadd.f32 0.0, %v7721
    %v7723 = vpop.f32.mrb[0].mxu0
    %v7724 = vpop.f32.mrb[0].mxu0
    %v7725 = vadd.f32 0.0, %v7724
    %v7726 = vpop.f32.mrb[0].mxu0
    %7727 = vmatprep.mubr.bf16.mxu0 0
    %7728 = vmatmul.mubr.bf16.gmra.mrb[0].mxu0 %v7620
    %v7729 = vpop.f32.mrb[0].mxu0
    %v7730 = vadd.f32 0.0, %v7729
    %v7731 = vpop.f32.mrb[0].mxu0
    %v7732 = vpop.f32.mrb[0].mxu0
    %v7733 = vadd.f32 0.0, %v7732
    %v7734 = vpop.f32.mrb[0].mxu0
    %7735 = vmatprep.mubr.bf16.mxu0 0
    %7736 = vmatmul.mubr.bf16.gmra.mrb[0].mxu0 %v7621
    %v7737 = vpop.f32.mrb[0].mxu0
    %v7738 = vadd.f32 0.0, %v7737
    %v7739 = vpop.f32.mrb[0].mxu0
    %v7740 = vpop.f32.mrb[0].mxu0
    %v7741 = vadd.f32 0.0, %v7740
    %v7742 = vpop.f32.mrb[0].mxu0
    %7743 = vmatprep.mubr.bf16.mxu0 0
    %7744 = vmatmul.mubr.bf16.gmra.mrb[0].mxu0 %v7622
    %v7745 = vpop.f32.mrb[0].mxu0
    %v7746 = vadd.f32 0.0, %v7745
    %v7747 = vpop.f32.mrb[0].mxu0
    %v7748 = vpop.f32.mrb[0].mxu0
    %v7749 = vadd.f32 0.0, %v7748
    %v7750 = vpop.f32.mrb[0].mxu0
    %7751 = vdwg.mxu0
    %v7752 = vpack.c.bf16 %v7693, %v7690
    %v7753 = vpack.c.bf16 %v7701, %v7698
    %v7754 = vpack.c.bf16 %v7709, %v7706
    %v7755 = vpack.c.bf16 %v7717, %v7714
    %v7756 = vpack.c.bf16 %v7725, %v7722
    %v7757 = vpack.c.bf16 %v7733, %v7730
    %v7758 = vpack.c.bf16 %v7741, %v7738
    %v7759 = vpack.c.bf16 %v7749, %v7746
    %7768 = vrot.lane.b32.xlu0 %v7752, 64
    %v7769 = vpop.permute.xlu0 %7768
    %7770 = vrot.lane.b32.xlu0 %v7753, 64
    %v7771 = vpop.permute.xlu0 %7770
    %7772 = vrot.lane.b32.xlu0 %v7754, 64
    %v7773 = vpop.permute.xlu0 %7772
    %7774 = vrot.lane.b32.xlu0 %v7755, 64
    %v7775 = vpop.permute.xlu0 %7774
    %7776 = vrot.lane.b32.xlu0 %v7756, 64
    %v7777 = vpop.permute.xlu0 %7776
    %7778 = vrot.lane.b32.xlu0 %v7757, 64
    %v7779 = vpop.permute.xlu0 %7778
    %7780 = vrot.lane.b32.xlu0 %v7758, 64
    %v7781 = vpop.permute.xlu0 %7780
    %7782 = vrot.lane.b32.xlu0 %v7759, 64
    %v7783 = vpop.permute.xlu0 %7782
    %7792 = vst.msk [vmem:[#allocation3 + $0xc0] sm:$0xff] %vm4851, %v7769
    %7793 = vst.msk [vmem:[#allocation3 + $0xd8] sm:$0xff] %vm4851, %v7771
    %7794 = vst.msk [vmem:[#allocation3 + $0xf0] sm:$0xff] %vm4851, %v7773
    %7795 = vst.msk [vmem:[#allocation3 + $0x108] sm:$0xff] %vm4851, %v7775
    %7796 = vst.msk [vmem:[#allocation3 + $0x120] sm:$0xff] %vm4851, %v7777
    %7797 = vst.msk [vmem:[#allocation3 + $0x138] sm:$0xff] %vm4851, %v7779
    %7798 = vst.msk [vmem:[#allocation3 + $0x150] sm:$0xff] %vm4851, %v7781
    %7799 = vst.msk [vmem:[#allocation3 + $0x168] sm:$0xff] %vm4851, %v7783
    %v7800 = vld [vmem:[#allocation2 + $0x248] sm:$0xff]
    %v7801 = vld [vmem:[#allocation2 + $0x290] sm:$0xff]
    %v7802 = vld [vmem:[#allocation2 + $0x2d8] sm:$0xff]
    %v7803 = vld [vmem:[#allocation2 + $0x320] sm:$0xff]
    %v7804 = vld [vmem:[#allocation2 + $0x368] sm:$0xff]
    %v7805 = vld [vmem:[#allocation2 + $0x3b0] sm:$0xff]
    %v7806 = vld [vmem:[#allocation2 + $0x3f8] sm:$0xff]
    %v7807 = vld [vmem:[#allocation2 + $0x440] sm:$0xff]
    %v7808 = vld [vmem:[#allocation2 + $0x260] sm:$0xff]
    %v7809 = vld [vmem:[#allocation2 + $0x2a8] sm:$0xff]
    %v7810 = vld [vmem:[#allocation2 + $0x2f0] sm:$0xff]
    %v7811 = vld [vmem:[#allocation2 + $0x338] sm:$0xff]
    %v7812 = vld [vmem:[#allocation2 + $0x380] sm:$0xff]
    %v7813 = vld [vmem:[#allocation2 + $0x3c8] sm:$0xff]
    %v7814 = vld [vmem:[#allocation2 + $0x410] sm:$0xff]
    %v7815 = vld [vmem:[#allocation2 + $0x458] sm:$0xff]
    %v7816 = vld [vmem:[#allocation2 + $0x278] sm:$0xff]
    %v7817 = vld [vmem:[#allocation2 + $0x2c0] sm:$0xff]
    %v7818 = vld [vmem:[#allocation2 + $0x308] sm:$0xff]
    %v7819 = vld [vmem:[#allocation2 + $0x350] sm:$0xff]
    %v7820 = vld [vmem:[#allocation2 + $0x398] sm:$0xff]
    %v7821 = vld [vmem:[#allocation2 + $0x3e0] sm:$0xff]
    %v7822 = vld [vmem:[#allocation2 + $0x428] sm:$0xff]
    %v7823 = vld [vmem:[#allocation2 + $0x470] sm:$0xff]
    %v7825 = vsel %vm3902, %v7800, 0
    %v7828 = vsel %vm3902, %v7801, 0
    %v7831 = vsel %vm3902, %v7802, 0
    %v7834 = vsel %vm3902, %v7803, 0
    %v7837 = vsel %vm3902, %v7804, 0
    %v7840 = vsel %vm3902, %v7805, 0
    %v7843 = vsel %vm3902, %v7806, 0
    %v7846 = vsel %vm3902, %v7807, 0
    %v7849 = vsel %vm3902, %v7808, 0
    %v7852 = vsel %vm3902, %v7809, 0
    %v7855 = vsel %vm3902, %v7810, 0
    %v7858 = vsel %vm3902, %v7811, 0
    %v7861 = vsel %vm3902, %v7812, 0
    %v7864 = vsel %vm3902, %v7813, 0
    %v7867 = vsel %vm3902, %v7814, 0
    %v7870 = vsel %vm3902, %v7815, 0
    %7872 = vmatprep.subr.bf16.mxu0 0
    %7873 = vmatpush1.bf16.xpose.msra.mxu0 %v7849
    %7874 = vmatprep.subr.bf16.mxu0 0
    %7875 = vmatpush1.bf16.xpose.msra.mxu0 %v7852
    %7876 = vmatprep.subr.bf16.mxu0 0
    %7877 = vmatpush1.bf16.xpose.msra.mxu0 %v7855
    %7878 = vmatprep.subr.bf16.mxu0 0
    %7879 = vmatpush1.bf16.xpose.msra.mxu0 %v7858
    %7880 = vmatprep.subr.bf16.mxu0 0
    %7881 = vmatpush1.bf16.xpose.msra.mxu0 %v7861
    %7882 = vmatprep.subr.bf16.mxu0 0
    %7883 = vmatpush1.bf16.xpose.msra.mxu0 %v7864
    %7884 = vmatprep.subr.bf16.mxu0 0
    %7885 = vmatpush1.bf16.xpose.msra.mxu0 %v7867
    %7886 = vmatprep.subr.bf16.mxu0 0
    %7887 = vmatpush1.bf16.xpose.msra.mxu0 %v7870
    %7888 = vmatprep.subr.bf16.mxu0 0
    %7889 = vmatpush1.bf16.xpose.msra.mxu0 0
    %7890 = vmatprep.subr.bf16.mxu0 0
    %7891 = vmatpush1.bf16.xpose.msra.mxu0 0
    %7892 = vmatprep.subr.bf16.mxu0 0
    %7893 = vmatpush1.bf16.xpose.msra.mxu0 0
    %7894 = vmatprep.subr.bf16.mxu0 0
    %7895 = vmatpush1.bf16.xpose.msra.mxu0 0
    %7896 = vmatprep.subr.bf16.mxu0 0
    %7897 = vmatpush1.bf16.xpose.msra.mxu0 0
    %7898 = vmatprep.subr.bf16.mxu0 0
    %7899 = vmatpush1.bf16.xpose.msra.mxu0 0
    %7900 = vmatprep.subr.bf16.mxu0 0
    %7901 = vmatpush1.bf16.xpose.msra.mxu0 0
    %7902 = vmatprep.subr.bf16.mxu0 0
    %7903 = vmatpush1.bf16.xpose.msra.mxu0 0
    %7904 = vmatprep.mubr.bf16.mxu0 0
    %7905 = vmatmul.mubr.bf16.gmra.mrb[0].mxu0 %v7825
    %v7906 = vpop.f32.mrb[0].mxu0
    %v7907 = vadd.f32 0.0, %v7906
    %v7908 = vpop.f32.mrb[0].mxu0
    %v7909 = vpop.f32.mrb[0].mxu0
    %v7910 = vadd.f32 0.0, %v7909
    %v7911 = vpop.f32.mrb[0].mxu0
    %7912 = vmatprep.mubr.bf16.mxu0 0
    %7913 = vmatmul.mubr.bf16.gmra.mrb[0].mxu0 %v7828
    %v7914 = vpop.f32.mrb[0].mxu0
    %v7915 = vadd.f32 0.0, %v7914
    %v7916 = vpop.f32.mrb[0].mxu0
    %v7917 = vpop.f32.mrb[0].mxu0
    %v7918 = vadd.f32 0.0, %v7917
    %v7919 = vpop.f32.mrb[0].mxu0
    %7920 = vmatprep.mubr.bf16.mxu0 0
    %7921 = vmatmul.mubr.bf16.gmra.mrb[0].mxu0 %v7831
    %v7922 = vpop.f32.mrb[0].mxu0
    %v7923 = vadd.f32 0.0, %v7922
    %v7924 = vpop.f32.mrb[0].mxu0
    %v7925 = vpop.f32.mrb[0].mxu0
    %v7926 = vadd.f32 0.0, %v7925
    %v7927 = vpop.f32.mrb[0].mxu0
    %7928 = vmatprep.mubr.bf16.mxu0 0
    %7929 = vmatmul.mubr.bf16.gmra.mrb[0].mxu0 %v7834
    %v7930 = vpop.f32.mrb[0].mxu0
    %v7931 = vadd.f32 0.0, %v7930
    %v7932 = vpop.f32.mrb[0].mxu0
    %v7933 = vpop.f32.mrb[0].mxu0
    %v7934 = vadd.f32 0.0, %v7933
    %v7935 = vpop.f32.mrb[0].mxu0
    %7936 = vmatprep.mubr.bf16.mxu0 0
    %7937 = vmatmul.mubr.bf16.gmra.mrb[0].mxu0 %v7837
    %v7938 = vpop.f32.mrb[0].mxu0
    %v7939 = vadd.f32 0.0, %v7938
    %v7940 = vpop.f32.mrb[0].mxu0
    %v7941 = vpop.f32.mrb[0].mxu0
    %v7942 = vadd.f32 0.0, %v7941
    %v7943 = vpop.f32.mrb[0].mxu0
    %7944 = vmatprep.mubr.bf16.mxu0 0
    %7945 = vmatmul.mubr.bf16.gmra.mrb[0].mxu0 %v7840
    %v7946 = vpop.f32.mrb[0].mxu0
    %v7947 = vadd.f32 0.0, %v7946
    %v7948 = vpop.f32.mrb[0].mxu0
    %v7949 = vpop.f32.mrb[0].mxu0
    %v7950 = vadd.f32 0.0, %v7949
    %v7951 = vpop.f32.mrb[0].mxu0
    %7952 = vmatprep.mubr.bf16.mxu0 0
    %7953 = vmatmul.mubr.bf16.gmra.mrb[0].mxu0 %v7843
    %v7954 = vpop.f32.mrb[0].mxu0
    %v7955 = vadd.f32 0.0, %v7954
    %v7956 = vpop.f32.mrb[0].mxu0
    %v7957 = vpop.f32.mrb[0].mxu0
    %v7958 = vadd.f32 0.0, %v7957
    %v7959 = vpop.f32.mrb[0].mxu0
    %7960 = vmatprep.mubr.bf16.mxu0 0
    %7961 = vmatmul.mubr.bf16.gmra.mrb[0].mxu0 %v7846
    %v7962 = vpop.f32.mrb[0].mxu0
    %v7963 = vadd.f32 0.0, %v7962
    %v7964 = vpop.f32.mrb[0].mxu0
    %v7965 = vpop.f32.mrb[0].mxu0
    %v7966 = vadd.f32 0.0, %v7965
    %v7967 = vpop.f32.mrb[0].mxu0
    %7968 = vdwg.mxu0
    %7969 = vmax.xlane.f32.xlu0 %v7907
    %v7970 = vpop.xlane.xlu0 %7969
    %7971 = vmax.xlane.f32.xlu0 %v7910
    %v7972 = vpop.xlane.xlu0 %7971
    %7973 = vmax.xlane.f32.xlu0 %v7915
    %v7974 = vpop.xlane.xlu0 %7973
    %7975 = vmax.xlane.f32.xlu0 %v7918
    %v7976 = vpop.xlane.xlu0 %7975
    %7977 = vmax.xlane.f32.xlu0 %v7923
    %v7978 = vpop.xlane.xlu0 %7977
    %7979 = vmax.xlane.f32.xlu0 %v7926
    %v7980 = vpop.xlane.xlu0 %7979
    %7981 = vmax.xlane.f32.xlu0 %v7931
    %v7982 = vpop.xlane.xlu0 %7981
    %7983 = vmax.xlane.f32.xlu0 %v7934
    %v7984 = vpop.xlane.xlu0 %7983
    %7985 = vmax.xlane.f32.xlu0 %v7939
    %v7986 = vpop.xlane.xlu0 %7985
    %7987 = vmax.xlane.f32.xlu0 %v7942
    %v7988 = vpop.xlane.xlu0 %7987
    %7989 = vmax.xlane.f32.xlu0 %v7947
    %v7990 = vpop.xlane.xlu0 %7989
    %7991 = vmax.xlane.f32.xlu0 %v7950
    %v7992 = vpop.xlane.xlu0 %7991
    %7993 = vmax.xlane.f32.xlu0 %v7955
    %v7994 = vpop.xlane.xlu0 %7993
    %7995 = vmax.xlane.f32.xlu0 %v7958
    %v7996 = vpop.xlane.xlu0 %7995
    %7997 = vmax.xlane.f32.xlu0 %v7963
    %v7998 = vpop.xlane.xlu0 %7997
    %7999 = vmax.xlane.f32.xlu0 %v7966
    %v8000 = vpop.xlane.xlu0 %7999
    %v8001 = vsub.f32 %v7907, %v7970
    %v8002 = vsub.f32 %v7910, %v7972
    %v8003 = vsub.f32 %v7915, %v7974
    %v8004 = vsub.f32 %v7918, %v7976
    %v8005 = vsub.f32 %v7923, %v7978
    %v8006 = vsub.f32 %v7926, %v7980
    %v8007 = vsub.f32 %v7931, %v7982
    %v8008 = vsub.f32 %v7934, %v7984
    %v8009 = vsub.f32 %v7939, %v7986
    %v8010 = vsub.f32 %v7942, %v7988
    %v8011 = vsub.f32 %v7947, %v7990
    %v8012 = vsub.f32 %v7950, %v7992
    %v8013 = vsub.f32 %v7955, %v7994
    %v8014 = vsub.f32 %v7958, %v7996
    %v8015 = vsub.f32 %v7963, %v7998
    %v8016 = vsub.f32 %v7966, %v8000
    %v8017 = vmul.f32 %v8001, 1.442695
    %v8018 = vpow.pop %v8017
    %v8019 = vmul.f32 %v8002, 1.442695
    %v8020 = vpow.pop %v8019
    %v8021 = vmul.f32 %v8003, 1.442695
    %v8022 = vpow.pop %v8021
    %v8023 = vmul.f32 %v8004, 1.442695
    %v8024 = vpow.pop %v8023
    %v8025 = vmul.f32 %v8005, 1.442695
    %v8026 = vpow.pop %v8025
    %v8027 = vmul.f32 %v8006, 1.442695
    %v8028 = vpow.pop %v8027
    %v8029 = vmul.f32 %v8007, 1.442695
    %v8030 = vpow.pop %v8029
    %v8031 = vmul.f32 %v8008, 1.442695
    %v8032 = vpow.pop %v8031
    %v8033 = vmul.f32 %v8009, 1.442695
    %v8034 = vpow.pop %v8033
    %v8035 = vmul.f32 %v8010, 1.442695
    %v8036 = vpow.pop %v8035
    %v8037 = vmul.f32 %v8011, 1.442695
    %v8038 = vpow.pop %v8037
    %v8039 = vmul.f32 %v8012, 1.442695
    %v8040 = vpow.pop %v8039
    %v8041 = vmul.f32 %v8013, 1.442695
    %v8042 = vpow.pop %v8041
    %v8043 = vmul.f32 %v8014, 1.442695
    %v8044 = vpow.pop %v8043
    %v8045 = vmul.f32 %v8015, 1.442695
    %v8046 = vpow.pop %v8045
    %v8047 = vmul.f32 %v8016, 1.442695
    %v8048 = vpow.pop %v8047
    %8049 = vadd.xlane.f32.xlu0 %v8018
    %v8050 = vpop.xlane.xlu0 %8049
    %8051 = vadd.xlane.f32.xlu0 %v8020
    %v8052 = vpop.xlane.xlu0 %8051
    %8053 = vadd.xlane.f32.xlu0 %v8022
    %v8054 = vpop.xlane.xlu0 %8053
    %8055 = vadd.xlane.f32.xlu0 %v8024
    %v8056 = vpop.xlane.xlu0 %8055
    %8057 = vadd.xlane.f32.xlu0 %v8026
    %v8058 = vpop.xlane.xlu0 %8057
    %8059 = vadd.xlane.f32.xlu0 %v8028
    %v8060 = vpop.xlane.xlu0 %8059
    %8061 = vadd.xlane.f32.xlu0 %v8030
    %v8062 = vpop.xlane.xlu0 %8061
    %8063 = vadd.xlane.f32.xlu0 %v8032
    %v8064 = vpop.xlane.xlu0 %8063
    %8065 = vadd.xlane.f32.xlu0 %v8034
    %v8066 = vpop.xlane.xlu0 %8065
    %8067 = vadd.xlane.f32.xlu0 %v8036
    %v8068 = vpop.xlane.xlu0 %8067
    %8069 = vadd.xlane.f32.xlu0 %v8038
    %v8070 = vpop.xlane.xlu0 %8069
    %8071 = vadd.xlane.f32.xlu0 %v8040
    %v8072 = vpop.xlane.xlu0 %8071
    %8073 = vadd.xlane.f32.xlu0 %v8042
    %v8074 = vpop.xlane.xlu0 %8073
    %8075 = vadd.xlane.f32.xlu0 %v8044
    %v8076 = vpop.xlane.xlu0 %8075
    %8077 = vadd.xlane.f32.xlu0 %v8046
    %v8078 = vpop.xlane.xlu0 %8077
    %8079 = vadd.xlane.f32.xlu0 %v8048
    %v8080 = vpop.xlane.xlu0 %8079
    %v8081 = vrcp.pop %v8050
    %v8082 = vrcp.pop %v8052
    %v8083 = vrcp.pop %v8054
    %v8084 = vrcp.pop %v8056
    %v8085 = vrcp.pop %v8058
    %v8086 = vrcp.pop %v8060
    %v8087 = vrcp.pop %v8062
    %v8088 = vrcp.pop %v8064
    %v8089 = vrcp.pop %v8066
    %v8090 = vrcp.pop %v8068
    %v8091 = vrcp.pop %v8070
    %v8092 = vrcp.pop %v8072
    %v8093 = vrcp.pop %v8074
    %v8094 = vrcp.pop %v8076
    %v8095 = vrcp.pop %v8078
    %v8096 = vrcp.pop %v8080
    %v8097 = vmul.f32 %v8018, %v8081
    %v8098 = vmul.f32 %v8020, %v8082
    %v8099 = vmul.f32 %v8022, %v8083
    %v8100 = vmul.f32 %v8024, %v8084
    %v8101 = vmul.f32 %v8026, %v8085
    %v8102 = vmul.f32 %v8028, %v8086
    %v8103 = vmul.f32 %v8030, %v8087
    %v8104 = vmul.f32 %v8032, %v8088
    %v8105 = vmul.f32 %v8034, %v8089
    %v8106 = vmul.f32 %v8036, %v8090
    %v8107 = vmul.f32 %v8038, %v8091
    %v8108 = vmul.f32 %v8040, %v8092
    %v8109 = vmul.f32 %v8042, %v8093
    %v8110 = vmul.f32 %v8044, %v8094
    %v8111 = vmul.f32 %v8046, %v8095
    %v8112 = vmul.f32 %v8048, %v8096
    %v8113 = vpack.c.bf16 %v8098, %v8097
    %v8114 = vpack.c.bf16 %v8100, %v8099
    %v8115 = vpack.c.bf16 %v8102, %v8101
    %v8116 = vpack.c.bf16 %v8104, %v8103
    %v8117 = vpack.c.bf16 %v8106, %v8105
    %v8118 = vpack.c.bf16 %v8108, %v8107
    %v8119 = vpack.c.bf16 %v8110, %v8109
    %v8120 = vpack.c.bf16 %v8112, %v8111
    %8121 = vmatprep.subr.bf16.mxu0 0
    %8122 = vmatpush1.bf16.msra.mxu0 %v7816
    %8123 = vmatprep.subr.bf16.mxu0 0
    %8124 = vmatpush1.bf16.msra.mxu0 %v7817
    %8125 = vmatprep.subr.bf16.mxu0 0
    %8126 = vmatpush1.bf16.msra.mxu0 %v7818
    %8127 = vmatprep.subr.bf16.mxu0 0
    %8128 = vmatpush1.bf16.msra.mxu0 %v7819
    %8129 = vmatprep.subr.bf16.mxu0 0
    %8130 = vmatpush1.bf16.msra.mxu0 %v7820
    %8131 = vmatprep.subr.bf16.mxu0 0
    %8132 = vmatpush1.bf16.msra.mxu0 %v7821
    %8133 = vmatprep.subr.bf16.mxu0 0
    %8134 = vmatpush1.bf16.msra.mxu0 %v7822
    %8135 = vmatprep.subr.bf16.mxu0 0
    %8136 = vmatpush1.bf16.msra.mxu0 %v7823
    %8137 = vmatprep.subr.bf16.mxu0 0
    %8138 = vmatpush1.bf16.msra.mxu0 0
    %8139 = vmatprep.subr.bf16.mxu0 0
    %8140 = vmatpush1.bf16.msra.mxu0 0
    %8141 = vmatprep.subr.bf16.mxu0 0
    %8142 = vmatpush1.bf16.msra.mxu0 0
    %8143 = vmatprep.subr.bf16.mxu0 0
    %8144 = vmatpush1.bf16.msra.mxu0 0
    %8145 = vmatprep.subr.bf16.mxu0 0
    %8146 = vmatpush1.bf16.msra.mxu0 0
    %8147 = vmatprep.subr.bf16.mxu0 0
    %8148 = vmatpush1.bf16.msra.mxu0 0
    %8149 = vmatprep.subr.bf16.mxu0 0
    %8150 = vmatpush1.bf16.msra.mxu0 0
    %8151 = vmatprep.subr.bf16.mxu0 0
    %8152 = vmatpush1.bf16.msra.mxu0 0
    %8153 = vmatprep.mubr.bf16.mxu0 0
    %8154 = vmatmul.mubr.bf16.gmra.mrb[0].mxu0 %v8113
    %v8155 = vpop.f32.mrb[0].mxu0
    %v8156 = vadd.f32 0.0, %v8155
    %v8157 = vpop.f32.mrb[0].mxu0
    %v8158 = vpop.f32.mrb[0].mxu0
    %v8159 = vadd.f32 0.0, %v8158
    %v8160 = vpop.f32.mrb[0].mxu0
    %8161 = vmatprep.mubr.bf16.mxu0 0
    %8162 = vmatmul.mubr.bf16.gmra.mrb[0].mxu0 %v8114
    %v8163 = vpop.f32.mrb[0].mxu0
    %v8164 = vadd.f32 0.0, %v8163
    %v8165 = vpop.f32.mrb[0].mxu0
    %v8166 = vpop.f32.mrb[0].mxu0
    %v8167 = vadd.f32 0.0, %v8166
    %v8168 = vpop.f32.mrb[0].mxu0
    %8169 = vmatprep.mubr.bf16.mxu0 0
    %8170 = vmatmul.mubr.bf16.gmra.mrb[0].mxu0 %v8115
    %v8171 = vpop.f32.mrb[0].mxu0
    %v8172 = vadd.f32 0.0, %v8171
    %v8173 = vpop.f32.mrb[0].mxu0
    %v8174 = vpop.f32.mrb[0].mxu0
    %v8175 = vadd.f32 0.0, %v8174
    %v8176 = vpop.f32.mrb[0].mxu0
    %8177 = vmatprep.mubr.bf16.mxu0 0
    %8178 = vmatmul.mubr.bf16.gmra.mrb[0].mxu0 %v8116
    %v8179 = vpop.f32.mrb[0].mxu0
    %v8180 = vadd.f32 0.0, %v8179
    %v8181 = vpop.f32.mrb[0].mxu0
    %v8182 = vpop.f32.mrb[0].mxu0
    %v8183 = vadd.f32 0.0, %v8182
    %v8184 = vpop.f32.mrb[0].mxu0
    %8185 = vmatprep.mubr.bf16.mxu0 0
    %8186 = vmatmul.mubr.bf16.gmra.mrb[0].mxu0 %v8117
    %v8187 = vpop.f32.mrb[0].mxu0
    %v8188 = vadd.f32 0.0, %v8187
    %v8189 = vpop.f32.mrb[0].mxu0
    %v8190 = vpop.f32.mrb[0].mxu0
    %v8191 = vadd.f32 0.0, %v8190
    %v8192 = vpop.f32.mrb[0].mxu0
    %8193 = vmatprep.mubr.bf16.mxu0 0
    %8194 = vmatmul.mubr.bf16.gmra.mrb[0].mxu0 %v8118
    %v8195 = vpop.f32.mrb[0].mxu0
    %v8196 = vadd.f32 0.0, %v8195
    %v8197 = vpop.f32.mrb[0].mxu0
    %v8198 = vpop.f32.mrb[0].mxu0
    %v8199 = vadd.f32 0.0, %v8198
    %v8200 = vpop.f32.mrb[0].mxu0
    %8201 = vmatprep.mubr.bf16.mxu0 0
    %8202 = vmatmul.mubr.bf16.gmra.mrb[0].mxu0 %v8119
    %v8203 = vpop.f32.mrb[0].mxu0
    %v8204 = vadd.f32 0.0, %v8203
    %v8205 = vpop.f32.mrb[0].mxu0
    %v8206 = vpop.f32.mrb[0].mxu0
    %v8207 = vadd.f32 0.0, %v8206
    %v8208 = vpop.f32.mrb[0].mxu0
    %8209 = vmatprep.mubr.bf16.mxu0 0
    %8210 = vmatmul.mubr.bf16.gmra.mrb[0].mxu0 %v8120
    %v8211 = vpop.f32.mrb[0].mxu0
    %v8212 = vadd.f32 0.0, %v8211
    %v8213 = vpop.f32.mrb[0].mxu0
    %v8214 = vpop.f32.mrb[0].mxu0
    %v8215 = vadd.f32 0.0, %v8214
    %v8216 = vpop.f32.mrb[0].mxu0
    %8217 = vdwg.mxu0
    %v8218 = vpack.c.bf16 %v8159, %v8156
    %v8219 = vpack.c.bf16 %v8167, %v8164
    %v8220 = vpack.c.bf16 %v8175, %v8172
    %v8221 = vpack.c.bf16 %v8183, %v8180
    %v8222 = vpack.c.bf16 %v8191, %v8188
    %v8223 = vpack.c.bf16 %v8199, %v8196
    %v8224 = vpack.c.bf16 %v8207, %v8204
    %v8225 = vpack.c.bf16 %v8215, %v8212
    %8226 = vst.msk [vmem:[#allocation3 + $0xc8] sm:$0xff] %vm3902, %v8218
    %8227 = vst.msk [vmem:[#allocation3 + $0xe0] sm:$0xff] %vm3902, %v8219
    %8228 = vst.msk [vmem:[#allocation3 + $0xf8] sm:$0xff] %vm3902, %v8220
    %8229 = vst.msk [vmem:[#allocation3 + $0x110] sm:$0xff] %vm3902, %v8221
    %8230 = vst.msk [vmem:[#allocation3 + $0x128] sm:$0xff] %vm3902, %v8222
    %8231 = vst.msk [vmem:[#allocation3 + $0x140] sm:$0xff] %vm3902, %v8223
    %8232 = vst.msk [vmem:[#allocation3 + $0x158] sm:$0xff] %vm3902, %v8224
    %8233 = vst.msk [vmem:[#allocation3 + $0x170] sm:$0xff] %vm3902, %v8225
    %v8234 = vld [vmem:[#allocation2 + $0x248] sm:$0xff]
    %v8235 = vld [vmem:[#allocation2 + $0x290] sm:$0xff]
    %v8236 = vld [vmem:[#allocation2 + $0x2d8] sm:$0xff]
    %v8237 = vld [vmem:[#allocation2 + $0x320] sm:$0xff]
    %v8238 = vld [vmem:[#allocation2 + $0x368] sm:$0xff]
    %v8239 = vld [vmem:[#allocation2 + $0x3b0] sm:$0xff]
    %v8240 = vld [vmem:[#allocation2 + $0x3f8] sm:$0xff]
    %v8241 = vld [vmem:[#allocation2 + $0x440] sm:$0xff]
    %v8242 = vld [vmem:[#allocation2 + $0x260] sm:$0xff]
    %v8243 = vld [vmem:[#allocation2 + $0x2a8] sm:$0xff]
    %v8244 = vld [vmem:[#allocation2 + $0x2f0] sm:$0xff]
    %v8245 = vld [vmem:[#allocation2 + $0x338] sm:$0xff]
    %v8246 = vld [vmem:[#allocation2 + $0x380] sm:$0xff]
    %v8247 = vld [vmem:[#allocation2 + $0x3c8] sm:$0xff]
    %v8248 = vld [vmem:[#allocation2 + $0x410] sm:$0xff]
    %v8249 = vld [vmem:[#allocation2 + $0x458] sm:$0xff]
    %v8250 = vld [vmem:[#allocation2 + $0x278] sm:$0xff]
    %v8251 = vld [vmem:[#allocation2 + $0x2c0] sm:$0xff]
    %v8252 = vld [vmem:[#allocation2 + $0x308] sm:$0xff]
    %v8253 = vld [vmem:[#allocation2 + $0x350] sm:$0xff]
    %v8254 = vld [vmem:[#allocation2 + $0x398] sm:$0xff]
    %v8255 = vld [vmem:[#allocation2 + $0x3e0] sm:$0xff]
    %v8256 = vld [vmem:[#allocation2 + $0x428] sm:$0xff]
    %v8257 = vld [vmem:[#allocation2 + $0x470] sm:$0xff]
    %8266 = vrot.lane.b32.xlu0 %v8234, 64
    %v8267 = vpop.permute.xlu0 %8266
    %8268 = vrot.lane.b32.xlu0 %v8235, 64
    %v8269 = vpop.permute.xlu0 %8268
    %8270 = vrot.lane.b32.xlu0 %v8236, 64
    %v8271 = vpop.permute.xlu0 %8270
    %8272 = vrot.lane.b32.xlu0 %v8237, 64
    %v8273 = vpop.permute.xlu0 %8272
    %8274 = vrot.lane.b32.xlu0 %v8238, 64
    %v8275 = vpop.permute.xlu0 %8274
    %8276 = vrot.lane.b32.xlu0 %v8239, 64
    %v8277 = vpop.permute.xlu0 %8276
    %8278 = vrot.lane.b32.xlu0 %v8240, 64
    %v8279 = vpop.permute.xlu0 %8278
    %8280 = vrot.lane.b32.xlu0 %v8241, 64
    %v8281 = vpop.permute.xlu0 %8280
    %8290 = vrot.lane.b32.xlu0 %v8242, 64
    %v8291 = vpop.permute.xlu0 %8290
    %8292 = vrot.lane.b32.xlu0 %v8243, 64
    %v8293 = vpop.permute.xlu0 %8292
    %8294 = vrot.lane.b32.xlu0 %v8244, 64
    %v8295 = vpop.permute.xlu0 %8294
    %8296 = vrot.lane.b32.xlu0 %v8245, 64
    %v8297 = vpop.permute.xlu0 %8296
    %8298 = vrot.lane.b32.xlu0 %v8246, 64
    %v8299 = vpop.permute.xlu0 %8298
    %8300 = vrot.lane.b32.xlu0 %v8247, 64
    %v8301 = vpop.permute.xlu0 %8300
    %8302 = vrot.lane.b32.xlu0 %v8248, 64
    %v8303 = vpop.permute.xlu0 %8302
    %8304 = vrot.lane.b32.xlu0 %v8249, 64
    %v8305 = vpop.permute.xlu0 %8304
    %v8307 = vsel %vm3902, %v8267, 0
    %v8310 = vsel %vm3902, %v8269, 0
    %v8313 = vsel %vm3902, %v8271, 0
    %v8316 = vsel %vm3902, %v8273, 0
    %v8319 = vsel %vm3902, %v8275, 0
    %v8322 = vsel %vm3902, %v8277, 0
    %v8325 = vsel %vm3902, %v8279, 0
    %v8328 = vsel %vm3902, %v8281, 0
    %v8331 = vsel %vm3902, %v8291, 0
    %v8334 = vsel %vm3902, %v8293, 0
    %v8337 = vsel %vm3902, %v8295, 0
    %v8340 = vsel %vm3902, %v8297, 0
    %v8343 = vsel %vm3902, %v8299, 0
    %v8346 = vsel %vm3902, %v8301, 0
    %v8349 = vsel %vm3902, %v8303, 0
    %v8352 = vsel %vm3902, %v8305, 0
    %8354 = vmatprep.subr.bf16.mxu0 0
    %8355 = vmatpush1.bf16.xpose.msra.mxu0 %v8331
    %8356 = vmatprep.subr.bf16.mxu0 0
    %8357 = vmatpush1.bf16.xpose.msra.mxu0 %v8334
    %8358 = vmatprep.subr.bf16.mxu0 0
    %8359 = vmatpush1.bf16.xpose.msra.mxu0 %v8337
    %8360 = vmatprep.subr.bf16.mxu0 0
    %8361 = vmatpush1.bf16.xpose.msra.mxu0 %v8340
    %8362 = vmatprep.subr.bf16.mxu0 0
    %8363 = vmatpush1.bf16.xpose.msra.mxu0 %v8343
    %8364 = vmatprep.subr.bf16.mxu0 0
    %8365 = vmatpush1.bf16.xpose.msra.mxu0 %v8346
    %8366 = vmatprep.subr.bf16.mxu0 0
    %8367 = vmatpush1.bf16.xpose.msra.mxu0 %v8349
    %8368 = vmatprep.subr.bf16.mxu0 0
    %8369 = vmatpush1.bf16.xpose.msra.mxu0 %v8352
    %8370 = vmatprep.subr.bf16.mxu0 0
    %8371 = vmatpush1.bf16.xpose.msra.mxu0 0
    %8372 = vmatprep.subr.bf16.mxu0 0
    %8373 = vmatpush1.bf16.xpose.msra.mxu0 0
    %8374 = vmatprep.subr.bf16.mxu0 0
    %8375 = vmatpush1.bf16.xpose.msra.mxu0 0
    %8376 = vmatprep.subr.bf16.mxu0 0
    %8377 = vmatpush1.bf16.xpose.msra.mxu0 0
    %8378 = vmatprep.subr.bf16.mxu0 0
    %8379 = vmatpush1.bf16.xpose.msra.mxu0 0
    %8380 = vmatprep.subr.bf16.mxu0 0
    %8381 = vmatpush1.bf16.xpose.msra.mxu0 0
    %8382 = vmatprep.subr.bf16.mxu0 0
    %8383 = vmatpush1.bf16.xpose.msra.mxu0 0
    %8384 = vmatprep.subr.bf16.mxu0 0
    %8385 = vmatpush1.bf16.xpose.msra.mxu0 0
    %8386 = vmatprep.mubr.bf16.mxu0 0
    %8387 = vmatmul.mubr.bf16.gmra.mrb[0].mxu0 %v8307
    %v8388 = vpop.f32.mrb[0].mxu0
    %v8389 = vadd.f32 0.0, %v8388
    %v8390 = vpop.f32.mrb[0].mxu0
    %v8391 = vpop.f32.mrb[0].mxu0
    %v8392 = vadd.f32 0.0, %v8391
    %v8393 = vpop.f32.mrb[0].mxu0
    %8394 = vmatprep.mubr.bf16.mxu0 0
    %8395 = vmatmul.mubr.bf16.gmra.mrb[0].mxu0 %v8310
    %v8396 = vpop.f32.mrb[0].mxu0
    %v8397 = vadd.f32 0.0, %v8396
    %v8398 = vpop.f32.mrb[0].mxu0
    %v8399 = vpop.f32.mrb[0].mxu0
    %v8400 = vadd.f32 0.0, %v8399
    %v8401 = vpop.f32.mrb[0].mxu0
    %8402 = vmatprep.mubr.bf16.mxu0 0
    %8403 = vmatmul.mubr.bf16.gmra.mrb[0].mxu0 %v8313
    %v8404 = vpop.f32.mrb[0].mxu0
    %v8405 = vadd.f32 0.0, %v8404
    %v8406 = vpop.f32.mrb[0].mxu0
    %v8407 = vpop.f32.mrb[0].mxu0
    %v8408 = vadd.f32 0.0, %v8407
    %v8409 = vpop.f32.mrb[0].mxu0
    %8410 = vmatprep.mubr.bf16.mxu0 0
    %8411 = vmatmul.mubr.bf16.gmra.mrb[0].mxu0 %v8316
    %v8412 = vpop.f32.mrb[0].mxu0
    %v8413 = vadd.f32 0.0, %v8412
    %v8414 = vpop.f32.mrb[0].mxu0
    %v8415 = vpop.f32.mrb[0].mxu0
    %v8416 = vadd.f32 0.0, %v8415
    %v8417 = vpop.f32.mrb[0].mxu0
    %8418 = vmatprep.mubr.bf16.mxu0 0
    %8419 = vmatmul.mubr.bf16.gmra.mrb[0].mxu0 %v8319
    %v8420 = vpop.f32.mrb[0].mxu0
    %v8421 = vadd.f32 0.0, %v8420
    %v8422 = vpop.f32.mrb[0].mxu0
    %v8423 = vpop.f32.mrb[0].mxu0
    %v8424 = vadd.f32 0.0, %v8423
    %v8425 = vpop.f32.mrb[0].mxu0
    %8426 = vmatprep.mubr.bf16.mxu0 0
    %8427 = vmatmul.mubr.bf16.gmra.mrb[0].mxu0 %v8322
    %v8428 = vpop.f32.mrb[0].mxu0
    %v8429 = vadd.f32 0.0, %v8428
    %v8430 = vpop.f32.mrb[0].mxu0
    %v8431 = vpop.f32.mrb[0].mxu0
    %v8432 = vadd.f32 0.0, %v8431
    %v8433 = vpop.f32.mrb[0].mxu0
    %8434 = vmatprep.mubr.bf16.mxu0 0
    %8435 = vmatmul.mubr.bf16.gmra.mrb[0].mxu0 %v8325
    %v8436 = vpop.f32.mrb[0].mxu0
    %v8437 = vadd.f32 0.0, %v8436
    %v8438 = vpop.f32.mrb[0].mxu0
    %v8439 = vpop.f32.mrb[0].mxu0
    %v8440 = vadd.f32 0.0, %v8439
    %v8441 = vpop.f32.mrb[0].mxu0
    %8442 = vmatprep.mubr.bf16.mxu0 0
    %8443 = vmatmul.mubr.bf16.gmra.mrb[0].mxu0 %v8328
    %v8444 = vpop.f32.mrb[0].mxu0
    %v8445 = vadd.f32 0.0, %v8444
    %v8446 = vpop.f32.mrb[0].mxu0
    %v8447 = vpop.f32.mrb[0].mxu0
    %v8448 = vadd.f32 0.0, %v8447
    %v8449 = vpop.f32.mrb[0].mxu0
    %8450 = vdwg.mxu0
    %8451 = vmax.xlane.f32.xlu0 %v8389
    %v8452 = vpop.xlane.xlu0 %8451
    %8453 = vmax.xlane.f32.xlu0 %v8392
    %v8454 = vpop.xlane.xlu0 %8453
    %8455 = vmax.xlane.f32.xlu0 %v8397
    %v8456 = vpop.xlane.xlu0 %8455
    %8457 = vmax.xlane.f32.xlu0 %v8400
    %v8458 = vpop.xlane.xlu0 %8457
    %8459 = vmax.xlane.f32.xlu0 %v8405
    %v8460 = vpop.xlane.xlu0 %8459
    %8461 = vmax.xlane.f32.xlu0 %v8408
    %v8462 = vpop.xlane.xlu0 %8461
    %8463 = vmax.xlane.f32.xlu0 %v8413
    %v8464 = vpop.xlane.xlu0 %8463
    %8465 = vmax.xlane.f32.xlu0 %v8416
    %v8466 = vpop.xlane.xlu0 %8465
    %8467 = vmax.xlane.f32.xlu0 %v8421
    %v8468 = vpop.xlane.xlu0 %8467
    %8469 = vmax.xlane.f32.xlu0 %v8424
    %v8470 = vpop.xlane.xlu0 %8469
    %8471 = vmax.xlane.f32.xlu0 %v8429
    %v8472 = vpop.xlane.xlu0 %8471
    %8473 = vmax.xlane.f32.xlu0 %v8432
    %v8474 = vpop.xlane.xlu0 %8473
    %8475 = vmax.xlane.f32.xlu0 %v8437
    %v8476 = vpop.xlane.xlu0 %8475
    %8477 = vmax.xlane.f32.xlu0 %v8440
    %v8478 = vpop.xlane.xlu0 %8477
    %8479 = vmax.xlane.f32.xlu0 %v8445
    %v8480 = vpop.xlane.xlu0 %8479
    %8481 = vmax.xlane.f32.xlu0 %v8448
    %v8482 = vpop.xlane.xlu0 %8481
    %v8483 = vsub.f32 %v8389, %v8452
    %v8484 = vsub.f32 %v8392, %v8454
    %v8485 = vsub.f32 %v8397, %v8456
    %v8486 = vsub.f32 %v8400, %v8458
    %v8487 = vsub.f32 %v8405, %v8460
    %v8488 = vsub.f32 %v8408, %v8462
    %v8489 = vsub.f32 %v8413, %v8464
    %v8490 = vsub.f32 %v8416, %v8466
    %v8491 = vsub.f32 %v8421, %v8468
    %v8492 = vsub.f32 %v8424, %v8470
    %v8493 = vsub.f32 %v8429, %v8472
    %v8494 = vsub.f32 %v8432, %v8474
    %v8495 = vsub.f32 %v8437, %v8476
    %v8496 = vsub.f32 %v8440, %v8478
    %v8497 = vsub.f32 %v8445, %v8480
    %v8498 = vsub.f32 %v8448, %v8482
    %v8499 = vmul.f32 %v8483, 1.442695
    %v8500 = vpow.pop %v8499
    %v8501 = vmul.f32 %v8484, 1.442695
    %v8502 = vpow.pop %v8501
    %v8503 = vmul.f32 %v8485, 1.442695
    %v8504 = vpow.pop %v8503
    %v8505 = vmul.f32 %v8486, 1.442695
    %v8506 = vpow.pop %v8505
    %v8507 = vmul.f32 %v8487, 1.442695
    %v8508 = vpow.pop %v8507
    %v8509 = vmul.f32 %v8488, 1.442695
    %v8510 = vpow.pop %v8509
    %v8511 = vmul.f32 %v8489, 1.442695
    %v8512 = vpow.pop %v8511
    %v8513 = vmul.f32 %v8490, 1.442695
    %v8514 = vpow.pop %v8513
    %v8515 = vmul.f32 %v8491, 1.442695
    %v8516 = vpow.pop %v8515
    %v8517 = vmul.f32 %v8492, 1.442695
    %v8518 = vpow.pop %v8517
    %v8519 = vmul.f32 %v8493, 1.442695
    %v8520 = vpow.pop %v8519
    %v8521 = vmul.f32 %v8494, 1.442695
    %v8522 = vpow.pop %v8521
    %v8523 = vmul.f32 %v8495, 1.442695
    %v8524 = vpow.pop %v8523
    %v8525 = vmul.f32 %v8496, 1.442695
    %v8526 = vpow.pop %v8525
    %v8527 = vmul.f32 %v8497, 1.442695
    %v8528 = vpow.pop %v8527
    %v8529 = vmul.f32 %v8498, 1.442695
    %v8530 = vpow.pop %v8529
    %8531 = vadd.xlane.f32.xlu0 %v8500
    %v8532 = vpop.xlane.xlu0 %8531
    %8533 = vadd.xlane.f32.xlu0 %v8502
    %v8534 = vpop.xlane.xlu0 %8533
    %8535 = vadd.xlane.f32.xlu0 %v8504
    %v8536 = vpop.xlane.xlu0 %8535
    %8537 = vadd.xlane.f32.xlu0 %v8506
    %v8538 = vpop.xlane.xlu0 %8537
    %8539 = vadd.xlane.f32.xlu0 %v8508
    %v8540 = vpop.xlane.xlu0 %8539
    %8541 = vadd.xlane.f32.xlu0 %v8510
    %v8542 = vpop.xlane.xlu0 %8541
    %8543 = vadd.xlane.f32.xlu0 %v8512
    %v8544 = vpop.xlane.xlu0 %8543
    %8545 = vadd.xlane.f32.xlu0 %v8514
    %v8546 = vpop.xlane.xlu0 %8545
    %8547 = vadd.xlane.f32.xlu0 %v8516
    %v8548 = vpop.xlane.xlu0 %8547
    %8549 = vadd.xlane.f32.xlu0 %v8518
    %v8550 = vpop.xlane.xlu0 %8549
    %8551 = vadd.xlane.f32.xlu0 %v8520
    %v8552 = vpop.xlane.xlu0 %8551
    %8553 = vadd.xlane.f32.xlu0 %v8522
    %v8554 = vpop.xlane.xlu0 %8553
    %8555 = vadd.xlane.f32.xlu0 %v8524
    %v8556 = vpop.xlane.xlu0 %8555
    %8557 = vadd.xlane.f32.xlu0 %v8526
    %v8558 = vpop.xlane.xlu0 %8557
    %8559 = vadd.xlane.f32.xlu0 %v8528
    %v8560 = vpop.xlane.xlu0 %8559
    %8561 = vadd.xlane.f32.xlu0 %v8530
    %v8562 = vpop.xlane.xlu0 %8561
    %v8563 = vrcp.pop %v8532
    %v8564 = vrcp.pop %v8534
    %v8565 = vrcp.pop %v8536
    %v8566 = vrcp.pop %v8538
    %v8567 = vrcp.pop %v8540
    %v8568 = vrcp.pop %v8542
    %v8569 = vrcp.pop %v8544
    %v8570 = vrcp.pop %v8546
    %v8571 = vrcp.pop %v8548
    %v8572 = vrcp.pop %v8550
    %v8573 = vrcp.pop %v8552
    %v8574 = vrcp.pop %v8554
    %v8575 = vrcp.pop %v8556
    %v8576 = vrcp.pop %v8558
    %v8577 = vrcp.pop %v8560
    %v8578 = vrcp.pop %v8562
    %v8579 = vmul.f32 %v8500, %v8563
    %v8580 = vmul.f32 %v8502, %v8564
    %v8581 = vmul.f32 %v8504, %v8565
    %v8582 = vmul.f32 %v8506, %v8566
    %v8583 = vmul.f32 %v8508, %v8567
    %v8584 = vmul.f32 %v8510, %v8568
    %v8585 = vmul.f32 %v8512, %v8569
    %v8586 = vmul.f32 %v8514, %v8570
    %v8587 = vmul.f32 %v8516, %v8571
    %v8588 = vmul.f32 %v8518, %v8572
    %v8589 = vmul.f32 %v8520, %v8573
    %v8590 = vmul.f32 %v8522, %v8574
    %v8591 = vmul.f32 %v8524, %v8575
    %v8592 = vmul.f32 %v8526, %v8576
    %v8593 = vmul.f32 %v8528, %v8577
    %v8594 = vmul.f32 %v8530, %v8578
    %v8595 = vpack.c.bf16 %v8580, %v8579
    %v8596 = vpack.c.bf16 %v8582, %v8581
    %v8597 = vpack.c.bf16 %v8584, %v8583
    %v8598 = vpack.c.bf16 %v8586, %v8585
    %v8599 = vpack.c.bf16 %v8588, %v8587
    %v8600 = vpack.c.bf16 %v8590, %v8589
    %v8601 = vpack.c.bf16 %v8592, %v8591
    %v8602 = vpack.c.bf16 %v8594, %v8593
    %8611 = vrot.lane.b32.xlu0 %v8250, 64
    %v8612 = vpop.permute.xlu0 %8611
    %8613 = vrot.lane.b32.xlu0 %v8251, 64
    %v8614 = vpop.permute.xlu0 %8613
    %8615 = vrot.lane.b32.xlu0 %v8252, 64
    %v8616 = vpop.permute.xlu0 %8615
    %8617 = vrot.lane.b32.xlu0 %v8253, 64
    %v8618 = vpop.permute.xlu0 %8617
    %8619 = vrot.lane.b32.xlu0 %v8254, 64
    %v8620 = vpop.permute.xlu0 %8619
    %8621 = vrot.lane.b32.xlu0 %v8255, 64
    %v8622 = vpop.permute.xlu0 %8621
    %8623 = vrot.lane.b32.xlu0 %v8256, 64
    %v8624 = vpop.permute.xlu0 %8623
    %8625 = vrot.lane.b32.xlu0 %v8257, 64
    %v8626 = vpop.permute.xlu0 %8625
    %8635 = vmatprep.subr.bf16.mxu0 0
    %8636 = vmatpush1.bf16.msra.mxu0 %v8612
    %8637 = vmatprep.subr.bf16.mxu0 0
    %8638 = vmatpush1.bf16.msra.mxu0 %v8614
    %8639 = vmatprep.subr.bf16.mxu0 0
    %8640 = vmatpush1.bf16.msra.mxu0 %v8616
    %8641 = vmatprep.subr.bf16.mxu0 0
    %8642 = vmatpush1.bf16.msra.mxu0 %v8618
    %8643 = vmatprep.subr.bf16.mxu0 0
    %8644 = vmatpush1.bf16.msra.mxu0 %v8620
    %8645 = vmatprep.subr.bf16.mxu0 0
    %8646 = vmatpush1.bf16.msra.mxu0 %v8622
    %8647 = vmatprep.subr.bf16.mxu0 0
    %8648 = vmatpush1.bf16.msra.mxu0 %v8624
    %8649 = vmatprep.subr.bf16.mxu0 0
    %8650 = vmatpush1.bf16.msra.mxu0 %v8626
    %8651 = vmatprep.subr.bf16.mxu0 0
    %8652 = vmatpush1.bf16.msra.mxu0 0
    %8653 = vmatprep.subr.bf16.mxu0 0
    %8654 = vmatpush1.bf16.msra.mxu0 0
    %8655 = vmatprep.subr.bf16.mxu0 0
    %8656 = vmatpush1.bf16.msra.mxu0 0
    %8657 = vmatprep.subr.bf16.mxu0 0
    %8658 = vmatpush1.bf16.msra.mxu0 0
    %8659 = vmatprep.subr.bf16.mxu0 0
    %8660 = vmatpush1.bf16.msra.mxu0 0
    %8661 = vmatprep.subr.bf16.mxu0 0
    %8662 = vmatpush1.bf16.msra.mxu0 0
    %8663 = vmatprep.subr.bf16.mxu0 0
    %8664 = vmatpush1.bf16.msra.mxu0 0
    %8665 = vmatprep.subr.bf16.mxu0 0
    %8666 = vmatpush1.bf16.msra.mxu0 0
    %8667 = vmatprep.mubr.bf16.mxu0 0
    %8668 = vmatmul.mubr.bf16.gmra.mrb[0].mxu0 %v8595
    %v8669 = vpop.f32.mrb[0].mxu0
    %v8670 = vadd.f32 0.0, %v8669
    %v8671 = vpop.f32.mrb[0].mxu0
    %v8672 = vpop.f32.mrb[0].mxu0
    %v8673 = vadd.f32 0.0, %v8672
    %v8674 = vpop.f32.mrb[0].mxu0
    %8675 = vmatprep.mubr.bf16.mxu0 0
    %8676 = vmatmul.mubr.bf16.gmra.mrb[0].mxu0 %v8596
    %v8677 = vpop.f32.mrb[0].mxu0
    %v8678 = vadd.f32 0.0, %v8677
    %v8679 = vpop.f32.mrb[0].mxu0
    %v8680 = vpop.f32.mrb[0].mxu0
    %v8681 = vadd.f32 0.0, %v8680
    %v8682 = vpop.f32.mrb[0].mxu0
    %8683 = vmatprep.mubr.bf16.mxu0 0
    %8684 = vmatmul.mubr.bf16.gmra.mrb[0].mxu0 %v8597
    %v8685 = vpop.f32.mrb[0].mxu0
    %v8686 = vadd.f32 0.0, %v8685
    %v8687 = vpop.f32.mrb[0].mxu0
    %v8688 = vpop.f32.mrb[0].mxu0
    %v8689 = vadd.f32 0.0, %v8688
    %v8690 = vpop.f32.mrb[0].mxu0
    %8691 = vmatprep.mubr.bf16.mxu0 0
    %8692 = vmatmul.mubr.bf16.gmra.mrb[0].mxu0 %v8598
    %v8693 = vpop.f32.mrb[0].mxu0
    %v8694 = vadd.f32 0.0, %v8693
    %v8695 = vpop.f32.mrb[0].mxu0
    %v8696 = vpop.f32.mrb[0].mxu0
    %v8697 = vadd.f32 0.0, %v8696
    %v8698 = vpop.f32.mrb[0].mxu0
    %8699 = vmatprep.mubr.bf16.mxu0 0
    %8700 = vmatmul.mubr.bf16.gmra.mrb[0].mxu0 %v8599
    %v8701 = vpop.f32.mrb[0].mxu0
    %v8702 = vadd.f32 0.0, %v8701
    %v8703 = vpop.f32.mrb[0].mxu0
    %v8704 = vpop.f32.mrb[0].mxu0
    %v8705 = vadd.f32 0.0, %v8704
    %v8706 = vpop.f32.mrb[0].mxu0
    %8707 = vmatprep.mubr.bf16.mxu0 0
    %8708 = vmatmul.mubr.bf16.gmra.mrb[0].mxu0 %v8600
    %v8709 = vpop.f32.mrb[0].mxu0
    %v8710 = vadd.f32 0.0, %v8709
    %v8711 = vpop.f32.mrb[0].mxu0
    %v8712 = vpop.f32.mrb[0].mxu0
    %v8713 = vadd.f32 0.0, %v8712
    %v8714 = vpop.f32.mrb[0].mxu0
    %8715 = vmatprep.mubr.bf16.mxu0 0
    %8716 = vmatmul.mubr.bf16.gmra.mrb[0].mxu0 %v8601
    %v8717 = vpop.f32.mrb[0].mxu0
    %v8718 = vadd.f32 0.0, %v8717
    %v8719 = vpop.f32.mrb[0].mxu0
    %v8720 = vpop.f32.mrb[0].mxu0
    %v8721 = vadd.f32 0.0, %v8720
    %v8722 = vpop.f32.mrb[0].mxu0
    %8723 = vmatprep.mubr.bf16.mxu0 0
    %8724 = vmatmul.mubr.bf16.gmra.mrb[0].mxu0 %v8602
    %v8725 = vpop.f32.mrb[0].mxu0
    %v8726 = vadd.f32 0.0, %v8725
    %v8727 = vpop.f32.mrb[0].mxu0
    %v8728 = vpop.f32.mrb[0].mxu0
    %v8729 = vadd.f32 0.0, %v8728
    %v8730 = vpop.f32.mrb[0].mxu0
    %8731 = vdwg.mxu0
    %v8732 = vpack.c.bf16 %v8673, %v8670
    %v8733 = vpack.c.bf16 %v8681, %v8678
    %v8734 = vpack.c.bf16 %v8689, %v8686
    %v8735 = vpack.c.bf16 %v8697, %v8694
    %v8736 = vpack.c.bf16 %v8705, %v8702
    %v8737 = vpack.c.bf16 %v8713, %v8710
    %v8738 = vpack.c.bf16 %v8721, %v8718
    %v8739 = vpack.c.bf16 %v8729, %v8726
    %8748 = vrot.lane.b32.xlu0 %v8732, 64
    %v8749 = vpop.permute.xlu0 %8748
    %8750 = vrot.lane.b32.xlu0 %v8733, 64
    %v8751 = vpop.permute.xlu0 %8750
    %8752 = vrot.lane.b32.xlu0 %v8734, 64
    %v8753 = vpop.permute.xlu0 %8752
    %8754 = vrot.lane.b32.xlu0 %v8735, 64
    %v8755 = vpop.permute.xlu0 %8754
    %8756 = vrot.lane.b32.xlu0 %v8736, 64
    %v8757 = vpop.permute.xlu0 %8756
    %8758 = vrot.lane.b32.xlu0 %v8737, 64
    %v8759 = vpop.permute.xlu0 %8758
    %8760 = vrot.lane.b32.xlu0 %v8738, 64
    %v8761 = vpop.permute.xlu0 %8760
    %8762 = vrot.lane.b32.xlu0 %v8739, 64
    %v8763 = vpop.permute.xlu0 %8762
    %8772 = vst.msk [vmem:[#allocation3 + $0xc8] sm:$0xff] %vm4851, %v8749
    %8773 = vst.msk [vmem:[#allocation3 + $0xe0] sm:$0xff] %vm4851, %v8751
    %8774 = vst.msk [vmem:[#allocation3 + $0xf8] sm:$0xff] %vm4851, %v8753
    %8775 = vst.msk [vmem:[#allocation3 + $0x110] sm:$0xff] %vm4851, %v8755
    %8776 = vst.msk [vmem:[#allocation3 + $0x128] sm:$0xff] %vm4851, %v8757
    %8777 = vst.msk [vmem:[#allocation3 + $0x140] sm:$0xff] %vm4851, %v8759
    %8778 = vst.msk [vmem:[#allocation3 + $0x158] sm:$0xff] %vm4851, %v8761
    %8779 = vst.msk [vmem:[#allocation3 + $0x170] sm:$0xff] %vm4851, %v8763
    %v8780 = vld [vmem:[#allocation2 + $0x250] sm:$0xff]
    %v8781 = vld [vmem:[#allocation2 + $0x298] sm:$0xff]
    %v8782 = vld [vmem:[#allocation2 + $0x2e0] sm:$0xff]
    %v8783 = vld [vmem:[#allocation2 + $0x328] sm:$0xff]
    %v8784 = vld [vmem:[#allocation2 + $0x370] sm:$0xff]
    %v8785 = vld [vmem:[#allocation2 + $0x3b8] sm:$0xff]
    %v8786 = vld [vmem:[#allocation2 + $0x400] sm:$0xff]
    %v8787 = vld [vmem:[#allocation2 + $0x448] sm:$0xff]
    %v8788 = vld [vmem:[#allocation2 + $0x268] sm:$0xff]
    %v8789 = vld [vmem:[#allocation2 + $0x2b0] sm:$0xff]
    %v8790 = vld [vmem:[#allocation2 + $0x2f8] sm:$0xff]
    %v8791 = vld [vmem:[#allocation2 + $0x340] sm:$0xff]
    %v8792 = vld [vmem:[#allocation2 + $0x388] sm:$0xff]
    %v8793 = vld [vmem:[#allocation2 + $0x3d0] sm:$0xff]
    %v8794 = vld [vmem:[#allocation2 + $0x418] sm:$0xff]
    %v8795 = vld [vmem:[#allocation2 + $0x460] sm:$0xff]
    %v8796 = vld [vmem:[#allocation2 + $0x280] sm:$0xff]
    %v8797 = vld [vmem:[#allocation2 + $0x2c8] sm:$0xff]
    %v8798 = vld [vmem:[#allocation2 + $0x310] sm:$0xff]
    %v8799 = vld [vmem:[#allocation2 + $0x358] sm:$0xff]
    %v8800 = vld [vmem:[#allocation2 + $0x3a0] sm:$0xff]
    %v8801 = vld [vmem:[#allocation2 + $0x3e8] sm:$0xff]
    %v8802 = vld [vmem:[#allocation2 + $0x430] sm:$0xff]
    %v8803 = vld [vmem:[#allocation2 + $0x478] sm:$0xff]
    %v8805 = vsel %vm3902, %v8780, 0
    %v8808 = vsel %vm3902, %v8781, 0
    %v8811 = vsel %vm3902, %v8782, 0
    %v8814 = vsel %vm3902, %v8783, 0
    %v8817 = vsel %vm3902, %v8784, 0
    %v8820 = vsel %vm3902, %v8785, 0
    %v8823 = vsel %vm3902, %v8786, 0
    %v8826 = vsel %vm3902, %v8787, 0
    %v8829 = vsel %vm3902, %v8788, 0
    %v8832 = vsel %vm3902, %v8789, 0
    %v8835 = vsel %vm3902, %v8790, 0
    %v8838 = vsel %vm3902, %v8791, 0
    %v8841 = vsel %vm3902, %v8792, 0
    %v8844 = vsel %vm3902, %v8793, 0
    %v8847 = vsel %vm3902, %v8794, 0
    %v8850 = vsel %vm3902, %v8795, 0
    %8852 = vmatprep.subr.bf16.mxu0 0
    %8853 = vmatpush1.bf16.xpose.msra.mxu0 %v8829
    %8854 = vmatprep.subr.bf16.mxu0 0
    %8855 = vmatpush1.bf16.xpose.msra.mxu0 %v8832
    %8856 = vmatprep.subr.bf16.mxu0 0
    %8857 = vmatpush1.bf16.xpose.msra.mxu0 %v8835
    %8858 = vmatprep.subr.bf16.mxu0 0
    %8859 = vmatpush1.bf16.xpose.msra.mxu0 %v8838
    %8860 = vmatprep.subr.bf16.mxu0 0
    %8861 = vmatpush1.bf16.xpose.msra.mxu0 %v8841
    %8862 = vmatprep.subr.bf16.mxu0 0
    %8863 = vmatpush1.bf16.xpose.msra.mxu0 %v8844
    %8864 = vmatprep.subr.bf16.mxu0 0
    %8865 = vmatpush1.bf16.xpose.msra.mxu0 %v8847
    %8866 = vmatprep.subr.bf16.mxu0 0
    %8867 = vmatpush1.bf16.xpose.msra.mxu0 %v8850
    %8868 = vmatprep.subr.bf16.mxu0 0
    %8869 = vmatpush1.bf16.xpose.msra.mxu0 0
    %8870 = vmatprep.subr.bf16.mxu0 0
    %8871 = vmatpush1.bf16.xpose.msra.mxu0 0
    %8872 = vmatprep.subr.bf16.mxu0 0
    %8873 = vmatpush1.bf16.xpose.msra.mxu0 0
    %8874 = vmatprep.subr.bf16.mxu0 0
    %8875 = vmatpush1.bf16.xpose.msra.mxu0 0
    %8876 = vmatprep.subr.bf16.mxu0 0
    %8877 = vmatpush1.bf16.xpose.msra.mxu0 0
    %8878 = vmatprep.subr.bf16.mxu0 0
    %8879 = vmatpush1.bf16.xpose.msra.mxu0 0
    %8880 = vmatprep.subr.bf16.mxu0 0
    %8881 = vmatpush1.bf16.xpose.msra.mxu0 0
    %8882 = vmatprep.subr.bf16.mxu0 0
    %8883 = vmatpush1.bf16.xpose.msra.mxu0 0
    %8884 = vmatprep.mubr.bf16.mxu0 0
    %8885 = vmatmul.mubr.bf16.gmra.mrb[0].mxu0 %v8805
    %v8886 = vpop.f32.mrb[0].mxu0
    %v8887 = vadd.f32 0.0, %v8886
    %v8888 = vpop.f32.mrb[0].mxu0
    %v8889 = vpop.f32.mrb[0].mxu0
    %v8890 = vadd.f32 0.0, %v8889
    %v8891 = vpop.f32.mrb[0].mxu0
    %8892 = vmatprep.mubr.bf16.mxu0 0
    %8893 = vmatmul.mubr.bf16.gmra.mrb[0].mxu0 %v8808
    %v8894 = vpop.f32.mrb[0].mxu0
    %v8895 = vadd.f32 0.0, %v8894
    %v8896 = vpop.f32.mrb[0].mxu0
    %v8897 = vpop.f32.mrb[0].mxu0
    %v8898 = vadd.f32 0.0, %v8897
    %v8899 = vpop.f32.mrb[0].mxu0
    %8900 = vmatprep.mubr.bf16.mxu0 0
    %8901 = vmatmul.mubr.bf16.gmra.mrb[0].mxu0 %v8811
    %v8902 = vpop.f32.mrb[0].mxu0
    %v8903 = vadd.f32 0.0, %v8902
    %v8904 = vpop.f32.mrb[0].mxu0
    %v8905 = vpop.f32.mrb[0].mxu0
    %v8906 = vadd.f32 0.0, %v8905
    %v8907 = vpop.f32.mrb[0].mxu0
    %8908 = vmatprep.mubr.bf16.mxu0 0
    %8909 = vmatmul.mubr.bf16.gmra.mrb[0].mxu0 %v8814
    %v8910 = vpop.f32.mrb[0].mxu0
    %v8911 = vadd.f32 0.0, %v8910
    %v8912 = vpop.f32.mrb[0].mxu0
    %v8913 = vpop.f32.mrb[0].mxu0
    %v8914 = vadd.f32 0.0, %v8913
    %v8915 = vpop.f32.mrb[0].mxu0
    %8916 = vmatprep.mubr.bf16.mxu0 0
    %8917 = vmatmul.mubr.bf16.gmra.mrb[0].mxu0 %v8817
    %v8918 = vpop.f32.mrb[0].mxu0
    %v8919 = vadd.f32 0.0, %v8918
    %v8920 = vpop.f32.mrb[0].mxu0
    %v8921 = vpop.f32.mrb[0].mxu0
    %v8922 = vadd.f32 0.0, %v8921
    %v8923 = vpop.f32.mrb[0].mxu0
    %8924 = vmatprep.mubr.bf16.mxu0 0
    %8925 = vmatmul.mubr.bf16.gmra.mrb[0].mxu0 %v8820
    %v8926 = vpop.f32.mrb[0].mxu0
    %v8927 = vadd.f32 0.0, %v8926
    %v8928 = vpop.f32.mrb[0].mxu0
    %v8929 = vpop.f32.mrb[0].mxu0
    %v8930 = vadd.f32 0.0, %v8929
    %v8931 = vpop.f32.mrb[0].mxu0
    %8932 = vmatprep.mubr.bf16.mxu0 0
    %8933 = vmatmul.mubr.bf16.gmra.mrb[0].mxu0 %v8823
    %v8934 = vpop.f32.mrb[0].mxu0
    %v8935 = vadd.f32 0.0, %v8934
    %v8936 = vpop.f32.mrb[0].mxu0
    %v8937 = vpop.f32.mrb[0].mxu0
    %v8938 = vadd.f32 0.0, %v8937
    %v8939 = vpop.f32.mrb[0].mxu0
    %8940 = vmatprep.mubr.bf16.mxu0 0
    %8941 = vmatmul.mubr.bf16.gmra.mrb[0].mxu0 %v8826
    %v8942 = vpop.f32.mrb[0].mxu0
    %v8943 = vadd.f32 0.0, %v8942
    %v8944 = vpop.f32.mrb[0].mxu0
    %v8945 = vpop.f32.mrb[0].mxu0
    %v8946 = vadd.f32 0.0, %v8945
    %v8947 = vpop.f32.mrb[0].mxu0
    %8948 = vdwg.mxu0
    %8949 = vmax.xlane.f32.xlu0 %v8887
    %v8950 = vpop.xlane.xlu0 %8949
    %8951 = vmax.xlane.f32.xlu0 %v8890
    %v8952 = vpop.xlane.xlu0 %8951
    %8953 = vmax.xlane.f32.xlu0 %v8895
    %v8954 = vpop.xlane.xlu0 %8953
    %8955 = vmax.xlane.f32.xlu0 %v8898
    %v8956 = vpop.xlane.xlu0 %8955
    %8957 = vmax.xlane.f32.xlu0 %v8903
    %v8958 = vpop.xlane.xlu0 %8957
    %8959 = vmax.xlane.f32.xlu0 %v8906
    %v8960 = vpop.xlane.xlu0 %8959
    %8961 = vmax.xlane.f32.xlu0 %v8911
    %v8962 = vpop.xlane.xlu0 %8961
    %8963 = vmax.xlane.f32.xlu0 %v8914
    %v8964 = vpop.xlane.xlu0 %8963
    %8965 = vmax.xlane.f32.xlu0 %v8919
    %v8966 = vpop.xlane.xlu0 %8965
    %8967 = vmax.xlane.f32.xlu0 %v8922
    %v8968 = vpop.xlane.xlu0 %8967
    %8969 = vmax.xlane.f32.xlu0 %v8927
    %v8970 = vpop.xlane.xlu0 %8969
    %8971 = vmax.xlane.f32.xlu0 %v8930
    %v8972 = vpop.xlane.xlu0 %8971
    %8973 = vmax.xlane.f32.xlu0 %v8935
    %v8974 = vpop.xlane.xlu0 %8973
    %8975 = vmax.xlane.f32.xlu0 %v8938
    %v8976 = vpop.xlane.xlu0 %8975
    %8977 = vmax.xlane.f32.xlu0 %v8943
    %v8978 = vpop.xlane.xlu0 %8977
    %8979 = vmax.xlane.f32.xlu0 %v8946
    %v8980 = vpop.xlane.xlu0 %8979
    %v8981 = vsub.f32 %v8887, %v8950
    %v8982 = vsub.f32 %v8890, %v8952
    %v8983 = vsub.f32 %v8895, %v8954
    %v8984 = vsub.f32 %v8898, %v8956
    %v8985 = vsub.f32 %v8903, %v8958
    %v8986 = vsub.f32 %v8906, %v8960
    %v8987 = vsub.f32 %v8911, %v8962
    %v8988 = vsub.f32 %v8914, %v8964
    %v8989 = vsub.f32 %v8919, %v8966
    %v8990 = vsub.f32 %v8922, %v8968
    %v8991 = vsub.f32 %v8927, %v8970
    %v8992 = vsub.f32 %v8930, %v8972
    %v8993 = vsub.f32 %v8935, %v8974
    %v8994 = vsub.f32 %v8938, %v8976
    %v8995 = vsub.f32 %v8943, %v8978
    %v8996 = vsub.f32 %v8946, %v8980
    %v8997 = vmul.f32 %v8981, 1.442695
    %v8998 = vpow.pop %v8997
    %v8999 = vmul.f32 %v8982, 1.442695
    %v9000 = vpow.pop %v8999
    %v9001 = vmul.f32 %v8983, 1.442695
    %v9002 = vpow.pop %v9001
    %v9003 = vmul.f32 %v8984, 1.442695
    %v9004 = vpow.pop %v9003
    %v9005 = vmul.f32 %v8985, 1.442695
    %v9006 = vpow.pop %v9005
    %v9007 = vmul.f32 %v8986, 1.442695
    %v9008 = vpow.pop %v9007
    %v9009 = vmul.f32 %v8987, 1.442695
    %v9010 = vpow.pop %v9009
    %v9011 = vmul.f32 %v8988, 1.442695
    %v9012 = vpow.pop %v9011
    %v9013 = vmul.f32 %v8989, 1.442695
    %v9014 = vpow.pop %v9013
    %v9015 = vmul.f32 %v8990, 1.442695
    %v9016 = vpow.pop %v9015
    %v9017 = vmul.f32 %v8991, 1.442695
    %v9018 = vpow.pop %v9017
    %v9019 = vmul.f32 %v8992, 1.442695
    %v9020 = vpow.pop %v9019
    %v9021 = vmul.f32 %v8993, 1.442695
    %v9022 = vpow.pop %v9021
    %v9023 = vmul.f32 %v8994, 1.442695
    %v9024 = vpow.pop %v9023
    %v9025 = vmul.f32 %v8995, 1.442695
    %v9026 = vpow.pop %v9025
    %v9027 = vmul.f32 %v8996, 1.442695
    %v9028 = vpow.pop %v9027
    %9029 = vadd.xlane.f32.xlu0 %v8998
    %v9030 = vpop.xlane.xlu0 %9029
    %9031 = vadd.xlane.f32.xlu0 %v9000
    %v9032 = vpop.xlane.xlu0 %9031
    %9033 = vadd.xlane.f32.xlu0 %v9002
    %v9034 = vpop.xlane.xlu0 %9033
    %9035 = vadd.xlane.f32.xlu0 %v9004
    %v9036 = vpop.xlane.xlu0 %9035
    %9037 = vadd.xlane.f32.xlu0 %v9006
    %v9038 = vpop.xlane.xlu0 %9037
    %9039 = vadd.xlane.f32.xlu0 %v9008
    %v9040 = vpop.xlane.xlu0 %9039
    %9041 = vadd.xlane.f32.xlu0 %v9010
    %v9042 = vpop.xlane.xlu0 %9041
    %9043 = vadd.xlane.f32.xlu0 %v9012
    %v9044 = vpop.xlane.xlu0 %9043
    %9045 = vadd.xlane.f32.xlu0 %v9014
    %v9046 = vpop.xlane.xlu0 %9045
    %9047 = vadd.xlane.f32.xlu0 %v9016
    %v9048 = vpop.xlane.xlu0 %9047
    %9049 = vadd.xlane.f32.xlu0 %v9018
    %v9050 = vpop.xlane.xlu0 %9049
    %9051 = vadd.xlane.f32.xlu0 %v9020
    %v9052 = vpop.xlane.xlu0 %9051
    %9053 = vadd.xlane.f32.xlu0 %v9022
    %v9054 = vpop.xlane.xlu0 %9053
    %9055 = vadd.xlane.f32.xlu0 %v9024
    %v9056 = vpop.xlane.xlu0 %9055
    %9057 = vadd.xlane.f32.xlu0 %v9026
    %v9058 = vpop.xlane.xlu0 %9057
    %9059 = vadd.xlane.f32.xlu0 %v9028
    %v9060 = vpop.xlane.xlu0 %9059
    %v9061 = vrcp.pop %v9030
    %v9062 = vrcp.pop %v9032
    %v9063 = vrcp.pop %v9034
    %v9064 = vrcp.pop %v9036
    %v9065 = vrcp.pop %v9038
    %v9066 = vrcp.pop %v9040
    %v9067 = vrcp.pop %v9042
    %v9068 = vrcp.pop %v9044
    %v9069 = vrcp.pop %v9046
    %v9070 = vrcp.pop %v9048
    %v9071 = vrcp.pop %v9050
    %v9072 = vrcp.pop %v9052
    %v9073 = vrcp.pop %v9054
    %v9074 = vrcp.pop %v9056
    %v9075 = vrcp.pop %v9058
    %v9076 = vrcp.pop %v9060
    %v9077 = vmul.f32 %v8998, %v9061
    %v9078 = vmul.f32 %v9000, %v9062
    %v9079 = vmul.f32 %v9002, %v9063
    %v9080 = vmul.f32 %v9004, %v9064
    %v9081 = vmul.f32 %v9006, %v9065
    %v9082 = vmul.f32 %v9008, %v9066
    %v9083 = vmul.f32 %v9010, %v9067
    %v9084 = vmul.f32 %v9012, %v9068
    %v9085 = vmul.f32 %v9014, %v9069
    %v9086 = vmul.f32 %v9016, %v9070
    %v9087 = vmul.f32 %v9018, %v9071
    %v9088 = vmul.f32 %v9020, %v9072
    %v9089 = vmul.f32 %v9022, %v9073
    %v9090 = vmul.f32 %v9024, %v9074
    %v9091 = vmul.f32 %v9026, %v9075
    %v9092 = vmul.f32 %v9028, %v9076
    %v9093 = vpack.c.bf16 %v9078, %v9077
    %v9094 = vpack.c.bf16 %v9080, %v9079
    %v9095 = vpack.c.bf16 %v9082, %v9081
    %v9096 = vpack.c.bf16 %v9084, %v9083
    %v9097 = vpack.c.bf16 %v9086, %v9085
    %v9098 = vpack.c.bf16 %v9088, %v9087
    %v9099 = vpack.c.bf16 %v9090, %v9089
    %v9100 = vpack.c.bf16 %v9092, %v9091
    %9101 = vmatprep.subr.bf16.mxu0 0
    %9102 = vmatpush1.bf16.msra.mxu0 %v8796
    %9103 = vmatprep.subr.bf16.mxu0 0
    %9104 = vmatpush1.bf16.msra.mxu0 %v8797
    %9105 = vmatprep.subr.bf16.mxu0 0
    %9106 = vmatpush1.bf16.msra.mxu0 %v8798
    %9107 = vmatprep.subr.bf16.mxu0 0
    %9108 = vmatpush1.bf16.msra.mxu0 %v8799
    %9109 = vmatprep.subr.bf16.mxu0 0
    %9110 = vmatpush1.bf16.msra.mxu0 %v8800
    %9111 = vmatprep.subr.bf16.mxu0 0
    %9112 = vmatpush1.bf16.msra.mxu0 %v8801
    %9113 = vmatprep.subr.bf16.mxu0 0
    %9114 = vmatpush1.bf16.msra.mxu0 %v8802
    %9115 = vmatprep.subr.bf16.mxu0 0
    %9116 = vmatpush1.bf16.msra.mxu0 %v8803
    %9117 = vmatprep.subr.bf16.mxu0 0
    %9118 = vmatpush1.bf16.msra.mxu0 0
    %9119 = vmatprep.subr.bf16.mxu0 0
    %9120 = vmatpush1.bf16.msra.mxu0 0
    %9121 = vmatprep.subr.bf16.mxu0 0
    %9122 = vmatpush1.bf16.msra.mxu0 0
    %9123 = vmatprep.subr.bf16.mxu0 0
    %9124 = vmatpush1.bf16.msra.mxu0 0
    %9125 = vmatprep.subr.bf16.mxu0 0
    %9126 = vmatpush1.bf16.msra.mxu0 0
    %9127 = vmatprep.subr.bf16.mxu0 0
    %9128 = vmatpush1.bf16.msra.mxu0 0
    %9129 = vmatprep.subr.bf16.mxu0 0
    %9130 = vmatpush1.bf16.msra.mxu0 0
    %9131 = vmatprep.subr.bf16.mxu0 0
    %9132 = vmatpush1.bf16.msra.mxu0 0
    %9133 = vmatprep.mubr.bf16.mxu0 0
    %9134 = vmatmul.mubr.bf16.gmra.mrb[0].mxu0 %v9093
    %v9135 = vpop.f32.mrb[0].mxu0
    %v9136 = vadd.f32 0.0, %v9135
    %v9137 = vpop.f32.mrb[0].mxu0
    %v9138 = vpop.f32.mrb[0].mxu0
    %v9139 = vadd.f32 0.0, %v9138
    %v9140 = vpop.f32.mrb[0].mxu0
    %9141 = vmatprep.mubr.bf16.mxu0 0
    %9142 = vmatmul.mubr.bf16.gmra.mrb[0].mxu0 %v9094
    %v9143 = vpop.f32.mrb[0].mxu0
    %v9144 = vadd.f32 0.0, %v9143
    %v9145 = vpop.f32.mrb[0].mxu0
    %v9146 = vpop.f32.mrb[0].mxu0
    %v9147 = vadd.f32 0.0, %v9146
    %v9148 = vpop.f32.mrb[0].mxu0
    %9149 = vmatprep.mubr.bf16.mxu0 0
    %9150 = vmatmul.mubr.bf16.gmra.mrb[0].mxu0 %v9095
    %v9151 = vpop.f32.mrb[0].mxu0
    %v9152 = vadd.f32 0.0, %v9151
    %v9153 = vpop.f32.mrb[0].mxu0
    %v9154 = vpop.f32.mrb[0].mxu0
    %v9155 = vadd.f32 0.0, %v9154
    %v9156 = vpop.f32.mrb[0].mxu0
    %9157 = vmatprep.mubr.bf16.mxu0 0
    %9158 = vmatmul.mubr.bf16.gmra.mrb[0].mxu0 %v9096
    %v9159 = vpop.f32.mrb[0].mxu0
    %v9160 = vadd.f32 0.0, %v9159
    %v9161 = vpop.f32.mrb[0].mxu0
    %v9162 = vpop.f32.mrb[0].mxu0
    %v9163 = vadd.f32 0.0, %v9162
    %v9164 = vpop.f32.mrb[0].mxu0
    %9165 = vmatprep.mubr.bf16.mxu0 0
    %9166 = vmatmul.mubr.bf16.gmra.mrb[0].mxu0 %v9097
    %v9167 = vpop.f32.mrb[0].mxu0
    %v9168 = vadd.f32 0.0, %v9167
    %v9169 = vpop.f32.mrb[0].mxu0
    %v9170 = vpop.f32.mrb[0].mxu0
    %v9171 = vadd.f32 0.0, %v9170
    %v9172 = vpop.f32.mrb[0].mxu0
    %9173 = vmatprep.mubr.bf16.mxu0 0
    %9174 = vmatmul.mubr.bf16.gmra.mrb[0].mxu0 %v9098
    %v9175 = vpop.f32.mrb[0].mxu0
    %v9176 = vadd.f32 0.0, %v9175
    %v9177 = vpop.f32.mrb[0].mxu0
    %v9178 = vpop.f32.mrb[0].mxu0
    %v9179 = vadd.f32 0.0, %v9178
    %v9180 = vpop.f32.mrb[0].mxu0
    %9181 = vmatprep.mubr.bf16.mxu0 0
    %9182 = vmatmul.mubr.bf16.gmra.mrb[0].mxu0 %v9099
    %v9183 = vpop.f32.mrb[0].mxu0
    %v9184 = vadd.f32 0.0, %v9183
    %v9185 = vpop.f32.mrb[0].mxu0
    %v9186 = vpop.f32.mrb[0].mxu0
    %v9187 = vadd.f32 0.0, %v9186
    %v9188 = vpop.f32.mrb[0].mxu0
    %9189 = vmatprep.mubr.bf16.mxu0 0
    %9190 = vmatmul.mubr.bf16.gmra.mrb[0].mxu0 %v9100
    %v9191 = vpop.f32.mrb[0].mxu0
    %v9192 = vadd.f32 0.0, %v9191
    %v9193 = vpop.f32.mrb[0].mxu0
    %v9194 = vpop.f32.mrb[0].mxu0
    %v9195 = vadd.f32 0.0, %v9194
    %v9196 = vpop.f32.mrb[0].mxu0
    %9197 = vdwg.mxu0
    %v9198 = vpack.c.bf16 %v9139, %v9136
    %v9199 = vpack.c.bf16 %v9147, %v9144
    %v9200 = vpack.c.bf16 %v9155, %v9152
    %v9201 = vpack.c.bf16 %v9163, %v9160
    %v9202 = vpack.c.bf16 %v9171, %v9168
    %v9203 = vpack.c.bf16 %v9179, %v9176
    %v9204 = vpack.c.bf16 %v9187, %v9184
    %v9205 = vpack.c.bf16 %v9195, %v9192
    %9206 = vst.msk [vmem:[#allocation3 + $0xd0] sm:$0xff] %vm3902, %v9198
    %9207 = vst.msk [vmem:[#allocation3 + $0xe8] sm:$0xff] %vm3902, %v9199
    %9208 = vst.msk [vmem:[#allocation3 + $0x100] sm:$0xff] %vm3902, %v9200
    %9209 = vst.msk [vmem:[#allocation3 + $0x118] sm:$0xff] %vm3902, %v9201
    %9210 = vst.msk [vmem:[#allocation3 + $0x130] sm:$0xff] %vm3902, %v9202
    %9211 = vst.msk [vmem:[#allocation3 + $0x148] sm:$0xff] %vm3902, %v9203
    %9212 = vst.msk [vmem:[#allocation3 + $0x160] sm:$0xff] %vm3902, %v9204
    %9213 = vst.msk [vmem:[#allocation3 + $0x178] sm:$0xff] %vm3902, %v9205
    %v9214 = vld [vmem:[#allocation2 + $0x250] sm:$0xff]
    %v9215 = vld [vmem:[#allocation2 + $0x298] sm:$0xff]
    %v9216 = vld [vmem:[#allocation2 + $0x2e0] sm:$0xff]
    %v9217 = vld [vmem:[#allocation2 + $0x328] sm:$0xff]
    %v9218 = vld [vmem:[#allocation2 + $0x370] sm:$0xff]
    %v9219 = vld [vmem:[#allocation2 + $0x3b8] sm:$0xff]
    %v9220 = vld [vmem:[#allocation2 + $0x400] sm:$0xff]
    %v9221 = vld [vmem:[#allocation2 + $0x448] sm:$0xff]
    %v9222 = vld [vmem:[#allocation2 + $0x268] sm:$0xff]
    %v9223 = vld [vmem:[#allocation2 + $0x2b0] sm:$0xff]
    %v9224 = vld [vmem:[#allocation2 + $0x2f8] sm:$0xff]
    %v9225 = vld [vmem:[#allocation2 + $0x340] sm:$0xff]
    %v9226 = vld [vmem:[#allocation2 + $0x388] sm:$0xff]
    %v9227 = vld [vmem:[#allocation2 + $0x3d0] sm:$0xff]
    %v9228 = vld [vmem:[#allocation2 + $0x418] sm:$0xff]
    %v9229 = vld [vmem:[#allocation2 + $0x460] sm:$0xff]
    %v9230 = vld [vmem:[#allocation2 + $0x280] sm:$0xff]
    %v9231 = vld [vmem:[#allocation2 + $0x2c8] sm:$0xff]
    %v9232 = vld [vmem:[#allocation2 + $0x310] sm:$0xff]
    %v9233 = vld [vmem:[#allocation2 + $0x358] sm:$0xff]
    %v9234 = vld [vmem:[#allocation2 + $0x3a0] sm:$0xff]
    %v9235 = vld [vmem:[#allocation2 + $0x3e8] sm:$0xff]
    %v9236 = vld [vmem:[#allocation2 + $0x430] sm:$0xff]
    %v9237 = vld [vmem:[#allocation2 + $0x478] sm:$0xff]
    %9246 = vrot.lane.b32.xlu0 %v9214, 64
    %v9247 = vpop.permute.xlu0 %9246
    %9248 = vrot.lane.b32.xlu0 %v9215, 64
    %v9249 = vpop.permute.xlu0 %9248
    %9250 = vrot.lane.b32.xlu0 %v9216, 64
    %v9251 = vpop.permute.xlu0 %9250
    %9252 = vrot.lane.b32.xlu0 %v9217, 64
    %v9253 = vpop.permute.xlu0 %9252
    %9254 = vrot.lane.b32.xlu0 %v9218, 64
    %v9255 = vpop.permute.xlu0 %9254
    %9256 = vrot.lane.b32.xlu0 %v9219, 64
    %v9257 = vpop.permute.xlu0 %9256
    %9258 = vrot.lane.b32.xlu0 %v9220, 64
    %v9259 = vpop.permute.xlu0 %9258
    %9260 = vrot.lane.b32.xlu0 %v9221, 64
    %v9261 = vpop.permute.xlu0 %9260
    %9270 = vrot.lane.b32.xlu0 %v9222, 64
    %v9271 = vpop.permute.xlu0 %9270
    %9272 = vrot.lane.b32.xlu0 %v9223, 64
    %v9273 = vpop.permute.xlu0 %9272
    %9274 = vrot.lane.b32.xlu0 %v9224, 64
    %v9275 = vpop.permute.xlu0 %9274
    %9276 = vrot.lane.b32.xlu0 %v9225, 64
    %v9277 = vpop.permute.xlu0 %9276
    %9278 = vrot.lane.b32.xlu0 %v9226, 64
    %v9279 = vpop.permute.xlu0 %9278
    %9280 = vrot.lane.b32.xlu0 %v9227, 64
    %v9281 = vpop.permute.xlu0 %9280
    %9282 = vrot.lane.b32.xlu0 %v9228, 64
    %v9283 = vpop.permute.xlu0 %9282
    %9284 = vrot.lane.b32.xlu0 %v9229, 64
    %v9285 = vpop.permute.xlu0 %9284
    %v9287 = vsel %vm3902, %v9247, 0
    %v9290 = vsel %vm3902, %v9249, 0
    %v9293 = vsel %vm3902, %v9251, 0
    %v9296 = vsel %vm3902, %v9253, 0
    %v9299 = vsel %vm3902, %v9255, 0
    %v9302 = vsel %vm3902, %v9257, 0
    %v9305 = vsel %vm3902, %v9259, 0
    %v9308 = vsel %vm3902, %v9261, 0
    %v9311 = vsel %vm3902, %v9271, 0
    %v9314 = vsel %vm3902, %v9273, 0
    %v9317 = vsel %vm3902, %v9275, 0
    %v9320 = vsel %vm3902, %v9277, 0
    %v9323 = vsel %vm3902, %v9279, 0
    %v9326 = vsel %vm3902, %v9281, 0
    %v9329 = vsel %vm3902, %v9283, 0
    %v9332 = vsel %vm3902, %v9285, 0
    %9334 = vmatprep.subr.bf16.mxu0 0
    %9335 = vmatpush1.bf16.xpose.msra.mxu0 %v9311
    %9336 = vmatprep.subr.bf16.mxu0 0
    %9337 = vmatpush1.bf16.xpose.msra.mxu0 %v9314
    %9338 = vmatprep.subr.bf16.mxu0 0
    %9339 = vmatpush1.bf16.xpose.msra.mxu0 %v9317
    %9340 = vmatprep.subr.bf16.mxu0 0
    %9341 = vmatpush1.bf16.xpose.msra.mxu0 %v9320
    %9342 = vmatprep.subr.bf16.mxu0 0
    %9343 = vmatpush1.bf16.xpose.msra.mxu0 %v9323
    %9344 = vmatprep.subr.bf16.mxu0 0
    %9345 = vmatpush1.bf16.xpose.msra.mxu0 %v9326
    %9346 = vmatprep.subr.bf16.mxu0 0
    %9347 = vmatpush1.bf16.xpose.msra.mxu0 %v9329
    %9348 = vmatprep.subr.bf16.mxu0 0
    %9349 = vmatpush1.bf16.xpose.msra.mxu0 %v9332
    %9350 = vmatprep.subr.bf16.mxu0 0
    %9351 = vmatpush1.bf16.xpose.msra.mxu0 0
    %9352 = vmatprep.subr.bf16.mxu0 0
    %9353 = vmatpush1.bf16.xpose.msra.mxu0 0
    %9354 = vmatprep.subr.bf16.mxu0 0
    %9355 = vmatpush1.bf16.xpose.msra.mxu0 0
    %9356 = vmatprep.subr.bf16.mxu0 0
    %9357 = vmatpush1.bf16.xpose.msra.mxu0 0
    %9358 = vmatprep.subr.bf16.mxu0 0
    %9359 = vmatpush1.bf16.xpose.msra.mxu0 0
    %9360 = vmatprep.subr.bf16.mxu0 0
    %9361 = vmatpush1.bf16.xpose.msra.mxu0 0
    %9362 = vmatprep.subr.bf16.mxu0 0
    %9363 = vmatpush1.bf16.xpose.msra.mxu0 0
    %9364 = vmatprep.subr.bf16.mxu0 0
    %9365 = vmatpush1.bf16.xpose.msra.mxu0 0
    %9366 = vmatprep.mubr.bf16.mxu0 0
    %9367 = vmatmul.mubr.bf16.gmra.mrb[0].mxu0 %v9287
    %v9368 = vpop.f32.mrb[0].mxu0
    %v9369 = vadd.f32 0.0, %v9368
    %v9370 = vpop.f32.mrb[0].mxu0
    %v9371 = vpop.f32.mrb[0].mxu0
    %v9372 = vadd.f32 0.0, %v9371
    %v9373 = vpop.f32.mrb[0].mxu0
    %9374 = vmatprep.mubr.bf16.mxu0 0
    %9375 = vmatmul.mubr.bf16.gmra.mrb[0].mxu0 %v9290
    %v9376 = vpop.f32.mrb[0].mxu0
    %v9377 = vadd.f32 0.0, %v9376
    %v9378 = vpop.f32.mrb[0].mxu0
    %v9379 = vpop.f32.mrb[0].mxu0
    %v9380 = vadd.f32 0.0, %v9379
    %v9381 = vpop.f32.mrb[0].mxu0
    %9382 = vmatprep.mubr.bf16.mxu0 0
    %9383 = vmatmul.mubr.bf16.gmra.mrb[0].mxu0 %v9293
    %v9384 = vpop.f32.mrb[0].mxu0
    %v9385 = vadd.f32 0.0, %v9384
    %v9386 = vpop.f32.mrb[0].mxu0
    %v9387 = vpop.f32.mrb[0].mxu0
    %v9388 = vadd.f32 0.0, %v9387
    %v9389 = vpop.f32.mrb[0].mxu0
    %9390 = vmatprep.mubr.bf16.mxu0 0
    %9391 = vmatmul.mubr.bf16.gmra.mrb[0].mxu0 %v9296
    %v9392 = vpop.f32.mrb[0].mxu0
    %v9393 = vadd.f32 0.0, %v9392
    %v9394 = vpop.f32.mrb[0].mxu0
    %v9395 = vpop.f32.mrb[0].mxu0
    %v9396 = vadd.f32 0.0, %v9395
    %v9397 = vpop.f32.mrb[0].mxu0
    %9398 = vmatprep.mubr.bf16.mxu0 0
    %9399 = vmatmul.mubr.bf16.gmra.mrb[0].mxu0 %v9299
    %v9400 = vpop.f32.mrb[0].mxu0
    %v9401 = vadd.f32 0.0, %v9400
    %v9402 = vpop.f32.mrb[0].mxu0
    %v9403 = vpop.f32.mrb[0].mxu0
    %v9404 = vadd.f32 0.0, %v9403
    %v9405 = vpop.f32.mrb[0].mxu0
    %9406 = vmatprep.mubr.bf16.mxu0 0
    %9407 = vmatmul.mubr.bf16.gmra.mrb[0].mxu0 %v9302
    %v9408 = vpop.f32.mrb[0].mxu0
    %v9409 = vadd.f32 0.0, %v9408
    %v9410 = vpop.f32.mrb[0].mxu0
    %v9411 = vpop.f32.mrb[0].mxu0
    %v9412 = vadd.f32 0.0, %v9411
    %v9413 = vpop.f32.mrb[0].mxu0
    %9414 = vmatprep.mubr.bf16.mxu0 0
    %9415 = vmatmul.mubr.bf16.gmra.mrb[0].mxu0 %v9305
    %v9416 = vpop.f32.mrb[0].mxu0
    %v9417 = vadd.f32 0.0, %v9416
    %v9418 = vpop.f32.mrb[0].mxu0
    %v9419 = vpop.f32.mrb[0].mxu0
    %v9420 = vadd.f32 0.0, %v9419
    %v9421 = vpop.f32.mrb[0].mxu0
    %9422 = vmatprep.mubr.bf16.mxu0 0
    %9423 = vmatmul.mubr.bf16.gmra.mrb[0].mxu0 %v9308
    %v9424 = vpop.f32.mrb[0].mxu0
    %v9425 = vadd.f32 0.0, %v9424
    %v9426 = vpop.f32.mrb[0].mxu0
    %v9427 = vpop.f32.mrb[0].mxu0
    %v9428 = vadd.f32 0.0, %v9427
    %v9429 = vpop.f32.mrb[0].mxu0
    %9430 = vdwg.mxu0
    %9431 = vmax.xlane.f32.xlu0 %v9369
    %v9432 = vpop.xlane.xlu0 %9431
    %9433 = vmax.xlane.f32.xlu0 %v9372
    %v9434 = vpop.xlane.xlu0 %9433
    %9435 = vmax.xlane.f32.xlu0 %v9377
    %v9436 = vpop.xlane.xlu0 %9435
    %9437 = vmax.xlane.f32.xlu0 %v9380
    %v9438 = vpop.xlane.xlu0 %9437
    %9439 = vmax.xlane.f32.xlu0 %v9385
    %v9440 = vpop.xlane.xlu0 %9439
    %9441 = vmax.xlane.f32.xlu0 %v9388
    %v9442 = vpop.xlane.xlu0 %9441
    %9443 = vmax.xlane.f32.xlu0 %v9393
    %v9444 = vpop.xlane.xlu0 %9443
    %9445 = vmax.xlane.f32.xlu0 %v9396
    %v9446 = vpop.xlane.xlu0 %9445
    %9447 = vmax.xlane.f32.xlu0 %v9401
    %v9448 = vpop.xlane.xlu0 %9447
    %9449 = vmax.xlane.f32.xlu0 %v9404
    %v9450 = vpop.xlane.xlu0 %9449
    %9451 = vmax.xlane.f32.xlu0 %v9409
    %v9452 = vpop.xlane.xlu0 %9451
    %9453 = vmax.xlane.f32.xlu0 %v9412
    %v9454 = vpop.xlane.xlu0 %9453
    %9455 = vmax.xlane.f32.xlu0 %v9417
    %v9456 = vpop.xlane.xlu0 %9455
    %9457 = vmax.xlane.f32.xlu0 %v9420
    %v9458 = vpop.xlane.xlu0 %9457
    %9459 = vmax.xlane.f32.xlu0 %v9425
    %v9460 = vpop.xlane.xlu0 %9459
    %9461 = vmax.xlane.f32.xlu0 %v9428
    %v9462 = vpop.xlane.xlu0 %9461
    %v9463 = vsub.f32 %v9369, %v9432
    %v9464 = vsub.f32 %v9372, %v9434
    %v9465 = vsub.f32 %v9377, %v9436
    %v9466 = vsub.f32 %v9380, %v9438
    %v9467 = vsub.f32 %v9385, %v9440
    %v9468 = vsub.f32 %v9388, %v9442
    %v9469 = vsub.f32 %v9393, %v9444
    %v9470 = vsub.f32 %v9396, %v9446
    %v9471 = vsub.f32 %v9401, %v9448
    %v9472 = vsub.f32 %v9404, %v9450
    %v9473 = vsub.f32 %v9409, %v9452
    %v9474 = vsub.f32 %v9412, %v9454
    %v9475 = vsub.f32 %v9417, %v9456
    %v9476 = vsub.f32 %v9420, %v9458
    %v9477 = vsub.f32 %v9425, %v9460
    %v9478 = vsub.f32 %v9428, %v9462
    %v9479 = vmul.f32 %v9463, 1.442695
    %v9480 = vpow.pop %v9479
    %v9481 = vmul.f32 %v9464, 1.442695
    %v9482 = vpow.pop %v9481
    %v9483 = vmul.f32 %v9465, 1.442695
    %v9484 = vpow.pop %v9483
    %v9485 = vmul.f32 %v9466, 1.442695
    %v9486 = vpow.pop %v9485
    %v9487 = vmul.f32 %v9467, 1.442695
    %v9488 = vpow.pop %v9487
    %v9489 = vmul.f32 %v9468, 1.442695
    %v9490 = vpow.pop %v9489
    %v9491 = vmul.f32 %v9469, 1.442695
    %v9492 = vpow.pop %v9491
    %v9493 = vmul.f32 %v9470, 1.442695
    %v9494 = vpow.pop %v9493
    %v9495 = vmul.f32 %v9471, 1.442695
    %v9496 = vpow.pop %v9495
    %v9497 = vmul.f32 %v9472, 1.442695
    %v9498 = vpow.pop %v9497
    %v9499 = vmul.f32 %v9473, 1.442695
    %v9500 = vpow.pop %v9499
    %v9501 = vmul.f32 %v9474, 1.442695
    %v9502 = vpow.pop %v9501
    %v9503 = vmul.f32 %v9475, 1.442695
    %v9504 = vpow.pop %v9503
    %v9505 = vmul.f32 %v9476, 1.442695
    %v9506 = vpow.pop %v9505
    %v9507 = vmul.f32 %v9477, 1.442695
    %v9508 = vpow.pop %v9507
    %v9509 = vmul.f32 %v9478, 1.442695
    %v9510 = vpow.pop %v9509
    %9511 = vadd.xlane.f32.xlu0 %v9480
    %v9512 = vpop.xlane.xlu0 %9511
    %9513 = vadd.xlane.f32.xlu0 %v9482
    %v9514 = vpop.xlane.xlu0 %9513
    %9515 = vadd.xlane.f32.xlu0 %v9484
    %v9516 = vpop.xlane.xlu0 %9515
    %9517 = vadd.xlane.f32.xlu0 %v9486
    %v9518 = vpop.xlane.xlu0 %9517
    %9519 = vadd.xlane.f32.xlu0 %v9488
    %v9520 = vpop.xlane.xlu0 %9519
    %9521 = vadd.xlane.f32.xlu0 %v9490
    %v9522 = vpop.xlane.xlu0 %9521
    %9523 = vadd.xlane.f32.xlu0 %v9492
    %v9524 = vpop.xlane.xlu0 %9523
    %9525 = vadd.xlane.f32.xlu0 %v9494
    %v9526 = vpop.xlane.xlu0 %9525
    %9527 = vadd.xlane.f32.xlu0 %v9496
    %v9528 = vpop.xlane.xlu0 %9527
    %9529 = vadd.xlane.f32.xlu0 %v9498
    %v9530 = vpop.xlane.xlu0 %9529
    %9531 = vadd.xlane.f32.xlu0 %v9500
    %v9532 = vpop.xlane.xlu0 %9531
    %9533 = vadd.xlane.f32.xlu0 %v9502
    %v9534 = vpop.xlane.xlu0 %9533
    %9535 = vadd.xlane.f32.xlu0 %v9504
    %v9536 = vpop.xlane.xlu0 %9535
    %9537 = vadd.xlane.f32.xlu0 %v9506
    %v9538 = vpop.xlane.xlu0 %9537
    %9539 = vadd.xlane.f32.xlu0 %v9508
    %v9540 = vpop.xlane.xlu0 %9539
    %9541 = vadd.xlane.f32.xlu0 %v9510
    %v9542 = vpop.xlane.xlu0 %9541
    %v9543 = vrcp.pop %v9512
    %v9544 = vrcp.pop %v9514
    %v9545 = vrcp.pop %v9516
    %v9546 = vrcp.pop %v9518
    %v9547 = vrcp.pop %v9520
    %v9548 = vrcp.pop %v9522
    %v9549 = vrcp.pop %v9524
    %v9550 = vrcp.pop %v9526
    %v9551 = vrcp.pop %v9528
    %v9552 = vrcp.pop %v9530
    %v9553 = vrcp.pop %v9532
    %v9554 = vrcp.pop %v9534
    %v9555 = vrcp.pop %v9536
    %v9556 = vrcp.pop %v9538
    %v9557 = vrcp.pop %v9540
    %v9558 = vrcp.pop %v9542
    %v9559 = vmul.f32 %v9480, %v9543
    %v9560 = vmul.f32 %v9482, %v9544
    %v9561 = vmul.f32 %v9484, %v9545
    %v9562 = vmul.f32 %v9486, %v9546
    %v9563 = vmul.f32 %v9488, %v9547
    %v9564 = vmul.f32 %v9490, %v9548
    %v9565 = vmul.f32 %v9492, %v9549
    %v9566 = vmul.f32 %v9494, %v9550
    %v9567 = vmul.f32 %v9496, %v9551
    %v9568 = vmul.f32 %v9498, %v9552
    %v9569 = vmul.f32 %v9500, %v9553
    %v9570 = vmul.f32 %v9502, %v9554
    %v9571 = vmul.f32 %v9504, %v9555
    %v9572 = vmul.f32 %v9506, %v9556
    %v9573 = vmul.f32 %v9508, %v9557
    %v9574 = vmul.f32 %v9510, %v9558
    %v9575 = vpack.c.bf16 %v9560, %v9559
    %v9576 = vpack.c.bf16 %v9562, %v9561
    %v9577 = vpack.c.bf16 %v9564, %v9563
    %v9578 = vpack.c.bf16 %v9566, %v9565
    %v9579 = vpack.c.bf16 %v9568, %v9567
    %v9580 = vpack.c.bf16 %v9570, %v9569
    %v9581 = vpack.c.bf16 %v9572, %v9571
    %v9582 = vpack.c.bf16 %v9574, %v9573
    %9591 = vrot.lane.b32.xlu0 %v9230, 64
    %v9592 = vpop.permute.xlu0 %9591
    %9593 = vrot.lane.b32.xlu0 %v9231, 64
    %v9594 = vpop.permute.xlu0 %9593
    %9595 = vrot.lane.b32.xlu0 %v9232, 64
    %v9596 = vpop.permute.xlu0 %9595
    %9597 = vrot.lane.b32.xlu0 %v9233, 64
    %v9598 = vpop.permute.xlu0 %9597
    %9599 = vrot.lane.b32.xlu0 %v9234, 64
    %v9600 = vpop.permute.xlu0 %9599
    %9601 = vrot.lane.b32.xlu0 %v9235, 64
    %v9602 = vpop.permute.xlu0 %9601
    %9603 = vrot.lane.b32.xlu0 %v9236, 64
    %v9604 = vpop.permute.xlu0 %9603
    %9605 = vrot.lane.b32.xlu0 %v9237, 64
    %v9606 = vpop.permute.xlu0 %9605
    %9615 = vmatprep.subr.bf16.mxu0 0
    %9616 = vmatpush1.bf16.msra.mxu0 %v9592
    %9617 = vmatprep.subr.bf16.mxu0 0
    %9618 = vmatpush1.bf16.msra.mxu0 %v9594
    %9619 = vmatprep.subr.bf16.mxu0 0
    %9620 = vmatpush1.bf16.msra.mxu0 %v9596
    %9621 = vmatprep.subr.bf16.mxu0 0
    %9622 = vmatpush1.bf16.msra.mxu0 %v9598
    %9623 = vmatprep.subr.bf16.mxu0 0
    %9624 = vmatpush1.bf16.msra.mxu0 %v9600
    %9625 = vmatprep.subr.bf16.mxu0 0
    %9626 = vmatpush1.bf16.msra.mxu0 %v9602
    %9627 = vmatprep.subr.bf16.mxu0 0
    %9628 = vmatpush1.bf16.msra.mxu0 %v9604
    %9629 = vmatprep.subr.bf16.mxu0 0
    %9630 = vmatpush1.bf16.msra.mxu0 %v9606
    %9631 = vmatprep.subr.bf16.mxu0 0
    %9632 = vmatpush1.bf16.msra.mxu0 0
    %9633 = vmatprep.subr.bf16.mxu0 0
    %9634 = vmatpush1.bf16.msra.mxu0 0
    %9635 = vmatprep.subr.bf16.mxu0 0
    %9636 = vmatpush1.bf16.msra.mxu0 0
    %9637 = vmatprep.subr.bf16.mxu0 0
    %9638 = vmatpush1.bf16.msra.mxu0 0
    %9639 = vmatprep.subr.bf16.mxu0 0
    %9640 = vmatpush1.bf16.msra.mxu0 0
    %9641 = vmatprep.subr.bf16.mxu0 0
    %9642 = vmatpush1.bf16.msra.mxu0 0
    %9643 = vmatprep.subr.bf16.mxu0 0
    %9644 = vmatpush1.bf16.msra.mxu0 0
    %9645 = vmatprep.subr.bf16.mxu0 0
    %9646 = vmatpush1.bf16.msra.mxu0 0
    %9647 = vmatprep.mubr.bf16.mxu0 0
    %9648 = vmatmul.mubr.bf16.gmra.mrb[0].mxu0 %v9575
    %v9649 = vpop.f32.mrb[0].mxu0
    %v9650 = vadd.f32 0.0, %v9649
    %v9651 = vpop.f32.mrb[0].mxu0
    %v9652 = vpop.f32.mrb[0].mxu0
    %v9653 = vadd.f32 0.0, %v9652
    %v9654 = vpop.f32.mrb[0].mxu0
    %9655 = vmatprep.mubr.bf16.mxu0 0
    %9656 = vmatmul.mubr.bf16.gmra.mrb[0].mxu0 %v9576
    %v9657 = vpop.f32.mrb[0].mxu0
    %v9658 = vadd.f32 0.0, %v9657
    %v9659 = vpop.f32.mrb[0].mxu0
    %v9660 = vpop.f32.mrb[0].mxu0
    %v9661 = vadd.f32 0.0, %v9660
    %v9662 = vpop.f32.mrb[0].mxu0
    %9663 = vmatprep.mubr.bf16.mxu0 0
    %9664 = vmatmul.mubr.bf16.gmra.mrb[0].mxu0 %v9577
    %v9665 = vpop.f32.mrb[0].mxu0
    %v9666 = vadd.f32 0.0, %v9665
    %v9667 = vpop.f32.mrb[0].mxu0
    %v9668 = vpop.f32.mrb[0].mxu0
    %v9669 = vadd.f32 0.0, %v9668
    %v9670 = vpop.f32.mrb[0].mxu0
    %9671 = vmatprep.mubr.bf16.mxu0 0
    %9672 = vmatmul.mubr.bf16.gmra.mrb[0].mxu0 %v9578
    %v9673 = vpop.f32.mrb[0].mxu0
    %v9674 = vadd.f32 0.0, %v9673
    %v9675 = vpop.f32.mrb[0].mxu0
    %v9676 = vpop.f32.mrb[0].mxu0
    %v9677 = vadd.f32 0.0, %v9676
    %v9678 = vpop.f32.mrb[0].mxu0
    %9679 = vmatprep.mubr.bf16.mxu0 0
    %9680 = vmatmul.mubr.bf16.gmra.mrb[0].mxu0 %v9579
    %v9681 = vpop.f32.mrb[0].mxu0
    %v9682 = vadd.f32 0.0, %v9681
    %v9683 = vpop.f32.mrb[0].mxu0
    %v9684 = vpop.f32.mrb[0].mxu0
    %v9685 = vadd.f32 0.0, %v9684
    %v9686 = vpop.f32.mrb[0].mxu0
    %9687 = vmatprep.mubr.bf16.mxu0 0
    %9688 = vmatmul.mubr.bf16.gmra.mrb[0].mxu0 %v9580
    %v9689 = vpop.f32.mrb[0].mxu0
    %v9690 = vadd.f32 0.0, %v9689
    %v9691 = vpop.f32.mrb[0].mxu0
    %v9692 = vpop.f32.mrb[0].mxu0
    %v9693 = vadd.f32 0.0, %v9692
    %v9694 = vpop.f32.mrb[0].mxu0
    %9695 = vmatprep.mubr.bf16.mxu0 0
    %9696 = vmatmul.mubr.bf16.gmra.mrb[0].mxu0 %v9581
    %v9697 = vpop.f32.mrb[0].mxu0
    %v9698 = vadd.f32 0.0, %v9697
    %v9699 = vpop.f32.mrb[0].mxu0
    %v9700 = vpop.f32.mrb[0].mxu0
    %v9701 = vadd.f32 0.0, %v9700
    %v9702 = vpop.f32.mrb[0].mxu0
    %9703 = vmatprep.mubr.bf16.mxu0 0
    %9704 = vmatmul.mubr.bf16.gmra.mrb[0].mxu0 %v9582
    %v9705 = vpop.f32.mrb[0].mxu0
    %v9706 = vadd.f32 0.0, %v9705
    %v9707 = vpop.f32.mrb[0].mxu0
    %v9708 = vpop.f32.mrb[0].mxu0
    %v9709 = vadd.f32 0.0, %v9708
    %v9710 = vpop.f32.mrb[0].mxu0
    %9711 = vdwg.mxu0
    %v9712 = vpack.c.bf16 %v9653, %v9650
    %v9713 = vpack.c.bf16 %v9661, %v9658
    %v9714 = vpack.c.bf16 %v9669, %v9666
    %v9715 = vpack.c.bf16 %v9677, %v9674
    %v9716 = vpack.c.bf16 %v9685, %v9682
    %v9717 = vpack.c.bf16 %v9693, %v9690
    %v9718 = vpack.c.bf16 %v9701, %v9698
    %v9719 = vpack.c.bf16 %v9709, %v9706
    %9728 = vrot.lane.b32.xlu0 %v9712, 64
    %v9729 = vpop.permute.xlu0 %9728
    %9730 = vrot.lane.b32.xlu0 %v9713, 64
    %v9731 = vpop.permute.xlu0 %9730
    %9732 = vrot.lane.b32.xlu0 %v9714, 64
    %v9733 = vpop.permute.xlu0 %9732
    %9734 = vrot.lane.b32.xlu0 %v9715, 64
    %v9735 = vpop.permute.xlu0 %9734
    %9736 = vrot.lane.b32.xlu0 %v9716, 64
    %v9737 = vpop.permute.xlu0 %9736
    %9738 = vrot.lane.b32.xlu0 %v9717, 64
    %v9739 = vpop.permute.xlu0 %9738
    %9740 = vrot.lane.b32.xlu0 %v9718, 64
    %v9741 = vpop.permute.xlu0 %9740
    %9742 = vrot.lane.b32.xlu0 %v9719, 64
    %v9743 = vpop.permute.xlu0 %9742
    %9752 = vst.msk [vmem:[#allocation3 + $0xd0] sm:$0xff] %vm4851, %v9729
    %9753 = vst.msk [vmem:[#allocation3 + $0xe8] sm:$0xff] %vm4851, %v9731
    %9754 = vst.msk [vmem:[#allocation3 + $0x100] sm:$0xff] %vm4851, %v9733
    %9755 = vst.msk [vmem:[#allocation3 + $0x118] sm:$0xff] %vm4851, %v9735
    %9756 = vst.msk [vmem:[#allocation3 + $0x130] sm:$0xff] %vm4851, %v9737
    %9757 = vst.msk [vmem:[#allocation3 + $0x148] sm:$0xff] %vm4851, %v9739
    %9758 = vst.msk [vmem:[#allocation3 + $0x160] sm:$0xff] %vm4851, %v9741
    %9759 = vst.msk [vmem:[#allocation3 + $0x178] sm:$0xff] %vm4851, %v9743
    %v9760 = vld [vmem:[#allocation3] sm:$0xff]
    %v9761 = vld [vmem:[#allocation3 + $0x8] sm:$0xff]
    %v9762 = vld [vmem:[#allocation3 + $0x10] sm:$0xff]
    %v9763 = vld [vmem:[#allocation3 + $0x18] sm:$0xff]
    %v9764 = vld [vmem:[#allocation3 + $0x20] sm:$0xff]
    %v9765 = vld [vmem:[#allocation3 + $0x28] sm:$0xff]
    %v9766 = vld [vmem:[#allocation3 + $0x30] sm:$0xff]
    %v9767 = vld [vmem:[#allocation3 + $0x38] sm:$0xff]
    %v9768 = vld [vmem:[#allocation3 + $0x40] sm:$0xff]
    %v9769 = vld [vmem:[#allocation3 + $0x48] sm:$0xff]
    %v9770 = vld [vmem:[#allocation3 + $0x50] sm:$0xff]
    %v9771 = vld [vmem:[#allocation3 + $0x58] sm:$0xff]
    %v9772 = vld [vmem:[#allocation3 + $0x60] sm:$0xff]
    %v9773 = vld [vmem:[#allocation3 + $0x68] sm:$0xff]
    %v9774 = vld [vmem:[#allocation3 + $0x70] sm:$0xff]
    %v9775 = vld [vmem:[#allocation3 + $0x78] sm:$0xff]
    %v9776 = vld [vmem:[#allocation3 + $0x80] sm:$0xff]
    %v9777 = vld [vmem:[#allocation3 + $0x88] sm:$0xff]
    %v9778 = vld [vmem:[#allocation3 + $0x90] sm:$0xff]
    %v9779 = vld [vmem:[#allocation3 + $0x98] sm:$0xff]
    %v9780 = vld [vmem:[#allocation3 + $0xa0] sm:$0xff]
    %v9781 = vld [vmem:[#allocation3 + $0xa8] sm:$0xff]
    %v9782 = vld [vmem:[#allocation3 + $0xb0] sm:$0xff]
    %v9783 = vld [vmem:[#allocation3 + $0xb8] sm:$0xff]
    %v9784 = vld [vmem:[#allocation3 + $0xc0] sm:$0xff]
    %v9785 = vld [vmem:[#allocation3 + $0xc8] sm:$0xff]
    %v9786 = vld [vmem:[#allocation3 + $0xd0] sm:$0xff]
    %v9787 = vld [vmem:[#allocation3 + $0xd8] sm:$0xff]
    %v9788 = vld [vmem:[#allocation3 + $0xe0] sm:$0xff]
    %v9789 = vld [vmem:[#allocation3 + $0xe8] sm:$0xff]
    %v9790 = vld [vmem:[#allocation3 + $0xf0] sm:$0xff]
    %v9791 = vld [vmem:[#allocation3 + $0xf8] sm:$0xff]
    %v9792 = vld [vmem:[#allocation3 + $0x100] sm:$0xff]
    %v9793 = vld [vmem:[#allocation3 + $0x108] sm:$0xff]
    %v9794 = vld [vmem:[#allocation3 + $0x110] sm:$0xff]
    %v9795 = vld [vmem:[#allocation3 + $0x118] sm:$0xff]
    %v9796 = vld [vmem:[#allocation3 + $0x120] sm:$0xff]
    %v9797 = vld [vmem:[#allocation3 + $0x128] sm:$0xff]
    %v9798 = vld [vmem:[#allocation3 + $0x130] sm:$0xff]
    %v9799 = vld [vmem:[#allocation3 + $0x138] sm:$0xff]
    %v9800 = vld [vmem:[#allocation3 + $0x140] sm:$0xff]
    %v9801 = vld [vmem:[#allocation3 + $0x148] sm:$0xff]
    %v9802 = vld [vmem:[#allocation3 + $0x150] sm:$0xff]
    %v9803 = vld [vmem:[#allocation3 + $0x158] sm:$0xff]
    %v9804 = vld [vmem:[#allocation3 + $0x160] sm:$0xff]
    %v9805 = vld [vmem:[#allocation3 + $0x168] sm:$0xff]
    %v9806 = vld [vmem:[#allocation3 + $0x170] sm:$0xff]
    %v9807 = vld [vmem:[#allocation3 + $0x178] sm:$0xff]
    %v9808 = vld [vmem:[#allocation9] sm:$0xff]
    %v9809 = vld [vmem:[#allocation9 + $0x8] sm:$0xf]
    %v9810 = vld [vmem:[#allocation9 + $0xc] sm:$0xff]
    %v9811 = vld [vmem:[#allocation9 + $0x14] sm:$0xf]
    %v9812 = vld [vmem:[#allocation9 + $0x18] sm:$0xff]
    %v9813 = vld [vmem:[#allocation9 + $0x20] sm:$0xf]
    %v9814 = vld [vmem:[#allocation9 + $0x24] sm:$0xff]
    %v9815 = vld [vmem:[#allocation9 + $0x2c] sm:$0xf]
    %v9816 = vld [vmem:[#allocation9 + $0x30] sm:$0xff]
    %v9817 = vld [vmem:[#allocation9 + $0x38] sm:$0xf]
    %v9818 = vld [vmem:[#allocation9 + $0x3c] sm:$0xff]
    %v9819 = vld [vmem:[#allocation9 + $0x44] sm:$0xf]
    %v9820 = vld [vmem:[#allocation9 + $0x48] sm:$0xff]
    %v9821 = vld [vmem:[#allocation9 + $0x50] sm:$0xf]
    %v9822 = vld [vmem:[#allocation9 + $0x54] sm:$0xff]
    %v9823 = vld [vmem:[#allocation9 + $0x5c] sm:$0xf]
    %v9824 = vld [vmem:[#allocation9 + $0x60] sm:$0xff]
    %v9825 = vld [vmem:[#allocation9 + $0x68] sm:$0xf]
    %v9826 = vld [vmem:[#allocation9 + $0x6c] sm:$0xff]
    %v9827 = vld [vmem:[#allocation9 + $0x74] sm:$0xf]
    %v9828 = vld [vmem:[#allocation9 + $0x78] sm:$0xff]
    %v9829 = vld [vmem:[#allocation9 + $0x80] sm:$0xf]
    %v9830 = vld [vmem:[#allocation9 + $0x84] sm:$0xff]
    %v9831 = vld [vmem:[#allocation9 + $0x8c] sm:$0xf]
    %v9832 = vld [vmem:[#allocation9 + $0x90] sm:$0xff]
    %v9833 = vld [vmem:[#allocation9 + $0x98] sm:$0xf]
    %v9834 = vld [vmem:[#allocation9 + $0x9c] sm:$0xff]
    %v9835 = vld [vmem:[#allocation9 + $0xa4] sm:$0xf]
    %v9836 = vld [vmem:[#allocation9 + $0xa8] sm:$0xff]
    %v9837 = vld [vmem:[#allocation9 + $0xb0] sm:$0xf]
    %v9838 = vld [vmem:[#allocation9 + $0xb4] sm:$0xff]
    %v9839 = vld [vmem:[#allocation9 + $0xbc] sm:$0xf]
    %v9840 = vld [vmem:[#allocation9 + $0xc0] sm:$0xff]
    %v9841 = vld [vmem:[#allocation9 + $0xc8] sm:$0xf]
    %v9842 = vld [vmem:[#allocation9 + $0xcc] sm:$0xff]
    %v9843 = vld [vmem:[#allocation9 + $0xd4] sm:$0xf]
    %v9844 = vld [vmem:[#allocation9 + $0xd8] sm:$0xff]
    %v9845 = vld [vmem:[#allocation9 + $0xe0] sm:$0xf]
    %v9846 = vld [vmem:[#allocation9 + $0xe4] sm:$0xff]
    %v9847 = vld [vmem:[#allocation9 + $0xec] sm:$0xf]
    %v9848 = vld [vmem:[#allocation9 + $0xf0] sm:$0xff]
    %v9849 = vld [vmem:[#allocation9 + $0xf8] sm:$0xf]
    %v9850 = vld [vmem:[#allocation9 + $0xfc] sm:$0xff]
    %v9851 = vld [vmem:[#allocation9 + $0x104] sm:$0xf]
    %v9852 = vld [vmem:[#allocation9 + $0x108] sm:$0xff]
    %v9853 = vld [vmem:[#allocation9 + $0x110] sm:$0xf]
    %v9854 = vld [vmem:[#allocation9 + $0x114] sm:$0xff]
    %v9855 = vld [vmem:[#allocation9 + $0x11c] sm:$0xf]
    %v9856 = vld [vmem:[#allocation9 + $0x120] sm:$0xff]
    %v9857 = vld [vmem:[#allocation9 + $0x128] sm:$0xf]
    %v9858 = vld [vmem:[#allocation9 + $0x12c] sm:$0xff]
    %v9859 = vld [vmem:[#allocation9 + $0x134] sm:$0xf]
    %v9860 = vld [vmem:[#allocation9 + $0x138] sm:$0xff]
    %v9861 = vld [vmem:[#allocation9 + $0x140] sm:$0xf]
    %v9862 = vld [vmem:[#allocation9 + $0x144] sm:$0xff]
    %v9863 = vld [vmem:[#allocation9 + $0x14c] sm:$0xf]
    %v9864 = vld [vmem:[#allocation9 + $0x150] sm:$0xff]
    %v9865 = vld [vmem:[#allocation9 + $0x158] sm:$0xf]
    %v9866 = vld [vmem:[#allocation9 + $0x15c] sm:$0xff]
    %v9867 = vld [vmem:[#allocation9 + $0x164] sm:$0xf]
    %v9868 = vld [vmem:[#allocation9 + $0x168] sm:$0xff]
    %v9869 = vld [vmem:[#allocation9 + $0x170] sm:$0xf]
    %v9870 = vld [vmem:[#allocation9 + $0x174] sm:$0xff]
    %v9871 = vld [vmem:[#allocation9 + $0x17c] sm:$0xf]
    %v9872 = vld [vmem:[#allocation9 + $0x180] sm:$0xff]
    %v9873 = vld [vmem:[#allocation9 + $0x188] sm:$0xf]
    %v9874 = vld [vmem:[#allocation9 + $0x18c] sm:$0xff]
    %v9875 = vld [vmem:[#allocation9 + $0x194] sm:$0xf]
    %v9876 = vld [vmem:[#allocation9 + $0x198] sm:$0xff]
    %v9877 = vld [vmem:[#allocation9 + $0x1a0] sm:$0xf]
    %v9878 = vld [vmem:[#allocation9 + $0x1a4] sm:$0xff]
    %v9879 = vld [vmem:[#allocation9 + $0x1ac] sm:$0xf]
    %v9880 = vld [vmem:[#allocation9 + $0x1b0] sm:$0xff]
    %v9881 = vld [vmem:[#allocation9 + $0x1b8] sm:$0xf]
    %v9882 = vld [vmem:[#allocation9 + $0x1bc] sm:$0xff]
    %v9883 = vld [vmem:[#allocation9 + $0x1c4] sm:$0xf]
    %v9884 = vld [vmem:[#allocation9 + $0x1c8] sm:$0xff]
    %v9885 = vld [vmem:[#allocation9 + $0x1d0] sm:$0xf]
    %v9886 = vld [vmem:[#allocation9 + $0x1d4] sm:$0xff]
    %v9887 = vld [vmem:[#allocation9 + $0x1dc] sm:$0xf]
    %v9888 = vld [vmem:[#allocation9 + $0x1e0] sm:$0xff]
    %v9889 = vld [vmem:[#allocation9 + $0x1e8] sm:$0xf]
    %v9890 = vld [vmem:[#allocation9 + $0x1ec] sm:$0xff]
    %v9891 = vld [vmem:[#allocation9 + $0x1f4] sm:$0xf]
    %v9892 = vld [vmem:[#allocation9 + $0x1f8] sm:$0xff]
    %v9893 = vld [vmem:[#allocation9 + $0x200] sm:$0xf]
    %v9894 = vld [vmem:[#allocation9 + $0x204] sm:$0xff]
    %v9895 = vld [vmem:[#allocation9 + $0x20c] sm:$0xf]
    %v9896 = vld [vmem:[#allocation9 + $0x210] sm:$0xff]
    %v9897 = vld [vmem:[#allocation9 + $0x218] sm:$0xf]
    %v9898 = vld [vmem:[#allocation9 + $0x21c] sm:$0xff]
    %v9899 = vld [vmem:[#allocation9 + $0x224] sm:$0xf]
    %v9900 = vld [vmem:[#allocation9 + $0x228] sm:$0xff]
    %v9901 = vld [vmem:[#allocation9 + $0x230] sm:$0xf]
    %v9902 = vld [vmem:[#allocation9 + $0x234] sm:$0xff]
    %v9903 = vld [vmem:[#allocation9 + $0x23c] sm:$0xf]
    %v9904 = vld [vmem:[%s3] sm:$0x7]
    %v9906 = vlaneseq
    %v9907 = vshrl.u32 %v9906, 7
    %v9908 = vsub.s32 0, %v9907
    %v9909 = vrot.slane %v9904, %v9908
    %v9910 = vlaneseq
    %v9911 = vshrl.u32 %v9910, 7
    %v9912 = vsub.s32 1, %v9911
    %v9913 = vrot.slane %v9904, %v9912
    %v9914 = vlaneseq
    %v9915 = vshrl.u32 %v9914, 7
    %v9916 = vsub.s32 2, %v9915
    %v9917 = vrot.slane %v9904, %v9916
    %v10017 = vunpack.c.l.b16 %v9808
    %v10018 = vunpack.c.h.b16 %v9808
    %v10019 = vunpack.c.l.b16 %v9809
    %v10020 = vunpack.c.l.b16 %v9810
    %v10021 = vunpack.c.h.b16 %v9810
    %v10022 = vunpack.c.l.b16 %v9811
    %v10023 = vunpack.c.l.b16 %v9812
    %v10024 = vunpack.c.h.b16 %v9812
    %v10025 = vunpack.c.l.b16 %v9813
    %v10026 = vunpack.c.l.b16 %v9814
    %v10027 = vunpack.c.h.b16 %v9814
    %v10028 = vunpack.c.l.b16 %v9815
    %v10029 = vunpack.c.l.b16 %v9816
    %v10030 = vunpack.c.h.b16 %v9816
    %v10031 = vunpack.c.l.b16 %v9817
    %v10032 = vunpack.c.l.b16 %v9818
    %v10033 = vunpack.c.h.b16 %v9818
    %v10034 = vunpack.c.l.b16 %v9819
    %v10035 = vunpack.c.l.b16 %v9820
    %v10036 = vunpack.c.h.b16 %v9820
    %v10037 = vunpack.c.l.b16 %v9821
    %v10038 = vunpack.c.l.b16 %v9822
    %v10039 = vunpack.c.h.b16 %v9822
    %v10040 = vunpack.c.l.b16 %v9823
    %v10041 = vunpack.c.l.b16 %v9824
    %v10042 = vunpack.c.h.b16 %v9824
    %v10043 = vunpack.c.l.b16 %v9825
    %v10044 = vunpack.c.l.b16 %v9826
    %v10045 = vunpack.c.h.b16 %v9826
    %v10046 = vunpack.c.l.b16 %v9827
    %v10047 = vunpack.c.l.b16 %v9828
    %v10048 = vunpack.c.h.b16 %v9828
    %v10049 = vunpack.c.l.b16 %v9829
    %v10050 = vunpack.c.l.b16 %v9830
    %v10051 = vunpack.c.h.b16 %v9830
    %v10052 = vunpack.c.l.b16 %v9831
    %v10053 = vunpack.c.l.b16 %v9832
    %v10054 = vunpack.c.h.b16 %v9832
    %v10055 = vunpack.c.l.b16 %v9833
    %v10056 = vunpack.c.l.b16 %v9834
    %v10057 = vunpack.c.h.b16 %v9834
    %v10058 = vunpack.c.l.b16 %v9835
    %v10059 = vunpack.c.l.b16 %v9836
    %v10060 = vunpack.c.h.b16 %v9836
    %v10061 = vunpack.c.l.b16 %v9837
    %v10062 = vunpack.c.l.b16 %v9838
    %v10063 = vunpack.c.h.b16 %v9838
    %v10064 = vunpack.c.l.b16 %v9839
    %v10065 = vunpack.c.l.b16 %v9840
    %v10066 = vunpack.c.h.b16 %v9840
    %v10067 = vunpack.c.l.b16 %v9841
    %v10068 = vunpack.c.l.b16 %v9842
    %v10069 = vunpack.c.h.b16 %v9842
    %v10070 = vunpack.c.l.b16 %v9843
    %v10071 = vunpack.c.l.b16 %v9844
    %v10072 = vunpack.c.h.b16 %v9844
    %v10073 = vunpack.c.l.b16 %v9845
    %v10074 = vunpack.c.l.b16 %v9846
    %v10075 = vunpack.c.h.b16 %v9846
    %v10076 = vunpack.c.l.b16 %v9847
    %v10077 = vunpack.c.l.b16 %v9848
    %v10078 = vunpack.c.h.b16 %v9848
    %v10079 = vunpack.c.l.b16 %v9849
    %v10080 = vunpack.c.l.b16 %v9850
    %v10081 = vunpack.c.h.b16 %v9850
    %v10082 = vunpack.c.l.b16 %v9851
    %v10083 = vunpack.c.l.b16 %v9852
    %v10084 = vunpack.c.h.b16 %v9852
    %v10085 = vunpack.c.l.b16 %v9853
    %v10086 = vunpack.c.l.b16 %v9854
    %v10087 = vunpack.c.h.b16 %v9854
    %v10088 = vunpack.c.l.b16 %v9855
    %v10089 = vunpack.c.l.b16 %v9856
    %v10090 = vunpack.c.h.b16 %v9856
    %v10091 = vunpack.c.l.b16 %v9857
    %v10092 = vunpack.c.l.b16 %v9858
    %v10093 = vunpack.c.h.b16 %v9858
    %v10094 = vunpack.c.l.b16 %v9859
    %v10095 = vunpack.c.l.b16 %v9860
    %v10096 = vunpack.c.h.b16 %v9860
    %v10097 = vunpack.c.l.b16 %v9861
    %v10098 = vunpack.c.l.b16 %v9862
    %v10099 = vunpack.c.h.b16 %v9862
    %v10100 = vunpack.c.l.b16 %v9863
    %v10101 = vunpack.c.l.b16 %v9864
    %v10102 = vunpack.c.h.b16 %v9864
    %v10103 = vunpack.c.l.b16 %v9865
    %v10104 = vunpack.c.l.b16 %v9866
    %v10105 = vunpack.c.h.b16 %v9866
    %v10106 = vunpack.c.l.b16 %v9867
    %v10107 = vunpack.c.l.b16 %v9868
    %v10108 = vunpack.c.h.b16 %v9868
    %v10109 = vunpack.c.l.b16 %v9869
    %v10110 = vunpack.c.l.b16 %v9870
    %v10111 = vunpack.c.h.b16 %v9870
    %v10112 = vunpack.c.l.b16 %v9871
    %v10113 = vunpack.c.l.b16 %v9872
    %v10114 = vunpack.c.h.b16 %v9872
    %v10115 = vunpack.c.l.b16 %v9873
    %v10116 = vunpack.c.l.b16 %v9874
    %v10117 = vunpack.c.h.b16 %v9874
    %v10118 = vunpack.c.l.b16 %v9875
    %v10119 = vunpack.c.l.b16 %v9876
    %v10120 = vunpack.c.h.b16 %v9876
    %v10121 = vunpack.c.l.b16 %v9877
    %v10122 = vunpack.c.l.b16 %v9878
    %v10123 = vunpack.c.h.b16 %v9878
    %v10124 = vunpack.c.l.b16 %v9879
    %v10125 = vunpack.c.l.b16 %v9880
    %v10126 = vunpack.c.h.b16 %v9880
    %v10127 = vunpack.c.l.b16 %v9881
    %v10128 = vunpack.c.l.b16 %v9882
    %v10129 = vunpack.c.h.b16 %v9882
    %v10130 = vunpack.c.l.b16 %v9883
    %v10131 = vunpack.c.l.b16 %v9884
    %v10132 = vunpack.c.h.b16 %v9884
    %v10133 = vunpack.c.l.b16 %v9885
    %v10134 = vunpack.c.l.b16 %v9886
    %v10135 = vunpack.c.h.b16 %v9886
    %v10136 = vunpack.c.l.b16 %v9887
    %v10137 = vunpack.c.l.b16 %v9888
    %v10138 = vunpack.c.h.b16 %v9888
    %v10139 = vunpack.c.l.b16 %v9889
    %v10140 = vunpack.c.l.b16 %v9890
    %v10141 = vunpack.c.h.b16 %v9890
    %v10142 = vunpack.c.l.b16 %v9891
    %v10143 = vunpack.c.l.b16 %v9892
    %v10144 = vunpack.c.h.b16 %v9892
    %v10145 = vunpack.c.l.b16 %v9893
    %v10146 = vunpack.c.l.b16 %v9894
    %v10147 = vunpack.c.h.b16 %v9894
    %v10148 = vunpack.c.l.b16 %v9895
    %v10149 = vunpack.c.l.b16 %v9896
    %v10150 = vunpack.c.h.b16 %v9896
    %v10151 = vunpack.c.l.b16 %v9897
    %v10152 = vunpack.c.l.b16 %v9898
    %v10153 = vunpack.c.h.b16 %v9898
    %v10154 = vunpack.c.l.b16 %v9899
    %v10155 = vunpack.c.l.b16 %v9900
    %v10156 = vunpack.c.h.b16 %v9900
    %v10157 = vunpack.c.l.b16 %v9901
    %v10158 = vunpack.c.l.b16 %v9902
    %v10159 = vunpack.c.h.b16 %v9902
    %v10160 = vunpack.c.l.b16 %v9903
    %v10161 = vpack.c.b16 %v10020, %v10017
    %v10162 = vpack.c.b16 %v10021, %v10018
    %v10163 = vpack.c.b16 %v10022, %v10019
    %v10164 = vpack.c.b16 %v10026, %v10023
    %v10165 = vpack.c.b16 %v10027, %v10024
    %v10166 = vpack.c.b16 %v10028, %v10025
    %v10167 = vpack.c.b16 %v10032, %v10029
    %v10168 = vpack.c.b16 %v10033, %v10030
    %v10169 = vpack.c.b16 %v10034, %v10031
    %v10170 = vpack.c.b16 %v10038, %v10035
    %v10171 = vpack.c.b16 %v10039, %v10036
    %v10172 = vpack.c.b16 %v10040, %v10037
    %v10173 = vpack.c.b16 %v10044, %v10041
    %v10174 = vpack.c.b16 %v10045, %v10042
    %v10175 = vpack.c.b16 %v10046, %v10043
    %v10176 = vpack.c.b16 %v10050, %v10047
    %v10177 = vpack.c.b16 %v10051, %v10048
    %v10178 = vpack.c.b16 %v10052, %v10049
    %v10179 = vpack.c.b16 %v10056, %v10053
    %v10180 = vpack.c.b16 %v10057, %v10054
    %v10181 = vpack.c.b16 %v10058, %v10055
    %v10182 = vpack.c.b16 %v10062, %v10059
    %v10183 = vpack.c.b16 %v10063, %v10060
    %v10184 = vpack.c.b16 %v10064, %v10061
    %v10185 = vpack.c.b16 %v10068, %v10065
    %v10186 = vpack.c.b16 %v10069, %v10066
    %v10187 = vpack.c.b16 %v10070, %v10067
    %v10188 = vpack.c.b16 %v10074, %v10071
    %v10189 = vpack.c.b16 %v10075, %v10072
    %v10190 = vpack.c.b16 %v10076, %v10073
    %v10191 = vpack.c.b16 %v10080, %v10077
    %v10192 = vpack.c.b16 %v10081, %v10078
    %v10193 = vpack.c.b16 %v10082, %v10079
    %v10194 = vpack.c.b16 %v10086, %v10083
    %v10195 = vpack.c.b16 %v10087, %v10084
    %v10196 = vpack.c.b16 %v10088, %v10085
    %v10197 = vpack.c.b16 %v10092, %v10089
    %v10198 = vpack.c.b16 %v10093, %v10090
    %v10199 = vpack.c.b16 %v10094, %v10091
    %v10200 = vpack.c.b16 %v10098, %v10095
    %v10201 = vpack.c.b16 %v10099, %v10096
    %v10202 = vpack.c.b16 %v10100, %v10097
    %v10203 = vpack.c.b16 %v10104, %v10101
    %v10204 = vpack.c.b16 %v10105, %v10102
    %v10205 = vpack.c.b16 %v10106, %v10103
    %v10206 = vpack.c.b16 %v10110, %v10107
    %v10207 = vpack.c.b16 %v10111, %v10108
    %v10208 = vpack.c.b16 %v10112, %v10109
    %v10209 = vpack.c.b16 %v10116, %v10113
    %v10210 = vpack.c.b16 %v10117, %v10114
    %v10211 = vpack.c.b16 %v10118, %v10115
    %v10212 = vpack.c.b16 %v10122, %v10119
    %v10213 = vpack.c.b16 %v10123, %v10120
    %v10214 = vpack.c.b16 %v10124, %v10121
    %v10215 = vpack.c.b16 %v10128, %v10125
    %v10216 = vpack.c.b16 %v10129, %v10126
    %v10217 = vpack.c.b16 %v10130, %v10127
    %v10218 = vpack.c.b16 %v10134, %v10131
    %v10219 = vpack.c.b16 %v10135, %v10132
    %v10220 = vpack.c.b16 %v10136, %v10133
    %v10221 = vpack.c.b16 %v10140, %v10137
    %v10222 = vpack.c.b16 %v10141, %v10138
    %v10223 = vpack.c.b16 %v10142, %v10139
    %v10224 = vpack.c.b16 %v10146, %v10143
    %v10225 = vpack.c.b16 %v10147, %v10144
    %v10226 = vpack.c.b16 %v10148, %v10145
    %v10227 = vpack.c.b16 %v10152, %v10149
    %v10228 = vpack.c.b16 %v10153, %v10150
    %v10229 = vpack.c.b16 %v10154, %v10151
    %v10230 = vpack.c.b16 %v10158, %v10155
    %v10231 = vpack.c.b16 %v10159, %v10156
    %v10232 = vpack.c.b16 %v10160, %v10157
    %10305 = vmatprep.subr.bf16.mxu0 %v10162
    %10306 = vmatpush1.bf16.msra.mxu0 %v10161
    %10307 = vmatprep.subr.bf16.mxu0 %v10165
    %10308 = vmatpush1.bf16.msra.mxu0 %v10164
    %10309 = vmatprep.subr.bf16.mxu0 %v10168
    %10310 = vmatpush1.bf16.msra.mxu0 %v10167
    %10311 = vmatprep.subr.bf16.mxu0 %v10171
    %10312 = vmatpush1.bf16.msra.mxu0 %v10170
    %10313 = vmatprep.subr.bf16.mxu0 %v10174
    %10314 = vmatpush1.bf16.msra.mxu0 %v10173
    %10315 = vmatprep.subr.bf16.mxu0 %v10177
    %10316 = vmatpush1.bf16.msra.mxu0 %v10176
    %10317 = vmatprep.subr.bf16.mxu0 %v10180
    %10318 = vmatpush1.bf16.msra.mxu0 %v10179
    %10319 = vmatprep.subr.bf16.mxu0 %v10183
    %10320 = vmatpush1.bf16.msra.mxu0 %v10182
    %10321 = vmatprep.subr.bf16.mxu0 %v10186
    %10322 = vmatpush1.bf16.msra.mxu0 %v10185
    %10323 = vmatprep.subr.bf16.mxu0 %v10189
    %10324 = vmatpush1.bf16.msra.mxu0 %v10188
    %10325 = vmatprep.subr.bf16.mxu0 %v10192
    %10326 = vmatpush1.bf16.msra.mxu0 %v10191
    %10327 = vmatprep.subr.bf16.mxu0 %v10195
    %10328 = vmatpush1.bf16.msra.mxu0 %v10194
    %10329 = vmatprep.subr.bf16.mxu0 %v10198
    %10330 = vmatpush1.bf16.msra.mxu0 %v10197
    %10331 = vmatprep.subr.bf16.mxu0 %v10201
    %10332 = vmatpush1.bf16.msra.mxu0 %v10200
    %10333 = vmatprep.subr.bf16.mxu0 %v10204
    %10334 = vmatpush1.bf16.msra.mxu0 %v10203
    %10335 = vmatprep.subr.bf16.mxu0 %v10207
    %10336 = vmatpush1.bf16.msra.mxu0 %v10206
    %10337 = vmatprep.mubr.bf16.mxu0 %v9761
    %10338 = vmatmul.mubr.bf16.gmra.mrb[0].mxu0 %v9760
    %v10339 = vpop.f32.mrb[0].mxu0
    %v10340 = vadd.f32 %v9909, %v10339
    %v10341 = vpop.f32.mrb[0].mxu0
    %v10342 = vadd.f32 %v9913, %v10341
    %v10343 = vpop.f32.mrb[0].mxu0
    %v10344 = vadd.f32 %v9909, %v10343
    %v10345 = vpop.f32.mrb[0].mxu0
    %v10346 = vadd.f32 %v9913, %v10345
    %10347 = vmatprep.mubr.bf16.mxu0 %v9764
    %10348 = vmatmul.mubr.bf16.gmra.mrb[0].mxu0 %v9763
    %v10349 = vpop.f32.mrb[0].mxu0
    %v10350 = vadd.f32 %v9909, %v10349
    %v10351 = vpop.f32.mrb[0].mxu0
    %v10352 = vadd.f32 %v9913, %v10351
    %v10353 = vpop.f32.mrb[0].mxu0
    %v10354 = vadd.f32 %v9909, %v10353
    %v10355 = vpop.f32.mrb[0].mxu0
    %v10356 = vadd.f32 %v9913, %v10355
    %10357 = vmatprep.mubr.bf16.mxu0 %v9767
    %10358 = vmatmul.mubr.bf16.gmra.mrb[0].mxu0 %v9766
    %v10359 = vpop.f32.mrb[0].mxu0
    %v10360 = vadd.f32 %v9909, %v10359
    %v10361 = vpop.f32.mrb[0].mxu0
    %v10362 = vadd.f32 %v9913, %v10361
    %v10363 = vpop.f32.mrb[0].mxu0
    %v10364 = vadd.f32 %v9909, %v10363
    %v10365 = vpop.f32.mrb[0].mxu0
    %v10366 = vadd.f32 %v9913, %v10365
    %10367 = vmatprep.mubr.bf16.mxu0 %v9770
    %10368 = vmatmul.mubr.bf16.gmra.mrb[0].mxu0 %v9769
    %v10369 = vpop.f32.mrb[0].mxu0
    %v10370 = vadd.f32 %v9909, %v10369
    %v10371 = vpop.f32.mrb[0].mxu0
    %v10372 = vadd.f32 %v9913, %v10371
    %v10373 = vpop.f32.mrb[0].mxu0
    %v10374 = vadd.f32 %v9909, %v10373
    %v10375 = vpop.f32.mrb[0].mxu0
    %v10376 = vadd.f32 %v9913, %v10375
    %10377 = vmatprep.mubr.bf16.mxu0 %v9773
    %10378 = vmatmul.mubr.bf16.gmra.mrb[0].mxu0 %v9772
    %v10379 = vpop.f32.mrb[0].mxu0
    %v10380 = vadd.f32 %v9909, %v10379
    %v10381 = vpop.f32.mrb[0].mxu0
    %v10382 = vadd.f32 %v9913, %v10381
    %v10383 = vpop.f32.mrb[0].mxu0
    %v10384 = vadd.f32 %v9909, %v10383
    %v10385 = vpop.f32.mrb[0].mxu0
    %v10386 = vadd.f32 %v9913, %v10385
    %10387 = vmatprep.mubr.bf16.mxu0 %v9776
    %10388 = vmatmul.mubr.bf16.gmra.mrb[0].mxu0 %v9775
    %v10389 = vpop.f32.mrb[0].mxu0
    %v10390 = vadd.f32 %v9909, %v10389
    %v10391 = vpop.f32.mrb[0].mxu0
    %v10392 = vadd.f32 %v9913, %v10391
    %v10393 = vpop.f32.mrb[0].mxu0
    %v10394 = vadd.f32 %v9909, %v10393
    %v10395 = vpop.f32.mrb[0].mxu0
    %v10396 = vadd.f32 %v9913, %v10395
    %10397 = vmatprep.mubr.bf16.mxu0 %v9779
    %10398 = vmatmul.mubr.bf16.gmra.mrb[0].mxu0 %v9778
    %v10399 = vpop.f32.mrb[0].mxu0
    %v10400 = vadd.f32 %v9909, %v10399
    %v10401 = vpop.f32.mrb[0].mxu0
    %v10402 = vadd.f32 %v9913, %v10401
    %v10403 = vpop.f32.mrb[0].mxu0
    %v10404 = vadd.f32 %v9909, %v10403
    %v10405 = vpop.f32.mrb[0].mxu0
    %v10406 = vadd.f32 %v9913, %v10405
    %10407 = vmatprep.mubr.bf16.mxu0 %v9782
    %10408 = vmatmul.mubr.bf16.gmra.mrb[0].mxu0 %v9781
    %v10409 = vpop.f32.mrb[0].mxu0
    %v10410 = vadd.f32 %v9909, %v10409
    %v10411 = vpop.f32.mrb[0].mxu0
    %v10412 = vadd.f32 %v9913, %v10411
    %v10413 = vpop.f32.mrb[0].mxu0
    %v10414 = vadd.f32 %v9909, %v10413
    %v10415 = vpop.f32.mrb[0].mxu0
    %v10416 = vadd.f32 %v9913, %v10415
    %10417 = vmatprep.mubr.bf16.mxu0 %v9785
    %10418 = vmatmul.mubr.bf16.gmra.mrb[0].mxu0 %v9784
    %v10419 = vpop.f32.mrb[0].mxu0
    %v10420 = vadd.f32 %v9909, %v10419
    %v10421 = vpop.f32.mrb[0].mxu0
    %v10422 = vadd.f32 %v9913, %v10421
    %v10423 = vpop.f32.mrb[0].mxu0
    %v10424 = vadd.f32 %v9909, %v10423
    %v10425 = vpop.f32.mrb[0].mxu0
    %v10426 = vadd.f32 %v9913, %v10425
    %10427 = vmatprep.mubr.bf16.mxu0 %v9788
    %10428 = vmatmul.mubr.bf16.gmra.mrb[0].mxu0 %v9787
    %v10429 = vpop.f32.mrb[0].mxu0
    %v10430 = vadd.f32 %v9909, %v10429
    %v10431 = vpop.f32.mrb[0].mxu0
    %v10432 = vadd.f32 %v9913, %v10431
    %v10433 = vpop.f32.mrb[0].mxu0
    %v10434 = vadd.f32 %v9909, %v10433
    %v10435 = vpop.f32.mrb[0].mxu0
    %v10436 = vadd.f32 %v9913, %v10435
    %10437 = vmatprep.mubr.bf16.mxu0 %v9791
    %10438 = vmatmul.mubr.bf16.gmra.mrb[0].mxu0 %v9790
    %v10439 = vpop.f32.mrb[0].mxu0
    %v10440 = vadd.f32 %v9909, %v10439
    %v10441 = vpop.f32.mrb[0].mxu0
    %v10442 = vadd.f32 %v9913, %v10441
    %v10443 = vpop.f32.mrb[0].mxu0
    %v10444 = vadd.f32 %v9909, %v10443
    %v10445 = vpop.f32.mrb[0].mxu0
    %v10446 = vadd.f32 %v9913, %v10445
    %10447 = vmatprep.mubr.bf16.mxu0 %v9794
    %10448 = vmatmul.mubr.bf16.gmra.mrb[0].mxu0 %v9793
    %v10449 = vpop.f32.mrb[0].mxu0
    %v10450 = vadd.f32 %v9909, %v10449
    %v10451 = vpop.f32.mrb[0].mxu0
    %v10452 = vadd.f32 %v9913, %v10451
    %v10453 = vpop.f32.mrb[0].mxu0
    %v10454 = vadd.f32 %v9909, %v10453
    %v10455 = vpop.f32.mrb[0].mxu0
    %v10456 = vadd.f32 %v9913, %v10455
    %10457 = vmatprep.mubr.bf16.mxu0 %v9797
    %10458 = vmatmul.mubr.bf16.gmra.mrb[0].mxu0 %v9796
    %v10459 = vpop.f32.mrb[0].mxu0
    %v10460 = vadd.f32 %v9909, %v10459
    %v10461 = vpop.f32.mrb[0].mxu0
    %v10462 = vadd.f32 %v9913, %v10461
    %v10463 = vpop.f32.mrb[0].mxu0
    %v10464 = vadd.f32 %v9909, %v10463
    %v10465 = vpop.f32.mrb[0].mxu0
    %v10466 = vadd.f32 %v9913, %v10465
    %10467 = vmatprep.mubr.bf16.mxu0 %v9800
    %10468 = vmatmul.mubr.bf16.gmra.mrb[0].mxu0 %v9799
    %v10469 = vpop.f32.mrb[0].mxu0
    %v10470 = vadd.f32 %v9909, %v10469
    %v10471 = vpop.f32.mrb[0].mxu0
    %v10472 = vadd.f32 %v9913, %v10471
    %v10473 = vpop.f32.mrb[0].mxu0
    %v10474 = vadd.f32 %v9909, %v10473
    %v10475 = vpop.f32.mrb[0].mxu0
    %v10476 = vadd.f32 %v9913, %v10475
    %10477 = vmatprep.mubr.bf16.mxu0 %v9803
    %10478 = vmatmul.mubr.bf16.gmra.mrb[0].mxu0 %v9802
    %v10479 = vpop.f32.mrb[0].mxu0
    %v10480 = vadd.f32 %v9909, %v10479
    %v10481 = vpop.f32.mrb[0].mxu0
    %v10482 = vadd.f32 %v9913, %v10481
    %v10483 = vpop.f32.mrb[0].mxu0
    %v10484 = vadd.f32 %v9909, %v10483
    %v10485 = vpop.f32.mrb[0].mxu0
    %v10486 = vadd.f32 %v9913, %v10485
    %10487 = vmatprep.mubr.bf16.mxu0 %v9806
    %10488 = vmatmul.mubr.bf16.gmra.mrb[0].mxu0 %v9805
    %v10489 = vpop.f32.mrb[0].mxu0
    %v10490 = vadd.f32 %v9909, %v10489
    %v10491 = vpop.f32.mrb[0].mxu0
    %v10492 = vadd.f32 %v9913, %v10491
    %v10493 = vpop.f32.mrb[0].mxu0
    %v10494 = vadd.f32 %v9909, %v10493
    %v10495 = vpop.f32.mrb[0].mxu0
    %v10496 = vadd.f32 %v9913, %v10495
    %10497 = vdwg.mxu0
    %10498 = vmatprep.subr.bf16.mxu0 %v10210
    %10499 = vmatpush1.bf16.msra.mxu0 %v10209
    %10500 = vmatprep.subr.bf16.mxu0 %v10213
    %10501 = vmatpush1.bf16.msra.mxu0 %v10212
    %10502 = vmatprep.subr.bf16.mxu0 %v10216
    %10503 = vmatpush1.bf16.msra.mxu0 %v10215
    %10504 = vmatprep.subr.bf16.mxu0 %v10219
    %10505 = vmatpush1.bf16.msra.mxu0 %v10218
    %10506 = vmatprep.subr.bf16.mxu0 %v10222
    %10507 = vmatpush1.bf16.msra.mxu0 %v10221
    %10508 = vmatprep.subr.bf16.mxu0 %v10225
    %10509 = vmatpush1.bf16.msra.mxu0 %v10224
    %10510 = vmatprep.subr.bf16.mxu0 %v10228
    %10511 = vmatpush1.bf16.msra.mxu0 %v10227
    %10512 = vmatprep.subr.bf16.mxu0 %v10231
    %10513 = vmatpush1.bf16.msra.mxu0 %v10230
    %10514 = vmatprep.subr.bf16.mxu0 0
    %10515 = vmatpush1.bf16.msra.mxu0 0
    %10516 = vmatprep.subr.bf16.mxu0 0
    %10517 = vmatpush1.bf16.msra.mxu0 0
    %10518 = vmatprep.subr.bf16.mxu0 0
    %10519 = vmatpush1.bf16.msra.mxu0 0
    %10520 = vmatprep.subr.bf16.mxu0 0
    %10521 = vmatpush1.bf16.msra.mxu0 0
    %10522 = vmatprep.subr.bf16.mxu0 0
    %10523 = vmatpush1.bf16.msra.mxu0 0
    %10524 = vmatprep.subr.bf16.mxu0 0
    %10525 = vmatpush1.bf16.msra.mxu0 0
    %10526 = vmatprep.subr.bf16.mxu0 0
    %10527 = vmatpush1.bf16.msra.mxu0 0
    %10528 = vmatprep.subr.bf16.mxu0 0
    %10529 = vmatpush1.bf16.msra.mxu0 0
    %10530 = vmatprep.mubr.bf16.mxu0 0
    %10531 = vmatmul.mubr.bf16.gmra.mrb[0].mxu0 %v9762
    %v10532 = vpop.f32.mrb[0].mxu0
    %v10533 = vadd.f32 %v10340, %v10532
    %v10534 = vpop.f32.mrb[0].mxu0
    %v10535 = vadd.f32 %v10342, %v10534
    %v10536 = vpop.f32.mrb[0].mxu0
    %v10537 = vadd.f32 %v10344, %v10536
    %v10538 = vpop.f32.mrb[0].mxu0
    %v10539 = vadd.f32 %v10346, %v10538
    %10540 = vmatprep.mubr.bf16.mxu0 0
    %10541 = vmatmul.mubr.bf16.gmra.mrb[0].mxu0 %v9765
    %v10542 = vpop.f32.mrb[0].mxu0
    %v10543 = vadd.f32 %v10350, %v10542
    %v10544 = vpop.f32.mrb[0].mxu0
    %v10545 = vadd.f32 %v10352, %v10544
    %v10546 = vpop.f32.mrb[0].mxu0
    %v10547 = vadd.f32 %v10354, %v10546
    %v10548 = vpop.f32.mrb[0].mxu0
    %v10549 = vadd.f32 %v10356, %v10548
    %10550 = vmatprep.mubr.bf16.mxu0 0
    %10551 = vmatmul.mubr.bf16.gmra.mrb[0].mxu0 %v9768
    %v10552 = vpop.f32.mrb[0].mxu0
    %v10553 = vadd.f32 %v10360, %v10552
    %v10554 = vpop.f32.mrb[0].mxu0
    %v10555 = vadd.f32 %v10362, %v10554
    %v10556 = vpop.f32.mrb[0].mxu0
    %v10557 = vadd.f32 %v10364, %v10556
    %v10558 = vpop.f32.mrb[0].mxu0
    %v10559 = vadd.f32 %v10366, %v10558
    %10560 = vmatprep.mubr.bf16.mxu0 0
    %10561 = vmatmul.mubr.bf16.gmra.mrb[0].mxu0 %v9771
    %v10562 = vpop.f32.mrb[0].mxu0
    %v10563 = vadd.f32 %v10370, %v10562
    %v10564 = vpop.f32.mrb[0].mxu0
    %v10565 = vadd.f32 %v10372, %v10564
    %v10566 = vpop.f32.mrb[0].mxu0
    %v10567 = vadd.f32 %v10374, %v10566
    %v10568 = vpop.f32.mrb[0].mxu0
    %v10569 = vadd.f32 %v10376, %v10568
    %10570 = vmatprep.mubr.bf16.mxu0 0
    %10571 = vmatmul.mubr.bf16.gmra.mrb[0].mxu0 %v9774
    %v10572 = vpop.f32.mrb[0].mxu0
    %v10573 = vadd.f32 %v10380, %v10572
    %v10574 = vpop.f32.mrb[0].mxu0
    %v10575 = vadd.f32 %v10382, %v10574
    %v10576 = vpop.f32.mrb[0].mxu0
    %v10577 = vadd.f32 %v10384, %v10576
    %v10578 = vpop.f32.mrb[0].mxu0
    %v10579 = vadd.f32 %v10386, %v10578
    %10580 = vmatprep.mubr.bf16.mxu0 0
    %10581 = vmatmul.mubr.bf16.gmra.mrb[0].mxu0 %v9777
    %v10582 = vpop.f32.mrb[0].mxu0
    %v10583 = vadd.f32 %v10390, %v10582
    %v10584 = vpop.f32.mrb[0].mxu0
    %v10585 = vadd.f32 %v10392, %v10584
    %v10586 = vpop.f32.mrb[0].mxu0
    %v10587 = vadd.f32 %v10394, %v10586
    %v10588 = vpop.f32.mrb[0].mxu0
    %v10589 = vadd.f32 %v10396, %v10588
    %10590 = vmatprep.mubr.bf16.mxu0 0
    %10591 = vmatmul.mubr.bf16.gmra.mrb[0].mxu0 %v9780
    %v10592 = vpop.f32.mrb[0].mxu0
    %v10593 = vadd.f32 %v10400, %v10592
    %v10594 = vpop.f32.mrb[0].mxu0
    %v10595 = vadd.f32 %v10402, %v10594
    %v10596 = vpop.f32.mrb[0].mxu0
    %v10597 = vadd.f32 %v10404, %v10596
    %v10598 = vpop.f32.mrb[0].mxu0
    %v10599 = vadd.f32 %v10406, %v10598
    %10600 = vmatprep.mubr.bf16.mxu0 0
    %10601 = vmatmul.mubr.bf16.gmra.mrb[0].mxu0 %v9783
    %v10602 = vpop.f32.mrb[0].mxu0
    %v10603 = vadd.f32 %v10410, %v10602
    %v10604 = vpop.f32.mrb[0].mxu0
    %v10605 = vadd.f32 %v10412, %v10604
    %v10606 = vpop.f32.mrb[0].mxu0
    %v10607 = vadd.f32 %v10414, %v10606
    %v10608 = vpop.f32.mrb[0].mxu0
    %v10609 = vadd.f32 %v10416, %v10608
    %10610 = vmatprep.mubr.bf16.mxu0 0
    %10611 = vmatmul.mubr.bf16.gmra.mrb[0].mxu0 %v9786
    %v10612 = vpop.f32.mrb[0].mxu0
    %v10613 = vadd.f32 %v10420, %v10612
    %v10614 = vpop.f32.mrb[0].mxu0
    %v10615 = vadd.f32 %v10422, %v10614
    %v10616 = vpop.f32.mrb[0].mxu0
    %v10617 = vadd.f32 %v10424, %v10616
    %v10618 = vpop.f32.mrb[0].mxu0
    %v10619 = vadd.f32 %v10426, %v10618
    %10620 = vmatprep.mubr.bf16.mxu0 0
    %10621 = vmatmul.mubr.bf16.gmra.mrb[0].mxu0 %v9789
    %v10622 = vpop.f32.mrb[0].mxu0
    %v10623 = vadd.f32 %v10430, %v10622
    %v10624 = vpop.f32.mrb[0].mxu0
    %v10625 = vadd.f32 %v10432, %v10624
    %v10626 = vpop.f32.mrb[0].mxu0
    %v10627 = vadd.f32 %v10434, %v10626
    %v10628 = vpop.f32.mrb[0].mxu0
    %v10629 = vadd.f32 %v10436, %v10628
    %10630 = vmatprep.mubr.bf16.mxu0 0
    %10631 = vmatmul.mubr.bf16.gmra.mrb[0].mxu0 %v9792
    %v10632 = vpop.f32.mrb[0].mxu0
    %v10633 = vadd.f32 %v10440, %v10632
    %v10634 = vpop.f32.mrb[0].mxu0
    %v10635 = vadd.f32 %v10442, %v10634
    %v10636 = vpop.f32.mrb[0].mxu0
    %v10637 = vadd.f32 %v10444, %v10636
    %v10638 = vpop.f32.mrb[0].mxu0
    %v10639 = vadd.f32 %v10446, %v10638
    %10640 = vmatprep.mubr.bf16.mxu0 0
    %10641 = vmatmul.mubr.bf16.gmra.mrb[0].mxu0 %v9795
    %v10642 = vpop.f32.mrb[0].mxu0
    %v10643 = vadd.f32 %v10450, %v10642
    %v10644 = vpop.f32.mrb[0].mxu0
    %v10645 = vadd.f32 %v10452, %v10644
    %v10646 = vpop.f32.mrb[0].mxu0
    %v10647 = vadd.f32 %v10454, %v10646
    %v10648 = vpop.f32.mrb[0].mxu0
    %v10649 = vadd.f32 %v10456, %v10648
    %10650 = vmatprep.mubr.bf16.mxu0 0
    %10651 = vmatmul.mubr.bf16.gmra.mrb[0].mxu0 %v9798
    %v10652 = vpop.f32.mrb[0].mxu0
    %v10653 = vadd.f32 %v10460, %v10652
    %v10654 = vpop.f32.mrb[0].mxu0
    %v10655 = vadd.f32 %v10462, %v10654
    %v10656 = vpop.f32.mrb[0].mxu0
    %v10657 = vadd.f32 %v10464, %v10656
    %v10658 = vpop.f32.mrb[0].mxu0
    %v10659 = vadd.f32 %v10466, %v10658
    %10660 = vmatprep.mubr.bf16.mxu0 0
    %10661 = vmatmul.mubr.bf16.gmra.mrb[0].mxu0 %v9801
    %v10662 = vpop.f32.mrb[0].mxu0
    %v10663 = vadd.f32 %v10470, %v10662
    %v10664 = vpop.f32.mrb[0].mxu0
    %v10665 = vadd.f32 %v10472, %v10664
    %v10666 = vpop.f32.mrb[0].mxu0
    %v10667 = vadd.f32 %v10474, %v10666
    %v10668 = vpop.f32.mrb[0].mxu0
    %v10669 = vadd.f32 %v10476, %v10668
    %10670 = vmatprep.mubr.bf16.mxu0 0
    %10671 = vmatmul.mubr.bf16.gmra.mrb[0].mxu0 %v9804
    %v10672 = vpop.f32.mrb[0].mxu0
    %v10673 = vadd.f32 %v10480, %v10672
    %v10674 = vpop.f32.mrb[0].mxu0
    %v10675 = vadd.f32 %v10482, %v10674
    %v10676 = vpop.f32.mrb[0].mxu0
    %v10677 = vadd.f32 %v10484, %v10676
    %v10678 = vpop.f32.mrb[0].mxu0
    %v10679 = vadd.f32 %v10486, %v10678
    %10680 = vmatprep.mubr.bf16.mxu0 0
    %10681 = vmatmul.mubr.bf16.gmra.mrb[0].mxu0 %v9807
    %v10682 = vpop.f32.mrb[0].mxu0
    %v10683 = vadd.f32 %v10490, %v10682
    %v10684 = vpop.f32.mrb[0].mxu0
    %v10685 = vadd.f32 %v10492, %v10684
    %v10686 = vpop.f32.mrb[0].mxu0
    %v10687 = vadd.f32 %v10494, %v10686
    %v10688 = vpop.f32.mrb[0].mxu0
    %v10689 = vadd.f32 %v10496, %v10688
    %10690 = vdwg.mxu0
    %10691 = vmatprep.subr.bf16.mxu0 0
    %10692 = vmatpush1.bf16.msra.mxu0 %v10163
    %10693 = vmatprep.subr.bf16.mxu0 0
    %10694 = vmatpush1.bf16.msra.mxu0 %v10166
    %10695 = vmatprep.subr.bf16.mxu0 0
    %10696 = vmatpush1.bf16.msra.mxu0 %v10169
    %10697 = vmatprep.subr.bf16.mxu0 0
    %10698 = vmatpush1.bf16.msra.mxu0 %v10172
    %10699 = vmatprep.subr.bf16.mxu0 0
    %10700 = vmatpush1.bf16.msra.mxu0 %v10175
    %10701 = vmatprep.subr.bf16.mxu0 0
    %10702 = vmatpush1.bf16.msra.mxu0 %v10178
    %10703 = vmatprep.subr.bf16.mxu0 0
    %10704 = vmatpush1.bf16.msra.mxu0 %v10181
    %10705 = vmatprep.subr.bf16.mxu0 0
    %10706 = vmatpush1.bf16.msra.mxu0 %v10184
    %10707 = vmatprep.subr.bf16.mxu0 0
    %10708 = vmatpush1.bf16.msra.mxu0 %v10187
    %10709 = vmatprep.subr.bf16.mxu0 0
    %10710 = vmatpush1.bf16.msra.mxu0 %v10190
    %10711 = vmatprep.subr.bf16.mxu0 0
    %10712 = vmatpush1.bf16.msra.mxu0 %v10193
    %10713 = vmatprep.subr.bf16.mxu0 0
    %10714 = vmatpush1.bf16.msra.mxu0 %v10196
    %10715 = vmatprep.subr.bf16.mxu0 0
    %10716 = vmatpush1.bf16.msra.mxu0 %v10199
    %10717 = vmatprep.subr.bf16.mxu0 0
    %10718 = vmatpush1.bf16.msra.mxu0 %v10202
    %10719 = vmatprep.subr.bf16.mxu0 0
    %10720 = vmatpush1.bf16.msra.mxu0 %v10205
    %10721 = vmatprep.subr.bf16.mxu0 0
    %10722 = vmatpush1.bf16.msra.mxu0 %v10208
    %10723 = vmatprep.mubr.bf16.mxu0 %v9761
    %10724 = vmatmul.mubr.bf16.gmra.mrb[0].mxu0 %v9760
    %v10725 = vpop.f32.mrb[0].mxu0
    %v10726 = vadd.f32 %v9917, %v10725
    %v10727 = vpop.f32.mrb[0].mxu0
    %v10728 = vpop.f32.mrb[0].mxu0
    %v10729 = vadd.f32 %v9917, %v10728
    %v10730 = vpop.f32.mrb[0].mxu0
    %10731 = vmatprep.mubr.bf16.mxu0 %v9764
    %10732 = vmatmul.mubr.bf16.gmra.mrb[0].mxu0 %v9763
    %v10733 = vpop.f32.mrb[0].mxu0
    %v10734 = vadd.f32 %v9917, %v10733
    %v10735 = vpop.f32.mrb[0].mxu0
    %v10736 = vpop.f32.mrb[0].mxu0
    %v10737 = vadd.f32 %v9917, %v10736
    %v10738 = vpop.f32.mrb[0].mxu0
    %10739 = vmatprep.mubr.bf16.mxu0 %v9767
    %10740 = vmatmul.mubr.bf16.gmra.mrb[0].mxu0 %v9766
    %v10741 = vpop.f32.mrb[0].mxu0
    %v10742 = vadd.f32 %v9917, %v10741
    %v10743 = vpop.f32.mrb[0].mxu0
    %v10744 = vpop.f32.mrb[0].mxu0
    %v10745 = vadd.f32 %v9917, %v10744
    %v10746 = vpop.f32.mrb[0].mxu0
    %10747 = vmatprep.mubr.bf16.mxu0 %v9770
    %10748 = vmatmul.mubr.bf16.gmra.mrb[0].mxu0 %v9769
    %v10749 = vpop.f32.mrb[0].mxu0
    %v10750 = vadd.f32 %v9917, %v10749
    %v10751 = vpop.f32.mrb[0].mxu0
    %v10752 = vpop.f32.mrb[0].mxu0
    %v10753 = vadd.f32 %v9917, %v10752
    %v10754 = vpop.f32.mrb[0].mxu0
    %10755 = vmatprep.mubr.bf16.mxu0 %v9773
    %10756 = vmatmul.mubr.bf16.gmra.mrb[0].mxu0 %v9772
    %v10757 = vpop.f32.mrb[0].mxu0
    %v10758 = vadd.f32 %v9917, %v10757
    %v10759 = vpop.f32.mrb[0].mxu0
    %v10760 = vpop.f32.mrb[0].mxu0
    %v10761 = vadd.f32 %v9917, %v10760
    %v10762 = vpop.f32.mrb[0].mxu0
    %10763 = vmatprep.mubr.bf16.mxu0 %v9776
    %10764 = vmatmul.mubr.bf16.gmra.mrb[0].mxu0 %v9775
    %v10765 = vpop.f32.mrb[0].mxu0
    %v10766 = vadd.f32 %v9917, %v10765
    %v10767 = vpop.f32.mrb[0].mxu0
    %v10768 = vpop.f32.mrb[0].mxu0
    %v10769 = vadd.f32 %v9917, %v10768
    %v10770 = vpop.f32.mrb[0].mxu0
    %10771 = vmatprep.mubr.bf16.mxu0 %v9779
    %10772 = vmatmul.mubr.bf16.gmra.mrb[0].mxu0 %v9778
    %v10773 = vpop.f32.mrb[0].mxu0
    %v10774 = vadd.f32 %v9917, %v10773
    %v10775 = vpop.f32.mrb[0].mxu0
    %v10776 = vpop.f32.mrb[0].mxu0
    %v10777 = vadd.f32 %v9917, %v10776
    %v10778 = vpop.f32.mrb[0].mxu0
    %10779 = vmatprep.mubr.bf16.mxu0 %v9782
    %10780 = vmatmul.mubr.bf16.gmra.mrb[0].mxu0 %v9781
    %v10781 = vpop.f32.mrb[0].mxu0
    %v10782 = vadd.f32 %v9917, %v10781
    %v10783 = vpop.f32.mrb[0].mxu0
    %v10784 = vpop.f32.mrb[0].mxu0
    %v10785 = vadd.f32 %v9917, %v10784
    %v10786 = vpop.f32.mrb[0].mxu0
    %10787 = vmatprep.mubr.bf16.mxu0 %v9785
    %10788 = vmatmul.mubr.bf16.gmra.mrb[0].mxu0 %v9784
    %v10789 = vpop.f32.mrb[0].mxu0
    %v10790 = vadd.f32 %v9917, %v10789
    %v10791 = vpop.f32.mrb[0].mxu0
    %v10792 = vpop.f32.mrb[0].mxu0
    %v10793 = vadd.f32 %v9917, %v10792
    %v10794 = vpop.f32.mrb[0].mxu0
    %10795 = vmatprep.mubr.bf16.mxu0 %v9788
    %10796 = vmatmul.mubr.bf16.gmra.mrb[0].mxu0 %v9787
    %v10797 = vpop.f32.mrb[0].mxu0
    %v10798 = vadd.f32 %v9917, %v10797
    %v10799 = vpop.f32.mrb[0].mxu0
    %v10800 = vpop.f32.mrb[0].mxu0
    %v10801 = vadd.f32 %v9917, %v10800
    %v10802 = vpop.f32.mrb[0].mxu0
    %10803 = vmatprep.mubr.bf16.mxu0 %v9791
    %10804 = vmatmul.mubr.bf16.gmra.mrb[0].mxu0 %v9790
    %v10805 = vpop.f32.mrb[0].mxu0
    %v10806 = vadd.f32 %v9917, %v10805
    %v10807 = vpop.f32.mrb[0].mxu0
    %v10808 = vpop.f32.mrb[0].mxu0
    %v10809 = vadd.f32 %v9917, %v10808
    %v10810 = vpop.f32.mrb[0].mxu0
    %10811 = vmatprep.mubr.bf16.mxu0 %v9794
    %10812 = vmatmul.mubr.bf16.gmra.mrb[0].mxu0 %v9793
    %v10813 = vpop.f32.mrb[0].mxu0
    %v10814 = vadd.f32 %v9917, %v10813
    %v10815 = vpop.f32.mrb[0].mxu0
    %v10816 = vpop.f32.mrb[0].mxu0
    %v10817 = vadd.f32 %v9917, %v10816
    %v10818 = vpop.f32.mrb[0].mxu0
    %10819 = vmatprep.mubr.bf16.mxu0 %v9797
    %10820 = vmatmul.mubr.bf16.gmra.mrb[0].mxu0 %v9796
    %v10821 = vpop.f32.mrb[0].mxu0
    %v10822 = vadd.f32 %v9917, %v10821
    %v10823 = vpop.f32.mrb[0].mxu0
    %v10824 = vpop.f32.mrb[0].mxu0
    %v10825 = vadd.f32 %v9917, %v10824
    %v10826 = vpop.f32.mrb[0].mxu0
    %10827 = vmatprep.mubr.bf16.mxu0 %v9800
    %10828 = vmatmul.mubr.bf16.gmra.mrb[0].mxu0 %v9799
    %v10829 = vpop.f32.mrb[0].mxu0
    %v10830 = vadd.f32 %v9917, %v10829
    %v10831 = vpop.f32.mrb[0].mxu0
    %v10832 = vpop.f32.mrb[0].mxu0
    %v10833 = vadd.f32 %v9917, %v10832
    %v10834 = vpop.f32.mrb[0].mxu0
    %10835 = vmatprep.mubr.bf16.mxu0 %v9803
    %10836 = vmatmul.mubr.bf16.gmra.mrb[0].mxu0 %v9802
    %v10837 = vpop.f32.mrb[0].mxu0
    %v10838 = vadd.f32 %v9917, %v10837
    %v10839 = vpop.f32.mrb[0].mxu0
    %v10840 = vpop.f32.mrb[0].mxu0
    %v10841 = vadd.f32 %v9917, %v10840
    %v10842 = vpop.f32.mrb[0].mxu0
    %10843 = vmatprep.mubr.bf16.mxu0 %v9806
    %10844 = vmatmul.mubr.bf16.gmra.mrb[0].mxu0 %v9805
    %v10845 = vpop.f32.mrb[0].mxu0
    %v10846 = vadd.f32 %v9917, %v10845
    %v10847 = vpop.f32.mrb[0].mxu0
    %v10848 = vpop.f32.mrb[0].mxu0
    %v10849 = vadd.f32 %v9917, %v10848
    %v10850 = vpop.f32.mrb[0].mxu0
    %10851 = vdwg.mxu0
    %10852 = vmatprep.subr.bf16.mxu0 0
    %10853 = vmatpush1.bf16.msra.mxu0 %v10211
    %10854 = vmatprep.subr.bf16.mxu0 0
    %10855 = vmatpush1.bf16.msra.mxu0 %v10214
    %10856 = vmatprep.subr.bf16.mxu0 0
    %10857 = vmatpush1.bf16.msra.mxu0 %v10217
    %10858 = vmatprep.subr.bf16.mxu0 0
    %10859 = vmatpush1.bf16.msra.mxu0 %v10220
    %10860 = vmatprep.subr.bf16.mxu0 0
    %10861 = vmatpush1.bf16.msra.mxu0 %v10223
    %10862 = vmatprep.subr.bf16.mxu0 0
    %10863 = vmatpush1.bf16.msra.mxu0 %v10226
    %10864 = vmatprep.subr.bf16.mxu0 0
    %10865 = vmatpush1.bf16.msra.mxu0 %v10229
    %10866 = vmatprep.subr.bf16.mxu0 0
    %10867 = vmatpush1.bf16.msra.mxu0 %v10232
    %10868 = vmatprep.subr.bf16.mxu0 0
    %10869 = vmatpush1.bf16.msra.mxu0 0
    %10870 = vmatprep.subr.bf16.mxu0 0
    %10871 = vmatpush1.bf16.msra.mxu0 0
    %10872 = vmatprep.subr.bf16.mxu0 0
    %10873 = vmatpush1.bf16.msra.mxu0 0
    %10874 = vmatprep.subr.bf16.mxu0 0
    %10875 = vmatpush1.bf16.msra.mxu0 0
    %10876 = vmatprep.subr.bf16.mxu0 0
    %10877 = vmatpush1.bf16.msra.mxu0 0
    %10878 = vmatprep.subr.bf16.mxu0 0
    %10879 = vmatpush1.bf16.msra.mxu0 0
    %10880 = vmatprep.subr.bf16.mxu0 0
    %10881 = vmatpush1.bf16.msra.mxu0 0
    %10882 = vmatprep.subr.bf16.mxu0 0
    %10883 = vmatpush1.bf16.msra.mxu0 0
    %10884 = vmatprep.mubr.bf16.mxu0 0
    %10885 = vmatmul.mubr.bf16.gmra.mrb[0].mxu0 %v9762
    %v10886 = vpop.f32.mrb[0].mxu0
    %v10887 = vadd.f32 %v10726, %v10886
    %v10888 = vpop.f32.mrb[0].mxu0
    %v10889 = vpop.f32.mrb[0].mxu0
    %v10890 = vadd.f32 %v10729, %v10889
    %v10891 = vpop.f32.mrb[0].mxu0
    %10892 = vmatprep.mubr.bf16.mxu0 0
    %10893 = vmatmul.mubr.bf16.gmra.mrb[0].mxu0 %v9765
    %v10894 = vpop.f32.mrb[0].mxu0
    %v10895 = vadd.f32 %v10734, %v10894
    %v10896 = vpop.f32.mrb[0].mxu0
    %v10897 = vpop.f32.mrb[0].mxu0
    %v10898 = vadd.f32 %v10737, %v10897
    %v10899 = vpop.f32.mrb[0].mxu0
    %10900 = vmatprep.mubr.bf16.mxu0 0
    %10901 = vmatmul.mubr.bf16.gmra.mrb[0].mxu0 %v9768
    %v10902 = vpop.f32.mrb[0].mxu0
    %v10903 = vadd.f32 %v10742, %v10902
    %v10904 = vpop.f32.mrb[0].mxu0
    %v10905 = vpop.f32.mrb[0].mxu0
    %v10906 = vadd.f32 %v10745, %v10905
    %v10907 = vpop.f32.mrb[0].mxu0
    %10908 = vmatprep.mubr.bf16.mxu0 0
    %10909 = vmatmul.mubr.bf16.gmra.mrb[0].mxu0 %v9771
    %v10910 = vpop.f32.mrb[0].mxu0
    %v10911 = vadd.f32 %v10750, %v10910
    %v10912 = vpop.f32.mrb[0].mxu0
    %v10913 = vpop.f32.mrb[0].mxu0
    %v10914 = vadd.f32 %v10753, %v10913
    %v10915 = vpop.f32.mrb[0].mxu0
    %10916 = vmatprep.mubr.bf16.mxu0 0
    %10917 = vmatmul.mubr.bf16.gmra.mrb[0].mxu0 %v9774
    %v10918 = vpop.f32.mrb[0].mxu0
    %v10919 = vadd.f32 %v10758, %v10918
    %v10920 = vpop.f32.mrb[0].mxu0
    %v10921 = vpop.f32.mrb[0].mxu0
    %v10922 = vadd.f32 %v10761, %v10921
    %v10923 = vpop.f32.mrb[0].mxu0
    %10924 = vmatprep.mubr.bf16.mxu0 0
    %10925 = vmatmul.mubr.bf16.gmra.mrb[0].mxu0 %v9777
    %v10926 = vpop.f32.mrb[0].mxu0
    %v10927 = vadd.f32 %v10766, %v10926
    %v10928 = vpop.f32.mrb[0].mxu0
    %v10929 = vpop.f32.mrb[0].mxu0
    %v10930 = vadd.f32 %v10769, %v10929
    %v10931 = vpop.f32.mrb[0].mxu0
    %10932 = vmatprep.mubr.bf16.mxu0 0
    %10933 = vmatmul.mubr.bf16.gmra.mrb[0].mxu0 %v9780
    %v10934 = vpop.f32.mrb[0].mxu0
    %v10935 = vadd.f32 %v10774, %v10934
    %v10936 = vpop.f32.mrb[0].mxu0
    %v10937 = vpop.f32.mrb[0].mxu0
    %v10938 = vadd.f32 %v10777, %v10937
    %v10939 = vpop.f32.mrb[0].mxu0
    %10940 = vmatprep.mubr.bf16.mxu0 0
    %10941 = vmatmul.mubr.bf16.gmra.mrb[0].mxu0 %v9783
    %v10942 = vpop.f32.mrb[0].mxu0
    %v10943 = vadd.f32 %v10782, %v10942
    %v10944 = vpop.f32.mrb[0].mxu0
    %v10945 = vpop.f32.mrb[0].mxu0
    %v10946 = vadd.f32 %v10785, %v10945
    %v10947 = vpop.f32.mrb[0].mxu0
    %10948 = vmatprep.mubr.bf16.mxu0 0
    %10949 = vmatmul.mubr.bf16.gmra.mrb[0].mxu0 %v9786
    %v10950 = vpop.f32.mrb[0].mxu0
    %v10951 = vadd.f32 %v10790, %v10950
    %v10952 = vpop.f32.mrb[0].mxu0
    %v10953 = vpop.f32.mrb[0].mxu0
    %v10954 = vadd.f32 %v10793, %v10953
    %v10955 = vpop.f32.mrb[0].mxu0
    %10956 = vmatprep.mubr.bf16.mxu0 0
    %10957 = vmatmul.mubr.bf16.gmra.mrb[0].mxu0 %v9789
    %v10958 = vpop.f32.mrb[0].mxu0
    %v10959 = vadd.f32 %v10798, %v10958
    %v10960 = vpop.f32.mrb[0].mxu0
    %v10961 = vpop.f32.mrb[0].mxu0
    %v10962 = vadd.f32 %v10801, %v10961
    %v10963 = vpop.f32.mrb[0].mxu0
    %10964 = vmatprep.mubr.bf16.mxu0 0
    %10965 = vmatmul.mubr.bf16.gmra.mrb[0].mxu0 %v9792
    %v10966 = vpop.f32.mrb[0].mxu0
    %v10967 = vadd.f32 %v10806, %v10966
    %v10968 = vpop.f32.mrb[0].mxu0
    %v10969 = vpop.f32.mrb[0].mxu0
    %v10970 = vadd.f32 %v10809, %v10969
    %v10971 = vpop.f32.mrb[0].mxu0
    %10972 = vmatprep.mubr.bf16.mxu0 0
    %10973 = vmatmul.mubr.bf16.gmra.mrb[0].mxu0 %v9795
    %v10974 = vpop.f32.mrb[0].mxu0
    %v10975 = vadd.f32 %v10814, %v10974
    %v10976 = vpop.f32.mrb[0].mxu0
    %v10977 = vpop.f32.mrb[0].mxu0
    %v10978 = vadd.f32 %v10817, %v10977
    %v10979 = vpop.f32.mrb[0].mxu0
    %10980 = vmatprep.mubr.bf16.mxu0 0
    %10981 = vmatmul.mubr.bf16.gmra.mrb[0].mxu0 %v9798
    %v10982 = vpop.f32.mrb[0].mxu0
    %v10983 = vadd.f32 %v10822, %v10982
    %v10984 = vpop.f32.mrb[0].mxu0
    %v10985 = vpop.f32.mrb[0].mxu0
    %v10986 = vadd.f32 %v10825, %v10985
    %v10987 = vpop.f32.mrb[0].mxu0
    %10988 = vmatprep.mubr.bf16.mxu0 0
    %10989 = vmatmul.mubr.bf16.gmra.mrb[0].mxu0 %v9801
    %v10990 = vpop.f32.mrb[0].mxu0
    %v10991 = vadd.f32 %v10830, %v10990
    %v10992 = vpop.f32.mrb[0].mxu0
    %v10993 = vpop.f32.mrb[0].mxu0
    %v10994 = vadd.f32 %v10833, %v10993
    %v10995 = vpop.f32.mrb[0].mxu0
    %10996 = vmatprep.mubr.bf16.mxu0 0
    %10997 = vmatmul.mubr.bf16.gmra.mrb[0].mxu0 %v9804
    %v10998 = vpop.f32.mrb[0].mxu0
    %v10999 = vadd.f32 %v10838, %v10998
    %v11000 = vpop.f32.mrb[0].mxu0
    %v11001 = vpop.f32.mrb[0].mxu0
    %v11002 = vadd.f32 %v10841, %v11001
    %v11003 = vpop.f32.mrb[0].mxu0
    %11004 = vmatprep.mubr.bf16.mxu0 0
    %11005 = vmatmul.mubr.bf16.gmra.mrb[0].mxu0 %v9807
    %v11006 = vpop.f32.mrb[0].mxu0
    %v11007 = vadd.f32 %v10846, %v11006
    %v11008 = vpop.f32.mrb[0].mxu0
    %v11009 = vpop.f32.mrb[0].mxu0
    %v11010 = vadd.f32 %v10849, %v11009
    %v11011 = vpop.f32.mrb[0].mxu0
    %11012 = vdwg.mxu0
    %v11013 = vpack.c.bf16 %v10537, %v10533
    %v11014 = vpack.c.bf16 %v10539, %v10535
    %v11015 = vpack.c.bf16 %v10890, %v10887
    %v11016 = vpack.c.bf16 %v10547, %v10543
    %v11017 = vpack.c.bf16 %v10549, %v10545
    %v11018 = vpack.c.bf16 %v10898, %v10895
    %v11019 = vpack.c.bf16 %v10557, %v10553
    %v11020 = vpack.c.bf16 %v10559, %v10555
    %v11021 = vpack.c.bf16 %v10906, %v10903
    %v11022 = vpack.c.bf16 %v10567, %v10563
    %v11023 = vpack.c.bf16 %v10569, %v10565
    %v11024 = vpack.c.bf16 %v10914, %v10911
    %v11025 = vpack.c.bf16 %v10577, %v10573
    %v11026 = vpack.c.bf16 %v10579, %v10575
    %v11027 = vpack.c.bf16 %v10922, %v10919
    %v11028 = vpack.c.bf16 %v10587, %v10583
    %v11029 = vpack.c.bf16 %v10589, %v10585
    %v11030 = vpack.c.bf16 %v10930, %v10927
    %v11031 = vpack.c.bf16 %v10597, %v10593
    %v11032 = vpack.c.bf16 %v10599, %v10595
    %v11033 = vpack.c.bf16 %v10938, %v10935
    %v11034 = vpack.c.bf16 %v10607, %v10603
    %v11035 = vpack.c.bf16 %v10609, %v10605
    %v11036 = vpack.c.bf16 %v10946, %v10943
    %v11037 = vpack.c.bf16 %v10617, %v10613
    %v11038 = vpack.c.bf16 %v10619, %v10615
    %v11039 = vpack.c.bf16 %v10954, %v10951
    %v11040 = vpack.c.bf16 %v10627, %v10623
    %v11041 = vpack.c.bf16 %v10629, %v10625
    %v11042 = vpack.c.bf16 %v10962, %v10959
    %v11043 = vpack.c.bf16 %v10637, %v10633
    %v11044 = vpack.c.bf16 %v10639, %v10635
    %v11045 = vpack.c.bf16 %v10970, %v10967
    %v11046 = vpack.c.bf16 %v10647, %v10643
    %v11047 = vpack.c.bf16 %v10649, %v10645
    %v11048 = vpack.c.bf16 %v10978, %v10975
    %v11049 = vpack.c.bf16 %v10657, %v10653
    %v11050 = vpack.c.bf16 %v10659, %v10655
    %v11051 = vpack.c.bf16 %v10986, %v10983
    %v11052 = vpack.c.bf16 %v10667, %v10663
    %v11053 = vpack.c.bf16 %v10669, %v10665
    %v11054 = vpack.c.bf16 %v10994, %v10991
    %v11055 = vpack.c.bf16 %v10677, %v10673
    %v11056 = vpack.c.bf16 %v10679, %v10675
    %v11057 = vpack.c.bf16 %v11002, %v10999
    %v11058 = vpack.c.bf16 %v10687, %v10683
    %v11059 = vpack.c.bf16 %v10689, %v10685
    %v11060 = vpack.c.bf16 %v11010, %v11007
    %v11109 = vunpack.c.l.b16 %v11013
    %v11110 = vunpack.c.l.b16 %v11014
    %v11111 = vunpack.c.l.b16 %v11015
    %v11112 = vunpack.c.h.b16 %v11013
    %v11113 = vunpack.c.h.b16 %v11014
    %v11114 = vunpack.c.h.b16 %v11015
    %v11115 = vunpack.c.l.b16 %v11016
    %v11116 = vunpack.c.l.b16 %v11017
    %v11117 = vunpack.c.l.b16 %v11018
    %v11118 = vunpack.c.h.b16 %v11016
    %v11119 = vunpack.c.h.b16 %v11017
    %v11120 = vunpack.c.h.b16 %v11018
    %v11121 = vunpack.c.l.b16 %v11019
    %v11122 = vunpack.c.l.b16 %v11020
    %v11123 = vunpack.c.l.b16 %v11021
    %v11124 = vunpack.c.h.b16 %v11019
    %v11125 = vunpack.c.h.b16 %v11020
    %v11126 = vunpack.c.h.b16 %v11021
    %v11127 = vunpack.c.l.b16 %v11022
    %v11128 = vunpack.c.l.b16 %v11023
    %v11129 = vunpack.c.l.b16 %v11024
    %v11130 = vunpack.c.h.b16 %v11022
    %v11131 = vunpack.c.h.b16 %v11023
    %v11132 = vunpack.c.h.b16 %v11024
    %v11133 = vunpack.c.l.b16 %v11025
    %v11134 = vunpack.c.l.b16 %v11026
    %v11135 = vunpack.c.l.b16 %v11027
    %v11136 = vunpack.c.h.b16 %v11025
    %v11137 = vunpack.c.h.b16 %v11026
    %v11138 = vunpack.c.h.b16 %v11027
    %v11139 = vunpack.c.l.b16 %v11028
    %v11140 = vunpack.c.l.b16 %v11029
    %v11141 = vunpack.c.l.b16 %v11030
    %v11142 = vunpack.c.h.b16 %v11028
    %v11143 = vunpack.c.h.b16 %v11029
    %v11144 = vunpack.c.h.b16 %v11030
    %v11145 = vunpack.c.l.b16 %v11031
    %v11146 = vunpack.c.l.b16 %v11032
    %v11147 = vunpack.c.l.b16 %v11033
    %v11148 = vunpack.c.h.b16 %v11031
    %v11149 = vunpack.c.h.b16 %v11032
    %v11150 = vunpack.c.h.b16 %v11033
    %v11151 = vunpack.c.l.b16 %v11034
    %v11152 = vunpack.c.l.b16 %v11035
    %v11153 = vunpack.c.l.b16 %v11036
    %v11154 = vunpack.c.h.b16 %v11034
    %v11155 = vunpack.c.h.b16 %v11035
    %v11156 = vunpack.c.h.b16 %v11036
    %v11157 = vunpack.c.l.b16 %v11037
    %v11158 = vunpack.c.l.b16 %v11038
    %v11159 = vunpack.c.l.b16 %v11039
    %v11160 = vunpack.c.h.b16 %v11037
    %v11161 = vunpack.c.h.b16 %v11038
    %v11162 = vunpack.c.h.b16 %v11039
    %v11163 = vunpack.c.l.b16 %v11040
    %v11164 = vunpack.c.l.b16 %v11041
    %v11165 = vunpack.c.l.b16 %v11042
    %v11166 = vunpack.c.h.b16 %v11040
    %v11167 = vunpack.c.h.b16 %v11041
    %v11168 = vunpack.c.h.b16 %v11042
    %v11169 = vunpack.c.l.b16 %v11043
    %v11170 = vunpack.c.l.b16 %v11044
    %v11171 = vunpack.c.l.b16 %v11045
    %v11172 = vunpack.c.h.b16 %v11043
    %v11173 = vunpack.c.h.b16 %v11044
    %v11174 = vunpack.c.h.b16 %v11045
    %v11175 = vunpack.c.l.b16 %v11046
    %v11176 = vunpack.c.l.b16 %v11047
    %v11177 = vunpack.c.l.b16 %v11048
    %v11178 = vunpack.c.h.b16 %v11046
    %v11179 = vunpack.c.h.b16 %v11047
    %v11180 = vunpack.c.h.b16 %v11048
    %v11181 = vunpack.c.l.b16 %v11049
    %v11182 = vunpack.c.l.b16 %v11050
    %v11183 = vunpack.c.l.b16 %v11051
    %v11184 = vunpack.c.h.b16 %v11049
    %v11185 = vunpack.c.h.b16 %v11050
    %v11186 = vunpack.c.h.b16 %v11051
    %v11187 = vunpack.c.l.b16 %v11052
    %v11188 = vunpack.c.l.b16 %v11053
    %v11189 = vunpack.c.l.b16 %v11054
    %v11190 = vunpack.c.h.b16 %v11052
    %v11191 = vunpack.c.h.b16 %v11053
    %v11192 = vunpack.c.h.b16 %v11054
    %v11193 = vunpack.c.l.b16 %v11055
    %v11194 = vunpack.c.l.b16 %v11056
    %v11195 = vunpack.c.l.b16 %v11057
    %v11196 = vunpack.c.h.b16 %v11055
    %v11197 = vunpack.c.h.b16 %v11056
    %v11198 = vunpack.c.h.b16 %v11057
    %v11199 = vunpack.c.l.b16 %v11058
    %v11200 = vunpack.c.l.b16 %v11059
    %v11201 = vunpack.c.l.b16 %v11060
    %v11202 = vunpack.c.h.b16 %v11058
    %v11203 = vunpack.c.h.b16 %v11059
    %v11204 = vunpack.c.h.b16 %v11060
    %v11205 = vpack.c.b16 %v11110, %v11109
    %v11206 = vpack.c.b16 %v11111, %v11111
    %v11207 = vpack.c.b16 %v11113, %v11112
    %v11208 = vpack.c.b16 %v11114, %v11114
    %v11209 = vpack.c.b16 %v11116, %v11115
    %v11210 = vpack.c.b16 %v11117, %v11117
    %v11211 = vpack.c.b16 %v11119, %v11118
    %v11212 = vpack.c.b16 %v11120, %v11120
    %v11213 = vpack.c.b16 %v11122, %v11121
    %v11214 = vpack.c.b16 %v11123, %v11123
    %v11215 = vpack.c.b16 %v11125, %v11124
    %v11216 = vpack.c.b16 %v11126, %v11126
    %v11217 = vpack.c.b16 %v11128, %v11127
    %v11218 = vpack.c.b16 %v11129, %v11129
    %v11219 = vpack.c.b16 %v11131, %v11130
    %v11220 = vpack.c.b16 %v11132, %v11132
    %v11221 = vpack.c.b16 %v11134, %v11133
    %v11222 = vpack.c.b16 %v11135, %v11135
    %v11223 = vpack.c.b16 %v11137, %v11136
    %v11224 = vpack.c.b16 %v11138, %v11138
    %v11225 = vpack.c.b16 %v11140, %v11139
    %v11226 = vpack.c.b16 %v11141, %v11141
    %v11227 = vpack.c.b16 %v11143, %v11142
    %v11228 = vpack.c.b16 %v11144, %v11144
    %v11229 = vpack.c.b16 %v11146, %v11145
    %v11230 = vpack.c.b16 %v11147, %v11147
    %v11231 = vpack.c.b16 %v11149, %v11148
    %v11232 = vpack.c.b16 %v11150, %v11150
    %v11233 = vpack.c.b16 %v11152, %v11151
    %v11234 = vpack.c.b16 %v11153, %v11153
    %v11235 = vpack.c.b16 %v11155, %v11154
    %v11236 = vpack.c.b16 %v11156, %v11156
    %v11237 = vpack.c.b16 %v11158, %v11157
    %v11238 = vpack.c.b16 %v11159, %v11159
    %v11239 = vpack.c.b16 %v11161, %v11160
    %v11240 = vpack.c.b16 %v11162, %v11162
    %v11241 = vpack.c.b16 %v11164, %v11163
    %v11242 = vpack.c.b16 %v11165, %v11165
    %v11243 = vpack.c.b16 %v11167, %v11166
    %v11244 = vpack.c.b16 %v11168, %v11168
    %v11245 = vpack.c.b16 %v11170, %v11169
    %v11246 = vpack.c.b16 %v11171, %v11171
    %v11247 = vpack.c.b16 %v11173, %v11172
    %v11248 = vpack.c.b16 %v11174, %v11174
    %v11249 = vpack.c.b16 %v11176, %v11175
    %v11250 = vpack.c.b16 %v11177, %v11177
    %v11251 = vpack.c.b16 %v11179, %v11178
    %v11252 = vpack.c.b16 %v11180, %v11180
    %v11253 = vpack.c.b16 %v11182, %v11181
    %v11254 = vpack.c.b16 %v11183, %v11183
    %v11255 = vpack.c.b16 %v11185, %v11184
    %v11256 = vpack.c.b16 %v11186, %v11186
    %v11257 = vpack.c.b16 %v11188, %v11187
    %v11258 = vpack.c.b16 %v11189, %v11189
    %v11259 = vpack.c.b16 %v11191, %v11190
    %v11260 = vpack.c.b16 %v11192, %v11192
    %v11261 = vpack.c.b16 %v11194, %v11193
    %v11262 = vpack.c.b16 %v11195, %v11195
    %v11263 = vpack.c.b16 %v11197, %v11196
    %v11264 = vpack.c.b16 %v11198, %v11198
    %v11265 = vpack.c.b16 %v11200, %v11199
    %v11266 = vpack.c.b16 %v11201, %v11201
    %v11267 = vpack.c.b16 %v11203, %v11202
    %v11268 = vpack.c.b16 %v11204, %v11204
    %11333 = vst [vmem:[#allocation10] sm:$0xff] %v11205
    %11334 = vst [vmem:[#allocation10 + $0x8] sm:$0xf] %v11206
    %11335 = vst [vmem:[#allocation10 + $0xc] sm:$0xff] %v11207
    %11336 = vst [vmem:[#allocation10 + $0x14] sm:$0xf] %v11208
    %11337 = vst [vmem:[#allocation10 + $0x18] sm:$0xff] %v11209
    %11338 = vst [vmem:[#allocation10 + $0x20] sm:$0xf] %v11210
    %11339 = vst [vmem:[#allocation10 + $0x24] sm:$0xff] %v11211
    %11340 = vst [vmem:[#allocation10 + $0x2c] sm:$0xf] %v11212
    %11341 = vst [vmem:[#allocation10 + $0x30] sm:$0xff] %v11213
    %11342 = vst [vmem:[#allocation10 + $0x38] sm:$0xf] %v11214
    %11343 = vst [vmem:[#allocation10 + $0x3c] sm:$0xff] %v11215
    %11344 = vst [vmem:[#allocation10 + $0x44] sm:$0xf] %v11216
    %11345 = vst [vmem:[#allocation10 + $0x48] sm:$0xff] %v11217
    %11346 = vst [vmem:[#allocation10 + $0x50] sm:$0xf] %v11218
    %11347 = vst [vmem:[#allocation10 + $0x54] sm:$0xff] %v11219
    %11348 = vst [vmem:[#allocation10 + $0x5c] sm:$0xf] %v11220
    %11349 = vst [vmem:[#allocation10 + $0x60] sm:$0xff] %v11221
    %11350 = vst [vmem:[#allocation10 + $0x68] sm:$0xf] %v11222
    %11351 = vst [vmem:[#allocation10 + $0x6c] sm:$0xff] %v11223
    %11352 = vst [vmem:[#allocation10 + $0x74] sm:$0xf] %v11224
    %11353 = vst [vmem:[#allocation10 + $0x78] sm:$0xff] %v11225
    %11354 = vst [vmem:[#allocation10 + $0x80] sm:$0xf] %v11226
    %11355 = vst [vmem:[#allocation10 + $0x84] sm:$0xff] %v11227
    %11356 = vst [vmem:[#allocation10 + $0x8c] sm:$0xf] %v11228
    %11357 = vst [vmem:[#allocation10 + $0x90] sm:$0xff] %v11229
    %11358 = vst [vmem:[#allocation10 + $0x98] sm:$0xf] %v11230
    %11359 = vst [vmem:[#allocation10 + $0x9c] sm:$0xff] %v11231
    %11360 = vst [vmem:[#allocation10 + $0xa4] sm:$0xf] %v11232
    %11361 = vst [vmem:[#allocation10 + $0xa8] sm:$0xff] %v11233
    %11362 = vst [vmem:[#allocation10 + $0xb0] sm:$0xf] %v11234
    %11363 = vst [vmem:[#allocation10 + $0xb4] sm:$0xff] %v11235
    %11364 = vst [vmem:[#allocation10 + $0xbc] sm:$0xf] %v11236
    %11365 = vst [vmem:[#allocation10 + $0xc0] sm:$0xff] %v11237
    %11366 = vst [vmem:[#allocation10 + $0xc8] sm:$0xf] %v11238
    %11367 = vst [vmem:[#allocation10 + $0xcc] sm:$0xff] %v11239
    %11368 = vst [vmem:[#allocation10 + $0xd4] sm:$0xf] %v11240
    %11369 = vst [vmem:[#allocation10 + $0xd8] sm:$0xff] %v11241
    %11370 = vst [vmem:[#allocation10 + $0xe0] sm:$0xf] %v11242
    %11371 = vst [vmem:[#allocation10 + $0xe4] sm:$0xff] %v11243
    %11372 = vst [vmem:[#allocation10 + $0xec] sm:$0xf] %v11244
    %11373 = vst [vmem:[#allocation10 + $0xf0] sm:$0xff] %v11245
    %11374 = vst [vmem:[#allocation10 + $0xf8] sm:$0xf] %v11246
    %11375 = vst [vmem:[#allocation10 + $0xfc] sm:$0xff] %v11247
    %11376 = vst [vmem:[#allocation10 + $0x104] sm:$0xf] %v11248
    %11377 = vst [vmem:[#allocation10 + $0x108] sm:$0xff] %v11249
    %11378 = vst [vmem:[#allocation10 + $0x110] sm:$0xf] %v11250
    %11379 = vst [vmem:[#allocation10 + $0x114] sm:$0xff] %v11251
    %11380 = vst [vmem:[#allocation10 + $0x11c] sm:$0xf] %v11252
    %11381 = vst [vmem:[#allocation10 + $0x120] sm:$0xff] %v11253
    %11382 = vst [vmem:[#allocation10 + $0x128] sm:$0xf] %v11254
    %11383 = vst [vmem:[#allocation10 + $0x12c] sm:$0xff] %v11255
    %11384 = vst [vmem:[#allocation10 + $0x134] sm:$0xf] %v11256
    %11385 = vst [vmem:[#allocation10 + $0x138] sm:$0xff] %v11257
    %11386 = vst [vmem:[#allocation10 + $0x140] sm:$0xf] %v11258
    %11387 = vst [vmem:[#allocation10 + $0x144] sm:$0xff] %v11259
    %11388 = vst [vmem:[#allocation10 + $0x14c] sm:$0xf] %v11260
    %11389 = vst [vmem:[#allocation10 + $0x150] sm:$0xff] %v11261
    %11390 = vst [vmem:[#allocation10 + $0x158] sm:$0xf] %v11262
    %11391 = vst [vmem:[#allocation10 + $0x15c] sm:$0xff] %v11263
    %11392 = vst [vmem:[#allocation10 + $0x164] sm:$0xf] %v11264
    %11393 = vst [vmem:[#allocation10 + $0x168] sm:$0xff] %v11265
    %11394 = vst [vmem:[#allocation10 + $0x170] sm:$0xf] %v11266
    %11395 = vst [vmem:[#allocation10 + $0x174] sm:$0xff] %v11267
    %11396 = vst [vmem:[#allocation10 + $0x17c] sm:$0xf] %v11268
    // Predicated region
    $region30: #{tpu_custom_call.1} parent=1 // pred_check
      _
    $region31: #{tpu_custom_call.1} parent=1 // pred_check_branch
      %11398 = sbr.rel (0) target = $region33
    $region32: #{tpu_custom_call.1} parent=1 // pred_region
      %s11400 = ssub.s32 6144, 6144
      %11401 = vsyncadd [#allocation6], %s11400
      %s11402 = sshll.u32 [#allocation10], 4
      %s11403 = int_to_ptr.vmem [resolvable:$true] %s11402
      %11408 = dma.vmem_to_hbm [thread:$0]  %s11403, 6144, %s4, [#allocation6], 192, 192, 12
    $region33: #{tpu_custom_call.1} parent=1 // pred_fallthru
      _
    // Predicated region
    $region34: #{tpu_custom_call.1} parent=1 // pred_check
      _
    $region35: #{tpu_custom_call.1} parent=1 // pred_check_branch
      %11410 = sbr.rel (0) target = $region37
    $region36: #{tpu_custom_call.1} parent=1 // pred_region
      %11411 = dma.done [#allocation6], 6144
    $region37: #{tpu_custom_call.1} parent=1 // pred_fallthru
      _
    %11412 = vsyncpa [#allocation5], 1
    %11413 = vsyncpa [#allocation8], 1
    %11414 = vsyncpa [#allocation6], 1

</llo_original>
